<compile_context>
chip_gen: v5e
topology: v5e:2x2
jax: 0.10.0
libtpu: 0.0.40
codegen_flags: <defaults>
</compile_context>

<pallas_src>
import jax
import jax.numpy as jnp
from jax import lax
from jax.experimental import pallas as pl
from jax.experimental.pallas import tpu as pltpu


def decoder_kernel(x_ref, h0_ref, c0_ref, enc_ref,
                   wenc_ref, wdec_ref, wval_ref,
                   wih4_ref, whh4_ref, b4_ref,
                   wfin_ref, bfin_ref,
                   fin_ref, hn_ref, cn_ref, attn_ref):
    BB, L, H = enc_ref.shape
    IN = x_ref.shape[1]
    T = H + IN                      # LSTM sequence length (feature size == 1)

    enc = enc_ref[...]              # (BB, L, H) f32
    h0 = h0_ref[...]                # (BB, H)    f32
    c0 = c0_ref[...]                # (BB, H)    f32
    x = x_ref[...]                  # (BB, IN)   f32

    # ---- additive (Bahdanau-style) attention --------------------------------
    # TODO(synk): if this decoder is called repeatedly with a fixed encoder_output,
    # hoist enc @ w_enc^T out of the kernel (it is loop-invariant across decode steps).
    enc_p = jnp.dot(enc.reshape(BB * L, H).astype(jnp.bfloat16), wenc_ref[...],
                    preferred_element_type=jnp.float32).reshape(BB, L, H)
    dec_p = jnp.dot(h0.astype(jnp.bfloat16), wdec_ref[...],
                    preferred_element_type=jnp.float32)                  # (BB, H)
    e = jnp.tanh(enc_p + dec_p[:, None, :])                              # (BB, L, H)
    scores = jnp.sum(e * wval_ref[...][None, :, :], axis=-1)             # (BB, L)

    m = jnp.max(scores, axis=-1, keepdims=True)
    p = jnp.exp(scores - m)
    attn = p * pl.reciprocal(jnp.sum(p, axis=-1, keepdims=True), approx=True)
    attn_ref[...] = attn

    # context vector: elementwise multiply + sublane reduce (VPU/XLU, frees MXU)
    ctx = jnp.sum(attn[:, :, None] * enc, axis=1)                        # (BB, H)

    # ---- LSTM over [ctx[:,0] .. ctx[:,H-1], x] (all f32) --------------------
    # Per-gate split (gate order i, f, g, o): each gate's matmul result, bias and
    # activation live at lanes 0:H -> no lane rotations in the serial recurrence.
    wih = wih4_ref[...]             # (4, H)   input-weight rows (input_size == 1)
    bg = b4_ref[...]                # (4, H)   b_ih + b_hh
    wih_i, wih_f, wih_g, wih_o = wih[0:1], wih[1:2], wih[2:3], wih[3:4]
    b_i, b_f, b_g, b_o = bg[0:1], bg[1:2], bg[2:3], bg[3:4]
    whh_i = whh4_ref[0]             # (H, H) pre-transposed for h @ W
    whh_f = whh4_ref[1]
    whh_g = whh4_ref[2]
    whh_o = whh4_ref[3]

    def sig(v):                     # one EUP push per gate (vs. exp + divide)
        return 0.5 * jnp.tanh(0.5 * v) + 0.5

    h, c = h0, c0
    # T is static -> fully unrolled loop: every slice below is static, and the
    # h-independent input-gate work can be scheduled ahead of the activation chain.
    for t in range(T):
        xt = ctx[:, t:t + 1] if t < H else x[:, t - H:t - H + 1]         # (BB, 1)
        xb = jnp.broadcast_to(xt, (BB, H))
        gi = xb * wih_i + b_i + jnp.dot(h, whh_i, preferred_element_type=jnp.float32)
        gf = xb * wih_f + b_f + jnp.dot(h, whh_f, preferred_element_type=jnp.float32)
        gg = xb * wih_g + b_g + jnp.dot(h, whh_g, preferred_element_type=jnp.float32)
        go = xb * wih_o + b_o + jnp.dot(h, whh_o, preferred_element_type=jnp.float32)
        ig = sig(gi)
        fg = sig(gf)
        gt = jnp.tanh(gg)
        og = sig(go)
        c = fg * c + ig * gt
        h = og * jnp.tanh(c)

    hn_ref[...] = h
    cn_ref[...] = c
    fin_ref[...] = jnp.dot(h, wfin_ref[...],
                           preferred_element_type=jnp.float32) + bfin_ref[...]


def init_params(key, input_size, hidden_size):
    """Deterministic synthetic parameters with PyTorch-module shapes."""
    H, IN = hidden_size, input_size
    ks = jax.random.split(key, 9)
    u = lambda k, shape: jax.random.uniform(k, shape, jnp.float32, -0.1, 0.1)
    return dict(
        w_enc=u(ks[0], (H, H)),       # encoder_weight.weight  (out, in)
        w_dec=u(ks[1], (H, H)),       # decoder_weight.weight
        w_val=u(ks[2], (1, H)),       # value_weight.weight
        w_ih=u(ks[3], (4 * H, IN)),   # lstm.weight_ih_l0  (gate order i,f,g,o)
        w_hh=u(ks[4], (4 * H, H)),    # lstm.weight_hh_l0
        b_ih=u(ks[5], (4 * H,)),
        b_hh=u(ks[6], (4 * H,)),
        w_fin=u(ks[7], (IN, H)),      # fin_linear.weight
        b_fin=u(ks[8], (IN,)),
    )


def decoder_forward(x, hidden, encoder_output, params):
    h_all, c_all = hidden
    assert h_all.shape[0] == 1, "kernel supports num_layers == 1"
    h0, c0 = h_all[0], c_all[0]
    B, L, H = encoder_output.shape
    IN = x.shape[1]

    # ---- weight prep (plain JAX glue) ----------------------------------------
    wenc_bf = params['w_enc'].T.astype(jnp.bfloat16)               # (H, H) MXU operand
    wdec_bf = params['w_dec'].T.astype(jnp.bfloat16)               # (H, H) MXU operand
    wval = params['w_val']                                         # (1, H)  f32
    wih4 = params['w_ih'].reshape(4, H, IN)[:, :, 0]               # (4, H)  per gate
    whh4 = params['w_hh'].reshape(4, H, H).transpose(0, 2, 1)      # (4, H, H) per gate, (in,out)
    b4 = (params['b_ih'] + params['b_hh']).reshape(4, H)           # (4, H)
    wfin = params['w_fin'].T                                       # (H, IN)
    bfin = params['b_fin'][None, :]                                # (1, IN)

    # batch-block grid: one block at tiny B, parallel blocks for larger batches
    BB = B if B <= 8 else 8
    assert B % BB == 0, "batch must be a multiple of the batch block"
    grid = (B // BB,)

    in_specs = [
        pl.BlockSpec((BB, IN), lambda i: (i, 0)),          # x
        pl.BlockSpec((BB, H), lambda i: (i, 0)),           # h0
        pl.BlockSpec((BB, H), lambda i: (i, 0)),           # c0
        pl.BlockSpec((BB, L, H), lambda i: (i, 0, 0)),     # encoder_output
        pl.BlockSpec((H, H), lambda i: (0, 0)),            # w_enc^T (bf16)
        pl.BlockSpec((H, H), lambda i: (0, 0)),            # w_dec^T (bf16)
        pl.BlockSpec((1, H), lambda i: (0, 0)),            # w_val
        pl.BlockSpec((4, H), lambda i: (0, 0)),            # w_ih per gate
        pl.BlockSpec((4, H, H), lambda i: (0, 0, 0)),      # w_hh^T per gate
        pl.BlockSpec((4, H), lambda i: (0, 0)),            # b_ih + b_hh per gate
        pl.BlockSpec((H, IN), lambda i: (0, 0)),           # w_fin^T
        pl.BlockSpec((1, IN), lambda i: (0, 0)),           # b_fin
    ]
    out_specs = (
        pl.BlockSpec((BB, IN), lambda i: (i, 0)),          # fin_output
        pl.BlockSpec((BB, H), lambda i: (i, 0)),           # h_n
        pl.BlockSpec((BB, H), lambda i: (i, 0)),           # c_n
        pl.BlockSpec((BB, L), lambda i: (i, 0)),           # attn_weight
    )

    fin, hn, cn, attn = pl.pallas_call(
        decoder_kernel,
        out_shape=(
            jax.ShapeDtypeStruct((B, IN), jnp.float32),
            jax.ShapeDtypeStruct((B, H), jnp.float32),
            jax.ShapeDtypeStruct((B, H), jnp.float32),
            jax.ShapeDtypeStruct((B, L), jnp.float32),
        ),
        grid=grid,
        in_specs=in_specs,
        out_specs=out_specs,
        compiler_params=pltpu.CompilerParams(
            dimension_semantics=("parallel",)),
    )(x, h0, c0, encoder_output,
      wenc_bf, wdec_bf, wval, wih4, whh4, b4, wfin, bfin)

    return fin, (hn[None], cn[None]), attn


def decoder_reference(x, hidden, encoder_output, params):
    """Pure-JAX mirror of the PyTorch forward (for correctness check)."""
    h0, c0 = hidden[0][0], hidden[1][0]
    B, L, H = encoder_output.shape
    dec_p = h0 @ params['w_dec'].T
    enc_p = jnp.einsum('blh,kh->blk', encoder_output, params['w_enc'])
    e = jnp.tanh(enc_p + dec_p[:, None, :])
    scores = jnp.einsum('blh,oh->blo', e, params['w_val'])[..., 0]
    attn = jax.nn.softmax(scores, axis=1)
    ctx = jnp.einsum('bl,blh->bh', attn, encoder_output)
    seq = jnp.concatenate([ctx, x], axis=1)               # (B, H+IN)

    wih_t = params['w_ih'].T
    whh_t = params['w_hh'].T
    b = params['b_ih'] + params['b_hh']

    def step(carry, xt):                                   # xt: (B, 1)
        h, c = carry
        gates = xt @ wih_t + h @ whh_t + b
        i = jax.nn.sigmoid(gates[:, 0 * H:1 * H])
        f = jax.nn.sigmoid(gates[:, 1 * H:2 * H])
        g = jnp.tanh(gates[:, 2 * H:3 * H])
        o = jax.nn.sigmoid(gates[:, 3 * H:4 * H])
        c = f * c + i * g
        h = o * jnp.tanh(c)
        return (h, c), None

    xs = jnp.swapaxes(seq, 0, 1)[:, :, None]               # (T, B, 1)
    (hn, cn), _ = lax.scan(step, (h0, c0), xs)
    fin = hn @ params['w_fin'].T + params['b_fin']
    return fin, (hn[None], cn[None]), attn


if __name__ == "__main__":
    B, H, IN, L = 2, 32, 1, 8          # batch, hidden, input_size(=1), enc seq len
    key = jax.random.PRNGKey(0)
    kx, kh, kc, ke, kp = jax.random.split(key, 5)
    x = jax.random.normal(kx, (B, IN), jnp.float32)
    h0 = jax.random.normal(kh, (1, B, H), jnp.float32)
    c0 = jax.random.normal(kc, (1, B, H), jnp.float32)
    enc = jax.random.normal(ke, (B, L, H), jnp.float32)
    params = init_params(kp, IN, H)

    fin, (hn, cn), attn = decoder_forward(x, (h0, c0), enc, params)
    jax.block_until_ready((fin, hn, cn, attn))

    fin_r, (hn_r, cn_r), attn_r = decoder_reference(x, (h0, c0), enc, params)
    for a, r, name in ((fin, fin_r, "fin"), (hn, hn_r, "h_n"),
                       (cn, cn_r, "c_n"), (attn, attn_r, "attn")):
        err = float(jnp.max(jnp.abs(a - r)))
        assert jnp.allclose(a, r, atol=1e-2, rtol=1e-2), (name, err)

    print("KERNEL_OK")
</pallas_src>

<mosaic_0001>
module attributes {stable_mosaic.version = 11 : i64} {
  func.func @decoder_kernel(%arg0: i32, %arg1: memref<2x1xf32, #tpu.memory_space<vmem>>, %arg2: memref<2x32xf32, #tpu.memory_space<vmem>>, %arg3: memref<2x32xf32, #tpu.memory_space<vmem>>, %arg4: memref<2x8x32xf32, #tpu.memory_space<vmem>>, %arg5: memref<32x32xbf16, #tpu.memory_space<vmem>>, %arg6: memref<32x32xbf16, #tpu.memory_space<vmem>>, %arg7: memref<1x32xf32, #tpu.memory_space<vmem>>, %arg8: memref<4x32xf32, #tpu.memory_space<vmem>>, %arg9: memref<4x32x32xf32, #tpu.memory_space<vmem>>, %arg10: memref<4x32xf32, #tpu.memory_space<vmem>>, %arg11: memref<32x1xf32, #tpu.memory_space<vmem>>, %arg12: memref<1x1xf32, #tpu.memory_space<vmem>>, %arg13: memref<2x1xf32, #tpu.memory_space<vmem>>, %arg14: memref<2x32xf32, #tpu.memory_space<vmem>>, %arg15: memref<2x32xf32, #tpu.memory_space<vmem>>, %arg16: memref<2x8xf32, #tpu.memory_space<vmem>>) attributes {dimension_semantics = [#tpu.dimension_semantics<parallel>], iteration_bounds = array<i64: 1>, scalar_prefetch = 0 : i64, scratch_operands = 0 : i64, tpu.core_type = #tpu.core_type<tc>, window_params = [{transform_indices = @transform_0, window_bounds = array<i64: 2, 1>}, {transform_indices = @transform_1, window_bounds = array<i64: 2, 32>}, {transform_indices = @transform_2, window_bounds = array<i64: 2, 32>}, {transform_indices = @transform_3, window_bounds = array<i64: 2, 8, 32>}, {pipeline_mode = #tpu.pipeline_mode<synchronous>, transform_indices = @transform_4, window_bounds = array<i64: 32, 32>}, {pipeline_mode = #tpu.pipeline_mode<synchronous>, transform_indices = @transform_5, window_bounds = array<i64: 32, 32>}, {pipeline_mode = #tpu.pipeline_mode<synchronous>, transform_indices = @transform_6, window_bounds = array<i64: 1, 32>}, {pipeline_mode = #tpu.pipeline_mode<synchronous>, transform_indices = @transform_7, window_bounds = array<i64: 4, 32>}, {pipeline_mode = #tpu.pipeline_mode<synchronous>, transform_indices = @transform_8, window_bounds = array<i64: 4, 32, 32>}, {pipeline_mode = #tpu.pipeline_mode<synchronous>, transform_indices = @transform_9, window_bounds = array<i64: 4, 32>}, {pipeline_mode = #tpu.pipeline_mode<synchronous>, transform_indices = @transform_10, window_bounds = array<i64: 32, 1>}, {pipeline_mode = #tpu.pipeline_mode<synchronous>, transform_indices = @transform_11, window_bounds = array<i64: 1, 1>}, {transform_indices = @transform_12, window_bounds = array<i64: 2, 1>}, {transform_indices = @transform_13, window_bounds = array<i64: 2, 32>}, {transform_indices = @transform_14, window_bounds = array<i64: 2, 32>}, {transform_indices = @transform_15, window_bounds = array<i64: 2, 8>}]} {
    %c0 = arith.constant 0 : index
    %c0_0 = arith.constant 0 : index
    %c0_1 = arith.constant 0 : index
    %0 = vector.load %arg4[%c0, %c0_0, %c0_1] : memref<2x8x32xf32, #tpu.memory_space<vmem>>, vector<2x8x32xf32>
    %c0_2 = arith.constant 0 : index
    %c0_3 = arith.constant 0 : index
    %1 = vector.load %arg2[%c0_2, %c0_3] : memref<2x32xf32, #tpu.memory_space<vmem>>, vector<2x32xf32>
    %c0_4 = arith.constant 0 : index
    %c0_5 = arith.constant 0 : index
    %2 = vector.load %arg3[%c0_4, %c0_5] : memref<2x32xf32, #tpu.memory_space<vmem>>, vector<2x32xf32>
    %c0_6 = arith.constant 0 : index
    %c0_7 = arith.constant 0 : index
    %3 = vector.load %arg1[%c0_6, %c0_7] : memref<2x1xf32, #tpu.memory_space<vmem>>, vector<2x1xf32>
    %4 = vector.shape_cast %0 : vector<2x8x32xf32> to vector<16x32xf32>
    %5 = arith.truncf %4 : vector<16x32xf32> to vector<16x32xbf16>
    %c0_8 = arith.constant 0 : index
    %c0_9 = arith.constant 0 : index
    %6 = vector.load %arg5[%c0_8, %c0_9] : memref<32x32xbf16, #tpu.memory_space<vmem>>, vector<32x32xbf16>
    %cst = arith.constant dense<0.000000e+00> : vector<16x32xf32>
    %7 = tpu.matmul %5, %6, %cst {dimension_numbers = #tpu.dot_dimension_numbers<[1], [0], [0], [1], [0, 0, 1, 1], [], []>} : vector<16x32xbf16>, vector<32x32xbf16>, vector<16x32xf32> -> vector<16x32xf32>
    %8 = vector.shape_cast %7 : vector<16x32xf32> to vector<2x8x32xf32>
    %9 = arith.truncf %1 : vector<2x32xf32> to vector<2x32xbf16>
    %c0_10 = arith.constant 0 : index
    %c0_11 = arith.constant 0 : index
    %10 = vector.load %arg6[%c0_10, %c0_11] : memref<32x32xbf16, #tpu.memory_space<vmem>>, vector<32x32xbf16>
    %cst_12 = arith.constant dense<0.000000e+00> : vector<2x32xf32>
    %11 = tpu.matmul %9, %10, %cst_12 {dimension_numbers = #tpu.dot_dimension_numbers<[1], [0], [0], [1], [0, 0, 1, 1], [], []>} : vector<2x32xbf16>, vector<32x32xbf16>, vector<2x32xf32> -> vector<2x32xf32>
    %12 = vector.shape_cast %11 : vector<2x32xf32> to vector<2x1x32xf32>
    %13 = vector.broadcast %12 : vector<2x1x32xf32> to vector<2x8x32xf32>
    %14 = arith.addf %8, %13 : vector<2x8x32xf32>
    %15 = math.tanh %14 : vector<2x8x32xf32>
    %c0_13 = arith.constant 0 : index
    %c0_14 = arith.constant 0 : index
    %16 = vector.load %arg7[%c0_13, %c0_14] : memref<1x32xf32, #tpu.memory_space<vmem>>, vector<1x32xf32>
    %17 = vector.shape_cast %16 : vector<1x32xf32> to vector<1x1x32xf32>
    %18 = vector.broadcast %17 : vector<1x1x32xf32> to vector<2x8x32xf32>
    %19 = arith.mulf %15, %18 : vector<2x8x32xf32>
    %cst_15 = arith.constant dense<0.000000e+00> : vector<2x8xf32>
    %20 = vector.multi_reduction <add>, %19, %cst_15 [2] : vector<2x8x32xf32> to vector<2x8xf32>
    %cst_16 = arith.constant dense<0xFF800000> : vector<2xf32>
    %21 = vector.multi_reduction <maximumf>, %20, %cst_16 [1] : vector<2x8xf32> to vector<2xf32>
    %22 = vector.shape_cast %21 : vector<2xf32> to vector<2x1xf32>
    %23 = vector.broadcast %22 : vector<2x1xf32> to vector<2x8xf32>
    %24 = arith.subf %20, %23 : vector<2x8xf32>
    %25 = math.exp %24 : vector<2x8xf32>
    %cst_17 = arith.constant dense<0.000000e+00> : vector<2xf32>
    %26 = vector.multi_reduction <add>, %25, %cst_17 [1] : vector<2x8xf32> to vector<2xf32>
    %27 = vector.shape_cast %26 : vector<2xf32> to vector<2x1xf32>
    %28 = tpu.reciprocal %27 {approx = true} : vector<2x1xf32> -> vector<2x1xf32>
    %29 = vector.broadcast %28 : vector<2x1xf32> to vector<2x8xf32>
    %30 = arith.mulf %25, %29 : vector<2x8xf32>
    %c0_18 = arith.constant 0 : index
    %c0_19 = arith.constant 0 : index
    %31 = vector.load %arg16[%c0_18, %c0_19] : memref<2x8xf32, #tpu.memory_space<vmem>>, vector<2x8xf32>
    tpu.vector_store %arg16[%c0_18, %c0_19], %30 {strides = array<i32>} : memref<2x8xf32, #tpu.memory_space<vmem>>, vector<2x8xf32>,
    %32 = vector.shape_cast %30 : vector<2x8xf32> to vector<2x8x1xf32>
    %33 = vector.broadcast %32 : vector<2x8x1xf32> to vector<2x8x32xf32>
    %34 = arith.mulf %33, %0 : vector<2x8x32xf32>
    %cst_20 = arith.constant dense<0.000000e+00> : vector<2x32xf32>
    %35 = vector.multi_reduction <add>, %34, %cst_20 [1] : vector<2x8x32xf32> to vector<2x32xf32>
    %c0_21 = arith.constant 0 : index
    %c0_22 = arith.constant 0 : index
    %36 = vector.load %arg8[%c0_21, %c0_22] : memref<4x32xf32, #tpu.memory_space<vmem>>, vector<4x32xf32>
    %c0_23 = arith.constant 0 : index
    %c0_24 = arith.constant 0 : index
    %37 = vector.load %arg10[%c0_23, %c0_24] : memref<4x32xf32, #tpu.memory_space<vmem>>, vector<4x32xf32>
    %38 = vector.extract_strided_slice %36 {offsets = [0, 0], sizes = [1, 32], strides = [1, 1]} : vector<4x32xf32> to vector<1x32xf32>
    %39 = vector.extract_strided_slice %36 {offsets = [1, 0], sizes = [1, 32], strides = [1, 1]} : vector<4x32xf32> to vector<1x32xf32>
    %40 = vector.extract_strided_slice %36 {offsets = [2, 0], sizes = [1, 32], strides = [1, 1]} : vector<4x32xf32> to vector<1x32xf32>
    %41 = vector.extract_strided_slice %36 {offsets = [3, 0], sizes = [1, 32], strides = [1, 1]} : vector<4x32xf32> to vector<1x32xf32>
    %42 = vector.extract_strided_slice %37 {offsets = [0, 0], sizes = [1, 32], strides = [1, 1]} : vector<4x32xf32> to vector<1x32xf32>
    %43 = vector.extract_strided_slice %37 {offsets = [1, 0], sizes = [1, 32], strides = [1, 1]} : vector<4x32xf32> to vector<1x32xf32>
    %44 = vector.extract_strided_slice %37 {offsets = [2, 0], sizes = [1, 32], strides = [1, 1]} : vector<4x32xf32> to vector<1x32xf32>
    %45 = vector.extract_strided_slice %37 {offsets = [3, 0], sizes = [1, 32], strides = [1, 1]} : vector<4x32xf32> to vector<1x32xf32>
    %c0_25 = arith.constant 0 : index
    %c0_26 = arith.constant 0 : index
    %c0_27 = arith.constant 0 : index
    %46 = vector.load %arg9[%c0_25, %c0_26, %c0_27] : memref<4x32x32xf32, #tpu.memory_space<vmem>>, vector<1x32x32xf32>
    %47 = vector.shape_cast %46 : vector<1x32x32xf32> to vector<32x32xf32>
    %c1 = arith.constant 1 : index
    %c0_28 = arith.constant 0 : index
    %c0_29 = arith.constant 0 : index
    %48 = vector.load %arg9[%c1, %c0_28, %c0_29] : memref<4x32x32xf32, #tpu.memory_space<vmem>>, vector<1x32x32xf32>
    %49 = vector.shape_cast %48 : vector<1x32x32xf32> to vector<32x32xf32>
    %c2 = arith.constant 2 : index
    %c0_30 = arith.constant 0 : index
    %c0_31 = arith.constant 0 : index
    %50 = vector.load %arg9[%c2, %c0_30, %c0_31] : memref<4x32x32xf32, #tpu.memory_space<vmem>>, vector<1x32x32xf32>
    %51 = vector.shape_cast %50 : vector<1x32x32xf32> to vector<32x32xf32>
    %c3 = arith.constant 3 : index
    %c0_32 = arith.constant 0 : index
    %c0_33 = arith.constant 0 : index
    %52 = vector.load %arg9[%c3, %c0_32, %c0_33] : memref<4x32x32xf32, #tpu.memory_space<vmem>>, vector<1x32x32xf32>
    %53 = vector.shape_cast %52 : vector<1x32x32xf32> to vector<32x32xf32>
    %54 = vector.extract_strided_slice %35 {offsets = [0, 0], sizes = [2, 1], strides = [1, 1]} : vector<2x32xf32> to vector<2x1xf32>
    %55 = vector.shape_cast %54 : vector<2x1xf32> to vector<2x1xf32>
    %56 = vector.broadcast %55 : vector<2x1xf32> to vector<2x32xf32>
    %57 = vector.broadcast %38 : vector<1x32xf32> to vector<2x32xf32>
    %58 = arith.mulf %56, %57 : vector<2x32xf32>
    %59 = vector.broadcast %42 : vector<1x32xf32> to vector<2x32xf32>
    %60 = arith.addf %58, %59 : vector<2x32xf32>
    %cst_34 = arith.constant dense<0.000000e+00> : vector<2x32xf32>
    %61 = tpu.matmul %1, %47, %cst_34 {dimension_numbers = #tpu.dot_dimension_numbers<[1], [0], [0], [1], [0, 0, 1, 1], [], []>} : vector<2x32xf32>, vector<32x32xf32>, vector<2x32xf32> -> vector<2x32xf32>
    %62 = arith.addf %60, %61 : vector<2x32xf32>
    %63 = vector.broadcast %39 : vector<1x32xf32> to vector<2x32xf32>
    %64 = arith.mulf %56, %63 : vector<2x32xf32>
    %65 = vector.broadcast %43 : vector<1x32xf32> to vector<2x32xf32>
    %66 = arith.addf %64, %65 : vector<2x32xf32>
    %cst_35 = arith.constant dense<0.000000e+00> : vector<2x32xf32>
    %67 = tpu.matmul %1, %49, %cst_35 {dimension_numbers = #tpu.dot_dimension_numbers<[1], [0], [0], [1], [0, 0, 1, 1], [], []>} : vector<2x32xf32>, vector<32x32xf32>, vector<2x32xf32> -> vector<2x32xf32>
    %68 = arith.addf %66, %67 : vector<2x32xf32>
    %69 = vector.broadcast %40 : vector<1x32xf32> to vector<2x32xf32>
    %70 = arith.mulf %56, %69 : vector<2x32xf32>
    %71 = vector.broadcast %44 : vector<1x32xf32> to vector<2x32xf32>
    %72 = arith.addf %70, %71 : vector<2x32xf32>
    %cst_36 = arith.constant dense<0.000000e+00> : vector<2x32xf32>
    %73 = tpu.matmul %1, %51, %cst_36 {dimension_numbers = #tpu.dot_dimension_numbers<[1], [0], [0], [1], [0, 0, 1, 1], [], []>} : vector<2x32xf32>, vector<32x32xf32>, vector<2x32xf32> -> vector<2x32xf32>
    %74 = arith.addf %72, %73 : vector<2x32xf32>
    %75 = vector.broadcast %41 : vector<1x32xf32> to vector<2x32xf32>
    %76 = arith.mulf %56, %75 : vector<2x32xf32>
    %77 = vector.broadcast %45 : vector<1x32xf32> to vector<2x32xf32>
    %78 = arith.addf %76, %77 : vector<2x32xf32>
    %cst_37 = arith.constant dense<0.000000e+00> : vector<2x32xf32>
    %79 = tpu.matmul %1, %53, %cst_37 {dimension_numbers = #tpu.dot_dimension_numbers<[1], [0], [0], [1], [0, 0, 1, 1], [], []>} : vector<2x32xf32>, vector<32x32xf32>, vector<2x32xf32> -> vector<2x32xf32>
    %80 = arith.addf %78, %79 : vector<2x32xf32>
    %cst_38 = arith.constant 5.000000e-01 : f32
    %81 = vector.broadcast %cst_38 : f32 to vector<2x32xf32>
    %82 = arith.mulf %81, %62 : vector<2x32xf32>
    %83 = math.tanh %82 : vector<2x32xf32>
    %cst_39 = arith.constant 5.000000e-01 : f32
    %84 = vector.broadcast %cst_39 : f32 to vector<2x32xf32>
    %85 = arith.mulf %84, %83 : vector<2x32xf32>
    %cst_40 = arith.constant 5.000000e-01 : f32
    %86 = vector.broadcast %cst_40 : f32 to vector<2x32xf32>
    %87 = arith.addf %85, %86 : vector<2x32xf32>
    %cst_41 = arith.constant 5.000000e-01 : f32
    %88 = vector.broadcast %cst_41 : f32 to vector<2x32xf32>
    %89 = arith.mulf %88, %68 : vector<2x32xf32>
    %90 = math.tanh %89 : vector<2x32xf32>
    %cst_42 = arith.constant 5.000000e-01 : f32
    %91 = vector.broadcast %cst_42 : f32 to vector<2x32xf32>
    %92 = arith.mulf %91, %90 : vector<2x32xf32>
    %cst_43 = arith.constant 5.000000e-01 : f32
    %93 = vector.broadcast %cst_43 : f32 to vector<2x32xf32>
    %94 = arith.addf %92, %93 : vector<2x32xf32>
    %95 = math.tanh %74 : vector<2x32xf32>
    %cst_44 = arith.constant 5.000000e-01 : f32
    %96 = vector.broadcast %cst_44 : f32 to vector<2x32xf32>
    %97 = arith.mulf %96, %80 : vector<2x32xf32>
    %98 = math.tanh %97 : vector<2x32xf32>
    %cst_45 = arith.constant 5.000000e-01 : f32
    %99 = vector.broadcast %cst_45 : f32 to vector<2x32xf32>
    %100 = arith.mulf %99, %98 : vector<2x32xf32>
    %cst_46 = arith.constant 5.000000e-01 : f32
    %101 = vector.broadcast %cst_46 : f32 to vector<2x32xf32>
    %102 = arith.addf %100, %101 : vector<2x32xf32>
    %103 = arith.mulf %94, %2 : vector<2x32xf32>
    %104 = arith.mulf %87, %95 : vector<2x32xf32>
    %105 = arith.addf %103, %104 : vector<2x32xf32>
    %106 = math.tanh %105 : vector<2x32xf32>
    %107 = arith.mulf %102, %106 : vector<2x32xf32>
    %108 = vector.extract_strided_slice %35 {offsets = [0, 1], sizes = [2, 1], strides = [1, 1]} : vector<2x32xf32> to vector<2x1xf32>
    %109 = vector.shape_cast %108 : vector<2x1xf32> to vector<2x1xf32>
    %110 = vector.broadcast %109 : vector<2x1xf32> to vector<2x32xf32>
    %111 = vector.broadcast %38 : vector<1x32xf32> to vector<2x32xf32>
    %112 = arith.mulf %110, %111 : vector<2x32xf32>
    %113 = vector.broadcast %42 : vector<1x32xf32> to vector<2x32xf32>
    %114 = arith.addf %112, %113 : vector<2x32xf32>
    %cst_47 = arith.constant dense<0.000000e+00> : vector<2x32xf32>
    %115 = tpu.matmul %107, %47, %cst_47 {dimension_numbers = #tpu.dot_dimension_numbers<[1], [0], [0], [1], [0, 0, 1, 1], [], []>} : vector<2x32xf32>, vector<32x32xf32>, vector<2x32xf32> -> vector<2x32xf32>
    %116 = arith.addf %114, %115 : vector<2x32xf32>
    %117 = vector.broadcast %39 : vector<1x32xf32> to vector<2x32xf32>
    %118 = arith.mulf %110, %117 : vector<2x32xf32>
    %119 = vector.broadcast %43 : vector<1x32xf32> to vector<2x32xf32>
    %120 = arith.addf %118, %119 : vector<2x32xf32>
    %cst_48 = arith.constant dense<0.000000e+00> : vector<2x32xf32>
    %121 = tpu.matmul %107, %49, %cst_48 {dimension_numbers = #tpu.dot_dimension_numbers<[1], [0], [0], [1], [0, 0, 1, 1], [], []>} : vector<2x32xf32>, vector<32x32xf32>, vector<2x32xf32> -> vector<2x32xf32>
    %122 = arith.addf %120, %121 : vector<2x32xf32>
    %123 = vector.broadcast %40 : vector<1x32xf32> to vector<2x32xf32>
    %124 = arith.mulf %110, %123 : vector<2x32xf32>
    %125 = vector.broadcast %44 : vector<1x32xf32> to vector<2x32xf32>
    %126 = arith.addf %124, %125 : vector<2x32xf32>
    %cst_49 = arith.constant dense<0.000000e+00> : vector<2x32xf32>
    %127 = tpu.matmul %107, %51, %cst_49 {dimension_numbers = #tpu.dot_dimension_numbers<[1], [0], [0], [1], [0, 0, 1, 1], [], []>} : vector<2x32xf32>, vector<32x32xf32>, vector<2x32xf32> -> vector<2x32xf32>
    %128 = arith.addf %126, %127 : vector<2x32xf32>
    %129 = vector.broadcast %41 : vector<1x32xf32> to vector<2x32xf32>
    %130 = arith.mulf %110, %129 : vector<2x32xf32>
    %131 = vector.broadcast %45 : vector<1x32xf32> to vector<2x32xf32>
    %132 = arith.addf %130, %131 : vector<2x32xf32>
    %cst_50 = arith.constant dense<0.000000e+00> : vector<2x32xf32>
    %133 = tpu.matmul %107, %53, %cst_50 {dimension_numbers = #tpu.dot_dimension_numbers<[1], [0], [0], [1], [0, 0, 1, 1], [], []>} : vector<2x32xf32>, vector<32x32xf32>, vector<2x32xf32> -> vector<2x32xf32>
    %134 = arith.addf %132, %133 : vector<2x32xf32>
    %cst_51 = arith.constant 5.000000e-01 : f32
    %135 = vector.broadcast %cst_51 : f32 to vector<2x32xf32>
    %136 = arith.mulf %135, %116 : vector<2x32xf32>
    %137 = math.tanh %136 : vector<2x32xf32>
    %cst_52 = arith.constant 5.000000e-01 : f32
    %138 = vector.broadcast %cst_52 : f32 to vector<2x32xf32>
    %139 = arith.mulf %138, %137 : vector<2x32xf32>
    %cst_53 = arith.constant 5.000000e-01 : f32
    %140 = vector.broadcast %cst_53 : f32 to vector<2x32xf32>
    %141 = arith.addf %139, %140 : vector<2x32xf32>
    %cst_54 = arith.constant 5.000000e-01 : f32
    %142 = vector.broadcast %cst_54 : f32 to vector<2x32xf32>
    %143 = arith.mulf %142, %122 : vector<2x32xf32>
    %144 = math.tanh %143 : vector<2x32xf32>
    %cst_55 = arith.constant 5.000000e-01 : f32
    %145 = vector.broadcast %cst_55 : f32 to vector<2x32xf32>
    %146 = arith.mulf %145, %144 : vector<2x32xf32>
    %cst_56 = arith.constant 5.000000e-01 : f32
    %147 = vector.broadcast %cst_56 : f32 to vector<2x32xf32>
    %148 = arith.addf %146, %147 : vector<2x32xf32>
    %149 = math.tanh %128 : vector<2x32xf32>
    %cst_57 = arith.constant 5.000000e-01 : f32
    %150 = vector.broadcast %cst_57 : f32 to vector<2x32xf32>
    %151 = arith.mulf %150, %134 : vector<2x32xf32>
    %152 = math.tanh %151 : vector<2x32xf32>
    %cst_58 = arith.constant 5.000000e-01 : f32
    %153 = vector.broadcast %cst_58 : f32 to vector<2x32xf32>
    %154 = arith.mulf %153, %152 : vector<2x32xf32>
    %cst_59 = arith.constant 5.000000e-01 : f32
    %155 = vector.broadcast %cst_59 : f32 to vector<2x32xf32>
    %156 = arith.addf %154, %155 : vector<2x32xf32>
    %157 = arith.mulf %148, %105 : vector<2x32xf32>
    %158 = arith.mulf %141, %149 : vector<2x32xf32>
    %159 = arith.addf %157, %158 : vector<2x32xf32>
    %160 = math.tanh %159 : vector<2x32xf32>
    %161 = arith.mulf %156, %160 : vector<2x32xf32>
    %162 = vector.extract_strided_slice %35 {offsets = [0, 2], sizes = [2, 1], strides = [1, 1]} : vector<2x32xf32> to vector<2x1xf32>
    %163 = vector.shape_cast %162 : vector<2x1xf32> to vector<2x1xf32>
    %164 = vector.broadcast %163 : vector<2x1xf32> to vector<2x32xf32>
    %165 = vector.broadcast %38 : vector<1x32xf32> to vector<2x32xf32>
    %166 = arith.mulf %164, %165 : vector<2x32xf32>
    %167 = vector.broadcast %42 : vector<1x32xf32> to vector<2x32xf32>
    %168 = arith.addf %166, %167 : vector<2x32xf32>
    %cst_60 = arith.constant dense<0.000000e+00> : vector<2x32xf32>
    %169 = tpu.matmul %161, %47, %cst_60 {dimension_numbers = #tpu.dot_dimension_numbers<[1], [0], [0], [1], [0, 0, 1, 1], [], []>} : vector<2x32xf32>, vector<32x32xf32>, vector<2x32xf32> -> vector<2x32xf32>
    %170 = arith.addf %168, %169 : vector<2x32xf32>
    %171 = vector.broadcast %39 : vector<1x32xf32> to vector<2x32xf32>
    %172 = arith.mulf %164, %171 : vector<2x32xf32>
    %173 = vector.broadcast %43 : vector<1x32xf32> to vector<2x32xf32>
    %174 = arith.addf %172, %173 : vector<2x32xf32>
    %cst_61 = arith.constant dense<0.000000e+00> : vector<2x32xf32>
    %175 = tpu.matmul %161, %49, %cst_61 {dimension_numbers = #tpu.dot_dimension_numbers<[1], [0], [0], [1], [0, 0, 1, 1], [], []>} : vector<2x32xf32>, vector<32x32xf32>, vector<2x32xf32> -> vector<2x32xf32>
    %176 = arith.addf %174, %175 : vector<2x32xf32>
    %177 = vector.broadcast %40 : vector<1x32xf32> to vector<2x32xf32>
    %178 = arith.mulf %164, %177 : vector<2x32xf32>
    %179 = vector.broadcast %44 : vector<1x32xf32> to vector<2x32xf32>
    %180 = arith.addf %178, %179 : vector<2x32xf32>
    %cst_62 = arith.constant dense<0.000000e+00> : vector<2x32xf32>
    %181 = tpu.matmul %161, %51, %cst_62 {dimension_numbers = #tpu.dot_dimension_numbers<[1], [0], [0], [1], [0, 0, 1, 1], [], []>} : vector<2x32xf32>, vector<32x32xf32>, vector<2x32xf32> -> vector<2x32xf32>
    %182 = arith.addf %180, %181 : vector<2x32xf32>
    %183 = vector.broadcast %41 : vector<1x32xf32> to vector<2x32xf32>
    %184 = arith.mulf %164, %183 : vector<2x32xf32>
    %185 = vector.broadcast %45 : vector<1x32xf32> to vector<2x32xf32>
    %186 = arith.addf %184, %185 : vector<2x32xf32>
    %cst_63 = arith.constant dense<0.000000e+00> : vector<2x32xf32>
    %187 = tpu.matmul %161, %53, %cst_63 {dimension_numbers = #tpu.dot_dimension_numbers<[1], [0], [0], [1], [0, 0, 1, 1], [], []>} : vector<2x32xf32>, vector<32x32xf32>, vector<2x32xf32> -> vector<2x32xf32>
    %188 = arith.addf %186, %187 : vector<2x32xf32>
    %cst_64 = arith.constant 5.000000e-01 : f32
    %189 = vector.broadcast %cst_64 : f32 to vector<2x32xf32>
    %190 = arith.mulf %189, %170 : vector<2x32xf32>
    %191 = math.tanh %190 : vector<2x32xf32>
    %cst_65 = arith.constant 5.000000e-01 : f32
    %192 = vector.broadcast %cst_65 : f32 to vector<2x32xf32>
    %193 = arith.mulf %192, %191 : vector<2x32xf32>
    %cst_66 = arith.constant 5.000000e-01 : f32
    %194 = vector.broadcast %cst_66 : f32 to vector<2x32xf32>
    %195 = arith.addf %193, %194 : vector<2x32xf32>
    %cst_67 = arith.constant 5.000000e-01 : f32
    %196 = vector.broadcast %cst_67 : f32 to vector<2x32xf32>
    %197 = arith.mulf %196, %176 : vector<2x32xf32>
    %198 = math.tanh %197 : vector<2x32xf32>
    %cst_68 = arith.constant 5.000000e-01 : f32
    %199 = vector.broadcast %cst_68 : f32 to vector<2x32xf32>
    %200 = arith.mulf %199, %198 : vector<2x32xf32>
    %cst_69 = arith.constant 5.000000e-01 : f32
    %201 = vector.broadcast %cst_69 : f32 to vector<2x32xf32>
    %202 = arith.addf %200, %201 : vector<2x32xf32>
    %203 = math.tanh %182 : vector<2x32xf32>
    %cst_70 = arith.constant 5.000000e-01 : f32
    %204 = vector.broadcast %cst_70 : f32 to vector<2x32xf32>
    %205 = arith.mulf %204, %188 : vector<2x32xf32>
    %206 = math.tanh %205 : vector<2x32xf32>
    %cst_71 = arith.constant 5.000000e-01 : f32
    %207 = vector.broadcast %cst_71 : f32 to vector<2x32xf32>
    %208 = arith.mulf %207, %206 : vector<2x32xf32>
    %cst_72 = arith.constant 5.000000e-01 : f32
    %209 = vector.broadcast %cst_72 : f32 to vector<2x32xf32>
    %210 = arith.addf %208, %209 : vector<2x32xf32>
    %211 = arith.mulf %202, %159 : vector<2x32xf32>
    %212 = arith.mulf %195, %203 : vector<2x32xf32>
    %213 = arith.addf %211, %212 : vector<2x32xf32>
    %214 = math.tanh %213 : vector<2x32xf32>
    %215 = arith.mulf %210, %214 : vector<2x32xf32>
    %216 = vector.extract_strided_slice %35 {offsets = [0, 3], sizes = [2, 1], strides = [1, 1]} : vector<2x32xf32> to vector<2x1xf32>
    %217 = vector.shape_cast %216 : vector<2x1xf32> to vector<2x1xf32>
    %218 = vector.broadcast %217 : vector<2x1xf32> to vector<2x32xf32>
    %219 = vector.broadcast %38 : vector<1x32xf32> to vector<2x32xf32>
    %220 = arith.mulf %218, %219 : vector<2x32xf32>
    %221 = vector.broadcast %42 : vector<1x32xf32> to vector<2x32xf32>
    %222 = arith.addf %220, %221 : vector<2x32xf32>
    %cst_73 = arith.constant dense<0.000000e+00> : vector<2x32xf32>
    %223 = tpu.matmul %215, %47, %cst_73 {dimension_numbers = #tpu.dot_dimension_numbers<[1], [0], [0], [1], [0, 0, 1, 1], [], []>} : vector<2x32xf32>, vector<32x32xf32>, vector<2x32xf32> -> vector<2x32xf32>
    %224 = arith.addf %222, %223 : vector<2x32xf32>
    %225 = vector.broadcast %39 : vector<1x32xf32> to vector<2x32xf32>
    %226 = arith.mulf %218, %225 : vector<2x32xf32>
    %227 = vector.broadcast %43 : vector<1x32xf32> to vector<2x32xf32>
    %228 = arith.addf %226, %227 : vector<2x32xf32>
    %cst_74 = arith.constant dense<0.000000e+00> : vector<2x32xf32>
    %229 = tpu.matmul %215, %49, %cst_74 {dimension_numbers = #tpu.dot_dimension_numbers<[1], [0], [0], [1], [0, 0, 1, 1], [], []>} : vector<2x32xf32>, vector<32x32xf32>, vector<2x32xf32> -> vector<2x32xf32>
    %230 = arith.addf %228, %229 : vector<2x32xf32>
    %231 = vector.broadcast %40 : vector<1x32xf32> to vector<2x32xf32>
    %232 = arith.mulf %218, %231 : vector<2x32xf32>
    %233 = vector.broadcast %44 : vector<1x32xf32> to vector<2x32xf32>
    %234 = arith.addf %232, %233 : vector<2x32xf32>
    %cst_75 = arith.constant dense<0.000000e+00> : vector<2x32xf32>
    %235 = tpu.matmul %215, %51, %cst_75 {dimension_numbers = #tpu.dot_dimension_numbers<[1], [0], [0], [1], [0, 0, 1, 1], [], []>} : vector<2x32xf32>, vector<32x32xf32>, vector<2x32xf32> -> vector<2x32xf32>
    %236 = arith.addf %234, %235 : vector<2x32xf32>
    %237 = vector.broadcast %41 : vector<1x32xf32> to vector<2x32xf32>
    %238 = arith.mulf %218, %237 : vector<2x32xf32>
    %239 = vector.broadcast %45 : vector<1x32xf32> to vector<2x32xf32>
    %240 = arith.addf %238, %239 : vector<2x32xf32>
    %cst_76 = arith.constant dense<0.000000e+00> : vector<2x32xf32>
    %241 = tpu.matmul %215, %53, %cst_76 {dimension_numbers = #tpu.dot_dimension_numbers<[1], [0], [0], [1], [0, 0, 1, 1], [], []>} : vector<2x32xf32>, vector<32x32xf32>, vector<2x32xf32> -> vector<2x32xf32>
    %242 = arith.addf %240, %241 : vector<2x32xf32>
    %cst_77 = arith.constant 5.000000e-01 : f32
    %243 = vector.broadcast %cst_77 : f32 to vector<2x32xf32>
    %244 = arith.mulf %243, %224 : vector<2x32xf32>
    %245 = math.tanh %244 : vector<2x32xf32>
    %cst_78 = arith.constant 5.000000e-01 : f32
    %246 = vector.broadcast %cst_78 : f32 to vector<2x32xf32>
    %247 = arith.mulf %246, %245 : vector<2x32xf32>
    %cst_79 = arith.constant 5.000000e-01 : f32
    %248 = vector.broadcast %cst_79 : f32 to vector<2x32xf32>
    %249 = arith.addf %247, %248 : vector<2x32xf32>
    %cst_80 = arith.constant 5.000000e-01 : f32
    %250 = vector.broadcast %cst_80 : f32 to vector<2x32xf32>
    %251 = arith.mulf %250, %230 : vector<2x32xf32>
    %252 = math.tanh %251 : vector<2x32xf32>
    %cst_81 = arith.constant 5.000000e-01 : f32
    %253 = vector.broadcast %cst_81 : f32 to vector<2x32xf32>
    %254 = arith.mulf %253, %252 : vector<2x32xf32>
    %cst_82 = arith.constant 5.000000e-01 : f32
    %255 = vector.broadcast %cst_82 : f32 to vector<2x32xf32>
    %256 = arith.addf %254, %255 : vector<2x32xf32>
    %257 = math.tanh %236 : vector<2x32xf32>
    %cst_83 = arith.constant 5.000000e-01 : f32
    %258 = vector.broadcast %cst_83 : f32 to vector<2x32xf32>
    %259 = arith.mulf %258, %242 : vector<2x32xf32>
    %260 = math.tanh %259 : vector<2x32xf32>
    %cst_84 = arith.constant 5.000000e-01 : f32
    %261 = vector.broadcast %cst_84 : f32 to vector<2x32xf32>
    %262 = arith.mulf %261, %260 : vector<2x32xf32>
    %cst_85 = arith.constant 5.000000e-01 : f32
    %263 = vector.broadcast %cst_85 : f32 to vector<2x32xf32>
    %264 = arith.addf %262, %263 : vector<2x32xf32>
    %265 = arith.mulf %256, %213 : vector<2x32xf32>
    %266 = arith.mulf %249, %257 : vector<2x32xf32>
    %267 = arith.addf %265, %266 : vector<2x32xf32>
    %268 = math.tanh %267 : vector<2x32xf32>
    %269 = arith.mulf %264, %268 : vector<2x32xf32>
    %270 = vector.extract_strided_slice %35 {offsets = [0, 4], sizes = [2, 1], strides = [1, 1]} : vector<2x32xf32> to vector<2x1xf32>
    %271 = vector.shape_cast %270 : vector<2x1xf32> to vector<2x1xf32>
    %272 = vector.broadcast %271 : vector<2x1xf32> to vector<2x32xf32>
    %273 = vector.broadcast %38 : vector<1x32xf32> to vector<2x32xf32>
    %274 = arith.mulf %272, %273 : vector<2x32xf32>
    %275 = vector.broadcast %42 : vector<1x32xf32> to vector<2x32xf32>
    %276 = arith.addf %274, %275 : vector<2x32xf32>
    %cst_86 = arith.constant dense<0.000000e+00> : vector<2x32xf32>
    %277 = tpu.matmul %269, %47, %cst_86 {dimension_numbers = #tpu.dot_dimension_numbers<[1], [0], [0], [1], [0, 0, 1, 1], [], []>} : vector<2x32xf32>, vector<32x32xf32>, vector<2x32xf32> -> vector<2x32xf32>
    %278 = arith.addf %276, %277 : vector<2x32xf32>
    %279 = vector.broadcast %39 : vector<1x32xf32> to vector<2x32xf32>
    %280 = arith.mulf %272, %279 : vector<2x32xf32>
    %281 = vector.broadcast %43 : vector<1x32xf32> to vector<2x32xf32>
    %282 = arith.addf %280, %281 : vector<2x32xf32>
    %cst_87 = arith.constant dense<0.000000e+00> : vector<2x32xf32>
    %283 = tpu.matmul %269, %49, %cst_87 {dimension_numbers = #tpu.dot_dimension_numbers<[1], [0], [0], [1], [0, 0, 1, 1], [], []>} : vector<2x32xf32>, vector<32x32xf32>, vector<2x32xf32> -> vector<2x32xf32>
    %284 = arith.addf %282, %283 : vector<2x32xf32>
    %285 = vector.broadcast %40 : vector<1x32xf32> to vector<2x32xf32>
    %286 = arith.mulf %272, %285 : vector<2x32xf32>
    %287 = vector.broadcast %44 : vector<1x32xf32> to vector<2x32xf32>
    %288 = arith.addf %286, %287 : vector<2x32xf32>
    %cst_88 = arith.constant dense<0.000000e+00> : vector<2x32xf32>
    %289 = tpu.matmul %269, %51, %cst_88 {dimension_numbers = #tpu.dot_dimension_numbers<[1], [0], [0], [1], [0, 0, 1, 1], [], []>} : vector<2x32xf32>, vector<32x32xf32>, vector<2x32xf32> -> vector<2x32xf32>
    %290 = arith.addf %288, %289 : vector<2x32xf32>
    %291 = vector.broadcast %41 : vector<1x32xf32> to vector<2x32xf32>
    %292 = arith.mulf %272, %291 : vector<2x32xf32>
    %293 = vector.broadcast %45 : vector<1x32xf32> to vector<2x32xf32>
    %294 = arith.addf %292, %293 : vector<2x32xf32>
    %cst_89 = arith.constant dense<0.000000e+00> : vector<2x32xf32>
    %295 = tpu.matmul %269, %53, %cst_89 {dimension_numbers = #tpu.dot_dimension_numbers<[1], [0], [0], [1], [0, 0, 1, 1], [], []>} : vector<2x32xf32>, vector<32x32xf32>, vector<2x32xf32> -> vector<2x32xf32>
    %296 = arith.addf %294, %295 : vector<2x32xf32>
    %cst_90 = arith.constant 5.000000e-01 : f32
    %297 = vector.broadcast %cst_90 : f32 to vector<2x32xf32>
    %298 = arith.mulf %297, %278 : vector<2x32xf32>
    %299 = math.tanh %298 : vector<2x32xf32>
    %cst_91 = arith.constant 5.000000e-01 : f32
    %300 = vector.broadcast %cst_91 : f32 to vector<2x32xf32>
    %301 = arith.mulf %300, %299 : vector<2x32xf32>
    %cst_92 = arith.constant 5.000000e-01 : f32
    %302 = vector.broadcast %cst_92 : f32 to vector<2x32xf32>
    %303 = arith.addf %301, %302 : vector<2x32xf32>
    %cst_93 = arith.constant 5.000000e-01 : f32
    %304 = vector.broadcast %cst_93 : f32 to vector<2x32xf32>
    %305 = arith.mulf %304, %284 : vector<2x32xf32>
    %306 = math.tanh %305 : vector<2x32xf32>
    %cst_94 = arith.constant 5.000000e-01 : f32
    %307 = vector.broadcast %cst_94 : f32 to vector<2x32xf32>
    %308 = arith.mulf %307, %306 : vector<2x32xf32>
    %cst_95 = arith.constant 5.000000e-01 : f32
    %309 = vector.broadcast %cst_95 : f32 to vector<2x32xf32>
    %310 = arith.addf %308, %309 : vector<2x32xf32>
    %311 = math.tanh %290 : vector<2x32xf32>
    %cst_96 = arith.constant 5.000000e-01 : f32
    %312 = vector.broadcast %cst_96 : f32 to vector<2x32xf32>
    %313 = arith.mulf %312, %296 : vector<2x32xf32>
    %314 = math.tanh %313 : vector<2x32xf32>
    %cst_97 = arith.constant 5.000000e-01 : f32
    %315 = vector.broadcast %cst_97 : f32 to vector<2x32xf32>
    %316 = arith.mulf %315, %314 : vector<2x32xf32>
    %cst_98 = arith.constant 5.000000e-01 : f32
    %317 = vector.broadcast %cst_98 : f32 to vector<2x32xf32>
    %318 = arith.addf %316, %317 : vector<2x32xf32>
    %319 = arith.mulf %310, %267 : vector<2x32xf32>
    %320 = arith.mulf %303, %311 : vector<2x32xf32>
    %321 = arith.addf %319, %320 : vector<2x32xf32>
    %322 = math.tanh %321 : vector<2x32xf32>
    %323 = arith.mulf %318, %322 : vector<2x32xf32>
    %324 = vector.extract_strided_slice %35 {offsets = [0, 5], sizes = [2, 1], strides = [1, 1]} : vector<2x32xf32> to vector<2x1xf32>
    %325 = vector.shape_cast %324 : vector<2x1xf32> to vector<2x1xf32>
    %326 = vector.broadcast %325 : vector<2x1xf32> to vector<2x32xf32>
    %327 = vector.broadcast %38 : vector<1x32xf32> to vector<2x32xf32>
    %328 = arith.mulf %326, %327 : vector<2x32xf32>
    %329 = vector.broadcast %42 : vector<1x32xf32> to vector<2x32xf32>
    %330 = arith.addf %328, %329 : vector<2x32xf32>
    %cst_99 = arith.constant dense<0.000000e+00> : vector<2x32xf32>
    %331 = tpu.matmul %323, %47, %cst_99 {dimension_numbers = #tpu.dot_dimension_numbers<[1], [0], [0], [1], [0, 0, 1, 1], [], []>} : vector<2x32xf32>, vector<32x32xf32>, vector<2x32xf32> -> vector<2x32xf32>
    %332 = arith.addf %330, %331 : vector<2x32xf32>
    %333 = vector.broadcast %39 : vector<1x32xf32> to vector<2x32xf32>
    %334 = arith.mulf %326, %333 : vector<2x32xf32>
    %335 = vector.broadcast %43 : vector<1x32xf32> to vector<2x32xf32>
    %336 = arith.addf %334, %335 : vector<2x32xf32>
    %cst_100 = arith.constant dense<0.000000e+00> : vector<2x32xf32>
    %337 = tpu.matmul %323, %49, %cst_100 {dimension_numbers = #tpu.dot_dimension_numbers<[1], [0], [0], [1], [0, 0, 1, 1], [], []>} : vector<2x32xf32>, vector<32x32xf32>, vector<2x32xf32> -> vector<2x32xf32>
    %338 = arith.addf %336, %337 : vector<2x32xf32>
    %339 = vector.broadcast %40 : vector<1x32xf32> to vector<2x32xf32>
    %340 = arith.mulf %326, %339 : vector<2x32xf32>
    %341 = vector.broadcast %44 : vector<1x32xf32> to vector<2x32xf32>
    %342 = arith.addf %340, %341 : vector<2x32xf32>
    %cst_101 = arith.constant dense<0.000000e+00> : vector<2x32xf32>
    %343 = tpu.matmul %323, %51, %cst_101 {dimension_numbers = #tpu.dot_dimension_numbers<[1], [0], [0], [1], [0, 0, 1, 1], [], []>} : vector<2x32xf32>, vector<32x32xf32>, vector<2x32xf32> -> vector<2x32xf32>
    %344 = arith.addf %342, %343 : vector<2x32xf32>
    %345 = vector.broadcast %41 : vector<1x32xf32> to vector<2x32xf32>
    %346 = arith.mulf %326, %345 : vector<2x32xf32>
    %347 = vector.broadcast %45 : vector<1x32xf32> to vector<2x32xf32>
    %348 = arith.addf %346, %347 : vector<2x32xf32>
    %cst_102 = arith.constant dense<0.000000e+00> : vector<2x32xf32>
    %349 = tpu.matmul %323, %53, %cst_102 {dimension_numbers = #tpu.dot_dimension_numbers<[1], [0], [0], [1], [0, 0, 1, 1], [], []>} : vector<2x32xf32>, vector<32x32xf32>, vector<2x32xf32> -> vector<2x32xf32>
    %350 = arith.addf %348, %349 : vector<2x32xf32>
    %cst_103 = arith.constant 5.000000e-01 : f32
    %351 = vector.broadcast %cst_103 : f32 to vector<2x32xf32>
    %352 = arith.mulf %351, %332 : vector<2x32xf32>
    %353 = math.tanh %352 : vector<2x32xf32>
    %cst_104 = arith.constant 5.000000e-01 : f32
    %354 = vector.broadcast %cst_104 : f32 to vector<2x32xf32>
    %355 = arith.mulf %354, %353 : vector<2x32xf32>
    %cst_105 = arith.constant 5.000000e-01 : f32
    %356 = vector.broadcast %cst_105 : f32 to vector<2x32xf32>
    %357 = arith.addf %355, %356 : vector<2x32xf32>
    %cst_106 = arith.constant 5.000000e-01 : f32
    %358 = vector.broadcast %cst_106 : f32 to vector<2x32xf32>
    %359 = arith.mulf %358, %338 : vector<2x32xf32>
    %360 = math.tanh %359 : vector<2x32xf32>
    %cst_107 = arith.constant 5.000000e-01 : f32
    %361 = vector.broadcast %cst_107 : f32 to vector<2x32xf32>
    %362 = arith.mulf %361, %360 : vector<2x32xf32>
    %cst_108 = arith.constant 5.000000e-01 : f32
    %363 = vector.broadcast %cst_108 : f32 to vector<2x32xf32>
    %364 = arith.addf %362, %363 : vector<2x32xf32>
    %365 = math.tanh %344 : vector<2x32xf32>
    %cst_109 = arith.constant 5.000000e-01 : f32
    %366 = vector.broadcast %cst_109 : f32 to vector<2x32xf32>
    %367 = arith.mulf %366, %350 : vector<2x32xf32>
    %368 = math.tanh %367 : vector<2x32xf32>
    %cst_110 = arith.constant 5.000000e-01 : f32
    %369 = vector.broadcast %cst_110 : f32 to vector<2x32xf32>
    %370 = arith.mulf %369, %368 : vector<2x32xf32>
    %cst_111 = arith.constant 5.000000e-01 : f32
    %371 = vector.broadcast %cst_111 : f32 to vector<2x32xf32>
    %372 = arith.addf %370, %371 : vector<2x32xf32>
    %373 = arith.mulf %364, %321 : vector<2x32xf32>
    %374 = arith.mulf %357, %365 : vector<2x32xf32>
    %375 = arith.addf %373, %374 : vector<2x32xf32>
    %376 = math.tanh %375 : vector<2x32xf32>
    %377 = arith.mulf %372, %376 : vector<2x32xf32>
    %378 = vector.extract_strided_slice %35 {offsets = [0, 6], sizes = [2, 1], strides = [1, 1]} : vector<2x32xf32> to vector<2x1xf32>
    %379 = vector.shape_cast %378 : vector<2x1xf32> to vector<2x1xf32>
    %380 = vector.broadcast %379 : vector<2x1xf32> to vector<2x32xf32>
    %381 = vector.broadcast %38 : vector<1x32xf32> to vector<2x32xf32>
    %382 = arith.mulf %380, %381 : vector<2x32xf32>
    %383 = vector.broadcast %42 : vector<1x32xf32> to vector<2x32xf32>
    %384 = arith.addf %382, %383 : vector<2x32xf32>
    %cst_112 = arith.constant dense<0.000000e+00> : vector<2x32xf32>
    %385 = tpu.matmul %377, %47, %cst_112 {dimension_numbers = #tpu.dot_dimension_numbers<[1], [0], [0], [1], [0, 0, 1, 1], [], []>} : vector<2x32xf32>, vector<32x32xf32>, vector<2x32xf32> -> vector<2x32xf32>
    %386 = arith.addf %384, %385 : vector<2x32xf32>
    %387 = vector.broadcast %39 : vector<1x32xf32> to vector<2x32xf32>
    %388 = arith.mulf %380, %387 : vector<2x32xf32>
    %389 = vector.broadcast %43 : vector<1x32xf32> to vector<2x32xf32>
    %390 = arith.addf %388, %389 : vector<2x32xf32>
    %cst_113 = arith.constant dense<0.000000e+00> : vector<2x32xf32>
    %391 = tpu.matmul %377, %49, %cst_113 {dimension_numbers = #tpu.dot_dimension_numbers<[1], [0], [0], [1], [0, 0, 1, 1], [], []>} : vector<2x32xf32>, vector<32x32xf32>, vector<2x32xf32> -> vector<2x32xf32>
    %392 = arith.addf %390, %391 : vector<2x32xf32>
    %393 = vector.broadcast %40 : vector<1x32xf32> to vector<2x32xf32>
    %394 = arith.mulf %380, %393 : vector<2x32xf32>
    %395 = vector.broadcast %44 : vector<1x32xf32> to vector<2x32xf32>
    %396 = arith.addf %394, %395 : vector<2x32xf32>
    %cst_114 = arith.constant dense<0.000000e+00> : vector<2x32xf32>
    %397 = tpu.matmul %377, %51, %cst_114 {dimension_numbers = #tpu.dot_dimension_numbers<[1], [0], [0], [1], [0, 0, 1, 1], [], []>} : vector<2x32xf32>, vector<32x32xf32>, vector<2x32xf32> -> vector<2x32xf32>
    %398 = arith.addf %396, %397 : vector<2x32xf32>
    %399 = vector.broadcast %41 : vector<1x32xf32> to vector<2x32xf32>
    %400 = arith.mulf %380, %399 : vector<2x32xf32>
    %401 = vector.broadcast %45 : vector<1x32xf32> to vector<2x32xf32>
    %402 = arith.addf %400, %401 : vector<2x32xf32>
    %cst_115 = arith.constant dense<0.000000e+00> : vector<2x32xf32>
    %403 = tpu.matmul %377, %53, %cst_115 {dimension_numbers = #tpu.dot_dimension_numbers<[1], [0], [0], [1], [0, 0, 1, 1], [], []>} : vector<2x32xf32>, vector<32x32xf32>, vector<2x32xf32> -> vector<2x32xf32>
    %404 = arith.addf %402, %403 : vector<2x32xf32>
    %cst_116 = arith.constant 5.000000e-01 : f32
    %405 = vector.broadcast %cst_116 : f32 to vector<2x32xf32>
    %406 = arith.mulf %405, %386 : vector<2x32xf32>
    %407 = math.tanh %406 : vector<2x32xf32>
    %cst_117 = arith.constant 5.000000e-01 : f32
    %408 = vector.broadcast %cst_117 : f32 to vector<2x32xf32>
    %409 = arith.mulf %408, %407 : vector<2x32xf32>
    %cst_118 = arith.constant 5.000000e-01 : f32
    %410 = vector.broadcast %cst_118 : f32 to vector<2x32xf32>
    %411 = arith.addf %409, %410 : vector<2x32xf32>
    %cst_119 = arith.constant 5.000000e-01 : f32
    %412 = vector.broadcast %cst_119 : f32 to vector<2x32xf32>
    %413 = arith.mulf %412, %392 : vector<2x32xf32>
    %414 = math.tanh %413 : vector<2x32xf32>
    %cst_120 = arith.constant 5.000000e-01 : f32
    %415 = vector.broadcast %cst_120 : f32 to vector<2x32xf32>
    %416 = arith.mulf %415, %414 : vector<2x32xf32>
    %cst_121 = arith.constant 5.000000e-01 : f32
    %417 = vector.broadcast %cst_121 : f32 to vector<2x32xf32>
    %418 = arith.addf %416, %417 : vector<2x32xf32>
    %419 = math.tanh %398 : vector<2x32xf32>
    %cst_122 = arith.constant 5.000000e-01 : f32
    %420 = vector.broadcast %cst_122 : f32 to vector<2x32xf32>
    %421 = arith.mulf %420, %404 : vector<2x32xf32>
    %422 = math.tanh %421 : vector<2x32xf32>
    %cst_123 = arith.constant 5.000000e-01 : f32
    %423 = vector.broadcast %cst_123 : f32 to vector<2x32xf32>
    %424 = arith.mulf %423, %422 : vector<2x32xf32>
    %cst_124 = arith.constant 5.000000e-01 : f32
    %425 = vector.broadcast %cst_124 : f32 to vector<2x32xf32>
    %426 = arith.addf %424, %425 : vector<2x32xf32>
    %427 = arith.mulf %418, %375 : vector<2x32xf32>
    %428 = arith.mulf %411, %419 : vector<2x32xf32>
    %429 = arith.addf %427, %428 : vector<2x32xf32>
    %430 = math.tanh %429 : vector<2x32xf32>
    %431 = arith.mulf %426, %430 : vector<2x32xf32>
    %432 = vector.extract_strided_slice %35 {offsets = [0, 7], sizes = [2, 1], strides = [1, 1]} : vector<2x32xf32> to vector<2x1xf32>
    %433 = vector.shape_cast %432 : vector<2x1xf32> to vector<2x1xf32>
    %434 = vector.broadcast %433 : vector<2x1xf32> to vector<2x32xf32>
    %435 = vector.broadcast %38 : vector<1x32xf32> to vector<2x32xf32>
    %436 = arith.mulf %434, %435 : vector<2x32xf32>
    %437 = vector.broadcast %42 : vector<1x32xf32> to vector<2x32xf32>
    %438 = arith.addf %436, %437 : vector<2x32xf32>
    %cst_125 = arith.constant dense<0.000000e+00> : vector<2x32xf32>
    %439 = tpu.matmul %431, %47, %cst_125 {dimension_numbers = #tpu.dot_dimension_numbers<[1], [0], [0], [1], [0, 0, 1, 1], [], []>} : vector<2x32xf32>, vector<32x32xf32>, vector<2x32xf32> -> vector<2x32xf32>
    %440 = arith.addf %438, %439 : vector<2x32xf32>
    %441 = vector.broadcast %39 : vector<1x32xf32> to vector<2x32xf32>
    %442 = arith.mulf %434, %441 : vector<2x32xf32>
    %443 = vector.broadcast %43 : vector<1x32xf32> to vector<2x32xf32>
    %444 = arith.addf %442, %443 : vector<2x32xf32>
    %cst_126 = arith.constant dense<0.000000e+00> : vector<2x32xf32>
    %445 = tpu.matmul %431, %49, %cst_126 {dimension_numbers = #tpu.dot_dimension_numbers<[1], [0], [0], [1], [0, 0, 1, 1], [], []>} : vector<2x32xf32>, vector<32x32xf32>, vector<2x32xf32> -> vector<2x32xf32>
    %446 = arith.addf %444, %445 : vector<2x32xf32>
    %447 = vector.broadcast %40 : vector<1x32xf32> to vector<2x32xf32>
    %448 = arith.mulf %434, %447 : vector<2x32xf32>
    %449 = vector.broadcast %44 : vector<1x32xf32> to vector<2x32xf32>
    %450 = arith.addf %448, %449 : vector<2x32xf32>
    %cst_127 = arith.constant dense<0.000000e+00> : vector<2x32xf32>
    %451 = tpu.matmul %431, %51, %cst_127 {dimension_numbers = #tpu.dot_dimension_numbers<[1], [0], [0], [1], [0, 0, 1, 1], [], []>} : vector<2x32xf32>, vector<32x32xf32>, vector<2x32xf32> -> vector<2x32xf32>
    %452 = arith.addf %450, %451 : vector<2x32xf32>
    %453 = vector.broadcast %41 : vector<1x32xf32> to vector<2x32xf32>
    %454 = arith.mulf %434, %453 : vector<2x32xf32>
    %455 = vector.broadcast %45 : vector<1x32xf32> to vector<2x32xf32>
    %456 = arith.addf %454, %455 : vector<2x32xf32>
    %cst_128 = arith.constant dense<0.000000e+00> : vector<2x32xf32>
    %457 = tpu.matmul %431, %53, %cst_128 {dimension_numbers = #tpu.dot_dimension_numbers<[1], [0], [0], [1], [0, 0, 1, 1], [], []>} : vector<2x32xf32>, vector<32x32xf32>, vector<2x32xf32> -> vector<2x32xf32>
    %458 = arith.addf %456, %457 : vector<2x32xf32>
    %cst_129 = arith.constant 5.000000e-01 : f32
    %459 = vector.broadcast %cst_129 : f32 to vector<2x32xf32>
    %460 = arith.mulf %459, %440 : vector<2x32xf32>
    %461 = math.tanh %460 : vector<2x32xf32>
    %cst_130 = arith.constant 5.000000e-01 : f32
    %462 = vector.broadcast %cst_130 : f32 to vector<2x32xf32>
    %463 = arith.mulf %462, %461 : vector<2x32xf32>
    %cst_131 = arith.constant 5.000000e-01 : f32
    %464 = vector.broadcast %cst_131 : f32 to vector<2x32xf32>
    %465 = arith.addf %463, %464 : vector<2x32xf32>
    %cst_132 = arith.constant 5.000000e-01 : f32
    %466 = vector.broadcast %cst_132 : f32 to vector<2x32xf32>
    %467 = arith.mulf %466, %446 : vector<2x32xf32>
    %468 = math.tanh %467 : vector<2x32xf32>
    %cst_133 = arith.constant 5.000000e-01 : f32
    %469 = vector.broadcast %cst_133 : f32 to vector<2x32xf32>
    %470 = arith.mulf %469, %468 : vector<2x32xf32>
    %cst_134 = arith.constant 5.000000e-01 : f32
    %471 = vector.broadcast %cst_134 : f32 to vector<2x32xf32>
    %472 = arith.addf %470, %471 : vector<2x32xf32>
    %473 = math.tanh %452 : vector<2x32xf32>
    %cst_135 = arith.constant 5.000000e-01 : f32
    %474 = vector.broadcast %cst_135 : f32 to vector<2x32xf32>
    %475 = arith.mulf %474, %458 : vector<2x32xf32>
    %476 = math.tanh %475 : vector<2x32xf32>
    %cst_136 = arith.constant 5.000000e-01 : f32
    %477 = vector.broadcast %cst_136 : f32 to vector<2x32xf32>
    %478 = arith.mulf %477, %476 : vector<2x32xf32>
    %cst_137 = arith.constant 5.000000e-01 : f32
    %479 = vector.broadcast %cst_137 : f32 to vector<2x32xf32>
    %480 = arith.addf %478, %479 : vector<2x32xf32>
    %481 = arith.mulf %472, %429 : vector<2x32xf32>
    %482 = arith.mulf %465, %473 : vector<2x32xf32>
    %483 = arith.addf %481, %482 : vector<2x32xf32>
    %484 = math.tanh %483 : vector<2x32xf32>
    %485 = arith.mulf %480, %484 : vector<2x32xf32>
    %486 = vector.extract_strided_slice %35 {offsets = [0, 8], sizes = [2, 1], strides = [1, 1]} : vector<2x32xf32> to vector<2x1xf32>
    %487 = vector.shape_cast %486 : vector<2x1xf32> to vector<2x1xf32>
    %488 = vector.broadcast %487 : vector<2x1xf32> to vector<2x32xf32>
    %489 = vector.broadcast %38 : vector<1x32xf32> to vector<2x32xf32>
    %490 = arith.mulf %488, %489 : vector<2x32xf32>
    %491 = vector.broadcast %42 : vector<1x32xf32> to vector<2x32xf32>
    %492 = arith.addf %490, %491 : vector<2x32xf32>
    %cst_138 = arith.constant dense<0.000000e+00> : vector<2x32xf32>
    %493 = tpu.matmul %485, %47, %cst_138 {dimension_numbers = #tpu.dot_dimension_numbers<[1], [0], [0], [1], [0, 0, 1, 1], [], []>} : vector<2x32xf32>, vector<32x32xf32>, vector<2x32xf32> -> vector<2x32xf32>
    %494 = arith.addf %492, %493 : vector<2x32xf32>
    %495 = vector.broadcast %39 : vector<1x32xf32> to vector<2x32xf32>
    %496 = arith.mulf %488, %495 : vector<2x32xf32>
    %497 = vector.broadcast %43 : vector<1x32xf32> to vector<2x32xf32>
    %498 = arith.addf %496, %497 : vector<2x32xf32>
    %cst_139 = arith.constant dense<0.000000e+00> : vector<2x32xf32>
    %499 = tpu.matmul %485, %49, %cst_139 {dimension_numbers = #tpu.dot_dimension_numbers<[1], [0], [0], [1], [0, 0, 1, 1], [], []>} : vector<2x32xf32>, vector<32x32xf32>, vector<2x32xf32> -> vector<2x32xf32>
    %500 = arith.addf %498, %499 : vector<2x32xf32>
    %501 = vector.broadcast %40 : vector<1x32xf32> to vector<2x32xf32>
    %502 = arith.mulf %488, %501 : vector<2x32xf32>
    %503 = vector.broadcast %44 : vector<1x32xf32> to vector<2x32xf32>
    %504 = arith.addf %502, %503 : vector<2x32xf32>
    %cst_140 = arith.constant dense<0.000000e+00> : vector<2x32xf32>
    %505 = tpu.matmul %485, %51, %cst_140 {dimension_numbers = #tpu.dot_dimension_numbers<[1], [0], [0], [1], [0, 0, 1, 1], [], []>} : vector<2x32xf32>, vector<32x32xf32>, vector<2x32xf32> -> vector<2x32xf32>
    %506 = arith.addf %504, %505 : vector<2x32xf32>
    %507 = vector.broadcast %41 : vector<1x32xf32> to vector<2x32xf32>
    %508 = arith.mulf %488, %507 : vector<2x32xf32>
    %509 = vector.broadcast %45 : vector<1x32xf32> to vector<2x32xf32>
    %510 = arith.addf %508, %509 : vector<2x32xf32>
    %cst_141 = arith.constant dense<0.000000e+00> : vector<2x32xf32>
    %511 = tpu.matmul %485, %53, %cst_141 {dimension_numbers = #tpu.dot_dimension_numbers<[1], [0], [0], [1], [0, 0, 1, 1], [], []>} : vector<2x32xf32>, vector<32x32xf32>, vector<2x32xf32> -> vector<2x32xf32>
    %512 = arith.addf %510, %511 : vector<2x32xf32>
    %cst_142 = arith.constant 5.000000e-01 : f32
    %513 = vector.broadcast %cst_142 : f32 to vector<2x32xf32>
    %514 = arith.mulf %513, %494 : vector<2x32xf32>
    %515 = math.tanh %514 : vector<2x32xf32>
    %cst_143 = arith.constant 5.000000e-01 : f32
    %516 = vector.broadcast %cst_143 : f32 to vector<2x32xf32>
    %517 = arith.mulf %516, %515 : vector<2x32xf32>
    %cst_144 = arith.constant 5.000000e-01 : f32
    %518 = vector.broadcast %cst_144 : f32 to vector<2x32xf32>
    %519 = arith.addf %517, %518 : vector<2x32xf32>
    %cst_145 = arith.constant 5.000000e-01 : f32
    %520 = vector.broadcast %cst_145 : f32 to vector<2x32xf32>
    %521 = arith.mulf %520, %500 : vector<2x32xf32>
    %522 = math.tanh %521 : vector<2x32xf32>
    %cst_146 = arith.constant 5.000000e-01 : f32
    %523 = vector.broadcast %cst_146 : f32 to vector<2x32xf32>
    %524 = arith.mulf %523, %522 : vector<2x32xf32>
    %cst_147 = arith.constant 5.000000e-01 : f32
    %525 = vector.broadcast %cst_147 : f32 to vector<2x32xf32>
    %526 = arith.addf %524, %525 : vector<2x32xf32>
    %527 = math.tanh %506 : vector<2x32xf32>
    %cst_148 = arith.constant 5.000000e-01 : f32
    %528 = vector.broadcast %cst_148 : f32 to vector<2x32xf32>
    %529 = arith.mulf %528, %512 : vector<2x32xf32>
    %530 = math.tanh %529 : vector<2x32xf32>
    %cst_149 = arith.constant 5.000000e-01 : f32
    %531 = vector.broadcast %cst_149 : f32 to vector<2x32xf32>
    %532 = arith.mulf %531, %530 : vector<2x32xf32>
    %cst_150 = arith.constant 5.000000e-01 : f32
    %533 = vector.broadcast %cst_150 : f32 to vector<2x32xf32>
    %534 = arith.addf %532, %533 : vector<2x32xf32>
    %535 = arith.mulf %526, %483 : vector<2x32xf32>
    %536 = arith.mulf %519, %527 : vector<2x32xf32>
    %537 = arith.addf %535, %536 : vector<2x32xf32>
    %538 = math.tanh %537 : vector<2x32xf32>
    %539 = arith.mulf %534, %538 : vector<2x32xf32>
    %540 = vector.extract_strided_slice %35 {offsets = [0, 9], sizes = [2, 1], strides = [1, 1]} : vector<2x32xf32> to vector<2x1xf32>
    %541 = vector.shape_cast %540 : vector<2x1xf32> to vector<2x1xf32>
    %542 = vector.broadcast %541 : vector<2x1xf32> to vector<2x32xf32>
    %543 = vector.broadcast %38 : vector<1x32xf32> to vector<2x32xf32>
    %544 = arith.mulf %542, %543 : vector<2x32xf32>
    %545 = vector.broadcast %42 : vector<1x32xf32> to vector<2x32xf32>
    %546 = arith.addf %544, %545 : vector<2x32xf32>
    %cst_151 = arith.constant dense<0.000000e+00> : vector<2x32xf32>
    %547 = tpu.matmul %539, %47, %cst_151 {dimension_numbers = #tpu.dot_dimension_numbers<[1], [0], [0], [1], [0, 0, 1, 1], [], []>} : vector<2x32xf32>, vector<32x32xf32>, vector<2x32xf32> -> vector<2x32xf32>
    %548 = arith.addf %546, %547 : vector<2x32xf32>
    %549 = vector.broadcast %39 : vector<1x32xf32> to vector<2x32xf32>
    %550 = arith.mulf %542, %549 : vector<2x32xf32>
    %551 = vector.broadcast %43 : vector<1x32xf32> to vector<2x32xf32>
    %552 = arith.addf %550, %551 : vector<2x32xf32>
    %cst_152 = arith.constant dense<0.000000e+00> : vector<2x32xf32>
    %553 = tpu.matmul %539, %49, %cst_152 {dimension_numbers = #tpu.dot_dimension_numbers<[1], [0], [0], [1], [0, 0, 1, 1], [], []>} : vector<2x32xf32>, vector<32x32xf32>, vector<2x32xf32> -> vector<2x32xf32>
    %554 = arith.addf %552, %553 : vector<2x32xf32>
    %555 = vector.broadcast %40 : vector<1x32xf32> to vector<2x32xf32>
    %556 = arith.mulf %542, %555 : vector<2x32xf32>
    %557 = vector.broadcast %44 : vector<1x32xf32> to vector<2x32xf32>
    %558 = arith.addf %556, %557 : vector<2x32xf32>
    %cst_153 = arith.constant dense<0.000000e+00> : vector<2x32xf32>
    %559 = tpu.matmul %539, %51, %cst_153 {dimension_numbers = #tpu.dot_dimension_numbers<[1], [0], [0], [1], [0, 0, 1, 1], [], []>} : vector<2x32xf32>, vector<32x32xf32>, vector<2x32xf32> -> vector<2x32xf32>
    %560 = arith.addf %558, %559 : vector<2x32xf32>
    %561 = vector.broadcast %41 : vector<1x32xf32> to vector<2x32xf32>
    %562 = arith.mulf %542, %561 : vector<2x32xf32>
    %563 = vector.broadcast %45 : vector<1x32xf32> to vector<2x32xf32>
    %564 = arith.addf %562, %563 : vector<2x32xf32>
    %cst_154 = arith.constant dense<0.000000e+00> : vector<2x32xf32>
    %565 = tpu.matmul %539, %53, %cst_154 {dimension_numbers = #tpu.dot_dimension_numbers<[1], [0], [0], [1], [0, 0, 1, 1], [], []>} : vector<2x32xf32>, vector<32x32xf32>, vector<2x32xf32> -> vector<2x32xf32>
    %566 = arith.addf %564, %565 : vector<2x32xf32>
    %cst_155 = arith.constant 5.000000e-01 : f32
    %567 = vector.broadcast %cst_155 : f32 to vector<2x32xf32>
    %568 = arith.mulf %567, %548 : vector<2x32xf32>
    %569 = math.tanh %568 : vector<2x32xf32>
    %cst_156 = arith.constant 5.000000e-01 : f32
    %570 = vector.broadcast %cst_156 : f32 to vector<2x32xf32>
    %571 = arith.mulf %570, %569 : vector<2x32xf32>
    %cst_157 = arith.constant 5.000000e-01 : f32
    %572 = vector.broadcast %cst_157 : f32 to vector<2x32xf32>
    %573 = arith.addf %571, %572 : vector<2x32xf32>
    %cst_158 = arith.constant 5.000000e-01 : f32
    %574 = vector.broadcast %cst_158 : f32 to vector<2x32xf32>
    %575 = arith.mulf %574, %554 : vector<2x32xf32>
    %576 = math.tanh %575 : vector<2x32xf32>
    %cst_159 = arith.constant 5.000000e-01 : f32
    %577 = vector.broadcast %cst_159 : f32 to vector<2x32xf32>
    %578 = arith.mulf %577, %576 : vector<2x32xf32>
    %cst_160 = arith.constant 5.000000e-01 : f32
    %579 = vector.broadcast %cst_160 : f32 to vector<2x32xf32>
    %580 = arith.addf %578, %579 : vector<2x32xf32>
    %581 = math.tanh %560 : vector<2x32xf32>
    %cst_161 = arith.constant 5.000000e-01 : f32
    %582 = vector.broadcast %cst_161 : f32 to vector<2x32xf32>
    %583 = arith.mulf %582, %566 : vector<2x32xf32>
    %584 = math.tanh %583 : vector<2x32xf32>
    %cst_162 = arith.constant 5.000000e-01 : f32
    %585 = vector.broadcast %cst_162 : f32 to vector<2x32xf32>
    %586 = arith.mulf %585, %584 : vector<2x32xf32>
    %cst_163 = arith.constant 5.000000e-01 : f32
    %587 = vector.broadcast %cst_163 : f32 to vector<2x32xf32>
    %588 = arith.addf %586, %587 : vector<2x32xf32>
    %589 = arith.mulf %580, %537 : vector<2x32xf32>
    %590 = arith.mulf %573, %581 : vector<2x32xf32>
    %591 = arith.addf %589, %590 : vector<2x32xf32>
    %592 = math.tanh %591 : vector<2x32xf32>
    %593 = arith.mulf %588, %592 : vector<2x32xf32>
    %594 = vector.extract_strided_slice %35 {offsets = [0, 10], sizes = [2, 1], strides = [1, 1]} : vector<2x32xf32> to vector<2x1xf32>
    %595 = vector.shape_cast %594 : vector<2x1xf32> to vector<2x1xf32>
    %596 = vector.broadcast %595 : vector<2x1xf32> to vector<2x32xf32>
    %597 = vector.broadcast %38 : vector<1x32xf32> to vector<2x32xf32>
    %598 = arith.mulf %596, %597 : vector<2x32xf32>
    %599 = vector.broadcast %42 : vector<1x32xf32> to vector<2x32xf32>
    %600 = arith.addf %598, %599 : vector<2x32xf32>
    %cst_164 = arith.constant dense<0.000000e+00> : vector<2x32xf32>
    %601 = tpu.matmul %593, %47, %cst_164 {dimension_numbers = #tpu.dot_dimension_numbers<[1], [0], [0], [1], [0, 0, 1, 1], [], []>} : vector<2x32xf32>, vector<32x32xf32>, vector<2x32xf32> -> vector<2x32xf32>
    %602 = arith.addf %600, %601 : vector<2x32xf32>
    %603 = vector.broadcast %39 : vector<1x32xf32> to vector<2x32xf32>
    %604 = arith.mulf %596, %603 : vector<2x32xf32>
    %605 = vector.broadcast %43 : vector<1x32xf32> to vector<2x32xf32>
    %606 = arith.addf %604, %605 : vector<2x32xf32>
    %cst_165 = arith.constant dense<0.000000e+00> : vector<2x32xf32>
    %607 = tpu.matmul %593, %49, %cst_165 {dimension_numbers = #tpu.dot_dimension_numbers<[1], [0], [0], [1], [0, 0, 1, 1], [], []>} : vector<2x32xf32>, vector<32x32xf32>, vector<2x32xf32> -> vector<2x32xf32>
    %608 = arith.addf %606, %607 : vector<2x32xf32>
    %609 = vector.broadcast %40 : vector<1x32xf32> to vector<2x32xf32>
    %610 = arith.mulf %596, %609 : vector<2x32xf32>
    %611 = vector.broadcast %44 : vector<1x32xf32> to vector<2x32xf32>
    %612 = arith.addf %610, %611 : vector<2x32xf32>
    %cst_166 = arith.constant dense<0.000000e+00> : vector<2x32xf32>
    %613 = tpu.matmul %593, %51, %cst_166 {dimension_numbers = #tpu.dot_dimension_numbers<[1], [0], [0], [1], [0, 0, 1, 1], [], []>} : vector<2x32xf32>, vector<32x32xf32>, vector<2x32xf32> -> vector<2x32xf32>
    %614 = arith.addf %612, %613 : vector<2x32xf32>
    %615 = vector.broadcast %41 : vector<1x32xf32> to vector<2x32xf32>
    %616 = arith.mulf %596, %615 : vector<2x32xf32>
    %617 = vector.broadcast %45 : vector<1x32xf32> to vector<2x32xf32>
    %618 = arith.addf %616, %617 : vector<2x32xf32>
    %cst_167 = arith.constant dense<0.000000e+00> : vector<2x32xf32>
    %619 = tpu.matmul %593, %53, %cst_167 {dimension_numbers = #tpu.dot_dimension_numbers<[1], [0], [0], [1], [0, 0, 1, 1], [], []>} : vector<2x32xf32>, vector<32x32xf32>, vector<2x32xf32> -> vector<2x32xf32>
    %620 = arith.addf %618, %619 : vector<2x32xf32>
    %cst_168 = arith.constant 5.000000e-01 : f32
    %621 = vector.broadcast %cst_168 : f32 to vector<2x32xf32>
    %622 = arith.mulf %621, %602 : vector<2x32xf32>
    %623 = math.tanh %622 : vector<2x32xf32>
    %cst_169 = arith.constant 5.000000e-01 : f32
    %624 = vector.broadcast %cst_169 : f32 to vector<2x32xf32>
    %625 = arith.mulf %624, %623 : vector<2x32xf32>
    %cst_170 = arith.constant 5.000000e-01 : f32
    %626 = vector.broadcast %cst_170 : f32 to vector<2x32xf32>
    %627 = arith.addf %625, %626 : vector<2x32xf32>
    %cst_171 = arith.constant 5.000000e-01 : f32
    %628 = vector.broadcast %cst_171 : f32 to vector<2x32xf32>
    %629 = arith.mulf %628, %608 : vector<2x32xf32>
    %630 = math.tanh %629 : vector<2x32xf32>
    %cst_172 = arith.constant 5.000000e-01 : f32
    %631 = vector.broadcast %cst_172 : f32 to vector<2x32xf32>
    %632 = arith.mulf %631, %630 : vector<2x32xf32>
    %cst_173 = arith.constant 5.000000e-01 : f32
    %633 = vector.broadcast %cst_173 : f32 to vector<2x32xf32>
    %634 = arith.addf %632, %633 : vector<2x32xf32>
    %635 = math.tanh %614 : vector<2x32xf32>
    %cst_174 = arith.constant 5.000000e-01 : f32
    %636 = vector.broadcast %cst_174 : f32 to vector<2x32xf32>
    %637 = arith.mulf %636, %620 : vector<2x32xf32>
    %638 = math.tanh %637 : vector<2x32xf32>
    %cst_175 = arith.constant 5.000000e-01 : f32
    %639 = vector.broadcast %cst_175 : f32 to vector<2x32xf32>
    %640 = arith.mulf %639, %638 : vector<2x32xf32>
    %cst_176 = arith.constant 5.000000e-01 : f32
    %641 = vector.broadcast %cst_176 : f32 to vector<2x32xf32>
    %642 = arith.addf %640, %641 : vector<2x32xf32>
    %643 = arith.mulf %634, %591 : vector<2x32xf32>
    %644 = arith.mulf %627, %635 : vector<2x32xf32>
    %645 = arith.addf %643, %644 : vector<2x32xf32>
    %646 = math.tanh %645 : vector<2x32xf32>
    %647 = arith.mulf %642, %646 : vector<2x32xf32>
    %648 = vector.extract_strided_slice %35 {offsets = [0, 11], sizes = [2, 1], strides = [1, 1]} : vector<2x32xf32> to vector<2x1xf32>
    %649 = vector.shape_cast %648 : vector<2x1xf32> to vector<2x1xf32>
    %650 = vector.broadcast %649 : vector<2x1xf32> to vector<2x32xf32>
    %651 = vector.broadcast %38 : vector<1x32xf32> to vector<2x32xf32>
    %652 = arith.mulf %650, %651 : vector<2x32xf32>
    %653 = vector.broadcast %42 : vector<1x32xf32> to vector<2x32xf32>
    %654 = arith.addf %652, %653 : vector<2x32xf32>
    %cst_177 = arith.constant dense<0.000000e+00> : vector<2x32xf32>
    %655 = tpu.matmul %647, %47, %cst_177 {dimension_numbers = #tpu.dot_dimension_numbers<[1], [0], [0], [1], [0, 0, 1, 1], [], []>} : vector<2x32xf32>, vector<32x32xf32>, vector<2x32xf32> -> vector<2x32xf32>
    %656 = arith.addf %654, %655 : vector<2x32xf32>
    %657 = vector.broadcast %39 : vector<1x32xf32> to vector<2x32xf32>
    %658 = arith.mulf %650, %657 : vector<2x32xf32>
    %659 = vector.broadcast %43 : vector<1x32xf32> to vector<2x32xf32>
    %660 = arith.addf %658, %659 : vector<2x32xf32>
    %cst_178 = arith.constant dense<0.000000e+00> : vector<2x32xf32>
    %661 = tpu.matmul %647, %49, %cst_178 {dimension_numbers = #tpu.dot_dimension_numbers<[1], [0], [0], [1], [0, 0, 1, 1], [], []>} : vector<2x32xf32>, vector<32x32xf32>, vector<2x32xf32> -> vector<2x32xf32>
    %662 = arith.addf %660, %661 : vector<2x32xf32>
    %663 = vector.broadcast %40 : vector<1x32xf32> to vector<2x32xf32>
    %664 = arith.mulf %650, %663 : vector<2x32xf32>
    %665 = vector.broadcast %44 : vector<1x32xf32> to vector<2x32xf32>
    %666 = arith.addf %664, %665 : vector<2x32xf32>
    %cst_179 = arith.constant dense<0.000000e+00> : vector<2x32xf32>
    %667 = tpu.matmul %647, %51, %cst_179 {dimension_numbers = #tpu.dot_dimension_numbers<[1], [0], [0], [1], [0, 0, 1, 1], [], []>} : vector<2x32xf32>, vector<32x32xf32>, vector<2x32xf32> -> vector<2x32xf32>
    %668 = arith.addf %666, %667 : vector<2x32xf32>
    %669 = vector.broadcast %41 : vector<1x32xf32> to vector<2x32xf32>
    %670 = arith.mulf %650, %669 : vector<2x32xf32>
    %671 = vector.broadcast %45 : vector<1x32xf32> to vector<2x32xf32>
    %672 = arith.addf %670, %671 : vector<2x32xf32>
    %cst_180 = arith.constant dense<0.000000e+00> : vector<2x32xf32>
    %673 = tpu.matmul %647, %53, %cst_180 {dimension_numbers = #tpu.dot_dimension_numbers<[1], [0], [0], [1], [0, 0, 1, 1], [], []>} : vector<2x32xf32>, vector<32x32xf32>, vector<2x32xf32> -> vector<2x32xf32>
    %674 = arith.addf %672, %673 : vector<2x32xf32>
    %cst_181 = arith.constant 5.000000e-01 : f32
    %675 = vector.broadcast %cst_181 : f32 to vector<2x32xf32>
    %676 = arith.mulf %675, %656 : vector<2x32xf32>
    %677 = math.tanh %676 : vector<2x32xf32>
    %cst_182 = arith.constant 5.000000e-01 : f32
    %678 = vector.broadcast %cst_182 : f32 to vector<2x32xf32>
    %679 = arith.mulf %678, %677 : vector<2x32xf32>
    %cst_183 = arith.constant 5.000000e-01 : f32
    %680 = vector.broadcast %cst_183 : f32 to vector<2x32xf32>
    %681 = arith.addf %679, %680 : vector<2x32xf32>
    %cst_184 = arith.constant 5.000000e-01 : f32
    %682 = vector.broadcast %cst_184 : f32 to vector<2x32xf32>
    %683 = arith.mulf %682, %662 : vector<2x32xf32>
    %684 = math.tanh %683 : vector<2x32xf32>
    %cst_185 = arith.constant 5.000000e-01 : f32
    %685 = vector.broadcast %cst_185 : f32 to vector<2x32xf32>
    %686 = arith.mulf %685, %684 : vector<2x32xf32>
    %cst_186 = arith.constant 5.000000e-01 : f32
    %687 = vector.broadcast %cst_186 : f32 to vector<2x32xf32>
    %688 = arith.addf %686, %687 : vector<2x32xf32>
    %689 = math.tanh %668 : vector<2x32xf32>
    %cst_187 = arith.constant 5.000000e-01 : f32
    %690 = vector.broadcast %cst_187 : f32 to vector<2x32xf32>
    %691 = arith.mulf %690, %674 : vector<2x32xf32>
    %692 = math.tanh %691 : vector<2x32xf32>
    %cst_188 = arith.constant 5.000000e-01 : f32
    %693 = vector.broadcast %cst_188 : f32 to vector<2x32xf32>
    %694 = arith.mulf %693, %692 : vector<2x32xf32>
    %cst_189 = arith.constant 5.000000e-01 : f32
    %695 = vector.broadcast %cst_189 : f32 to vector<2x32xf32>
    %696 = arith.addf %694, %695 : vector<2x32xf32>
    %697 = arith.mulf %688, %645 : vector<2x32xf32>
    %698 = arith.mulf %681, %689 : vector<2x32xf32>
    %699 = arith.addf %697, %698 : vector<2x32xf32>
    %700 = math.tanh %699 : vector<2x32xf32>
    %701 = arith.mulf %696, %700 : vector<2x32xf32>
    %702 = vector.extract_strided_slice %35 {offsets = [0, 12], sizes = [2, 1], strides = [1, 1]} : vector<2x32xf32> to vector<2x1xf32>
    %703 = vector.shape_cast %702 : vector<2x1xf32> to vector<2x1xf32>
    %704 = vector.broadcast %703 : vector<2x1xf32> to vector<2x32xf32>
    %705 = vector.broadcast %38 : vector<1x32xf32> to vector<2x32xf32>
    %706 = arith.mulf %704, %705 : vector<2x32xf32>
    %707 = vector.broadcast %42 : vector<1x32xf32> to vector<2x32xf32>
    %708 = arith.addf %706, %707 : vector<2x32xf32>
    %cst_190 = arith.constant dense<0.000000e+00> : vector<2x32xf32>
    %709 = tpu.matmul %701, %47, %cst_190 {dimension_numbers = #tpu.dot_dimension_numbers<[1], [0], [0], [1], [0, 0, 1, 1], [], []>} : vector<2x32xf32>, vector<32x32xf32>, vector<2x32xf32> -> vector<2x32xf32>
    %710 = arith.addf %708, %709 : vector<2x32xf32>
    %711 = vector.broadcast %39 : vector<1x32xf32> to vector<2x32xf32>
    %712 = arith.mulf %704, %711 : vector<2x32xf32>
    %713 = vector.broadcast %43 : vector<1x32xf32> to vector<2x32xf32>
    %714 = arith.addf %712, %713 : vector<2x32xf32>
    %cst_191 = arith.constant dense<0.000000e+00> : vector<2x32xf32>
    %715 = tpu.matmul %701, %49, %cst_191 {dimension_numbers = #tpu.dot_dimension_numbers<[1], [0], [0], [1], [0, 0, 1, 1], [], []>} : vector<2x32xf32>, vector<32x32xf32>, vector<2x32xf32> -> vector<2x32xf32>
    %716 = arith.addf %714, %715 : vector<2x32xf32>
    %717 = vector.broadcast %40 : vector<1x32xf32> to vector<2x32xf32>
    %718 = arith.mulf %704, %717 : vector<2x32xf32>
    %719 = vector.broadcast %44 : vector<1x32xf32> to vector<2x32xf32>
    %720 = arith.addf %718, %719 : vector<2x32xf32>
    %cst_192 = arith.constant dense<0.000000e+00> : vector<2x32xf32>
    %721 = tpu.matmul %701, %51, %cst_192 {dimension_numbers = #tpu.dot_dimension_numbers<[1], [0], [0], [1], [0, 0, 1, 1], [], []>} : vector<2x32xf32>, vector<32x32xf32>, vector<2x32xf32> -> vector<2x32xf32>
    %722 = arith.addf %720, %721 : vector<2x32xf32>
    %723 = vector.broadcast %41 : vector<1x32xf32> to vector<2x32xf32>
    %724 = arith.mulf %704, %723 : vector<2x32xf32>
    %725 = vector.broadcast %45 : vector<1x32xf32> to vector<2x32xf32>
    %726 = arith.addf %724, %725 : vector<2x32xf32>
    %cst_193 = arith.constant dense<0.000000e+00> : vector<2x32xf32>
    %727 = tpu.matmul %701, %53, %cst_193 {dimension_numbers = #tpu.dot_dimension_numbers<[1], [0], [0], [1], [0, 0, 1, 1], [], []>} : vector<2x32xf32>, vector<32x32xf32>, vector<2x32xf32> -> vector<2x32xf32>
    %728 = arith.addf %726, %727 : vector<2x32xf32>
    %cst_194 = arith.constant 5.000000e-01 : f32
    %729 = vector.broadcast %cst_194 : f32 to vector<2x32xf32>
    %730 = arith.mulf %729, %710 : vector<2x32xf32>
    %731 = math.tanh %730 : vector<2x32xf32>
    %cst_195 = arith.constant 5.000000e-01 : f32
    %732 = vector.broadcast %cst_195 : f32 to vector<2x32xf32>
    %733 = arith.mulf %732, %731 : vector<2x32xf32>
    %cst_196 = arith.constant 5.000000e-01 : f32
    %734 = vector.broadcast %cst_196 : f32 to vector<2x32xf32>
    %735 = arith.addf %733, %734 : vector<2x32xf32>
    %cst_197 = arith.constant 5.000000e-01 : f32
    %736 = vector.broadcast %cst_197 : f32 to vector<2x32xf32>
    %737 = arith.mulf %736, %716 : vector<2x32xf32>
    %738 = math.tanh %737 : vector<2x32xf32>
    %cst_198 = arith.constant 5.000000e-01 : f32
    %739 = vector.broadcast %cst_198 : f32 to vector<2x32xf32>
    %740 = arith.mulf %739, %738 : vector<2x32xf32>
    %cst_199 = arith.constant 5.000000e-01 : f32
    %741 = vector.broadcast %cst_199 : f32 to vector<2x32xf32>
    %742 = arith.addf %740, %741 : vector<2x32xf32>
    %743 = math.tanh %722 : vector<2x32xf32>
    %cst_200 = arith.constant 5.000000e-01 : f32
    %744 = vector.broadcast %cst_200 : f32 to vector<2x32xf32>
    %745 = arith.mulf %744, %728 : vector<2x32xf32>
    %746 = math.tanh %745 : vector<2x32xf32>
    %cst_201 = arith.constant 5.000000e-01 : f32
    %747 = vector.broadcast %cst_201 : f32 to vector<2x32xf32>
    %748 = arith.mulf %747, %746 : vector<2x32xf32>
    %cst_202 = arith.constant 5.000000e-01 : f32
    %749 = vector.broadcast %cst_202 : f32 to vector<2x32xf32>
    %750 = arith.addf %748, %749 : vector<2x32xf32>
    %751 = arith.mulf %742, %699 : vector<2x32xf32>
    %752 = arith.mulf %735, %743 : vector<2x32xf32>
    %753 = arith.addf %751, %752 : vector<2x32xf32>
    %754 = math.tanh %753 : vector<2x32xf32>
    %755 = arith.mulf %750, %754 : vector<2x32xf32>
    %756 = vector.extract_strided_slice %35 {offsets = [0, 13], sizes = [2, 1], strides = [1, 1]} : vector<2x32xf32> to vector<2x1xf32>
    %757 = vector.shape_cast %756 : vector<2x1xf32> to vector<2x1xf32>
    %758 = vector.broadcast %757 : vector<2x1xf32> to vector<2x32xf32>
    %759 = vector.broadcast %38 : vector<1x32xf32> to vector<2x32xf32>
    %760 = arith.mulf %758, %759 : vector<2x32xf32>
    %761 = vector.broadcast %42 : vector<1x32xf32> to vector<2x32xf32>
    %762 = arith.addf %760, %761 : vector<2x32xf32>
    %cst_203 = arith.constant dense<0.000000e+00> : vector<2x32xf32>
    %763 = tpu.matmul %755, %47, %cst_203 {dimension_numbers = #tpu.dot_dimension_numbers<[1], [0], [0], [1], [0, 0, 1, 1], [], []>} : vector<2x32xf32>, vector<32x32xf32>, vector<2x32xf32> -> vector<2x32xf32>
    %764 = arith.addf %762, %763 : vector<2x32xf32>
    %765 = vector.broadcast %39 : vector<1x32xf32> to vector<2x32xf32>
    %766 = arith.mulf %758, %765 : vector<2x32xf32>
    %767 = vector.broadcast %43 : vector<1x32xf32> to vector<2x32xf32>
    %768 = arith.addf %766, %767 : vector<2x32xf32>
    %cst_204 = arith.constant dense<0.000000e+00> : vector<2x32xf32>
    %769 = tpu.matmul %755, %49, %cst_204 {dimension_numbers = #tpu.dot_dimension_numbers<[1], [0], [0], [1], [0, 0, 1, 1], [], []>} : vector<2x32xf32>, vector<32x32xf32>, vector<2x32xf32> -> vector<2x32xf32>
    %770 = arith.addf %768, %769 : vector<2x32xf32>
    %771 = vector.broadcast %40 : vector<1x32xf32> to vector<2x32xf32>
    %772 = arith.mulf %758, %771 : vector<2x32xf32>
    %773 = vector.broadcast %44 : vector<1x32xf32> to vector<2x32xf32>
    %774 = arith.addf %772, %773 : vector<2x32xf32>
    %cst_205 = arith.constant dense<0.000000e+00> : vector<2x32xf32>
    %775 = tpu.matmul %755, %51, %cst_205 {dimension_numbers = #tpu.dot_dimension_numbers<[1], [0], [0], [1], [0, 0, 1, 1], [], []>} : vector<2x32xf32>, vector<32x32xf32>, vector<2x32xf32> -> vector<2x32xf32>
    %776 = arith.addf %774, %775 : vector<2x32xf32>
    %777 = vector.broadcast %41 : vector<1x32xf32> to vector<2x32xf32>
    %778 = arith.mulf %758, %777 : vector<2x32xf32>
    %779 = vector.broadcast %45 : vector<1x32xf32> to vector<2x32xf32>
    %780 = arith.addf %778, %779 : vector<2x32xf32>
    %cst_206 = arith.constant dense<0.000000e+00> : vector<2x32xf32>
    %781 = tpu.matmul %755, %53, %cst_206 {dimension_numbers = #tpu.dot_dimension_numbers<[1], [0], [0], [1], [0, 0, 1, 1], [], []>} : vector<2x32xf32>, vector<32x32xf32>, vector<2x32xf32> -> vector<2x32xf32>
    %782 = arith.addf %780, %781 : vector<2x32xf32>
    %cst_207 = arith.constant 5.000000e-01 : f32
    %783 = vector.broadcast %cst_207 : f32 to vector<2x32xf32>
    %784 = arith.mulf %783, %764 : vector<2x32xf32>
    %785 = math.tanh %784 : vector<2x32xf32>
    %cst_208 = arith.constant 5.000000e-01 : f32
    %786 = vector.broadcast %cst_208 : f32 to vector<2x32xf32>
    %787 = arith.mulf %786, %785 : vector<2x32xf32>
    %cst_209 = arith.constant 5.000000e-01 : f32
    %788 = vector.broadcast %cst_209 : f32 to vector<2x32xf32>
    %789 = arith.addf %787, %788 : vector<2x32xf32>
    %cst_210 = arith.constant 5.000000e-01 : f32
    %790 = vector.broadcast %cst_210 : f32 to vector<2x32xf32>
    %791 = arith.mulf %790, %770 : vector<2x32xf32>
    %792 = math.tanh %791 : vector<2x32xf32>
    %cst_211 = arith.constant 5.000000e-01 : f32
    %793 = vector.broadcast %cst_211 : f32 to vector<2x32xf32>
    %794 = arith.mulf %793, %792 : vector<2x32xf32>
    %cst_212 = arith.constant 5.000000e-01 : f32
    %795 = vector.broadcast %cst_212 : f32 to vector<2x32xf32>
    %796 = arith.addf %794, %795 : vector<2x32xf32>
    %797 = math.tanh %776 : vector<2x32xf32>
    %cst_213 = arith.constant 5.000000e-01 : f32
    %798 = vector.broadcast %cst_213 : f32 to vector<2x32xf32>
    %799 = arith.mulf %798, %782 : vector<2x32xf32>
    %800 = math.tanh %799 : vector<2x32xf32>
    %cst_214 = arith.constant 5.000000e-01 : f32
    %801 = vector.broadcast %cst_214 : f32 to vector<2x32xf32>
    %802 = arith.mulf %801, %800 : vector<2x32xf32>
    %cst_215 = arith.constant 5.000000e-01 : f32
    %803 = vector.broadcast %cst_215 : f32 to vector<2x32xf32>
    %804 = arith.addf %802, %803 : vector<2x32xf32>
    %805 = arith.mulf %796, %753 : vector<2x32xf32>
    %806 = arith.mulf %789, %797 : vector<2x32xf32>
    %807 = arith.addf %805, %806 : vector<2x32xf32>
    %808 = math.tanh %807 : vector<2x32xf32>
    %809 = arith.mulf %804, %808 : vector<2x32xf32>
    %810 = vector.extract_strided_slice %35 {offsets = [0, 14], sizes = [2, 1], strides = [1, 1]} : vector<2x32xf32> to vector<2x1xf32>
    %811 = vector.shape_cast %810 : vector<2x1xf32> to vector<2x1xf32>
    %812 = vector.broadcast %811 : vector<2x1xf32> to vector<2x32xf32>
    %813 = vector.broadcast %38 : vector<1x32xf32> to vector<2x32xf32>
    %814 = arith.mulf %812, %813 : vector<2x32xf32>
    %815 = vector.broadcast %42 : vector<1x32xf32> to vector<2x32xf32>
    %816 = arith.addf %814, %815 : vector<2x32xf32>
    %cst_216 = arith.constant dense<0.000000e+00> : vector<2x32xf32>
    %817 = tpu.matmul %809, %47, %cst_216 {dimension_numbers = #tpu.dot_dimension_numbers<[1], [0], [0], [1], [0, 0, 1, 1], [], []>} : vector<2x32xf32>, vector<32x32xf32>, vector<2x32xf32> -> vector<2x32xf32>
    %818 = arith.addf %816, %817 : vector<2x32xf32>
    %819 = vector.broadcast %39 : vector<1x32xf32> to vector<2x32xf32>
    %820 = arith.mulf %812, %819 : vector<2x32xf32>
    %821 = vector.broadcast %43 : vector<1x32xf32> to vector<2x32xf32>
    %822 = arith.addf %820, %821 : vector<2x32xf32>
    %cst_217 = arith.constant dense<0.000000e+00> : vector<2x32xf32>
    %823 = tpu.matmul %809, %49, %cst_217 {dimension_numbers = #tpu.dot_dimension_numbers<[1], [0], [0], [1], [0, 0, 1, 1], [], []>} : vector<2x32xf32>, vector<32x32xf32>, vector<2x32xf32> -> vector<2x32xf32>
    %824 = arith.addf %822, %823 : vector<2x32xf32>
    %825 = vector.broadcast %40 : vector<1x32xf32> to vector<2x32xf32>
    %826 = arith.mulf %812, %825 : vector<2x32xf32>
    %827 = vector.broadcast %44 : vector<1x32xf32> to vector<2x32xf32>
    %828 = arith.addf %826, %827 : vector<2x32xf32>
    %cst_218 = arith.constant dense<0.000000e+00> : vector<2x32xf32>
    %829 = tpu.matmul %809, %51, %cst_218 {dimension_numbers = #tpu.dot_dimension_numbers<[1], [0], [0], [1], [0, 0, 1, 1], [], []>} : vector<2x32xf32>, vector<32x32xf32>, vector<2x32xf32> -> vector<2x32xf32>
    %830 = arith.addf %828, %829 : vector<2x32xf32>
    %831 = vector.broadcast %41 : vector<1x32xf32> to vector<2x32xf32>
    %832 = arith.mulf %812, %831 : vector<2x32xf32>
    %833 = vector.broadcast %45 : vector<1x32xf32> to vector<2x32xf32>
    %834 = arith.addf %832, %833 : vector<2x32xf32>
    %cst_219 = arith.constant dense<0.000000e+00> : vector<2x32xf32>
    %835 = tpu.matmul %809, %53, %cst_219 {dimension_numbers = #tpu.dot_dimension_numbers<[1], [0], [0], [1], [0, 0, 1, 1], [], []>} : vector<2x32xf32>, vector<32x32xf32>, vector<2x32xf32> -> vector<2x32xf32>
    %836 = arith.addf %834, %835 : vector<2x32xf32>
    %cst_220 = arith.constant 5.000000e-01 : f32
    %837 = vector.broadcast %cst_220 : f32 to vector<2x32xf32>
    %838 = arith.mulf %837, %818 : vector<2x32xf32>
    %839 = math.tanh %838 : vector<2x32xf32>
    %cst_221 = arith.constant 5.000000e-01 : f32
    %840 = vector.broadcast %cst_221 : f32 to vector<2x32xf32>
    %841 = arith.mulf %840, %839 : vector<2x32xf32>
    %cst_222 = arith.constant 5.000000e-01 : f32
    %842 = vector.broadcast %cst_222 : f32 to vector<2x32xf32>
    %843 = arith.addf %841, %842 : vector<2x32xf32>
    %cst_223 = arith.constant 5.000000e-01 : f32
    %844 = vector.broadcast %cst_223 : f32 to vector<2x32xf32>
    %845 = arith.mulf %844, %824 : vector<2x32xf32>
    %846 = math.tanh %845 : vector<2x32xf32>
    %cst_224 = arith.constant 5.000000e-01 : f32
    %847 = vector.broadcast %cst_224 : f32 to vector<2x32xf32>
    %848 = arith.mulf %847, %846 : vector<2x32xf32>
    %cst_225 = arith.constant 5.000000e-01 : f32
    %849 = vector.broadcast %cst_225 : f32 to vector<2x32xf32>
    %850 = arith.addf %848, %849 : vector<2x32xf32>
    %851 = math.tanh %830 : vector<2x32xf32>
    %cst_226 = arith.constant 5.000000e-01 : f32
    %852 = vector.broadcast %cst_226 : f32 to vector<2x32xf32>
    %853 = arith.mulf %852, %836 : vector<2x32xf32>
    %854 = math.tanh %853 : vector<2x32xf32>
    %cst_227 = arith.constant 5.000000e-01 : f32
    %855 = vector.broadcast %cst_227 : f32 to vector<2x32xf32>
    %856 = arith.mulf %855, %854 : vector<2x32xf32>
    %cst_228 = arith.constant 5.000000e-01 : f32
    %857 = vector.broadcast %cst_228 : f32 to vector<2x32xf32>
    %858 = arith.addf %856, %857 : vector<2x32xf32>
    %859 = arith.mulf %850, %807 : vector<2x32xf32>
    %860 = arith.mulf %843, %851 : vector<2x32xf32>
    %861 = arith.addf %859, %860 : vector<2x32xf32>
    %862 = math.tanh %861 : vector<2x32xf32>
    %863 = arith.mulf %858, %862 : vector<2x32xf32>
    %864 = vector.extract_strided_slice %35 {offsets = [0, 15], sizes = [2, 1], strides = [1, 1]} : vector<2x32xf32> to vector<2x1xf32>
    %865 = vector.shape_cast %864 : vector<2x1xf32> to vector<2x1xf32>
    %866 = vector.broadcast %865 : vector<2x1xf32> to vector<2x32xf32>
    %867 = vector.broadcast %38 : vector<1x32xf32> to vector<2x32xf32>
    %868 = arith.mulf %866, %867 : vector<2x32xf32>
    %869 = vector.broadcast %42 : vector<1x32xf32> to vector<2x32xf32>
    %870 = arith.addf %868, %869 : vector<2x32xf32>
    %cst_229 = arith.constant dense<0.000000e+00> : vector<2x32xf32>
    %871 = tpu.matmul %863, %47, %cst_229 {dimension_numbers = #tpu.dot_dimension_numbers<[1], [0], [0], [1], [0, 0, 1, 1], [], []>} : vector<2x32xf32>, vector<32x32xf32>, vector<2x32xf32> -> vector<2x32xf32>
    %872 = arith.addf %870, %871 : vector<2x32xf32>
    %873 = vector.broadcast %39 : vector<1x32xf32> to vector<2x32xf32>
    %874 = arith.mulf %866, %873 : vector<2x32xf32>
    %875 = vector.broadcast %43 : vector<1x32xf32> to vector<2x32xf32>
    %876 = arith.addf %874, %875 : vector<2x32xf32>
    %cst_230 = arith.constant dense<0.000000e+00> : vector<2x32xf32>
    %877 = tpu.matmul %863, %49, %cst_230 {dimension_numbers = #tpu.dot_dimension_numbers<[1], [0], [0], [1], [0, 0, 1, 1], [], []>} : vector<2x32xf32>, vector<32x32xf32>, vector<2x32xf32> -> vector<2x32xf32>
    %878 = arith.addf %876, %877 : vector<2x32xf32>
    %879 = vector.broadcast %40 : vector<1x32xf32> to vector<2x32xf32>
    %880 = arith.mulf %866, %879 : vector<2x32xf32>
    %881 = vector.broadcast %44 : vector<1x32xf32> to vector<2x32xf32>
    %882 = arith.addf %880, %881 : vector<2x32xf32>
    %cst_231 = arith.constant dense<0.000000e+00> : vector<2x32xf32>
    %883 = tpu.matmul %863, %51, %cst_231 {dimension_numbers = #tpu.dot_dimension_numbers<[1], [0], [0], [1], [0, 0, 1, 1], [], []>} : vector<2x32xf32>, vector<32x32xf32>, vector<2x32xf32> -> vector<2x32xf32>
    %884 = arith.addf %882, %883 : vector<2x32xf32>
    %885 = vector.broadcast %41 : vector<1x32xf32> to vector<2x32xf32>
    %886 = arith.mulf %866, %885 : vector<2x32xf32>
    %887 = vector.broadcast %45 : vector<1x32xf32> to vector<2x32xf32>
    %888 = arith.addf %886, %887 : vector<2x32xf32>
    %cst_232 = arith.constant dense<0.000000e+00> : vector<2x32xf32>
    %889 = tpu.matmul %863, %53, %cst_232 {dimension_numbers = #tpu.dot_dimension_numbers<[1], [0], [0], [1], [0, 0, 1, 1], [], []>} : vector<2x32xf32>, vector<32x32xf32>, vector<2x32xf32> -> vector<2x32xf32>
    %890 = arith.addf %888, %889 : vector<2x32xf32>
    %cst_233 = arith.constant 5.000000e-01 : f32
    %891 = vector.broadcast %cst_233 : f32 to vector<2x32xf32>
    %892 = arith.mulf %891, %872 : vector<2x32xf32>
    %893 = math.tanh %892 : vector<2x32xf32>
    %cst_234 = arith.constant 5.000000e-01 : f32
    %894 = vector.broadcast %cst_234 : f32 to vector<2x32xf32>
    %895 = arith.mulf %894, %893 : vector<2x32xf32>
    %cst_235 = arith.constant 5.000000e-01 : f32
    %896 = vector.broadcast %cst_235 : f32 to vector<2x32xf32>
    %897 = arith.addf %895, %896 : vector<2x32xf32>
    %cst_236 = arith.constant 5.000000e-01 : f32
    %898 = vector.broadcast %cst_236 : f32 to vector<2x32xf32>
    %899 = arith.mulf %898, %878 : vector<2x32xf32>
    %900 = math.tanh %899 : vector<2x32xf32>
    %cst_237 = arith.constant 5.000000e-01 : f32
    %901 = vector.broadcast %cst_237 : f32 to vector<2x32xf32>
    %902 = arith.mulf %901, %900 : vector<2x32xf32>
    %cst_238 = arith.constant 5.000000e-01 : f32
    %903 = vector.broadcast %cst_238 : f32 to vector<2x32xf32>
    %904 = arith.addf %902, %903 : vector<2x32xf32>
    %905 = math.tanh %884 : vector<2x32xf32>
    %cst_239 = arith.constant 5.000000e-01 : f32
    %906 = vector.broadcast %cst_239 : f32 to vector<2x32xf32>
    %907 = arith.mulf %906, %890 : vector<2x32xf32>
    %908 = math.tanh %907 : vector<2x32xf32>
    %cst_240 = arith.constant 5.000000e-01 : f32
    %909 = vector.broadcast %cst_240 : f32 to vector<2x32xf32>
    %910 = arith.mulf %909, %908 : vector<2x32xf32>
    %cst_241 = arith.constant 5.000000e-01 : f32
    %911 = vector.broadcast %cst_241 : f32 to vector<2x32xf32>
    %912 = arith.addf %910, %911 : vector<2x32xf32>
    %913 = arith.mulf %904, %861 : vector<2x32xf32>
    %914 = arith.mulf %897, %905 : vector<2x32xf32>
    %915 = arith.addf %913, %914 : vector<2x32xf32>
    %916 = math.tanh %915 : vector<2x32xf32>
    %917 = arith.mulf %912, %916 : vector<2x32xf32>
    %918 = vector.extract_strided_slice %35 {offsets = [0, 16], sizes = [2, 1], strides = [1, 1]} : vector<2x32xf32> to vector<2x1xf32>
    %919 = vector.shape_cast %918 : vector<2x1xf32> to vector<2x1xf32>
    %920 = vector.broadcast %919 : vector<2x1xf32> to vector<2x32xf32>
    %921 = vector.broadcast %38 : vector<1x32xf32> to vector<2x32xf32>
    %922 = arith.mulf %920, %921 : vector<2x32xf32>
    %923 = vector.broadcast %42 : vector<1x32xf32> to vector<2x32xf32>
    %924 = arith.addf %922, %923 : vector<2x32xf32>
    %cst_242 = arith.constant dense<0.000000e+00> : vector<2x32xf32>
    %925 = tpu.matmul %917, %47, %cst_242 {dimension_numbers = #tpu.dot_dimension_numbers<[1], [0], [0], [1], [0, 0, 1, 1], [], []>} : vector<2x32xf32>, vector<32x32xf32>, vector<2x32xf32> -> vector<2x32xf32>
    %926 = arith.addf %924, %925 : vector<2x32xf32>
    %927 = vector.broadcast %39 : vector<1x32xf32> to vector<2x32xf32>
    %928 = arith.mulf %920, %927 : vector<2x32xf32>
    %929 = vector.broadcast %43 : vector<1x32xf32> to vector<2x32xf32>
    %930 = arith.addf %928, %929 : vector<2x32xf32>
    %cst_243 = arith.constant dense<0.000000e+00> : vector<2x32xf32>
    %931 = tpu.matmul %917, %49, %cst_243 {dimension_numbers = #tpu.dot_dimension_numbers<[1], [0], [0], [1], [0, 0, 1, 1], [], []>} : vector<2x32xf32>, vector<32x32xf32>, vector<2x32xf32> -> vector<2x32xf32>
    %932 = arith.addf %930, %931 : vector<2x32xf32>
    %933 = vector.broadcast %40 : vector<1x32xf32> to vector<2x32xf32>
    %934 = arith.mulf %920, %933 : vector<2x32xf32>
    %935 = vector.broadcast %44 : vector<1x32xf32> to vector<2x32xf32>
    %936 = arith.addf %934, %935 : vector<2x32xf32>
    %cst_244 = arith.constant dense<0.000000e+00> : vector<2x32xf32>
    %937 = tpu.matmul %917, %51, %cst_244 {dimension_numbers = #tpu.dot_dimension_numbers<[1], [0], [0], [1], [0, 0, 1, 1], [], []>} : vector<2x32xf32>, vector<32x32xf32>, vector<2x32xf32> -> vector<2x32xf32>
    %938 = arith.addf %936, %937 : vector<2x32xf32>
    %939 = vector.broadcast %41 : vector<1x32xf32> to vector<2x32xf32>
    %940 = arith.mulf %920, %939 : vector<2x32xf32>
    %941 = vector.broadcast %45 : vector<1x32xf32> to vector<2x32xf32>
    %942 = arith.addf %940, %941 : vector<2x32xf32>
    %cst_245 = arith.constant dense<0.000000e+00> : vector<2x32xf32>
    %943 = tpu.matmul %917, %53, %cst_245 {dimension_numbers = #tpu.dot_dimension_numbers<[1], [0], [0], [1], [0, 0, 1, 1], [], []>} : vector<2x32xf32>, vector<32x32xf32>, vector<2x32xf32> -> vector<2x32xf32>
    %944 = arith.addf %942, %943 : vector<2x32xf32>
    %cst_246 = arith.constant 5.000000e-01 : f32
    %945 = vector.broadcast %cst_246 : f32 to vector<2x32xf32>
    %946 = arith.mulf %945, %926 : vector<2x32xf32>
    %947 = math.tanh %946 : vector<2x32xf32>
    %cst_247 = arith.constant 5.000000e-01 : f32
    %948 = vector.broadcast %cst_247 : f32 to vector<2x32xf32>
    %949 = arith.mulf %948, %947 : vector<2x32xf32>
    %cst_248 = arith.constant 5.000000e-01 : f32
    %950 = vector.broadcast %cst_248 : f32 to vector<2x32xf32>
    %951 = arith.addf %949, %950 : vector<2x32xf32>
    %cst_249 = arith.constant 5.000000e-01 : f32
    %952 = vector.broadcast %cst_249 : f32 to vector<2x32xf32>
    %953 = arith.mulf %952, %932 : vector<2x32xf32>
    %954 = math.tanh %953 : vector<2x32xf32>
    %cst_250 = arith.constant 5.000000e-01 : f32
    %955 = vector.broadcast %cst_250 : f32 to vector<2x32xf32>
    %956 = arith.mulf %955, %954 : vector<2x32xf32>
    %cst_251 = arith.constant 5.000000e-01 : f32
    %957 = vector.broadcast %cst_251 : f32 to vector<2x32xf32>
    %958 = arith.addf %956, %957 : vector<2x32xf32>
    %959 = math.tanh %938 : vector<2x32xf32>
    %cst_252 = arith.constant 5.000000e-01 : f32
    %960 = vector.broadcast %cst_252 : f32 to vector<2x32xf32>
    %961 = arith.mulf %960, %944 : vector<2x32xf32>
    %962 = math.tanh %961 : vector<2x32xf32>
    %cst_253 = arith.constant 5.000000e-01 : f32
    %963 = vector.broadcast %cst_253 : f32 to vector<2x32xf32>
    %964 = arith.mulf %963, %962 : vector<2x32xf32>
    %cst_254 = arith.constant 5.000000e-01 : f32
    %965 = vector.broadcast %cst_254 : f32 to vector<2x32xf32>
    %966 = arith.addf %964, %965 : vector<2x32xf32>
    %967 = arith.mulf %958, %915 : vector<2x32xf32>
    %968 = arith.mulf %951, %959 : vector<2x32xf32>
    %969 = arith.addf %967, %968 : vector<2x32xf32>
    %970 = math.tanh %969 : vector<2x32xf32>
    %971 = arith.mulf %966, %970 : vector<2x32xf32>
    %972 = vector.extract_strided_slice %35 {offsets = [0, 17], sizes = [2, 1], strides = [1, 1]} : vector<2x32xf32> to vector<2x1xf32>
    %973 = vector.shape_cast %972 : vector<2x1xf32> to vector<2x1xf32>
    %974 = vector.broadcast %973 : vector<2x1xf32> to vector<2x32xf32>
    %975 = vector.broadcast %38 : vector<1x32xf32> to vector<2x32xf32>
    %976 = arith.mulf %974, %975 : vector<2x32xf32>
    %977 = vector.broadcast %42 : vector<1x32xf32> to vector<2x32xf32>
    %978 = arith.addf %976, %977 : vector<2x32xf32>
    %cst_255 = arith.constant dense<0.000000e+00> : vector<2x32xf32>
    %979 = tpu.matmul %971, %47, %cst_255 {dimension_numbers = #tpu.dot_dimension_numbers<[1], [0], [0], [1], [0, 0, 1, 1], [], []>} : vector<2x32xf32>, vector<32x32xf32>, vector<2x32xf32> -> vector<2x32xf32>
    %980 = arith.addf %978, %979 : vector<2x32xf32>
    %981 = vector.broadcast %39 : vector<1x32xf32> to vector<2x32xf32>
    %982 = arith.mulf %974, %981 : vector<2x32xf32>
    %983 = vector.broadcast %43 : vector<1x32xf32> to vector<2x32xf32>
    %984 = arith.addf %982, %983 : vector<2x32xf32>
    %cst_256 = arith.constant dense<0.000000e+00> : vector<2x32xf32>
    %985 = tpu.matmul %971, %49, %cst_256 {dimension_numbers = #tpu.dot_dimension_numbers<[1], [0], [0], [1], [0, 0, 1, 1], [], []>} : vector<2x32xf32>, vector<32x32xf32>, vector<2x32xf32> -> vector<2x32xf32>
    %986 = arith.addf %984, %985 : vector<2x32xf32>
    %987 = vector.broadcast %40 : vector<1x32xf32> to vector<2x32xf32>
    %988 = arith.mulf %974, %987 : vector<2x32xf32>
    %989 = vector.broadcast %44 : vector<1x32xf32> to vector<2x32xf32>
    %990 = arith.addf %988, %989 : vector<2x32xf32>
    %cst_257 = arith.constant dense<0.000000e+00> : vector<2x32xf32>
    %991 = tpu.matmul %971, %51, %cst_257 {dimension_numbers = #tpu.dot_dimension_numbers<[1], [0], [0], [1], [0, 0, 1, 1], [], []>} : vector<2x32xf32>, vector<32x32xf32>, vector<2x32xf32> -> vector<2x32xf32>
    %992 = arith.addf %990, %991 : vector<2x32xf32>
    %993 = vector.broadcast %41 : vector<1x32xf32> to vector<2x32xf32>
    %994 = arith.mulf %974, %993 : vector<2x32xf32>
    %995 = vector.broadcast %45 : vector<1x32xf32> to vector<2x32xf32>
    %996 = arith.addf %994, %995 : vector<2x32xf32>
    %cst_258 = arith.constant dense<0.000000e+00> : vector<2x32xf32>
    %997 = tpu.matmul %971, %53, %cst_258 {dimension_numbers = #tpu.dot_dimension_numbers<[1], [0], [0], [1], [0, 0, 1, 1], [], []>} : vector<2x32xf32>, vector<32x32xf32>, vector<2x32xf32> -> vector<2x32xf32>
    %998 = arith.addf %996, %997 : vector<2x32xf32>
    %cst_259 = arith.constant 5.000000e-01 : f32
    %999 = vector.broadcast %cst_259 : f32 to vector<2x32xf32>
    %1000 = arith.mulf %999, %980 : vector<2x32xf32>
    %1001 = math.tanh %1000 : vector<2x32xf32>
    %cst_260 = arith.constant 5.000000e-01 : f32
    %1002 = vector.broadcast %cst_260 : f32 to vector<2x32xf32>
    %1003 = arith.mulf %1002, %1001 : vector<2x32xf32>
    %cst_261 = arith.constant 5.000000e-01 : f32
    %1004 = vector.broadcast %cst_261 : f32 to vector<2x32xf32>
    %1005 = arith.addf %1003, %1004 : vector<2x32xf32>
    %cst_262 = arith.constant 5.000000e-01 : f32
    %1006 = vector.broadcast %cst_262 : f32 to vector<2x32xf32>
    %1007 = arith.mulf %1006, %986 : vector<2x32xf32>
    %1008 = math.tanh %1007 : vector<2x32xf32>
    %cst_263 = arith.constant 5.000000e-01 : f32
    %1009 = vector.broadcast %cst_263 : f32 to vector<2x32xf32>
    %1010 = arith.mulf %1009, %1008 : vector<2x32xf32>
    %cst_264 = arith.constant 5.000000e-01 : f32
    %1011 = vector.broadcast %cst_264 : f32 to vector<2x32xf32>
    %1012 = arith.addf %1010, %1011 : vector<2x32xf32>
    %1013 = math.tanh %992 : vector<2x32xf32>
    %cst_265 = arith.constant 5.000000e-01 : f32
    %1014 = vector.broadcast %cst_265 : f32 to vector<2x32xf32>
    %1015 = arith.mulf %1014, %998 : vector<2x32xf32>
    %1016 = math.tanh %1015 : vector<2x32xf32>
    %cst_266 = arith.constant 5.000000e-01 : f32
    %1017 = vector.broadcast %cst_266 : f32 to vector<2x32xf32>
    %1018 = arith.mulf %1017, %1016 : vector<2x32xf32>
    %cst_267 = arith.constant 5.000000e-01 : f32
    %1019 = vector.broadcast %cst_267 : f32 to vector<2x32xf32>
    %1020 = arith.addf %1018, %1019 : vector<2x32xf32>
    %1021 = arith.mulf %1012, %969 : vector<2x32xf32>
    %1022 = arith.mulf %1005, %1013 : vector<2x32xf32>
    %1023 = arith.addf %1021, %1022 : vector<2x32xf32>
    %1024 = math.tanh %1023 : vector<2x32xf32>
    %1025 = arith.mulf %1020, %1024 : vector<2x32xf32>
    %1026 = vector.extract_strided_slice %35 {offsets = [0, 18], sizes = [2, 1], strides = [1, 1]} : vector<2x32xf32> to vector<2x1xf32>
    %1027 = vector.shape_cast %1026 : vector<2x1xf32> to vector<2x1xf32>
    %1028 = vector.broadcast %1027 : vector<2x1xf32> to vector<2x32xf32>
    %1029 = vector.broadcast %38 : vector<1x32xf32> to vector<2x32xf32>
    %1030 = arith.mulf %1028, %1029 : vector<2x32xf32>
    %1031 = vector.broadcast %42 : vector<1x32xf32> to vector<2x32xf32>
    %1032 = arith.addf %1030, %1031 : vector<2x32xf32>
    %cst_268 = arith.constant dense<0.000000e+00> : vector<2x32xf32>
    %1033 = tpu.matmul %1025, %47, %cst_268 {dimension_numbers = #tpu.dot_dimension_numbers<[1], [0], [0], [1], [0, 0, 1, 1], [], []>} : vector<2x32xf32>, vector<32x32xf32>, vector<2x32xf32> -> vector<2x32xf32>
    %1034 = arith.addf %1032, %1033 : vector<2x32xf32>
    %1035 = vector.broadcast %39 : vector<1x32xf32> to vector<2x32xf32>
    %1036 = arith.mulf %1028, %1035 : vector<2x32xf32>
    %1037 = vector.broadcast %43 : vector<1x32xf32> to vector<2x32xf32>
    %1038 = arith.addf %1036, %1037 : vector<2x32xf32>
    %cst_269 = arith.constant dense<0.000000e+00> : vector<2x32xf32>
    %1039 = tpu.matmul %1025, %49, %cst_269 {dimension_numbers = #tpu.dot_dimension_numbers<[1], [0], [0], [1], [0, 0, 1, 1], [], []>} : vector<2x32xf32>, vector<32x32xf32>, vector<2x32xf32> -> vector<2x32xf32>
    %1040 = arith.addf %1038, %1039 : vector<2x32xf32>
    %1041 = vector.broadcast %40 : vector<1x32xf32> to vector<2x32xf32>
    %1042 = arith.mulf %1028, %1041 : vector<2x32xf32>
    %1043 = vector.broadcast %44 : vector<1x32xf32> to vector<2x32xf32>
    %1044 = arith.addf %1042, %1043 : vector<2x32xf32>
    %cst_270 = arith.constant dense<0.000000e+00> : vector<2x32xf32>
    %1045 = tpu.matmul %1025, %51, %cst_270 {dimension_numbers = #tpu.dot_dimension_numbers<[1], [0], [0], [1], [0, 0, 1, 1], [], []>} : vector<2x32xf32>, vector<32x32xf32>, vector<2x32xf32> -> vector<2x32xf32>
    %1046 = arith.addf %1044, %1045 : vector<2x32xf32>
    %1047 = vector.broadcast %41 : vector<1x32xf32> to vector<2x32xf32>
    %1048 = arith.mulf %1028, %1047 : vector<2x32xf32>
    %1049 = vector.broadcast %45 : vector<1x32xf32> to vector<2x32xf32>
    %1050 = arith.addf %1048, %1049 : vector<2x32xf32>
    %cst_271 = arith.constant dense<0.000000e+00> : vector<2x32xf32>
    %1051 = tpu.matmul %1025, %53, %cst_271 {dimension_numbers = #tpu.dot_dimension_numbers<[1], [0], [0], [1], [0, 0, 1, 1], [], []>} : vector<2x32xf32>, vector<32x32xf32>, vector<2x32xf32> -> vector<2x32xf32>
    %1052 = arith.addf %1050, %1051 : vector<2x32xf32>
    %cst_272 = arith.constant 5.000000e-01 : f32
    %1053 = vector.broadcast %cst_272 : f32 to vector<2x32xf32>
    %1054 = arith.mulf %1053, %1034 : vector<2x32xf32>
    %1055 = math.tanh %1054 : vector<2x32xf32>
    %cst_273 = arith.constant 5.000000e-01 : f32
    %1056 = vector.broadcast %cst_273 : f32 to vector<2x32xf32>
    %1057 = arith.mulf %1056, %1055 : vector<2x32xf32>
    %cst_274 = arith.constant 5.000000e-01 : f32
    %1058 = vector.broadcast %cst_274 : f32 to vector<2x32xf32>
    %1059 = arith.addf %1057, %1058 : vector<2x32xf32>
    %cst_275 = arith.constant 5.000000e-01 : f32
    %1060 = vector.broadcast %cst_275 : f32 to vector<2x32xf32>
    %1061 = arith.mulf %1060, %1040 : vector<2x32xf32>
    %1062 = math.tanh %1061 : vector<2x32xf32>
    %cst_276 = arith.constant 5.000000e-01 : f32
    %1063 = vector.broadcast %cst_276 : f32 to vector<2x32xf32>
    %1064 = arith.mulf %1063, %1062 : vector<2x32xf32>
    %cst_277 = arith.constant 5.000000e-01 : f32
    %1065 = vector.broadcast %cst_277 : f32 to vector<2x32xf32>
    %1066 = arith.addf %1064, %1065 : vector<2x32xf32>
    %1067 = math.tanh %1046 : vector<2x32xf32>
    %cst_278 = arith.constant 5.000000e-01 : f32
    %1068 = vector.broadcast %cst_278 : f32 to vector<2x32xf32>
    %1069 = arith.mulf %1068, %1052 : vector<2x32xf32>
    %1070 = math.tanh %1069 : vector<2x32xf32>
    %cst_279 = arith.constant 5.000000e-01 : f32
    %1071 = vector.broadcast %cst_279 : f32 to vector<2x32xf32>
    %1072 = arith.mulf %1071, %1070 : vector<2x32xf32>
    %cst_280 = arith.constant 5.000000e-01 : f32
    %1073 = vector.broadcast %cst_280 : f32 to vector<2x32xf32>
    %1074 = arith.addf %1072, %1073 : vector<2x32xf32>
    %1075 = arith.mulf %1066, %1023 : vector<2x32xf32>
    %1076 = arith.mulf %1059, %1067 : vector<2x32xf32>
    %1077 = arith.addf %1075, %1076 : vector<2x32xf32>
    %1078 = math.tanh %1077 : vector<2x32xf32>
    %1079 = arith.mulf %1074, %1078 : vector<2x32xf32>
    %1080 = vector.extract_strided_slice %35 {offsets = [0, 19], sizes = [2, 1], strides = [1, 1]} : vector<2x32xf32> to vector<2x1xf32>
    %1081 = vector.shape_cast %1080 : vector<2x1xf32> to vector<2x1xf32>
    %1082 = vector.broadcast %1081 : vector<2x1xf32> to vector<2x32xf32>
    %1083 = vector.broadcast %38 : vector<1x32xf32> to vector<2x32xf32>
    %1084 = arith.mulf %1082, %1083 : vector<2x32xf32>
    %1085 = vector.broadcast %42 : vector<1x32xf32> to vector<2x32xf32>
    %1086 = arith.addf %1084, %1085 : vector<2x32xf32>
    %cst_281 = arith.constant dense<0.000000e+00> : vector<2x32xf32>
    %1087 = tpu.matmul %1079, %47, %cst_281 {dimension_numbers = #tpu.dot_dimension_numbers<[1], [0], [0], [1], [0, 0, 1, 1], [], []>} : vector<2x32xf32>, vector<32x32xf32>, vector<2x32xf32> -> vector<2x32xf32>
    %1088 = arith.addf %1086, %1087 : vector<2x32xf32>
    %1089 = vector.broadcast %39 : vector<1x32xf32> to vector<2x32xf32>
    %1090 = arith.mulf %1082, %1089 : vector<2x32xf32>
    %1091 = vector.broadcast %43 : vector<1x32xf32> to vector<2x32xf32>
    %1092 = arith.addf %1090, %1091 : vector<2x32xf32>
    %cst_282 = arith.constant dense<0.000000e+00> : vector<2x32xf32>
    %1093 = tpu.matmul %1079, %49, %cst_282 {dimension_numbers = #tpu.dot_dimension_numbers<[1], [0], [0], [1], [0, 0, 1, 1], [], []>} : vector<2x32xf32>, vector<32x32xf32>, vector<2x32xf32> -> vector<2x32xf32>
    %1094 = arith.addf %1092, %1093 : vector<2x32xf32>
    %1095 = vector.broadcast %40 : vector<1x32xf32> to vector<2x32xf32>
    %1096 = arith.mulf %1082, %1095 : vector<2x32xf32>
    %1097 = vector.broadcast %44 : vector<1x32xf32> to vector<2x32xf32>
    %1098 = arith.addf %1096, %1097 : vector<2x32xf32>
    %cst_283 = arith.constant dense<0.000000e+00> : vector<2x32xf32>
    %1099 = tpu.matmul %1079, %51, %cst_283 {dimension_numbers = #tpu.dot_dimension_numbers<[1], [0], [0], [1], [0, 0, 1, 1], [], []>} : vector<2x32xf32>, vector<32x32xf32>, vector<2x32xf32> -> vector<2x32xf32>
    %1100 = arith.addf %1098, %1099 : vector<2x32xf32>
    %1101 = vector.broadcast %41 : vector<1x32xf32> to vector<2x32xf32>
    %1102 = arith.mulf %1082, %1101 : vector<2x32xf32>
    %1103 = vector.broadcast %45 : vector<1x32xf32> to vector<2x32xf32>
    %1104 = arith.addf %1102, %1103 : vector<2x32xf32>
    %cst_284 = arith.constant dense<0.000000e+00> : vector<2x32xf32>
    %1105 = tpu.matmul %1079, %53, %cst_284 {dimension_numbers = #tpu.dot_dimension_numbers<[1], [0], [0], [1], [0, 0, 1, 1], [], []>} : vector<2x32xf32>, vector<32x32xf32>, vector<2x32xf32> -> vector<2x32xf32>
    %1106 = arith.addf %1104, %1105 : vector<2x32xf32>
    %cst_285 = arith.constant 5.000000e-01 : f32
    %1107 = vector.broadcast %cst_285 : f32 to vector<2x32xf32>
    %1108 = arith.mulf %1107, %1088 : vector<2x32xf32>
    %1109 = math.tanh %1108 : vector<2x32xf32>
    %cst_286 = arith.constant 5.000000e-01 : f32
    %1110 = vector.broadcast %cst_286 : f32 to vector<2x32xf32>
    %1111 = arith.mulf %1110, %1109 : vector<2x32xf32>
    %cst_287 = arith.constant 5.000000e-01 : f32
    %1112 = vector.broadcast %cst_287 : f32 to vector<2x32xf32>
    %1113 = arith.addf %1111, %1112 : vector<2x32xf32>
    %cst_288 = arith.constant 5.000000e-01 : f32
    %1114 = vector.broadcast %cst_288 : f32 to vector<2x32xf32>
    %1115 = arith.mulf %1114, %1094 : vector<2x32xf32>
    %1116 = math.tanh %1115 : vector<2x32xf32>
    %cst_289 = arith.constant 5.000000e-01 : f32
    %1117 = vector.broadcast %cst_289 : f32 to vector<2x32xf32>
    %1118 = arith.mulf %1117, %1116 : vector<2x32xf32>
    %cst_290 = arith.constant 5.000000e-01 : f32
    %1119 = vector.broadcast %cst_290 : f32 to vector<2x32xf32>
    %1120 = arith.addf %1118, %1119 : vector<2x32xf32>
    %1121 = math.tanh %1100 : vector<2x32xf32>
    %cst_291 = arith.constant 5.000000e-01 : f32
    %1122 = vector.broadcast %cst_291 : f32 to vector<2x32xf32>
    %1123 = arith.mulf %1122, %1106 : vector<2x32xf32>
    %1124 = math.tanh %1123 : vector<2x32xf32>
    %cst_292 = arith.constant 5.000000e-01 : f32
    %1125 = vector.broadcast %cst_292 : f32 to vector<2x32xf32>
    %1126 = arith.mulf %1125, %1124 : vector<2x32xf32>
    %cst_293 = arith.constant 5.000000e-01 : f32
    %1127 = vector.broadcast %cst_293 : f32 to vector<2x32xf32>
    %1128 = arith.addf %1126, %1127 : vector<2x32xf32>
    %1129 = arith.mulf %1120, %1077 : vector<2x32xf32>
    %1130 = arith.mulf %1113, %1121 : vector<2x32xf32>
    %1131 = arith.addf %1129, %1130 : vector<2x32xf32>
    %1132 = math.tanh %1131 : vector<2x32xf32>
    %1133 = arith.mulf %1128, %1132 : vector<2x32xf32>
    %1134 = vector.extract_strided_slice %35 {offsets = [0, 20], sizes = [2, 1], strides = [1, 1]} : vector<2x32xf32> to vector<2x1xf32>
    %1135 = vector.shape_cast %1134 : vector<2x1xf32> to vector<2x1xf32>
    %1136 = vector.broadcast %1135 : vector<2x1xf32> to vector<2x32xf32>
    %1137 = vector.broadcast %38 : vector<1x32xf32> to vector<2x32xf32>
    %1138 = arith.mulf %1136, %1137 : vector<2x32xf32>
    %1139 = vector.broadcast %42 : vector<1x32xf32> to vector<2x32xf32>
    %1140 = arith.addf %1138, %1139 : vector<2x32xf32>
    %cst_294 = arith.constant dense<0.000000e+00> : vector<2x32xf32>
    %1141 = tpu.matmul %1133, %47, %cst_294 {dimension_numbers = #tpu.dot_dimension_numbers<[1], [0], [0], [1], [0, 0, 1, 1], [], []>} : vector<2x32xf32>, vector<32x32xf32>, vector<2x32xf32> -> vector<2x32xf32>
    %1142 = arith.addf %1140, %1141 : vector<2x32xf32>
    %1143 = vector.broadcast %39 : vector<1x32xf32> to vector<2x32xf32>
    %1144 = arith.mulf %1136, %1143 : vector<2x32xf32>
    %1145 = vector.broadcast %43 : vector<1x32xf32> to vector<2x32xf32>
    %1146 = arith.addf %1144, %1145 : vector<2x32xf32>
    %cst_295 = arith.constant dense<0.000000e+00> : vector<2x32xf32>
    %1147 = tpu.matmul %1133, %49, %cst_295 {dimension_numbers = #tpu.dot_dimension_numbers<[1], [0], [0], [1], [0, 0, 1, 1], [], []>} : vector<2x32xf32>, vector<32x32xf32>, vector<2x32xf32> -> vector<2x32xf32>
    %1148 = arith.addf %1146, %1147 : vector<2x32xf32>
    %1149 = vector.broadcast %40 : vector<1x32xf32> to vector<2x32xf32>
    %1150 = arith.mulf %1136, %1149 : vector<2x32xf32>
    %1151 = vector.broadcast %44 : vector<1x32xf32> to vector<2x32xf32>
    %1152 = arith.addf %1150, %1151 : vector<2x32xf32>
    %cst_296 = arith.constant dense<0.000000e+00> : vector<2x32xf32>
    %1153 = tpu.matmul %1133, %51, %cst_296 {dimension_numbers = #tpu.dot_dimension_numbers<[1], [0], [0], [1], [0, 0, 1, 1], [], []>} : vector<2x32xf32>, vector<32x32xf32>, vector<2x32xf32> -> vector<2x32xf32>
    %1154 = arith.addf %1152, %1153 : vector<2x32xf32>
    %1155 = vector.broadcast %41 : vector<1x32xf32> to vector<2x32xf32>
    %1156 = arith.mulf %1136, %1155 : vector<2x32xf32>
    %1157 = vector.broadcast %45 : vector<1x32xf32> to vector<2x32xf32>
    %1158 = arith.addf %1156, %1157 : vector<2x32xf32>
    %cst_297 = arith.constant dense<0.000000e+00> : vector<2x32xf32>
    %1159 = tpu.matmul %1133, %53, %cst_297 {dimension_numbers = #tpu.dot_dimension_numbers<[1], [0], [0], [1], [0, 0, 1, 1], [], []>} : vector<2x32xf32>, vector<32x32xf32>, vector<2x32xf32> -> vector<2x32xf32>
    %1160 = arith.addf %1158, %1159 : vector<2x32xf32>
    %cst_298 = arith.constant 5.000000e-01 : f32
    %1161 = vector.broadcast %cst_298 : f32 to vector<2x32xf32>
    %1162 = arith.mulf %1161, %1142 : vector<2x32xf32>
    %1163 = math.tanh %1162 : vector<2x32xf32>
    %cst_299 = arith.constant 5.000000e-01 : f32
    %1164 = vector.broadcast %cst_299 : f32 to vector<2x32xf32>
    %1165 = arith.mulf %1164, %1163 : vector<2x32xf32>
    %cst_300 = arith.constant 5.000000e-01 : f32
    %1166 = vector.broadcast %cst_300 : f32 to vector<2x32xf32>
    %1167 = arith.addf %1165, %1166 : vector<2x32xf32>
    %cst_301 = arith.constant 5.000000e-01 : f32
    %1168 = vector.broadcast %cst_301 : f32 to vector<2x32xf32>
    %1169 = arith.mulf %1168, %1148 : vector<2x32xf32>
    %1170 = math.tanh %1169 : vector<2x32xf32>
    %cst_302 = arith.constant 5.000000e-01 : f32
    %1171 = vector.broadcast %cst_302 : f32 to vector<2x32xf32>
    %1172 = arith.mulf %1171, %1170 : vector<2x32xf32>
    %cst_303 = arith.constant 5.000000e-01 : f32
    %1173 = vector.broadcast %cst_303 : f32 to vector<2x32xf32>
    %1174 = arith.addf %1172, %1173 : vector<2x32xf32>
    %1175 = math.tanh %1154 : vector<2x32xf32>
    %cst_304 = arith.constant 5.000000e-01 : f32
    %1176 = vector.broadcast %cst_304 : f32 to vector<2x32xf32>
    %1177 = arith.mulf %1176, %1160 : vector<2x32xf32>
    %1178 = math.tanh %1177 : vector<2x32xf32>
    %cst_305 = arith.constant 5.000000e-01 : f32
    %1179 = vector.broadcast %cst_305 : f32 to vector<2x32xf32>
    %1180 = arith.mulf %1179, %1178 : vector<2x32xf32>
    %cst_306 = arith.constant 5.000000e-01 : f32
    %1181 = vector.broadcast %cst_306 : f32 to vector<2x32xf32>
    %1182 = arith.addf %1180, %1181 : vector<2x32xf32>
    %1183 = arith.mulf %1174, %1131 : vector<2x32xf32>
    %1184 = arith.mulf %1167, %1175 : vector<2x32xf32>
    %1185 = arith.addf %1183, %1184 : vector<2x32xf32>
    %1186 = math.tanh %1185 : vector<2x32xf32>
    %1187 = arith.mulf %1182, %1186 : vector<2x32xf32>
    %1188 = vector.extract_strided_slice %35 {offsets = [0, 21], sizes = [2, 1], strides = [1, 1]} : vector<2x32xf32> to vector<2x1xf32>
    %1189 = vector.shape_cast %1188 : vector<2x1xf32> to vector<2x1xf32>
    %1190 = vector.broadcast %1189 : vector<2x1xf32> to vector<2x32xf32>
    %1191 = vector.broadcast %38 : vector<1x32xf32> to vector<2x32xf32>
    %1192 = arith.mulf %1190, %1191 : vector<2x32xf32>
    %1193 = vector.broadcast %42 : vector<1x32xf32> to vector<2x32xf32>
    %1194 = arith.addf %1192, %1193 : vector<2x32xf32>
    %cst_307 = arith.constant dense<0.000000e+00> : vector<2x32xf32>
    %1195 = tpu.matmul %1187, %47, %cst_307 {dimension_numbers = #tpu.dot_dimension_numbers<[1], [0], [0], [1], [0, 0, 1, 1], [], []>} : vector<2x32xf32>, vector<32x32xf32>, vector<2x32xf32> -> vector<2x32xf32>
    %1196 = arith.addf %1194, %1195 : vector<2x32xf32>
    %1197 = vector.broadcast %39 : vector<1x32xf32> to vector<2x32xf32>
    %1198 = arith.mulf %1190, %1197 : vector<2x32xf32>
    %1199 = vector.broadcast %43 : vector<1x32xf32> to vector<2x32xf32>
    %1200 = arith.addf %1198, %1199 : vector<2x32xf32>
    %cst_308 = arith.constant dense<0.000000e+00> : vector<2x32xf32>
    %1201 = tpu.matmul %1187, %49, %cst_308 {dimension_numbers = #tpu.dot_dimension_numbers<[1], [0], [0], [1], [0, 0, 1, 1], [], []>} : vector<2x32xf32>, vector<32x32xf32>, vector<2x32xf32> -> vector<2x32xf32>
    %1202 = arith.addf %1200, %1201 : vector<2x32xf32>
    %1203 = vector.broadcast %40 : vector<1x32xf32> to vector<2x32xf32>
    %1204 = arith.mulf %1190, %1203 : vector<2x32xf32>
    %1205 = vector.broadcast %44 : vector<1x32xf32> to vector<2x32xf32>
    %1206 = arith.addf %1204, %1205 : vector<2x32xf32>
    %cst_309 = arith.constant dense<0.000000e+00> : vector<2x32xf32>
    %1207 = tpu.matmul %1187, %51, %cst_309 {dimension_numbers = #tpu.dot_dimension_numbers<[1], [0], [0], [1], [0, 0, 1, 1], [], []>} : vector<2x32xf32>, vector<32x32xf32>, vector<2x32xf32> -> vector<2x32xf32>
    %1208 = arith.addf %1206, %1207 : vector<2x32xf32>
    %1209 = vector.broadcast %41 : vector<1x32xf32> to vector<2x32xf32>
    %1210 = arith.mulf %1190, %1209 : vector<2x32xf32>
    %1211 = vector.broadcast %45 : vector<1x32xf32> to vector<2x32xf32>
    %1212 = arith.addf %1210, %1211 : vector<2x32xf32>
    %cst_310 = arith.constant dense<0.000000e+00> : vector<2x32xf32>
    %1213 = tpu.matmul %1187, %53, %cst_310 {dimension_numbers = #tpu.dot_dimension_numbers<[1], [0], [0], [1], [0, 0, 1, 1], [], []>} : vector<2x32xf32>, vector<32x32xf32>, vector<2x32xf32> -> vector<2x32xf32>
    %1214 = arith.addf %1212, %1213 : vector<2x32xf32>
    %cst_311 = arith.constant 5.000000e-01 : f32
    %1215 = vector.broadcast %cst_311 : f32 to vector<2x32xf32>
    %1216 = arith.mulf %1215, %1196 : vector<2x32xf32>
    %1217 = math.tanh %1216 : vector<2x32xf32>
    %cst_312 = arith.constant 5.000000e-01 : f32
    %1218 = vector.broadcast %cst_312 : f32 to vector<2x32xf32>
    %1219 = arith.mulf %1218, %1217 : vector<2x32xf32>
    %cst_313 = arith.constant 5.000000e-01 : f32
    %1220 = vector.broadcast %cst_313 : f32 to vector<2x32xf32>
    %1221 = arith.addf %1219, %1220 : vector<2x32xf32>
    %cst_314 = arith.constant 5.000000e-01 : f32
    %1222 = vector.broadcast %cst_314 : f32 to vector<2x32xf32>
    %1223 = arith.mulf %1222, %1202 : vector<2x32xf32>
    %1224 = math.tanh %1223 : vector<2x32xf32>
    %cst_315 = arith.constant 5.000000e-01 : f32
    %1225 = vector.broadcast %cst_315 : f32 to vector<2x32xf32>
    %1226 = arith.mulf %1225, %1224 : vector<2x32xf32>
    %cst_316 = arith.constant 5.000000e-01 : f32
    %1227 = vector.broadcast %cst_316 : f32 to vector<2x32xf32>
    %1228 = arith.addf %1226, %1227 : vector<2x32xf32>
    %1229 = math.tanh %1208 : vector<2x32xf32>
    %cst_317 = arith.constant 5.000000e-01 : f32
    %1230 = vector.broadcast %cst_317 : f32 to vector<2x32xf32>
    %1231 = arith.mulf %1230, %1214 : vector<2x32xf32>
    %1232 = math.tanh %1231 : vector<2x32xf32>
    %cst_318 = arith.constant 5.000000e-01 : f32
    %1233 = vector.broadcast %cst_318 : f32 to vector<2x32xf32>
    %1234 = arith.mulf %1233, %1232 : vector<2x32xf32>
    %cst_319 = arith.constant 5.000000e-01 : f32
    %1235 = vector.broadcast %cst_319 : f32 to vector<2x32xf32>
    %1236 = arith.addf %1234, %1235 : vector<2x32xf32>
    %1237 = arith.mulf %1228, %1185 : vector<2x32xf32>
    %1238 = arith.mulf %1221, %1229 : vector<2x32xf32>
    %1239 = arith.addf %1237, %1238 : vector<2x32xf32>
    %1240 = math.tanh %1239 : vector<2x32xf32>
    %1241 = arith.mulf %1236, %1240 : vector<2x32xf32>
    %1242 = vector.extract_strided_slice %35 {offsets = [0, 22], sizes = [2, 1], strides = [1, 1]} : vector<2x32xf32> to vector<2x1xf32>
    %1243 = vector.shape_cast %1242 : vector<2x1xf32> to vector<2x1xf32>
    %1244 = vector.broadcast %1243 : vector<2x1xf32> to vector<2x32xf32>
    %1245 = vector.broadcast %38 : vector<1x32xf32> to vector<2x32xf32>
    %1246 = arith.mulf %1244, %1245 : vector<2x32xf32>
    %1247 = vector.broadcast %42 : vector<1x32xf32> to vector<2x32xf32>
    %1248 = arith.addf %1246, %1247 : vector<2x32xf32>
    %cst_320 = arith.constant dense<0.000000e+00> : vector<2x32xf32>
    %1249 = tpu.matmul %1241, %47, %cst_320 {dimension_numbers = #tpu.dot_dimension_numbers<[1], [0], [0], [1], [0, 0, 1, 1], [], []>} : vector<2x32xf32>, vector<32x32xf32>, vector<2x32xf32> -> vector<2x32xf32>
    %1250 = arith.addf %1248, %1249 : vector<2x32xf32>
    %1251 = vector.broadcast %39 : vector<1x32xf32> to vector<2x32xf32>
    %1252 = arith.mulf %1244, %1251 : vector<2x32xf32>
    %1253 = vector.broadcast %43 : vector<1x32xf32> to vector<2x32xf32>
    %1254 = arith.addf %1252, %1253 : vector<2x32xf32>
    %cst_321 = arith.constant dense<0.000000e+00> : vector<2x32xf32>
    %1255 = tpu.matmul %1241, %49, %cst_321 {dimension_numbers = #tpu.dot_dimension_numbers<[1], [0], [0], [1], [0, 0, 1, 1], [], []>} : vector<2x32xf32>, vector<32x32xf32>, vector<2x32xf32> -> vector<2x32xf32>
    %1256 = arith.addf %1254, %1255 : vector<2x32xf32>
    %1257 = vector.broadcast %40 : vector<1x32xf32> to vector<2x32xf32>
    %1258 = arith.mulf %1244, %1257 : vector<2x32xf32>
    %1259 = vector.broadcast %44 : vector<1x32xf32> to vector<2x32xf32>
    %1260 = arith.addf %1258, %1259 : vector<2x32xf32>
    %cst_322 = arith.constant dense<0.000000e+00> : vector<2x32xf32>
    %1261 = tpu.matmul %1241, %51, %cst_322 {dimension_numbers = #tpu.dot_dimension_numbers<[1], [0], [0], [1], [0, 0, 1, 1], [], []>} : vector<2x32xf32>, vector<32x32xf32>, vector<2x32xf32> -> vector<2x32xf32>
    %1262 = arith.addf %1260, %1261 : vector<2x32xf32>
    %1263 = vector.broadcast %41 : vector<1x32xf32> to vector<2x32xf32>
    %1264 = arith.mulf %1244, %1263 : vector<2x32xf32>
    %1265 = vector.broadcast %45 : vector<1x32xf32> to vector<2x32xf32>
    %1266 = arith.addf %1264, %1265 : vector<2x32xf32>
    %cst_323 = arith.constant dense<0.000000e+00> : vector<2x32xf32>
    %1267 = tpu.matmul %1241, %53, %cst_323 {dimension_numbers = #tpu.dot_dimension_numbers<[1], [0], [0], [1], [0, 0, 1, 1], [], []>} : vector<2x32xf32>, vector<32x32xf32>, vector<2x32xf32> -> vector<2x32xf32>
    %1268 = arith.addf %1266, %1267 : vector<2x32xf32>
    %cst_324 = arith.constant 5.000000e-01 : f32
    %1269 = vector.broadcast %cst_324 : f32 to vector<2x32xf32>
    %1270 = arith.mulf %1269, %1250 : vector<2x32xf32>
    %1271 = math.tanh %1270 : vector<2x32xf32>
    %cst_325 = arith.constant 5.000000e-01 : f32
    %1272 = vector.broadcast %cst_325 : f32 to vector<2x32xf32>
    %1273 = arith.mulf %1272, %1271 : vector<2x32xf32>
    %cst_326 = arith.constant 5.000000e-01 : f32
    %1274 = vector.broadcast %cst_326 : f32 to vector<2x32xf32>
    %1275 = arith.addf %1273, %1274 : vector<2x32xf32>
    %cst_327 = arith.constant 5.000000e-01 : f32
    %1276 = vector.broadcast %cst_327 : f32 to vector<2x32xf32>
    %1277 = arith.mulf %1276, %1256 : vector<2x32xf32>
    %1278 = math.tanh %1277 : vector<2x32xf32>
    %cst_328 = arith.constant 5.000000e-01 : f32
    %1279 = vector.broadcast %cst_328 : f32 to vector<2x32xf32>
    %1280 = arith.mulf %1279, %1278 : vector<2x32xf32>
    %cst_329 = arith.constant 5.000000e-01 : f32
    %1281 = vector.broadcast %cst_329 : f32 to vector<2x32xf32>
    %1282 = arith.addf %1280, %1281 : vector<2x32xf32>
    %1283 = math.tanh %1262 : vector<2x32xf32>
    %cst_330 = arith.constant 5.000000e-01 : f32
    %1284 = vector.broadcast %cst_330 : f32 to vector<2x32xf32>
    %1285 = arith.mulf %1284, %1268 : vector<2x32xf32>
    %1286 = math.tanh %1285 : vector<2x32xf32>
    %cst_331 = arith.constant 5.000000e-01 : f32
    %1287 = vector.broadcast %cst_331 : f32 to vector<2x32xf32>
    %1288 = arith.mulf %1287, %1286 : vector<2x32xf32>
    %cst_332 = arith.constant 5.000000e-01 : f32
    %1289 = vector.broadcast %cst_332 : f32 to vector<2x32xf32>
    %1290 = arith.addf %1288, %1289 : vector<2x32xf32>
    %1291 = arith.mulf %1282, %1239 : vector<2x32xf32>
    %1292 = arith.mulf %1275, %1283 : vector<2x32xf32>
    %1293 = arith.addf %1291, %1292 : vector<2x32xf32>
    %1294 = math.tanh %1293 : vector<2x32xf32>
    %1295 = arith.mulf %1290, %1294 : vector<2x32xf32>
    %1296 = vector.extract_strided_slice %35 {offsets = [0, 23], sizes = [2, 1], strides = [1, 1]} : vector<2x32xf32> to vector<2x1xf32>
    %1297 = vector.shape_cast %1296 : vector<2x1xf32> to vector<2x1xf32>
    %1298 = vector.broadcast %1297 : vector<2x1xf32> to vector<2x32xf32>
    %1299 = vector.broadcast %38 : vector<1x32xf32> to vector<2x32xf32>
    %1300 = arith.mulf %1298, %1299 : vector<2x32xf32>
    %1301 = vector.broadcast %42 : vector<1x32xf32> to vector<2x32xf32>
    %1302 = arith.addf %1300, %1301 : vector<2x32xf32>
    %cst_333 = arith.constant dense<0.000000e+00> : vector<2x32xf32>
    %1303 = tpu.matmul %1295, %47, %cst_333 {dimension_numbers = #tpu.dot_dimension_numbers<[1], [0], [0], [1], [0, 0, 1, 1], [], []>} : vector<2x32xf32>, vector<32x32xf32>, vector<2x32xf32> -> vector<2x32xf32>
    %1304 = arith.addf %1302, %1303 : vector<2x32xf32>
    %1305 = vector.broadcast %39 : vector<1x32xf32> to vector<2x32xf32>
    %1306 = arith.mulf %1298, %1305 : vector<2x32xf32>
    %1307 = vector.broadcast %43 : vector<1x32xf32> to vector<2x32xf32>
    %1308 = arith.addf %1306, %1307 : vector<2x32xf32>
    %cst_334 = arith.constant dense<0.000000e+00> : vector<2x32xf32>
    %1309 = tpu.matmul %1295, %49, %cst_334 {dimension_numbers = #tpu.dot_dimension_numbers<[1], [0], [0], [1], [0, 0, 1, 1], [], []>} : vector<2x32xf32>, vector<32x32xf32>, vector<2x32xf32> -> vector<2x32xf32>
    %1310 = arith.addf %1308, %1309 : vector<2x32xf32>
    %1311 = vector.broadcast %40 : vector<1x32xf32> to vector<2x32xf32>
    %1312 = arith.mulf %1298, %1311 : vector<2x32xf32>
    %1313 = vector.broadcast %44 : vector<1x32xf32> to vector<2x32xf32>
    %1314 = arith.addf %1312, %1313 : vector<2x32xf32>
    %cst_335 = arith.constant dense<0.000000e+00> : vector<2x32xf32>
    %1315 = tpu.matmul %1295, %51, %cst_335 {dimension_numbers = #tpu.dot_dimension_numbers<[1], [0], [0], [1], [0, 0, 1, 1], [], []>} : vector<2x32xf32>, vector<32x32xf32>, vector<2x32xf32> -> vector<2x32xf32>
    %1316 = arith.addf %1314, %1315 : vector<2x32xf32>
    %1317 = vector.broadcast %41 : vector<1x32xf32> to vector<2x32xf32>
    %1318 = arith.mulf %1298, %1317 : vector<2x32xf32>
    %1319 = vector.broadcast %45 : vector<1x32xf32> to vector<2x32xf32>
    %1320 = arith.addf %1318, %1319 : vector<2x32xf32>
    %cst_336 = arith.constant dense<0.000000e+00> : vector<2x32xf32>
    %1321 = tpu.matmul %1295, %53, %cst_336 {dimension_numbers = #tpu.dot_dimension_numbers<[1], [0], [0], [1], [0, 0, 1, 1], [], []>} : vector<2x32xf32>, vector<32x32xf32>, vector<2x32xf32> -> vector<2x32xf32>
    %1322 = arith.addf %1320, %1321 : vector<2x32xf32>
    %cst_337 = arith.constant 5.000000e-01 : f32
    %1323 = vector.broadcast %cst_337 : f32 to vector<2x32xf32>
    %1324 = arith.mulf %1323, %1304 : vector<2x32xf32>
    %1325 = math.tanh %1324 : vector<2x32xf32>
    %cst_338 = arith.constant 5.000000e-01 : f32
    %1326 = vector.broadcast %cst_338 : f32 to vector<2x32xf32>
    %1327 = arith.mulf %1326, %1325 : vector<2x32xf32>
    %cst_339 = arith.constant 5.000000e-01 : f32
    %1328 = vector.broadcast %cst_339 : f32 to vector<2x32xf32>
    %1329 = arith.addf %1327, %1328 : vector<2x32xf32>
    %cst_340 = arith.constant 5.000000e-01 : f32
    %1330 = vector.broadcast %cst_340 : f32 to vector<2x32xf32>
    %1331 = arith.mulf %1330, %1310 : vector<2x32xf32>
    %1332 = math.tanh %1331 : vector<2x32xf32>
    %cst_341 = arith.constant 5.000000e-01 : f32
    %1333 = vector.broadcast %cst_341 : f32 to vector<2x32xf32>
    %1334 = arith.mulf %1333, %1332 : vector<2x32xf32>
    %cst_342 = arith.constant 5.000000e-01 : f32
    %1335 = vector.broadcast %cst_342 : f32 to vector<2x32xf32>
    %1336 = arith.addf %1334, %1335 : vector<2x32xf32>
    %1337 = math.tanh %1316 : vector<2x32xf32>
    %cst_343 = arith.constant 5.000000e-01 : f32
    %1338 = vector.broadcast %cst_343 : f32 to vector<2x32xf32>
    %1339 = arith.mulf %1338, %1322 : vector<2x32xf32>
    %1340 = math.tanh %1339 : vector<2x32xf32>
    %cst_344 = arith.constant 5.000000e-01 : f32
    %1341 = vector.broadcast %cst_344 : f32 to vector<2x32xf32>
    %1342 = arith.mulf %1341, %1340 : vector<2x32xf32>
    %cst_345 = arith.constant 5.000000e-01 : f32
    %1343 = vector.broadcast %cst_345 : f32 to vector<2x32xf32>
    %1344 = arith.addf %1342, %1343 : vector<2x32xf32>
    %1345 = arith.mulf %1336, %1293 : vector<2x32xf32>
    %1346 = arith.mulf %1329, %1337 : vector<2x32xf32>
    %1347 = arith.addf %1345, %1346 : vector<2x32xf32>
    %1348 = math.tanh %1347 : vector<2x32xf32>
    %1349 = arith.mulf %1344, %1348 : vector<2x32xf32>
    %1350 = vector.extract_strided_slice %35 {offsets = [0, 24], sizes = [2, 1], strides = [1, 1]} : vector<2x32xf32> to vector<2x1xf32>
    %1351 = vector.shape_cast %1350 : vector<2x1xf32> to vector<2x1xf32>
    %1352 = vector.broadcast %1351 : vector<2x1xf32> to vector<2x32xf32>
    %1353 = vector.broadcast %38 : vector<1x32xf32> to vector<2x32xf32>
    %1354 = arith.mulf %1352, %1353 : vector<2x32xf32>
    %1355 = vector.broadcast %42 : vector<1x32xf32> to vector<2x32xf32>
    %1356 = arith.addf %1354, %1355 : vector<2x32xf32>
    %cst_346 = arith.constant dense<0.000000e+00> : vector<2x32xf32>
    %1357 = tpu.matmul %1349, %47, %cst_346 {dimension_numbers = #tpu.dot_dimension_numbers<[1], [0], [0], [1], [0, 0, 1, 1], [], []>} : vector<2x32xf32>, vector<32x32xf32>, vector<2x32xf32> -> vector<2x32xf32>
    %1358 = arith.addf %1356, %1357 : vector<2x32xf32>
    %1359 = vector.broadcast %39 : vector<1x32xf32> to vector<2x32xf32>
    %1360 = arith.mulf %1352, %1359 : vector<2x32xf32>
    %1361 = vector.broadcast %43 : vector<1x32xf32> to vector<2x32xf32>
    %1362 = arith.addf %1360, %1361 : vector<2x32xf32>
    %cst_347 = arith.constant dense<0.000000e+00> : vector<2x32xf32>
    %1363 = tpu.matmul %1349, %49, %cst_347 {dimension_numbers = #tpu.dot_dimension_numbers<[1], [0], [0], [1], [0, 0, 1, 1], [], []>} : vector<2x32xf32>, vector<32x32xf32>, vector<2x32xf32> -> vector<2x32xf32>
    %1364 = arith.addf %1362, %1363 : vector<2x32xf32>
    %1365 = vector.broadcast %40 : vector<1x32xf32> to vector<2x32xf32>
    %1366 = arith.mulf %1352, %1365 : vector<2x32xf32>
    %1367 = vector.broadcast %44 : vector<1x32xf32> to vector<2x32xf32>
    %1368 = arith.addf %1366, %1367 : vector<2x32xf32>
    %cst_348 = arith.constant dense<0.000000e+00> : vector<2x32xf32>
    %1369 = tpu.matmul %1349, %51, %cst_348 {dimension_numbers = #tpu.dot_dimension_numbers<[1], [0], [0], [1], [0, 0, 1, 1], [], []>} : vector<2x32xf32>, vector<32x32xf32>, vector<2x32xf32> -> vector<2x32xf32>
    %1370 = arith.addf %1368, %1369 : vector<2x32xf32>
    %1371 = vector.broadcast %41 : vector<1x32xf32> to vector<2x32xf32>
    %1372 = arith.mulf %1352, %1371 : vector<2x32xf32>
    %1373 = vector.broadcast %45 : vector<1x32xf32> to vector<2x32xf32>
    %1374 = arith.addf %1372, %1373 : vector<2x32xf32>
    %cst_349 = arith.constant dense<0.000000e+00> : vector<2x32xf32>
    %1375 = tpu.matmul %1349, %53, %cst_349 {dimension_numbers = #tpu.dot_dimension_numbers<[1], [0], [0], [1], [0, 0, 1, 1], [], []>} : vector<2x32xf32>, vector<32x32xf32>, vector<2x32xf32> -> vector<2x32xf32>
    %1376 = arith.addf %1374, %1375 : vector<2x32xf32>
    %cst_350 = arith.constant 5.000000e-01 : f32
    %1377 = vector.broadcast %cst_350 : f32 to vector<2x32xf32>
    %1378 = arith.mulf %1377, %1358 : vector<2x32xf32>
    %1379 = math.tanh %1378 : vector<2x32xf32>
    %cst_351 = arith.constant 5.000000e-01 : f32
    %1380 = vector.broadcast %cst_351 : f32 to vector<2x32xf32>
    %1381 = arith.mulf %1380, %1379 : vector<2x32xf32>
    %cst_352 = arith.constant 5.000000e-01 : f32
    %1382 = vector.broadcast %cst_352 : f32 to vector<2x32xf32>
    %1383 = arith.addf %1381, %1382 : vector<2x32xf32>
    %cst_353 = arith.constant 5.000000e-01 : f32
    %1384 = vector.broadcast %cst_353 : f32 to vector<2x32xf32>
    %1385 = arith.mulf %1384, %1364 : vector<2x32xf32>
    %1386 = math.tanh %1385 : vector<2x32xf32>
    %cst_354 = arith.constant 5.000000e-01 : f32
    %1387 = vector.broadcast %cst_354 : f32 to vector<2x32xf32>
    %1388 = arith.mulf %1387, %1386 : vector<2x32xf32>
    %cst_355 = arith.constant 5.000000e-01 : f32
    %1389 = vector.broadcast %cst_355 : f32 to vector<2x32xf32>
    %1390 = arith.addf %1388, %1389 : vector<2x32xf32>
    %1391 = math.tanh %1370 : vector<2x32xf32>
    %cst_356 = arith.constant 5.000000e-01 : f32
    %1392 = vector.broadcast %cst_356 : f32 to vector<2x32xf32>
    %1393 = arith.mulf %1392, %1376 : vector<2x32xf32>
    %1394 = math.tanh %1393 : vector<2x32xf32>
    %cst_357 = arith.constant 5.000000e-01 : f32
    %1395 = vector.broadcast %cst_357 : f32 to vector<2x32xf32>
    %1396 = arith.mulf %1395, %1394 : vector<2x32xf32>
    %cst_358 = arith.constant 5.000000e-01 : f32
    %1397 = vector.broadcast %cst_358 : f32 to vector<2x32xf32>
    %1398 = arith.addf %1396, %1397 : vector<2x32xf32>
    %1399 = arith.mulf %1390, %1347 : vector<2x32xf32>
    %1400 = arith.mulf %1383, %1391 : vector<2x32xf32>
    %1401 = arith.addf %1399, %1400 : vector<2x32xf32>
    %1402 = math.tanh %1401 : vector<2x32xf32>
    %1403 = arith.mulf %1398, %1402 : vector<2x32xf32>
    %1404 = vector.extract_strided_slice %35 {offsets = [0, 25], sizes = [2, 1], strides = [1, 1]} : vector<2x32xf32> to vector<2x1xf32>
    %1405 = vector.shape_cast %1404 : vector<2x1xf32> to vector<2x1xf32>
    %1406 = vector.broadcast %1405 : vector<2x1xf32> to vector<2x32xf32>
    %1407 = vector.broadcast %38 : vector<1x32xf32> to vector<2x32xf32>
    %1408 = arith.mulf %1406, %1407 : vector<2x32xf32>
    %1409 = vector.broadcast %42 : vector<1x32xf32> to vector<2x32xf32>
    %1410 = arith.addf %1408, %1409 : vector<2x32xf32>
    %cst_359 = arith.constant dense<0.000000e+00> : vector<2x32xf32>
    %1411 = tpu.matmul %1403, %47, %cst_359 {dimension_numbers = #tpu.dot_dimension_numbers<[1], [0], [0], [1], [0, 0, 1, 1], [], []>} : vector<2x32xf32>, vector<32x32xf32>, vector<2x32xf32> -> vector<2x32xf32>
    %1412 = arith.addf %1410, %1411 : vector<2x32xf32>
    %1413 = vector.broadcast %39 : vector<1x32xf32> to vector<2x32xf32>
    %1414 = arith.mulf %1406, %1413 : vector<2x32xf32>
    %1415 = vector.broadcast %43 : vector<1x32xf32> to vector<2x32xf32>
    %1416 = arith.addf %1414, %1415 : vector<2x32xf32>
    %cst_360 = arith.constant dense<0.000000e+00> : vector<2x32xf32>
    %1417 = tpu.matmul %1403, %49, %cst_360 {dimension_numbers = #tpu.dot_dimension_numbers<[1], [0], [0], [1], [0, 0, 1, 1], [], []>} : vector<2x32xf32>, vector<32x32xf32>, vector<2x32xf32> -> vector<2x32xf32>
    %1418 = arith.addf %1416, %1417 : vector<2x32xf32>
    %1419 = vector.broadcast %40 : vector<1x32xf32> to vector<2x32xf32>
    %1420 = arith.mulf %1406, %1419 : vector<2x32xf32>
    %1421 = vector.broadcast %44 : vector<1x32xf32> to vector<2x32xf32>
    %1422 = arith.addf %1420, %1421 : vector<2x32xf32>
    %cst_361 = arith.constant dense<0.000000e+00> : vector<2x32xf32>
    %1423 = tpu.matmul %1403, %51, %cst_361 {dimension_numbers = #tpu.dot_dimension_numbers<[1], [0], [0], [1], [0, 0, 1, 1], [], []>} : vector<2x32xf32>, vector<32x32xf32>, vector<2x32xf32> -> vector<2x32xf32>
    %1424 = arith.addf %1422, %1423 : vector<2x32xf32>
    %1425 = vector.broadcast %41 : vector<1x32xf32> to vector<2x32xf32>
    %1426 = arith.mulf %1406, %1425 : vector<2x32xf32>
    %1427 = vector.broadcast %45 : vector<1x32xf32> to vector<2x32xf32>
    %1428 = arith.addf %1426, %1427 : vector<2x32xf32>
    %cst_362 = arith.constant dense<0.000000e+00> : vector<2x32xf32>
    %1429 = tpu.matmul %1403, %53, %cst_362 {dimension_numbers = #tpu.dot_dimension_numbers<[1], [0], [0], [1], [0, 0, 1, 1], [], []>} : vector<2x32xf32>, vector<32x32xf32>, vector<2x32xf32> -> vector<2x32xf32>
    %1430 = arith.addf %1428, %1429 : vector<2x32xf32>
    %cst_363 = arith.constant 5.000000e-01 : f32
    %1431 = vector.broadcast %cst_363 : f32 to vector<2x32xf32>
    %1432 = arith.mulf %1431, %1412 : vector<2x32xf32>
    %1433 = math.tanh %1432 : vector<2x32xf32>
    %cst_364 = arith.constant 5.000000e-01 : f32
    %1434 = vector.broadcast %cst_364 : f32 to vector<2x32xf32>
    %1435 = arith.mulf %1434, %1433 : vector<2x32xf32>
    %cst_365 = arith.constant 5.000000e-01 : f32
    %1436 = vector.broadcast %cst_365 : f32 to vector<2x32xf32>
    %1437 = arith.addf %1435, %1436 : vector<2x32xf32>
    %cst_366 = arith.constant 5.000000e-01 : f32
    %1438 = vector.broadcast %cst_366 : f32 to vector<2x32xf32>
    %1439 = arith.mulf %1438, %1418 : vector<2x32xf32>
    %1440 = math.tanh %1439 : vector<2x32xf32>
    %cst_367 = arith.constant 5.000000e-01 : f32
    %1441 = vector.broadcast %cst_367 : f32 to vector<2x32xf32>
    %1442 = arith.mulf %1441, %1440 : vector<2x32xf32>
    %cst_368 = arith.constant 5.000000e-01 : f32
    %1443 = vector.broadcast %cst_368 : f32 to vector<2x32xf32>
    %1444 = arith.addf %1442, %1443 : vector<2x32xf32>
    %1445 = math.tanh %1424 : vector<2x32xf32>
    %cst_369 = arith.constant 5.000000e-01 : f32
    %1446 = vector.broadcast %cst_369 : f32 to vector<2x32xf32>
    %1447 = arith.mulf %1446, %1430 : vector<2x32xf32>
    %1448 = math.tanh %1447 : vector<2x32xf32>
    %cst_370 = arith.constant 5.000000e-01 : f32
    %1449 = vector.broadcast %cst_370 : f32 to vector<2x32xf32>
    %1450 = arith.mulf %1449, %1448 : vector<2x32xf32>
    %cst_371 = arith.constant 5.000000e-01 : f32
    %1451 = vector.broadcast %cst_371 : f32 to vector<2x32xf32>
    %1452 = arith.addf %1450, %1451 : vector<2x32xf32>
    %1453 = arith.mulf %1444, %1401 : vector<2x32xf32>
    %1454 = arith.mulf %1437, %1445 : vector<2x32xf32>
    %1455 = arith.addf %1453, %1454 : vector<2x32xf32>
    %1456 = math.tanh %1455 : vector<2x32xf32>
    %1457 = arith.mulf %1452, %1456 : vector<2x32xf32>
    %1458 = vector.extract_strided_slice %35 {offsets = [0, 26], sizes = [2, 1], strides = [1, 1]} : vector<2x32xf32> to vector<2x1xf32>
    %1459 = vector.shape_cast %1458 : vector<2x1xf32> to vector<2x1xf32>
    %1460 = vector.broadcast %1459 : vector<2x1xf32> to vector<2x32xf32>
    %1461 = vector.broadcast %38 : vector<1x32xf32> to vector<2x32xf32>
    %1462 = arith.mulf %1460, %1461 : vector<2x32xf32>
    %1463 = vector.broadcast %42 : vector<1x32xf32> to vector<2x32xf32>
    %1464 = arith.addf %1462, %1463 : vector<2x32xf32>
    %cst_372 = arith.constant dense<0.000000e+00> : vector<2x32xf32>
    %1465 = tpu.matmul %1457, %47, %cst_372 {dimension_numbers = #tpu.dot_dimension_numbers<[1], [0], [0], [1], [0, 0, 1, 1], [], []>} : vector<2x32xf32>, vector<32x32xf32>, vector<2x32xf32> -> vector<2x32xf32>
    %1466 = arith.addf %1464, %1465 : vector<2x32xf32>
    %1467 = vector.broadcast %39 : vector<1x32xf32> to vector<2x32xf32>
    %1468 = arith.mulf %1460, %1467 : vector<2x32xf32>
    %1469 = vector.broadcast %43 : vector<1x32xf32> to vector<2x32xf32>
    %1470 = arith.addf %1468, %1469 : vector<2x32xf32>
    %cst_373 = arith.constant dense<0.000000e+00> : vector<2x32xf32>
    %1471 = tpu.matmul %1457, %49, %cst_373 {dimension_numbers = #tpu.dot_dimension_numbers<[1], [0], [0], [1], [0, 0, 1, 1], [], []>} : vector<2x32xf32>, vector<32x32xf32>, vector<2x32xf32> -> vector<2x32xf32>
    %1472 = arith.addf %1470, %1471 : vector<2x32xf32>
    %1473 = vector.broadcast %40 : vector<1x32xf32> to vector<2x32xf32>
    %1474 = arith.mulf %1460, %1473 : vector<2x32xf32>
    %1475 = vector.broadcast %44 : vector<1x32xf32> to vector<2x32xf32>
    %1476 = arith.addf %1474, %1475 : vector<2x32xf32>
    %cst_374 = arith.constant dense<0.000000e+00> : vector<2x32xf32>
    %1477 = tpu.matmul %1457, %51, %cst_374 {dimension_numbers = #tpu.dot_dimension_numbers<[1], [0], [0], [1], [0, 0, 1, 1], [], []>} : vector<2x32xf32>, vector<32x32xf32>, vector<2x32xf32> -> vector<2x32xf32>
    %1478 = arith.addf %1476, %1477 : vector<2x32xf32>
    %1479 = vector.broadcast %41 : vector<1x32xf32> to vector<2x32xf32>
    %1480 = arith.mulf %1460, %1479 : vector<2x32xf32>
    %1481 = vector.broadcast %45 : vector<1x32xf32> to vector<2x32xf32>
    %1482 = arith.addf %1480, %1481 : vector<2x32xf32>
    %cst_375 = arith.constant dense<0.000000e+00> : vector<2x32xf32>
    %1483 = tpu.matmul %1457, %53, %cst_375 {dimension_numbers = #tpu.dot_dimension_numbers<[1], [0], [0], [1], [0, 0, 1, 1], [], []>} : vector<2x32xf32>, vector<32x32xf32>, vector<2x32xf32> -> vector<2x32xf32>
    %1484 = arith.addf %1482, %1483 : vector<2x32xf32>
    %cst_376 = arith.constant 5.000000e-01 : f32
    %1485 = vector.broadcast %cst_376 : f32 to vector<2x32xf32>
    %1486 = arith.mulf %1485, %1466 : vector<2x32xf32>
    %1487 = math.tanh %1486 : vector<2x32xf32>
    %cst_377 = arith.constant 5.000000e-01 : f32
    %1488 = vector.broadcast %cst_377 : f32 to vector<2x32xf32>
    %1489 = arith.mulf %1488, %1487 : vector<2x32xf32>
    %cst_378 = arith.constant 5.000000e-01 : f32
    %1490 = vector.broadcast %cst_378 : f32 to vector<2x32xf32>
    %1491 = arith.addf %1489, %1490 : vector<2x32xf32>
    %cst_379 = arith.constant 5.000000e-01 : f32
    %1492 = vector.broadcast %cst_379 : f32 to vector<2x32xf32>
    %1493 = arith.mulf %1492, %1472 : vector<2x32xf32>
    %1494 = math.tanh %1493 : vector<2x32xf32>
    %cst_380 = arith.constant 5.000000e-01 : f32
    %1495 = vector.broadcast %cst_380 : f32 to vector<2x32xf32>
    %1496 = arith.mulf %1495, %1494 : vector<2x32xf32>
    %cst_381 = arith.constant 5.000000e-01 : f32
    %1497 = vector.broadcast %cst_381 : f32 to vector<2x32xf32>
    %1498 = arith.addf %1496, %1497 : vector<2x32xf32>
    %1499 = math.tanh %1478 : vector<2x32xf32>
    %cst_382 = arith.constant 5.000000e-01 : f32
    %1500 = vector.broadcast %cst_382 : f32 to vector<2x32xf32>
    %1501 = arith.mulf %1500, %1484 : vector<2x32xf32>
    %1502 = math.tanh %1501 : vector<2x32xf32>
    %cst_383 = arith.constant 5.000000e-01 : f32
    %1503 = vector.broadcast %cst_383 : f32 to vector<2x32xf32>
    %1504 = arith.mulf %1503, %1502 : vector<2x32xf32>
    %cst_384 = arith.constant 5.000000e-01 : f32
    %1505 = vector.broadcast %cst_384 : f32 to vector<2x32xf32>
    %1506 = arith.addf %1504, %1505 : vector<2x32xf32>
    %1507 = arith.mulf %1498, %1455 : vector<2x32xf32>
    %1508 = arith.mulf %1491, %1499 : vector<2x32xf32>
    %1509 = arith.addf %1507, %1508 : vector<2x32xf32>
    %1510 = math.tanh %1509 : vector<2x32xf32>
    %1511 = arith.mulf %1506, %1510 : vector<2x32xf32>
    %1512 = vector.extract_strided_slice %35 {offsets = [0, 27], sizes = [2, 1], strides = [1, 1]} : vector<2x32xf32> to vector<2x1xf32>
    %1513 = vector.shape_cast %1512 : vector<2x1xf32> to vector<2x1xf32>
    %1514 = vector.broadcast %1513 : vector<2x1xf32> to vector<2x32xf32>
    %1515 = vector.broadcast %38 : vector<1x32xf32> to vector<2x32xf32>
    %1516 = arith.mulf %1514, %1515 : vector<2x32xf32>
    %1517 = vector.broadcast %42 : vector<1x32xf32> to vector<2x32xf32>
    %1518 = arith.addf %1516, %1517 : vector<2x32xf32>
    %cst_385 = arith.constant dense<0.000000e+00> : vector<2x32xf32>
    %1519 = tpu.matmul %1511, %47, %cst_385 {dimension_numbers = #tpu.dot_dimension_numbers<[1], [0], [0], [1], [0, 0, 1, 1], [], []>} : vector<2x32xf32>, vector<32x32xf32>, vector<2x32xf32> -> vector<2x32xf32>
    %1520 = arith.addf %1518, %1519 : vector<2x32xf32>
    %1521 = vector.broadcast %39 : vector<1x32xf32> to vector<2x32xf32>
    %1522 = arith.mulf %1514, %1521 : vector<2x32xf32>
    %1523 = vector.broadcast %43 : vector<1x32xf32> to vector<2x32xf32>
    %1524 = arith.addf %1522, %1523 : vector<2x32xf32>
    %cst_386 = arith.constant dense<0.000000e+00> : vector<2x32xf32>
    %1525 = tpu.matmul %1511, %49, %cst_386 {dimension_numbers = #tpu.dot_dimension_numbers<[1], [0], [0], [1], [0, 0, 1, 1], [], []>} : vector<2x32xf32>, vector<32x32xf32>, vector<2x32xf32> -> vector<2x32xf32>
    %1526 = arith.addf %1524, %1525 : vector<2x32xf32>
    %1527 = vector.broadcast %40 : vector<1x32xf32> to vector<2x32xf32>
    %1528 = arith.mulf %1514, %1527 : vector<2x32xf32>
    %1529 = vector.broadcast %44 : vector<1x32xf32> to vector<2x32xf32>
    %1530 = arith.addf %1528, %1529 : vector<2x32xf32>
    %cst_387 = arith.constant dense<0.000000e+00> : vector<2x32xf32>
    %1531 = tpu.matmul %1511, %51, %cst_387 {dimension_numbers = #tpu.dot_dimension_numbers<[1], [0], [0], [1], [0, 0, 1, 1], [], []>} : vector<2x32xf32>, vector<32x32xf32>, vector<2x32xf32> -> vector<2x32xf32>
    %1532 = arith.addf %1530, %1531 : vector<2x32xf32>
    %1533 = vector.broadcast %41 : vector<1x32xf32> to vector<2x32xf32>
    %1534 = arith.mulf %1514, %1533 : vector<2x32xf32>
    %1535 = vector.broadcast %45 : vector<1x32xf32> to vector<2x32xf32>
    %1536 = arith.addf %1534, %1535 : vector<2x32xf32>
    %cst_388 = arith.constant dense<0.000000e+00> : vector<2x32xf32>
    %1537 = tpu.matmul %1511, %53, %cst_388 {dimension_numbers = #tpu.dot_dimension_numbers<[1], [0], [0], [1], [0, 0, 1, 1], [], []>} : vector<2x32xf32>, vector<32x32xf32>, vector<2x32xf32> -> vector<2x32xf32>
    %1538 = arith.addf %1536, %1537 : vector<2x32xf32>
    %cst_389 = arith.constant 5.000000e-01 : f32
    %1539 = vector.broadcast %cst_389 : f32 to vector<2x32xf32>
    %1540 = arith.mulf %1539, %1520 : vector<2x32xf32>
    %1541 = math.tanh %1540 : vector<2x32xf32>
    %cst_390 = arith.constant 5.000000e-01 : f32
    %1542 = vector.broadcast %cst_390 : f32 to vector<2x32xf32>
    %1543 = arith.mulf %1542, %1541 : vector<2x32xf32>
    %cst_391 = arith.constant 5.000000e-01 : f32
    %1544 = vector.broadcast %cst_391 : f32 to vector<2x32xf32>
    %1545 = arith.addf %1543, %1544 : vector<2x32xf32>
    %cst_392 = arith.constant 5.000000e-01 : f32
    %1546 = vector.broadcast %cst_392 : f32 to vector<2x32xf32>
    %1547 = arith.mulf %1546, %1526 : vector<2x32xf32>
    %1548 = math.tanh %1547 : vector<2x32xf32>
    %cst_393 = arith.constant 5.000000e-01 : f32
    %1549 = vector.broadcast %cst_393 : f32 to vector<2x32xf32>
    %1550 = arith.mulf %1549, %1548 : vector<2x32xf32>
    %cst_394 = arith.constant 5.000000e-01 : f32
    %1551 = vector.broadcast %cst_394 : f32 to vector<2x32xf32>
    %1552 = arith.addf %1550, %1551 : vector<2x32xf32>
    %1553 = math.tanh %1532 : vector<2x32xf32>
    %cst_395 = arith.constant 5.000000e-01 : f32
    %1554 = vector.broadcast %cst_395 : f32 to vector<2x32xf32>
    %1555 = arith.mulf %1554, %1538 : vector<2x32xf32>
    %1556 = math.tanh %1555 : vector<2x32xf32>
    %cst_396 = arith.constant 5.000000e-01 : f32
    %1557 = vector.broadcast %cst_396 : f32 to vector<2x32xf32>
    %1558 = arith.mulf %1557, %1556 : vector<2x32xf32>
    %cst_397 = arith.constant 5.000000e-01 : f32
    %1559 = vector.broadcast %cst_397 : f32 to vector<2x32xf32>
    %1560 = arith.addf %1558, %1559 : vector<2x32xf32>
    %1561 = arith.mulf %1552, %1509 : vector<2x32xf32>
    %1562 = arith.mulf %1545, %1553 : vector<2x32xf32>
    %1563 = arith.addf %1561, %1562 : vector<2x32xf32>
    %1564 = math.tanh %1563 : vector<2x32xf32>
    %1565 = arith.mulf %1560, %1564 : vector<2x32xf32>
    %1566 = vector.extract_strided_slice %35 {offsets = [0, 28], sizes = [2, 1], strides = [1, 1]} : vector<2x32xf32> to vector<2x1xf32>
    %1567 = vector.shape_cast %1566 : vector<2x1xf32> to vector<2x1xf32>
    %1568 = vector.broadcast %1567 : vector<2x1xf32> to vector<2x32xf32>
    %1569 = vector.broadcast %38 : vector<1x32xf32> to vector<2x32xf32>
    %1570 = arith.mulf %1568, %1569 : vector<2x32xf32>
    %1571 = vector.broadcast %42 : vector<1x32xf32> to vector<2x32xf32>
    %1572 = arith.addf %1570, %1571 : vector<2x32xf32>
    %cst_398 = arith.constant dense<0.000000e+00> : vector<2x32xf32>
    %1573 = tpu.matmul %1565, %47, %cst_398 {dimension_numbers = #tpu.dot_dimension_numbers<[1], [0], [0], [1], [0, 0, 1, 1], [], []>} : vector<2x32xf32>, vector<32x32xf32>, vector<2x32xf32> -> vector<2x32xf32>
    %1574 = arith.addf %1572, %1573 : vector<2x32xf32>
    %1575 = vector.broadcast %39 : vector<1x32xf32> to vector<2x32xf32>
    %1576 = arith.mulf %1568, %1575 : vector<2x32xf32>
    %1577 = vector.broadcast %43 : vector<1x32xf32> to vector<2x32xf32>
    %1578 = arith.addf %1576, %1577 : vector<2x32xf32>
    %cst_399 = arith.constant dense<0.000000e+00> : vector<2x32xf32>
    %1579 = tpu.matmul %1565, %49, %cst_399 {dimension_numbers = #tpu.dot_dimension_numbers<[1], [0], [0], [1], [0, 0, 1, 1], [], []>} : vector<2x32xf32>, vector<32x32xf32>, vector<2x32xf32> -> vector<2x32xf32>
    %1580 = arith.addf %1578, %1579 : vector<2x32xf32>
    %1581 = vector.broadcast %40 : vector<1x32xf32> to vector<2x32xf32>
    %1582 = arith.mulf %1568, %1581 : vector<2x32xf32>
    %1583 = vector.broadcast %44 : vector<1x32xf32> to vector<2x32xf32>
    %1584 = arith.addf %1582, %1583 : vector<2x32xf32>
    %cst_400 = arith.constant dense<0.000000e+00> : vector<2x32xf32>
    %1585 = tpu.matmul %1565, %51, %cst_400 {dimension_numbers = #tpu.dot_dimension_numbers<[1], [0], [0], [1], [0, 0, 1, 1], [], []>} : vector<2x32xf32>, vector<32x32xf32>, vector<2x32xf32> -> vector<2x32xf32>
    %1586 = arith.addf %1584, %1585 : vector<2x32xf32>
    %1587 = vector.broadcast %41 : vector<1x32xf32> to vector<2x32xf32>
    %1588 = arith.mulf %1568, %1587 : vector<2x32xf32>
    %1589 = vector.broadcast %45 : vector<1x32xf32> to vector<2x32xf32>
    %1590 = arith.addf %1588, %1589 : vector<2x32xf32>
    %cst_401 = arith.constant dense<0.000000e+00> : vector<2x32xf32>
    %1591 = tpu.matmul %1565, %53, %cst_401 {dimension_numbers = #tpu.dot_dimension_numbers<[1], [0], [0], [1], [0, 0, 1, 1], [], []>} : vector<2x32xf32>, vector<32x32xf32>, vector<2x32xf32> -> vector<2x32xf32>
    %1592 = arith.addf %1590, %1591 : vector<2x32xf32>
    %cst_402 = arith.constant 5.000000e-01 : f32
    %1593 = vector.broadcast %cst_402 : f32 to vector<2x32xf32>
    %1594 = arith.mulf %1593, %1574 : vector<2x32xf32>
    %1595 = math.tanh %1594 : vector<2x32xf32>
    %cst_403 = arith.constant 5.000000e-01 : f32
    %1596 = vector.broadcast %cst_403 : f32 to vector<2x32xf32>
    %1597 = arith.mulf %1596, %1595 : vector<2x32xf32>
    %cst_404 = arith.constant 5.000000e-01 : f32
    %1598 = vector.broadcast %cst_404 : f32 to vector<2x32xf32>
    %1599 = arith.addf %1597, %1598 : vector<2x32xf32>
    %cst_405 = arith.constant 5.000000e-01 : f32
    %1600 = vector.broadcast %cst_405 : f32 to vector<2x32xf32>
    %1601 = arith.mulf %1600, %1580 : vector<2x32xf32>
    %1602 = math.tanh %1601 : vector<2x32xf32>
    %cst_406 = arith.constant 5.000000e-01 : f32
    %1603 = vector.broadcast %cst_406 : f32 to vector<2x32xf32>
    %1604 = arith.mulf %1603, %1602 : vector<2x32xf32>
    %cst_407 = arith.constant 5.000000e-01 : f32
    %1605 = vector.broadcast %cst_407 : f32 to vector<2x32xf32>
    %1606 = arith.addf %1604, %1605 : vector<2x32xf32>
    %1607 = math.tanh %1586 : vector<2x32xf32>
    %cst_408 = arith.constant 5.000000e-01 : f32
    %1608 = vector.broadcast %cst_408 : f32 to vector<2x32xf32>
    %1609 = arith.mulf %1608, %1592 : vector<2x32xf32>
    %1610 = math.tanh %1609 : vector<2x32xf32>
    %cst_409 = arith.constant 5.000000e-01 : f32
    %1611 = vector.broadcast %cst_409 : f32 to vector<2x32xf32>
    %1612 = arith.mulf %1611, %1610 : vector<2x32xf32>
    %cst_410 = arith.constant 5.000000e-01 : f32
    %1613 = vector.broadcast %cst_410 : f32 to vector<2x32xf32>
    %1614 = arith.addf %1612, %1613 : vector<2x32xf32>
    %1615 = arith.mulf %1606, %1563 : vector<2x32xf32>
    %1616 = arith.mulf %1599, %1607 : vector<2x32xf32>
    %1617 = arith.addf %1615, %1616 : vector<2x32xf32>
    %1618 = math.tanh %1617 : vector<2x32xf32>
    %1619 = arith.mulf %1614, %1618 : vector<2x32xf32>
    %1620 = vector.extract_strided_slice %35 {offsets = [0, 29], sizes = [2, 1], strides = [1, 1]} : vector<2x32xf32> to vector<2x1xf32>
    %1621 = vector.shape_cast %1620 : vector<2x1xf32> to vector<2x1xf32>
    %1622 = vector.broadcast %1621 : vector<2x1xf32> to vector<2x32xf32>
    %1623 = vector.broadcast %38 : vector<1x32xf32> to vector<2x32xf32>
    %1624 = arith.mulf %1622, %1623 : vector<2x32xf32>
    %1625 = vector.broadcast %42 : vector<1x32xf32> to vector<2x32xf32>
    %1626 = arith.addf %1624, %1625 : vector<2x32xf32>
    %cst_411 = arith.constant dense<0.000000e+00> : vector<2x32xf32>
    %1627 = tpu.matmul %1619, %47, %cst_411 {dimension_numbers = #tpu.dot_dimension_numbers<[1], [0], [0], [1], [0, 0, 1, 1], [], []>} : vector<2x32xf32>, vector<32x32xf32>, vector<2x32xf32> -> vector<2x32xf32>
    %1628 = arith.addf %1626, %1627 : vector<2x32xf32>
    %1629 = vector.broadcast %39 : vector<1x32xf32> to vector<2x32xf32>
    %1630 = arith.mulf %1622, %1629 : vector<2x32xf32>
    %1631 = vector.broadcast %43 : vector<1x32xf32> to vector<2x32xf32>
    %1632 = arith.addf %1630, %1631 : vector<2x32xf32>
    %cst_412 = arith.constant dense<0.000000e+00> : vector<2x32xf32>
    %1633 = tpu.matmul %1619, %49, %cst_412 {dimension_numbers = #tpu.dot_dimension_numbers<[1], [0], [0], [1], [0, 0, 1, 1], [], []>} : vector<2x32xf32>, vector<32x32xf32>, vector<2x32xf32> -> vector<2x32xf32>
    %1634 = arith.addf %1632, %1633 : vector<2x32xf32>
    %1635 = vector.broadcast %40 : vector<1x32xf32> to vector<2x32xf32>
    %1636 = arith.mulf %1622, %1635 : vector<2x32xf32>
    %1637 = vector.broadcast %44 : vector<1x32xf32> to vector<2x32xf32>
    %1638 = arith.addf %1636, %1637 : vector<2x32xf32>
    %cst_413 = arith.constant dense<0.000000e+00> : vector<2x32xf32>
    %1639 = tpu.matmul %1619, %51, %cst_413 {dimension_numbers = #tpu.dot_dimension_numbers<[1], [0], [0], [1], [0, 0, 1, 1], [], []>} : vector<2x32xf32>, vector<32x32xf32>, vector<2x32xf32> -> vector<2x32xf32>
    %1640 = arith.addf %1638, %1639 : vector<2x32xf32>
    %1641 = vector.broadcast %41 : vector<1x32xf32> to vector<2x32xf32>
    %1642 = arith.mulf %1622, %1641 : vector<2x32xf32>
    %1643 = vector.broadcast %45 : vector<1x32xf32> to vector<2x32xf32>
    %1644 = arith.addf %1642, %1643 : vector<2x32xf32>
    %cst_414 = arith.constant dense<0.000000e+00> : vector<2x32xf32>
    %1645 = tpu.matmul %1619, %53, %cst_414 {dimension_numbers = #tpu.dot_dimension_numbers<[1], [0], [0], [1], [0, 0, 1, 1], [], []>} : vector<2x32xf32>, vector<32x32xf32>, vector<2x32xf32> -> vector<2x32xf32>
    %1646 = arith.addf %1644, %1645 : vector<2x32xf32>
    %cst_415 = arith.constant 5.000000e-01 : f32
    %1647 = vector.broadcast %cst_415 : f32 to vector<2x32xf32>
    %1648 = arith.mulf %1647, %1628 : vector<2x32xf32>
    %1649 = math.tanh %1648 : vector<2x32xf32>
    %cst_416 = arith.constant 5.000000e-01 : f32
    %1650 = vector.broadcast %cst_416 : f32 to vector<2x32xf32>
    %1651 = arith.mulf %1650, %1649 : vector<2x32xf32>
    %cst_417 = arith.constant 5.000000e-01 : f32
    %1652 = vector.broadcast %cst_417 : f32 to vector<2x32xf32>
    %1653 = arith.addf %1651, %1652 : vector<2x32xf32>
    %cst_418 = arith.constant 5.000000e-01 : f32
    %1654 = vector.broadcast %cst_418 : f32 to vector<2x32xf32>
    %1655 = arith.mulf %1654, %1634 : vector<2x32xf32>
    %1656 = math.tanh %1655 : vector<2x32xf32>
    %cst_419 = arith.constant 5.000000e-01 : f32
    %1657 = vector.broadcast %cst_419 : f32 to vector<2x32xf32>
    %1658 = arith.mulf %1657, %1656 : vector<2x32xf32>
    %cst_420 = arith.constant 5.000000e-01 : f32
    %1659 = vector.broadcast %cst_420 : f32 to vector<2x32xf32>
    %1660 = arith.addf %1658, %1659 : vector<2x32xf32>
    %1661 = math.tanh %1640 : vector<2x32xf32>
    %cst_421 = arith.constant 5.000000e-01 : f32
    %1662 = vector.broadcast %cst_421 : f32 to vector<2x32xf32>
    %1663 = arith.mulf %1662, %1646 : vector<2x32xf32>
    %1664 = math.tanh %1663 : vector<2x32xf32>
    %cst_422 = arith.constant 5.000000e-01 : f32
    %1665 = vector.broadcast %cst_422 : f32 to vector<2x32xf32>
    %1666 = arith.mulf %1665, %1664 : vector<2x32xf32>
    %cst_423 = arith.constant 5.000000e-01 : f32
    %1667 = vector.broadcast %cst_423 : f32 to vector<2x32xf32>
    %1668 = arith.addf %1666, %1667 : vector<2x32xf32>
    %1669 = arith.mulf %1660, %1617 : vector<2x32xf32>
    %1670 = arith.mulf %1653, %1661 : vector<2x32xf32>
    %1671 = arith.addf %1669, %1670 : vector<2x32xf32>
    %1672 = math.tanh %1671 : vector<2x32xf32>
    %1673 = arith.mulf %1668, %1672 : vector<2x32xf32>
    %1674 = vector.extract_strided_slice %35 {offsets = [0, 30], sizes = [2, 1], strides = [1, 1]} : vector<2x32xf32> to vector<2x1xf32>
    %1675 = vector.shape_cast %1674 : vector<2x1xf32> to vector<2x1xf32>
    %1676 = vector.broadcast %1675 : vector<2x1xf32> to vector<2x32xf32>
    %1677 = vector.broadcast %38 : vector<1x32xf32> to vector<2x32xf32>
    %1678 = arith.mulf %1676, %1677 : vector<2x32xf32>
    %1679 = vector.broadcast %42 : vector<1x32xf32> to vector<2x32xf32>
    %1680 = arith.addf %1678, %1679 : vector<2x32xf32>
    %cst_424 = arith.constant dense<0.000000e+00> : vector<2x32xf32>
    %1681 = tpu.matmul %1673, %47, %cst_424 {dimension_numbers = #tpu.dot_dimension_numbers<[1], [0], [0], [1], [0, 0, 1, 1], [], []>} : vector<2x32xf32>, vector<32x32xf32>, vector<2x32xf32> -> vector<2x32xf32>
    %1682 = arith.addf %1680, %1681 : vector<2x32xf32>
    %1683 = vector.broadcast %39 : vector<1x32xf32> to vector<2x32xf32>
    %1684 = arith.mulf %1676, %1683 : vector<2x32xf32>
    %1685 = vector.broadcast %43 : vector<1x32xf32> to vector<2x32xf32>
    %1686 = arith.addf %1684, %1685 : vector<2x32xf32>
    %cst_425 = arith.constant dense<0.000000e+00> : vector<2x32xf32>
    %1687 = tpu.matmul %1673, %49, %cst_425 {dimension_numbers = #tpu.dot_dimension_numbers<[1], [0], [0], [1], [0, 0, 1, 1], [], []>} : vector<2x32xf32>, vector<32x32xf32>, vector<2x32xf32> -> vector<2x32xf32>
    %1688 = arith.addf %1686, %1687 : vector<2x32xf32>
    %1689 = vector.broadcast %40 : vector<1x32xf32> to vector<2x32xf32>
    %1690 = arith.mulf %1676, %1689 : vector<2x32xf32>
    %1691 = vector.broadcast %44 : vector<1x32xf32> to vector<2x32xf32>
    %1692 = arith.addf %1690, %1691 : vector<2x32xf32>
    %cst_426 = arith.constant dense<0.000000e+00> : vector<2x32xf32>
    %1693 = tpu.matmul %1673, %51, %cst_426 {dimension_numbers = #tpu.dot_dimension_numbers<[1], [0], [0], [1], [0, 0, 1, 1], [], []>} : vector<2x32xf32>, vector<32x32xf32>, vector<2x32xf32> -> vector<2x32xf32>
    %1694 = arith.addf %1692, %1693 : vector<2x32xf32>
    %1695 = vector.broadcast %41 : vector<1x32xf32> to vector<2x32xf32>
    %1696 = arith.mulf %1676, %1695 : vector<2x32xf32>
    %1697 = vector.broadcast %45 : vector<1x32xf32> to vector<2x32xf32>
    %1698 = arith.addf %1696, %1697 : vector<2x32xf32>
    %cst_427 = arith.constant dense<0.000000e+00> : vector<2x32xf32>
    %1699 = tpu.matmul %1673, %53, %cst_427 {dimension_numbers = #tpu.dot_dimension_numbers<[1], [0], [0], [1], [0, 0, 1, 1], [], []>} : vector<2x32xf32>, vector<32x32xf32>, vector<2x32xf32> -> vector<2x32xf32>
    %1700 = arith.addf %1698, %1699 : vector<2x32xf32>
    %cst_428 = arith.constant 5.000000e-01 : f32
    %1701 = vector.broadcast %cst_428 : f32 to vector<2x32xf32>
    %1702 = arith.mulf %1701, %1682 : vector<2x32xf32>
    %1703 = math.tanh %1702 : vector<2x32xf32>
    %cst_429 = arith.constant 5.000000e-01 : f32
    %1704 = vector.broadcast %cst_429 : f32 to vector<2x32xf32>
    %1705 = arith.mulf %1704, %1703 : vector<2x32xf32>
    %cst_430 = arith.constant 5.000000e-01 : f32
    %1706 = vector.broadcast %cst_430 : f32 to vector<2x32xf32>
    %1707 = arith.addf %1705, %1706 : vector<2x32xf32>
    %cst_431 = arith.constant 5.000000e-01 : f32
    %1708 = vector.broadcast %cst_431 : f32 to vector<2x32xf32>
    %1709 = arith.mulf %1708, %1688 : vector<2x32xf32>
    %1710 = math.tanh %1709 : vector<2x32xf32>
    %cst_432 = arith.constant 5.000000e-01 : f32
    %1711 = vector.broadcast %cst_432 : f32 to vector<2x32xf32>
    %1712 = arith.mulf %1711, %1710 : vector<2x32xf32>
    %cst_433 = arith.constant 5.000000e-01 : f32
    %1713 = vector.broadcast %cst_433 : f32 to vector<2x32xf32>
    %1714 = arith.addf %1712, %1713 : vector<2x32xf32>
    %1715 = math.tanh %1694 : vector<2x32xf32>
    %cst_434 = arith.constant 5.000000e-01 : f32
    %1716 = vector.broadcast %cst_434 : f32 to vector<2x32xf32>
    %1717 = arith.mulf %1716, %1700 : vector<2x32xf32>
    %1718 = math.tanh %1717 : vector<2x32xf32>
    %cst_435 = arith.constant 5.000000e-01 : f32
    %1719 = vector.broadcast %cst_435 : f32 to vector<2x32xf32>
    %1720 = arith.mulf %1719, %1718 : vector<2x32xf32>
    %cst_436 = arith.constant 5.000000e-01 : f32
    %1721 = vector.broadcast %cst_436 : f32 to vector<2x32xf32>
    %1722 = arith.addf %1720, %1721 : vector<2x32xf32>
    %1723 = arith.mulf %1714, %1671 : vector<2x32xf32>
    %1724 = arith.mulf %1707, %1715 : vector<2x32xf32>
    %1725 = arith.addf %1723, %1724 : vector<2x32xf32>
    %1726 = math.tanh %1725 : vector<2x32xf32>
    %1727 = arith.mulf %1722, %1726 : vector<2x32xf32>
    %1728 = vector.extract_strided_slice %35 {offsets = [0, 31], sizes = [2, 1], strides = [1, 1]} : vector<2x32xf32> to vector<2x1xf32>
    %1729 = vector.shape_cast %1728 : vector<2x1xf32> to vector<2x1xf32>
    %1730 = vector.broadcast %1729 : vector<2x1xf32> to vector<2x32xf32>
    %1731 = vector.broadcast %38 : vector<1x32xf32> to vector<2x32xf32>
    %1732 = arith.mulf %1730, %1731 : vector<2x32xf32>
    %1733 = vector.broadcast %42 : vector<1x32xf32> to vector<2x32xf32>
    %1734 = arith.addf %1732, %1733 : vector<2x32xf32>
    %cst_437 = arith.constant dense<0.000000e+00> : vector<2x32xf32>
    %1735 = tpu.matmul %1727, %47, %cst_437 {dimension_numbers = #tpu.dot_dimension_numbers<[1], [0], [0], [1], [0, 0, 1, 1], [], []>} : vector<2x32xf32>, vector<32x32xf32>, vector<2x32xf32> -> vector<2x32xf32>
    %1736 = arith.addf %1734, %1735 : vector<2x32xf32>
    %1737 = vector.broadcast %39 : vector<1x32xf32> to vector<2x32xf32>
    %1738 = arith.mulf %1730, %1737 : vector<2x32xf32>
    %1739 = vector.broadcast %43 : vector<1x32xf32> to vector<2x32xf32>
    %1740 = arith.addf %1738, %1739 : vector<2x32xf32>
    %cst_438 = arith.constant dense<0.000000e+00> : vector<2x32xf32>
    %1741 = tpu.matmul %1727, %49, %cst_438 {dimension_numbers = #tpu.dot_dimension_numbers<[1], [0], [0], [1], [0, 0, 1, 1], [], []>} : vector<2x32xf32>, vector<32x32xf32>, vector<2x32xf32> -> vector<2x32xf32>
    %1742 = arith.addf %1740, %1741 : vector<2x32xf32>
    %1743 = vector.broadcast %40 : vector<1x32xf32> to vector<2x32xf32>
    %1744 = arith.mulf %1730, %1743 : vector<2x32xf32>
    %1745 = vector.broadcast %44 : vector<1x32xf32> to vector<2x32xf32>
    %1746 = arith.addf %1744, %1745 : vector<2x32xf32>
    %cst_439 = arith.constant dense<0.000000e+00> : vector<2x32xf32>
    %1747 = tpu.matmul %1727, %51, %cst_439 {dimension_numbers = #tpu.dot_dimension_numbers<[1], [0], [0], [1], [0, 0, 1, 1], [], []>} : vector<2x32xf32>, vector<32x32xf32>, vector<2x32xf32> -> vector<2x32xf32>
    %1748 = arith.addf %1746, %1747 : vector<2x32xf32>
    %1749 = vector.broadcast %41 : vector<1x32xf32> to vector<2x32xf32>
    %1750 = arith.mulf %1730, %1749 : vector<2x32xf32>
    %1751 = vector.broadcast %45 : vector<1x32xf32> to vector<2x32xf32>
    %1752 = arith.addf %1750, %1751 : vector<2x32xf32>
    %cst_440 = arith.constant dense<0.000000e+00> : vector<2x32xf32>
    %1753 = tpu.matmul %1727, %53, %cst_440 {dimension_numbers = #tpu.dot_dimension_numbers<[1], [0], [0], [1], [0, 0, 1, 1], [], []>} : vector<2x32xf32>, vector<32x32xf32>, vector<2x32xf32> -> vector<2x32xf32>
    %1754 = arith.addf %1752, %1753 : vector<2x32xf32>
    %cst_441 = arith.constant 5.000000e-01 : f32
    %1755 = vector.broadcast %cst_441 : f32 to vector<2x32xf32>
    %1756 = arith.mulf %1755, %1736 : vector<2x32xf32>
    %1757 = math.tanh %1756 : vector<2x32xf32>
    %cst_442 = arith.constant 5.000000e-01 : f32
    %1758 = vector.broadcast %cst_442 : f32 to vector<2x32xf32>
    %1759 = arith.mulf %1758, %1757 : vector<2x32xf32>
    %cst_443 = arith.constant 5.000000e-01 : f32
    %1760 = vector.broadcast %cst_443 : f32 to vector<2x32xf32>
    %1761 = arith.addf %1759, %1760 : vector<2x32xf32>
    %cst_444 = arith.constant 5.000000e-01 : f32
    %1762 = vector.broadcast %cst_444 : f32 to vector<2x32xf32>
    %1763 = arith.mulf %1762, %1742 : vector<2x32xf32>
    %1764 = math.tanh %1763 : vector<2x32xf32>
    %cst_445 = arith.constant 5.000000e-01 : f32
    %1765 = vector.broadcast %cst_445 : f32 to vector<2x32xf32>
    %1766 = arith.mulf %1765, %1764 : vector<2x32xf32>
    %cst_446 = arith.constant 5.000000e-01 : f32
    %1767 = vector.broadcast %cst_446 : f32 to vector<2x32xf32>
    %1768 = arith.addf %1766, %1767 : vector<2x32xf32>
    %1769 = math.tanh %1748 : vector<2x32xf32>
    %cst_447 = arith.constant 5.000000e-01 : f32
    %1770 = vector.broadcast %cst_447 : f32 to vector<2x32xf32>
    %1771 = arith.mulf %1770, %1754 : vector<2x32xf32>
    %1772 = math.tanh %1771 : vector<2x32xf32>
    %cst_448 = arith.constant 5.000000e-01 : f32
    %1773 = vector.broadcast %cst_448 : f32 to vector<2x32xf32>
    %1774 = arith.mulf %1773, %1772 : vector<2x32xf32>
    %cst_449 = arith.constant 5.000000e-01 : f32
    %1775 = vector.broadcast %cst_449 : f32 to vector<2x32xf32>
    %1776 = arith.addf %1774, %1775 : vector<2x32xf32>
    %1777 = arith.mulf %1768, %1725 : vector<2x32xf32>
    %1778 = arith.mulf %1761, %1769 : vector<2x32xf32>
    %1779 = arith.addf %1777, %1778 : vector<2x32xf32>
    %1780 = math.tanh %1779 : vector<2x32xf32>
    %1781 = arith.mulf %1776, %1780 : vector<2x32xf32>
    %1782 = vector.shape_cast %3 : vector<2x1xf32> to vector<2x1xf32>
    %1783 = vector.broadcast %1782 : vector<2x1xf32> to vector<2x32xf32>
    %1784 = vector.broadcast %38 : vector<1x32xf32> to vector<2x32xf32>
    %1785 = arith.mulf %1783, %1784 : vector<2x32xf32>
    %1786 = vector.broadcast %42 : vector<1x32xf32> to vector<2x32xf32>
    %1787 = arith.addf %1785, %1786 : vector<2x32xf32>
    %cst_450 = arith.constant dense<0.000000e+00> : vector<2x32xf32>
    %1788 = tpu.matmul %1781, %47, %cst_450 {dimension_numbers = #tpu.dot_dimension_numbers<[1], [0], [0], [1], [0, 0, 1, 1], [], []>} : vector<2x32xf32>, vector<32x32xf32>, vector<2x32xf32> -> vector<2x32xf32>
    %1789 = arith.addf %1787, %1788 : vector<2x32xf32>
    %1790 = vector.broadcast %39 : vector<1x32xf32> to vector<2x32xf32>
    %1791 = arith.mulf %1783, %1790 : vector<2x32xf32>
    %1792 = vector.broadcast %43 : vector<1x32xf32> to vector<2x32xf32>
    %1793 = arith.addf %1791, %1792 : vector<2x32xf32>
    %cst_451 = arith.constant dense<0.000000e+00> : vector<2x32xf32>
    %1794 = tpu.matmul %1781, %49, %cst_451 {dimension_numbers = #tpu.dot_dimension_numbers<[1], [0], [0], [1], [0, 0, 1, 1], [], []>} : vector<2x32xf32>, vector<32x32xf32>, vector<2x32xf32> -> vector<2x32xf32>
    %1795 = arith.addf %1793, %1794 : vector<2x32xf32>
    %1796 = vector.broadcast %40 : vector<1x32xf32> to vector<2x32xf32>
    %1797 = arith.mulf %1783, %1796 : vector<2x32xf32>
    %1798 = vector.broadcast %44 : vector<1x32xf32> to vector<2x32xf32>
    %1799 = arith.addf %1797, %1798 : vector<2x32xf32>
    %cst_452 = arith.constant dense<0.000000e+00> : vector<2x32xf32>
    %1800 = tpu.matmul %1781, %51, %cst_452 {dimension_numbers = #tpu.dot_dimension_numbers<[1], [0], [0], [1], [0, 0, 1, 1], [], []>} : vector<2x32xf32>, vector<32x32xf32>, vector<2x32xf32> -> vector<2x32xf32>
    %1801 = arith.addf %1799, %1800 : vector<2x32xf32>
    %1802 = vector.broadcast %41 : vector<1x32xf32> to vector<2x32xf32>
    %1803 = arith.mulf %1783, %1802 : vector<2x32xf32>
    %1804 = vector.broadcast %45 : vector<1x32xf32> to vector<2x32xf32>
    %1805 = arith.addf %1803, %1804 : vector<2x32xf32>
    %cst_453 = arith.constant dense<0.000000e+00> : vector<2x32xf32>
    %1806 = tpu.matmul %1781, %53, %cst_453 {dimension_numbers = #tpu.dot_dimension_numbers<[1], [0], [0], [1], [0, 0, 1, 1], [], []>} : vector<2x32xf32>, vector<32x32xf32>, vector<2x32xf32> -> vector<2x32xf32>
    %1807 = arith.addf %1805, %1806 : vector<2x32xf32>
    %cst_454 = arith.constant 5.000000e-01 : f32
    %1808 = vector.broadcast %cst_454 : f32 to vector<2x32xf32>
    %1809 = arith.mulf %1808, %1789 : vector<2x32xf32>
    %1810 = math.tanh %1809 : vector<2x32xf32>
    %cst_455 = arith.constant 5.000000e-01 : f32
    %1811 = vector.broadcast %cst_455 : f32 to vector<2x32xf32>
    %1812 = arith.mulf %1811, %1810 : vector<2x32xf32>
    %cst_456 = arith.constant 5.000000e-01 : f32
    %1813 = vector.broadcast %cst_456 : f32 to vector<2x32xf32>
    %1814 = arith.addf %1812, %1813 : vector<2x32xf32>
    %cst_457 = arith.constant 5.000000e-01 : f32
    %1815 = vector.broadcast %cst_457 : f32 to vector<2x32xf32>
    %1816 = arith.mulf %1815, %1795 : vector<2x32xf32>
    %1817 = math.tanh %1816 : vector<2x32xf32>
    %cst_458 = arith.constant 5.000000e-01 : f32
    %1818 = vector.broadcast %cst_458 : f32 to vector<2x32xf32>
    %1819 = arith.mulf %1818, %1817 : vector<2x32xf32>
    %cst_459 = arith.constant 5.000000e-01 : f32
    %1820 = vector.broadcast %cst_459 : f32 to vector<2x32xf32>
    %1821 = arith.addf %1819, %1820 : vector<2x32xf32>
    %1822 = math.tanh %1801 : vector<2x32xf32>
    %cst_460 = arith.constant 5.000000e-01 : f32
    %1823 = vector.broadcast %cst_460 : f32 to vector<2x32xf32>
    %1824 = arith.mulf %1823, %1807 : vector<2x32xf32>
    %1825 = math.tanh %1824 : vector<2x32xf32>
    %cst_461 = arith.constant 5.000000e-01 : f32
    %1826 = vector.broadcast %cst_461 : f32 to vector<2x32xf32>
    %1827 = arith.mulf %1826, %1825 : vector<2x32xf32>
    %cst_462 = arith.constant 5.000000e-01 : f32
    %1828 = vector.broadcast %cst_462 : f32 to vector<2x32xf32>
    %1829 = arith.addf %1827, %1828 : vector<2x32xf32>
    %1830 = arith.mulf %1821, %1779 : vector<2x32xf32>
    %1831 = arith.mulf %1814, %1822 : vector<2x32xf32>
    %1832 = arith.addf %1830, %1831 : vector<2x32xf32>
    %1833 = math.tanh %1832 : vector<2x32xf32>
    %1834 = arith.mulf %1829, %1833 : vector<2x32xf32>
    %c0_463 = arith.constant 0 : index
    %c0_464 = arith.constant 0 : index
    %1835 = vector.load %arg14[%c0_463, %c0_464] : memref<2x32xf32, #tpu.memory_space<vmem>>, vector<2x32xf32>
    tpu.vector_store %arg14[%c0_463, %c0_464], %1834 {strides = array<i32>} : memref<2x32xf32, #tpu.memory_space<vmem>>, vector<2x32xf32>,
    %c0_465 = arith.constant 0 : index
    %c0_466 = arith.constant 0 : index
    %1836 = vector.load %arg15[%c0_465, %c0_466] : memref<2x32xf32, #tpu.memory_space<vmem>>, vector<2x32xf32>
    tpu.vector_store %arg15[%c0_465, %c0_466], %1832 {strides = array<i32>} : memref<2x32xf32, #tpu.memory_space<vmem>>, vector<2x32xf32>,
    %c0_467 = arith.constant 0 : index
    %c0_468 = arith.constant 0 : index
    %1837 = vector.load %arg11[%c0_467, %c0_468] : memref<32x1xf32, #tpu.memory_space<vmem>>, vector<32x1xf32>
    %cst_469 = arith.constant dense<0.000000e+00> : vector<2x1xf32>
    %1838 = tpu.matmul %1834, %1837, %cst_469 {dimension_numbers = #tpu.dot_dimension_numbers<[1], [0], [0], [1], [0, 0, 1, 1], [], []>} : vector<2x32xf32>, vector<32x1xf32>, vector<2x1xf32> -> vector<2x1xf32>
    %c0_470 = arith.constant 0 : index
    %c0_471 = arith.constant 0 : index
    %1839 = vector.load %arg12[%c0_470, %c0_471] : memref<1x1xf32, #tpu.memory_space<vmem>>, vector<1x1xf32>
    %1840 = vector.broadcast %1839 : vector<1x1xf32> to vector<2x1xf32>
    %1841 = arith.addf %1838, %1840 : vector<2x1xf32>
    %c0_472 = arith.constant 0 : index
    %c0_473 = arith.constant 0 : index
    %1842 = vector.load %arg13[%c0_472, %c0_473] : memref<2x1xf32, #tpu.memory_space<vmem>>, vector<2x1xf32>
    tpu.vector_store %arg13[%c0_472, %c0_473], %1841 {strides = array<i32>} : memref<2x1xf32, #tpu.memory_space<vmem>>, vector<2x1xf32>,
    return
  }
  func.func @transform_0(%arg0: i32) -> (i32, i32) {
    %c0_i32 = arith.constant 0 : i32
    %c0_i32_0 = arith.constant 0 : i32
    return %arg0, %c0_i32 : i32, i32
  }
  func.func @transform_1(%arg0: i32) -> (i32, i32) {
    %c0_i32 = arith.constant 0 : i32
    %c0_i32_0 = arith.constant 0 : i32
    return %arg0, %c0_i32 : i32, i32
  }
  func.func @transform_2(%arg0: i32) -> (i32, i32) {
    %c0_i32 = arith.constant 0 : i32
    %c0_i32_0 = arith.constant 0 : i32
    return %arg0, %c0_i32 : i32, i32
  }
  func.func @transform_3(%arg0: i32) -> (i32, i32, i32) {
    %c0_i32 = arith.constant 0 : i32
    %c0_i32_0 = arith.constant 0 : i32
    %c0_i32_1 = arith.constant 0 : i32
    return %arg0, %c0_i32, %c0_i32_0 : i32, i32, i32
  }
  func.func @transform_4(%arg0: i32) -> (i32, i32) {
    %c0_i32 = arith.constant 0 : i32
    %c0_i32_0 = arith.constant 0 : i32
    %c0_i32_1 = arith.constant 0 : i32
    return %c0_i32, %c0_i32_0 : i32, i32
  }
  func.func @transform_5(%arg0: i32) -> (i32, i32) {
    %c0_i32 = arith.constant 0 : i32
    %c0_i32_0 = arith.constant 0 : i32
    %c0_i32_1 = arith.constant 0 : i32
    return %c0_i32, %c0_i32_0 : i32, i32
  }
  func.func @transform_6(%arg0: i32) -> (i32, i32) {
    %c0_i32 = arith.constant 0 : i32
    %c0_i32_0 = arith.constant 0 : i32
    %c0_i32_1 = arith.constant 0 : i32
    return %c0_i32, %c0_i32_0 : i32, i32
  }
  func.func @transform_7(%arg0: i32) -> (i32, i32) {
    %c0_i32 = arith.constant 0 : i32
    %c0_i32_0 = arith.constant 0 : i32
    %c0_i32_1 = arith.constant 0 : i32
    return %c0_i32, %c0_i32_0 : i32, i32
  }
  func.func @transform_8(%arg0: i32) -> (i32, i32, i32) {
    %c0_i32 = arith.constant 0 : i32
    %c0_i32_0 = arith.constant 0 : i32
    %c0_i32_1 = arith.constant 0 : i32
    %c0_i32_2 = arith.constant 0 : i32
    return %c0_i32, %c0_i32_0, %c0_i32_1 : i32, i32, i32
  }
  func.func @transform_9(%arg0: i32) -> (i32, i32) {
    %c0_i32 = arith.constant 0 : i32
    %c0_i32_0 = arith.constant 0 : i32
    %c0_i32_1 = arith.constant 0 : i32
    return %c0_i32, %c0_i32_0 : i32, i32
  }
  func.func @transform_10(%arg0: i32) -> (i32, i32) {
    %c0_i32 = arith.constant 0 : i32
    %c0_i32_0 = arith.constant 0 : i32
    %c0_i32_1 = arith.constant 0 : i32
    return %c0_i32, %c0_i32_0 : i32, i32
  }
  func.func @transform_11(%arg0: i32) -> (i32, i32) {
    %c0_i32 = arith.constant 0 : i32
    %c0_i32_0 = arith.constant 0 : i32
    %c0_i32_1 = arith.constant 0 : i32
    return %c0_i32, %c0_i32_0 : i32, i32
  }
  func.func @transform_12(%arg0: i32) -> (i32, i32) {
    %c0_i32 = arith.constant 0 : i32
    %c0_i32_0 = arith.constant 0 : i32
    return %arg0, %c0_i32 : i32, i32
  }
  func.func @transform_13(%arg0: i32) -> (i32, i32) {
    %c0_i32 = arith.constant 0 : i32
    %c0_i32_0 = arith.constant 0 : i32
    return %arg0, %c0_i32 : i32, i32
  }
  func.func @transform_14(%arg0: i32) -> (i32, i32) {
    %c0_i32 = arith.constant 0 : i32
    %c0_i32_0 = arith.constant 0 : i32
    return %arg0, %c0_i32 : i32, i32
  }
  func.func @transform_15(%arg0: i32) -> (i32, i32) {
    %c0_i32 = arith.constant 0 : i32
    %c0_i32_0 = arith.constant 0 : i32
    return %arg0, %c0_i32 : i32, i32
  }
}

</mosaic_0001>

<llo_original>
// kernel: tpu_custom_call.1
$region0: #{tpu_custom_call.1}
  #allocation0 [shape = 'u32[]', space=smem, size = 0x4, offset = 0x4, fixed_abs, tag = 'smem constant byte address 0x4 - core index']
  #allocation1 [shape = 'u32[72,128]{1,0:T(1,128)}', space=vmem, size = 0x9000, scoped, tag = 'internal scratch']
  #allocation2 [shape = 'f32[1,1]{1,0:T(1,128)S(1)}', space=vmem, size = 0x200, scoped, tag = 'scoped memory for tpu_custom_call.1']
  %s0 = inlined_call_operand.vmem [shape: f32[2,1], index: 0, kind: input, shape index: {}]
  %s1 = inlined_call_operand.vmem [shape: f32[2,32], index: 1, kind: input, shape index: {}]
  %s2 = inlined_call_operand.hbm [shape: f32[2,32], index: 2, kind: input, shape index: {}]
  %s3 = inlined_call_operand.vmem [shape: f32[2,8,32], index: 3, kind: input, shape index: {}]
  %s4 = inlined_call_operand.vmem [shape: bf16[32,32], index: 4, kind: input, shape index: {}]
  %s5 = inlined_call_operand.hbm [shape: bf16[32,32], index: 5, kind: input, shape index: {}]
  %s6 = inlined_call_operand.vmem [shape: f32[1,32], index: 6, kind: input, shape index: {}]
  %s7 = inlined_call_operand.vmem [shape: f32[4,32], index: 7, kind: input, shape index: {}]
  %s8 = inlined_call_operand.hbm [shape: f32[4,32,32], index: 8, kind: input, shape index: {}]
  %s9 = inlined_call_operand.vmem [shape: f32[4,32], index: 9, kind: input, shape index: {}]
  %s10 = inlined_call_operand.vmem [shape: f32[32,1], index: 10, kind: input, shape index: {}]
  %s11 = inlined_call_operand.<no memory space> [shape: f32[1,1], index: 11, kind: input, shape index: {}]
  %s12 = inlined_call_operand.vmem [shape: f32[2,1], index: 12, kind: output, shape index: {0}]
  %s13 = inlined_call_operand.hbm [shape: f32[2,32], index: 13, kind: output, shape index: {1}]
  %s14 = inlined_call_operand.hbm [shape: f32[2,32], index: 14, kind: output, shape index: {2}]
  %s15 = inlined_call_operand.hbm [shape: f32[2,8], index: 15, kind: output, shape index: {3}]
  %16 = xla_tuple %s12, %s13, %s14, %s15
  %s17 = sld [smem:[#allocation0]]
  $region94: #{tpu_custom_call.1} parent=0
    _
  %s19 = ssub.s32 1, %s17
  %s20 = scalar_select 0, %s19, %s17
  %v21 = vstv %s11
  %22 = vst [vmem:[#allocation2] sm:$0x1] %v21
  $region1: #{tpu_custom_call.1} parent=0
    #allocation3 [shape = 'u8[1024]{0}', space=vmem, size = 0x400, scoped, tag = 'input window, operand 2, single buffered']
    #allocation4 [shape = 's32[1]{0}', space=sflag, size = 0x4, scoped, tag = 'scoped memory for tpu_custom_call.1']
    #allocation5 [shape = 's32[1]{0}', space=sflag, size = 0x4, scoped, tag = 'scoped memory for tpu_custom_call.1']
    #allocation6 [shape = 'u8[8192]{0}', space=vmem, size = 0x2000, scoped, tag = 'input window, operand 5, single buffered']
    #allocation7 [shape = 's32[1]{0}', space=sflag, size = 0x4, scoped, tag = 'scoped memory for tpu_custom_call.1']
    #allocation8 [shape = 'u8[65536]{0}', space=vmem, size = 0x10000, scoped, tag = 'input window, operand 8, single buffered']
    #allocation9 [shape = 'u8[1024]{0}', space=vmem, size = 0x400, scoped, tag = 'output window, operand 1, single buffered']
    #allocation10 [shape = 'u8[1024]{0}', space=vmem, size = 0x400, scoped, tag = 'output window, operand 2, single buffered']
    #allocation11 [shape = 's32[1]{0}', space=sflag, size = 0x4, scoped, tag = 'scoped memory for tpu_custom_call.1']
    #allocation12 [shape = 'u8[1024]{0}', space=vmem, size = 0x400, scoped, tag = 'output window, operand 3, single buffered']
    %23 = vsyncpa [#allocation4], 0
    %24 = vsyncpa [#allocation7], 0
    %25 = vsyncpa [#allocation5], 0
    %26 = vsyncpa [#allocation11], 0
    // Predicated region
    $region2: #{tpu_custom_call.1} parent=1 // pred_check
      _
    $region3: #{tpu_custom_call.1} parent=1 // pred_check_branch
      %28 = sbr.rel (0) target = $region5
    $region4: #{tpu_custom_call.1} parent=1 // pred_region
      _
    $region5: #{tpu_custom_call.1} parent=1 // pred_fallthru
      _
    // Predicated region
    $region6: #{tpu_custom_call.1} parent=1 // pred_check
      _
    $region7: #{tpu_custom_call.1} parent=1 // pred_check_branch
      %30 = sbr.rel (0) target = $region9
    $region8: #{tpu_custom_call.1} parent=1 // pred_region
      _
    $region9: #{tpu_custom_call.1} parent=1 // pred_fallthru
      _
    // Predicated region
    $region10: #{tpu_custom_call.1} parent=1 // pred_check
      _
    $region11: #{tpu_custom_call.1} parent=1 // pred_check_branch
      %32 = sbr.rel (0) target = $region13
    $region12: #{tpu_custom_call.1} parent=1 // pred_region
      %34 = vsyncadd [#allocation4], 0
      %s36 = sshll.u32 %s2, 4
      %s37 = int_to_ptr.hbm [resolvable:$true] %s36
      %s38 = sshll.u32 [#allocation3], 4
      %s39 = int_to_ptr.vmem [resolvable:$true] %s38
      %41 = dma.hbm_to_vmem [thread:$0]  %s37, 32, %s39, [#allocation4]
    $region13: #{tpu_custom_call.1} parent=1 // pred_fallthru
      _
    // Predicated region
    $region14: #{tpu_custom_call.1} parent=1 // pred_check
      _
    $region15: #{tpu_custom_call.1} parent=1 // pred_check_branch
      %43 = sbr.rel (0) target = $region17
    $region16: #{tpu_custom_call.1} parent=1 // pred_region
      _
    $region17: #{tpu_custom_call.1} parent=1 // pred_fallthru
      _
    // Predicated region
    $region18: #{tpu_custom_call.1} parent=1 // pred_check
      _
    $region19: #{tpu_custom_call.1} parent=1 // pred_check_branch
      %45 = sbr.rel (0) target = $region21
    $region20: #{tpu_custom_call.1} parent=1 // pred_region
      _
    $region21: #{tpu_custom_call.1} parent=1 // pred_fallthru
      _
    // Predicated region
    $region22: #{tpu_custom_call.1} parent=1 // pred_check
      _
    $region23: #{tpu_custom_call.1} parent=1 // pred_check_branch
      %47 = sbr.rel (0) target = $region25
    $region24: #{tpu_custom_call.1} parent=1 // pred_region
      %49 = vsyncadd [#allocation7], 0
      %s50 = sshll.u32 %s5, 4
      %s51 = int_to_ptr.hbm [resolvable:$true] %s50
      %s52 = sshll.u32 [#allocation6], 4
      %s53 = int_to_ptr.vmem [resolvable:$true] %s52
      %58 = dma.hbm_to_vmem [thread:$0]  %s51, 256, %s53, [#allocation7], 64, 64, 4
    $region25: #{tpu_custom_call.1} parent=1 // pred_fallthru
      _
    // Predicated region
    $region26: #{tpu_custom_call.1} parent=1 // pred_check
      _
    $region27: #{tpu_custom_call.1} parent=1 // pred_check_branch
      %60 = sbr.rel (0) target = $region29
    $region28: #{tpu_custom_call.1} parent=1 // pred_region
      _
    $region29: #{tpu_custom_call.1} parent=1 // pred_fallthru
      _
    // Predicated region
    $region30: #{tpu_custom_call.1} parent=1 // pred_check
      _
    $region31: #{tpu_custom_call.1} parent=1 // pred_check_branch
      %62 = sbr.rel (0) target = $region33
    $region32: #{tpu_custom_call.1} parent=1 // pred_region
      _
    $region33: #{tpu_custom_call.1} parent=1 // pred_fallthru
      _
    // Predicated region
    $region34: #{tpu_custom_call.1} parent=1 // pred_check
      _
    $region35: #{tpu_custom_call.1} parent=1 // pred_check_branch
      %64 = sbr.rel (0) target = $region37
    $region36: #{tpu_custom_call.1} parent=1 // pred_region
      %66 = vsyncadd [#allocation7], 0
      %s67 = sshll.u32 %s8, 4
      %s68 = int_to_ptr.hbm [resolvable:$true] %s67
      %s69 = sshll.u32 [#allocation8], 4
      %s70 = int_to_ptr.vmem [resolvable:$true] %s69
      %75 = dma.hbm_to_vmem [thread:$0]  %s68, 2048, %s70, [#allocation7], 128, 128, 8
    $region37: #{tpu_custom_call.1} parent=1 // pred_fallthru
      _
    // Predicated region
    $region38: #{tpu_custom_call.1} parent=1 // pred_check
      _
    $region39: #{tpu_custom_call.1} parent=1 // pred_check_branch
      %77 = sbr.rel (0) target = $region41
    $region40: #{tpu_custom_call.1} parent=1 // pred_region
      _
    $region41: #{tpu_custom_call.1} parent=1 // pred_fallthru
      _
    // Predicated region
    $region42: #{tpu_custom_call.1} parent=1 // pred_check
      _
    $region43: #{tpu_custom_call.1} parent=1 // pred_check_branch
      %79 = sbr.rel (0) target = $region45
    $region44: #{tpu_custom_call.1} parent=1 // pred_region
      _
    $region45: #{tpu_custom_call.1} parent=1 // pred_fallthru
      _
    // Predicated region
    $region46: #{tpu_custom_call.1} parent=1 // pred_check
      _
    $region47: #{tpu_custom_call.1} parent=1 // pred_check_branch
      %81 = sbr.rel (0) target = $region49
    $region48: #{tpu_custom_call.1} parent=1 // pred_region
      _
    $region49: #{tpu_custom_call.1} parent=1 // pred_fallthru
      _
    // Predicated region
    $region50: #{tpu_custom_call.1} parent=1 // pred_check
      _
    $region51: #{tpu_custom_call.1} parent=1 // pred_check_branch
      %83 = sbr.rel (0) target = $region53
    $region52: #{tpu_custom_call.1} parent=1 // pred_region
      %85 = dma.done [#allocation4], 32
    $region53: #{tpu_custom_call.1} parent=1 // pred_fallthru
      _
    // Predicated region
    $region54: #{tpu_custom_call.1} parent=1 // pred_check
      _
    $region55: #{tpu_custom_call.1} parent=1 // pred_check_branch
      %87 = sbr.rel (0) target = $region57
    $region56: #{tpu_custom_call.1} parent=1 // pred_region
      %89 = dma.done [#allocation7], 256
    $region57: #{tpu_custom_call.1} parent=1 // pred_fallthru
      _
    // Predicated region
    $region58: #{tpu_custom_call.1} parent=1 // pred_check
      _
    $region59: #{tpu_custom_call.1} parent=1 // pred_check_branch
      %91 = sbr.rel (0) target = $region61
    $region60: #{tpu_custom_call.1} parent=1 // pred_region
      %93 = dma.done [#allocation7], 2048
    $region61: #{tpu_custom_call.1} parent=1 // pred_fallthru
      _
    %v95 = vld [vmem:[%s3] sm:$0xff]
    %v96 = vld [vmem:[%s3 + $0x8] sm:$0xff]
    %v97 = vld [vmem:[%s1] sm:$0x3]
    %v98 = vld [vmem:[#allocation3] sm:$0x3]
    %v99 = vld [vmem:[%s0] sm:$0x3]
    %v100 = vpack.c.bf16 %v96, %v95
    %v101 = vld [vmem:[%s4] sm:$0xf]
    %v102 = vld [vmem:[%s4 + $0x4] sm:$0xf]
    %v103 = vld [vmem:[%s4 + $0x8] sm:$0xf]
    %v104 = vld [vmem:[%s4 + $0xc] sm:$0xf]
    %v109 = vunpack.c.l.b16 %v101
    %v110 = vunpack.c.l.b16 %v102
    %v111 = vunpack.c.l.b16 %v103
    %v112 = vunpack.c.l.b16 %v104
    %v113 = vpack.c.b16 %v110, %v109
    %v114 = vpack.c.b16 %v112, %v111
    %vm117 = vcmask 261120
    %v119 = vsel %vm117, %v100, 0
    %121 = vmatpush.bf16.msra.mxu0 0
    %122 = vmatpush.bf16.msra.mxu0 0
    %123 = vmatpush.bf16.msra.mxu0 0
    %124 = vmatpush.bf16.msra.mxu0 0
    %125 = vmatpush.bf16.msra.mxu0 0
    %126 = vmatpush.bf16.msra.mxu0 0
    %127 = vmatpush.bf16.msra.mxu0 %v114
    %128 = vmatpush.bf16.msra.mxu0 %v113
    %129 = vmatmul.bf16.gmra.mxu0 %v119
    %v130 = vpop.f32.mrf.mxu0
    %v131 = vadd.f32 0.0, %v130
    %v132 = vpop.f32.mrf.mxu0
    %v133 = vadd.f32 0.0, %v132
    %134 = vdwg.mxu0
    %v135 = vpack.c.bf16 %v97, %v97
    %v136 = vld [vmem:[#allocation6] sm:$0xf]
    %v137 = vld [vmem:[#allocation6 + $0x4] sm:$0xf]
    %v138 = vld [vmem:[#allocation6 + $0x8] sm:$0xf]
    %v139 = vld [vmem:[#allocation6 + $0xc] sm:$0xf]
    %v144 = vunpack.c.l.b16 %v136
    %v145 = vunpack.c.l.b16 %v137
    %v146 = vunpack.c.l.b16 %v138
    %v147 = vunpack.c.l.b16 %v139
    %v148 = vpack.c.b16 %v145, %v144
    %v149 = vpack.c.b16 %v147, %v146
    %v153 = vsel %vm117, %v135, 0
    %155 = vmatpush.bf16.msra.mxu0 0
    %156 = vmatpush.bf16.msra.mxu0 0
    %157 = vmatpush.bf16.msra.mxu0 0
    %158 = vmatpush.bf16.msra.mxu0 0
    %159 = vmatpush.bf16.msra.mxu0 0
    %160 = vmatpush.bf16.msra.mxu0 0
    %161 = vmatpush.bf16.msra.mxu0 %v149
    %162 = vmatpush.bf16.msra.mxu0 %v148
    %163 = vmatmul.bf16.gmra.mxu0 %v153
    %v164 = vpop.f32.mrf.mxu0
    %v165 = vadd.f32 0.0, %v164
    %v166 = vpop.f32.mrf.mxu0
    %167 = vdwg.mxu0
    %v169 = vrot.slane %v165, 1
    %v170 = vperm.slane %v165, 0
    %v171 = vperm.slane %v169, 0
    %v174 = vadd.f32 %v131, %v170
    %v175 = vadd.f32 %v133, %v171
    %v176 = vtanh.pop %v174
    %v177 = vtanh.pop %v175
    %v178 = vld [vmem:[%s6] sm:$0x1]
    %v180 = vperm.slane %v178, 0
    %v182 = vmul.f32 %v176, %v180
    %v183 = vmul.f32 %v177, %v180
    %v184 = vsel %vm117, %v182, 0.0
    %185 = vadd.xlane.f32.xlu0 %v184
    %v186 = vpop.xlane.xlu0 %185
    %v187 = vsel %vm117, %v183, 0.0
    %188 = vadd.xlane.f32.xlu0 %v187
    %v189 = vpop.xlane.xlu0 %188
    %v192 = vlaneseq
    %v193 = vand.u32 %v192, 127
    %v194 = vperm.slane %v186, %v193
    %v195 = vperm.slane %v189, %v193
    %vm196 = vcmask 1041409
    %v197 = vsel %vm196, %v195, %v194
    %vm199 = vcmask 58368
    %v200 = vsel %vm199, %v197, -inf
    %201 = vmax.xlane.f32.xlu0 %v200
    %v202 = vpop.xlane.xlu0 %201
    %v204 = vperm.slane %v202, 0
    %v205 = vperm.slane %v202, 1
    %v208 = vsub.f32 %v186, %v204
    %v209 = vsub.f32 %v189, %v205
    %v210 = vmul.f32 %v208, 1.442695
    %v211 = vpow.pop %v210
    %v212 = vmul.f32 %v209, 1.442695
    %v213 = vpow.pop %v212
    %216 = vset.pattern.permute.xlu0 0
    %217 = vperm.xlu0 %216, %v211
    %v218 = vpop.permute.xlu0 %217
    %219 = vset.pattern.permute.xlu0 0
    %220 = vperm.xlu0 %219, %v213
    %v221 = vpop.permute.xlu0 %220
    %v222 = vperm.slane %v218, %v193
    %v223 = vperm.slane %v221, %v193
    %v224 = vsel %vm196, %v223, %v222
    %v226 = vsel %vm199, %v224, 0.0
    %227 = vadd.xlane.f32.xlu0 %v226
    %v228 = vpop.xlane.xlu0 %227
    %v229 = vrcp.pop %v228
    %v231 = vperm.slane %v229, 0
    %v232 = vperm.slane %v229, 1
    %v235 = vmul.f32 %v211, %v231
    %v236 = vmul.f32 %v213, %v232
    %239 = vset.pattern.permute.xlu0 0
    %240 = vperm.xlu0 %239, %v235
    %v241 = vpop.permute.xlu0 %240
    %242 = vset.pattern.permute.xlu0 0
    %243 = vperm.xlu0 %242, %v236
    %v244 = vpop.permute.xlu0 %243
    %v245 = vperm.slane %v241, %v193
    %v246 = vperm.slane %v244, %v193
    %v247 = vsel %vm196, %v246, %v245
    %249 = vst.msk [vmem:[#allocation12] sm:$0x3] %vm199, %v247
    %v252 = vmul.f32 %v241, %v95
    %v253 = vmul.f32 %v244, %v96
    %v254 = vsel %vm117, %v252, 0.0
    %v255 = vrot.slane %v254, 4
    %v256 = vadd.f32 %v254, %v255
    %v257 = vrot.slane %v256, 2
    %v258 = vadd.f32 %v256, %v257
    %v259 = vrot.slane %v258, 1
    %v260 = vadd.f32 %v258, %v259
    %v261 = vsel %vm117, %v253, 0.0
    %v262 = vrot.slane %v261, 4
    %v263 = vadd.f32 %v261, %v262
    %v264 = vrot.slane %v263, 2
    %v265 = vadd.f32 %v263, %v264
    %v266 = vrot.slane %v265, 1
    %v267 = vadd.f32 %v265, %v266
    %v268 = vld [vmem:[%s7] sm:$0xf]
    %v269 = vld [vmem:[%s9] sm:$0xf]
    %v270 = vld [vmem:[#allocation8] sm:$0xff]
    %v271 = vld [vmem:[#allocation8 + $0x8] sm:$0xff]
    %v272 = vld [vmem:[#allocation8 + $0x10] sm:$0xff]
    %v273 = vld [vmem:[#allocation8 + $0x18] sm:$0xff]
    %s274 = scalar_lea.vmem [#allocation8], 32
    %v275 = vld [vmem:[%s274] sm:$0xff]
    %v276 = vld [vmem:[%s274 + $0x8] sm:$0xff]
    %v277 = vld [vmem:[%s274 + $0x10] sm:$0xff]
    %v278 = vld [vmem:[%s274 + $0x18] sm:$0xff]
    %s279 = scalar_lea.vmem [#allocation8], 64
    %v280 = vld [vmem:[%s279] sm:$0xff]
    %v281 = vld [vmem:[%s279 + $0x8] sm:$0xff]
    %v282 = vld [vmem:[%s279 + $0x10] sm:$0xff]
    %v283 = vld [vmem:[%s279 + $0x18] sm:$0xff]
    %s284 = scalar_lea.vmem [#allocation8], 96
    %v285 = vld [vmem:[%s284] sm:$0xff]
    %v286 = vld [vmem:[%s284 + $0x8] sm:$0xff]
    %v287 = vld [vmem:[%s284 + $0x10] sm:$0xff]
    %v288 = vld [vmem:[%s284 + $0x18] sm:$0xff]
    %290 = vset.pattern.permute.xlu0 0
    %291 = vperm.xlu0 %290, %v260
    %v292 = vpop.permute.xlu0 %291
    %295 = vset.pattern.permute.xlu0 0
    %296 = vperm.xlu0 %295, %v267
    %v297 = vpop.permute.xlu0 %296
    %v299 = vperm.slane %v268, 0
    %v300 = vmul.f32 %v292, %v299
    %v301 = vmul.f32 %v297, %v299
    %v302 = vperm.slane %v269, 0
    %v303 = vadd.f32 %v300, %v302
    %v304 = vadd.f32 %v301, %v302
    %v306 = vsel %vm117, %v97, 0
    %308 = vmatpush.msra.mxu0 0.0
    %309 = vmatpush.msra.mxu0 0.0
    %310 = vmatpush.msra.mxu0 0.0
    %311 = vmatpush.msra.mxu0 0.0
    %312 = vmatpush.msra.mxu0 0.0
    %313 = vmatpush.msra.mxu0 0.0
    %314 = vmatpush.msra.mxu0 0.0
    %315 = vmatpush.msra.mxu0 0.0
    %316 = vmatpush.msra.mxu0 0.0
    %317 = vmatpush.msra.mxu0 0.0
    %318 = vmatpush.msra.mxu0 0.0
    %319 = vmatpush.msra.mxu0 0.0
    %320 = vmatpush.msra.mxu0 %v273
    %321 = vmatpush.msra.mxu0 %v272
    %322 = vmatpush.msra.mxu0 %v271
    %323 = vmatpush.msra.mxu0 %v270
    %324 = vmatmul.f32.gmra.mxu0 %v306
    %v325 = vpop.f32.mrf.mxu0
    %v326 = vadd.f32 0.0, %v325
    %327 = vdwg.mxu0
    %v329 = vrot.slane %v326, 1
    %v332 = vadd.f32 %v303, %v326
    %v333 = vadd.f32 %v304, %v329
    %v334 = vperm.slane %v268, 1
    %v335 = vmul.f32 %v292, %v334
    %v336 = vmul.f32 %v297, %v334
    %v337 = vperm.slane %v269, 1
    %v338 = vadd.f32 %v335, %v337
    %v339 = vadd.f32 %v336, %v337
    %340 = vmatpush.msra.mxu0 0.0
    %341 = vmatpush.msra.mxu0 0.0
    %342 = vmatpush.msra.mxu0 0.0
    %343 = vmatpush.msra.mxu0 0.0
    %344 = vmatpush.msra.mxu0 0.0
    %345 = vmatpush.msra.mxu0 0.0
    %346 = vmatpush.msra.mxu0 0.0
    %347 = vmatpush.msra.mxu0 0.0
    %348 = vmatpush.msra.mxu0 0.0
    %349 = vmatpush.msra.mxu0 0.0
    %350 = vmatpush.msra.mxu0 0.0
    %351 = vmatpush.msra.mxu0 0.0
    %352 = vmatpush.msra.mxu0 %v278
    %353 = vmatpush.msra.mxu0 %v277
    %354 = vmatpush.msra.mxu0 %v276
    %355 = vmatpush.msra.mxu0 %v275
    %356 = vmatmul.f32.gmra.mxu0 %v306
    %v357 = vpop.f32.mrf.mxu0
    %v358 = vadd.f32 0.0, %v357
    %359 = vdwg.mxu0
    %v361 = vrot.slane %v358, 1
    %v364 = vadd.f32 %v338, %v358
    %v365 = vadd.f32 %v339, %v361
    %v366 = vperm.slane %v268, 2
    %v367 = vmul.f32 %v292, %v366
    %v368 = vmul.f32 %v297, %v366
    %v369 = vperm.slane %v269, 2
    %v370 = vadd.f32 %v367, %v369
    %v371 = vadd.f32 %v368, %v369
    %372 = vmatpush.msra.mxu0 0.0
    %373 = vmatpush.msra.mxu0 0.0
    %374 = vmatpush.msra.mxu0 0.0
    %375 = vmatpush.msra.mxu0 0.0
    %376 = vmatpush.msra.mxu0 0.0
    %377 = vmatpush.msra.mxu0 0.0
    %378 = vmatpush.msra.mxu0 0.0
    %379 = vmatpush.msra.mxu0 0.0
    %380 = vmatpush.msra.mxu0 0.0
    %381 = vmatpush.msra.mxu0 0.0
    %382 = vmatpush.msra.mxu0 0.0
    %383 = vmatpush.msra.mxu0 0.0
    %384 = vmatpush.msra.mxu0 %v283
    %385 = vmatpush.msra.mxu0 %v282
    %386 = vmatpush.msra.mxu0 %v281
    %387 = vmatpush.msra.mxu0 %v280
    %388 = vmatmul.f32.gmra.mxu0 %v306
    %v389 = vpop.f32.mrf.mxu0
    %v390 = vadd.f32 0.0, %v389
    %391 = vdwg.mxu0
    %v393 = vrot.slane %v390, 1
    %v396 = vadd.f32 %v370, %v390
    %v397 = vadd.f32 %v371, %v393
    %v398 = vperm.slane %v268, 3
    %v399 = vmul.f32 %v292, %v398
    %v400 = vmul.f32 %v297, %v398
    %v401 = vperm.slane %v269, 3
    %v402 = vadd.f32 %v399, %v401
    %v403 = vadd.f32 %v400, %v401
    %404 = vmatpush.msra.mxu0 0.0
    %405 = vmatpush.msra.mxu0 0.0
    %406 = vmatpush.msra.mxu0 0.0
    %407 = vmatpush.msra.mxu0 0.0
    %408 = vmatpush.msra.mxu0 0.0
    %409 = vmatpush.msra.mxu0 0.0
    %410 = vmatpush.msra.mxu0 0.0
    %411 = vmatpush.msra.mxu0 0.0
    %412 = vmatpush.msra.mxu0 0.0
    %413 = vmatpush.msra.mxu0 0.0
    %414 = vmatpush.msra.mxu0 0.0
    %415 = vmatpush.msra.mxu0 0.0
    %416 = vmatpush.msra.mxu0 %v288
    %417 = vmatpush.msra.mxu0 %v287
    %418 = vmatpush.msra.mxu0 %v286
    %419 = vmatpush.msra.mxu0 %v285
    %420 = vmatmul.f32.gmra.mxu0 %v306
    %v421 = vpop.f32.mrf.mxu0
    %v422 = vadd.f32 0.0, %v421
    %423 = vdwg.mxu0
    %v425 = vrot.slane %v422, 1
    %v428 = vadd.f32 %v402, %v422
    %v429 = vadd.f32 %v403, %v425
    %v430 = vmul.f32 %v332, 0.5
    %v431 = vmul.f32 %v333, 0.5
    %v432 = vtanh.pop %v430
    %v433 = vtanh.pop %v431
    %v434 = vmul.f32 %v432, 0.5
    %v435 = vmul.f32 %v433, 0.5
    %v436 = vadd.f32 %v434, 0.5
    %v437 = vadd.f32 %v435, 0.5
    %v438 = vmul.f32 %v364, 0.5
    %v439 = vmul.f32 %v365, 0.5
    %v440 = vtanh.pop %v438
    %v441 = vtanh.pop %v439
    %v442 = vmul.f32 %v440, 0.5
    %v443 = vmul.f32 %v441, 0.5
    %v444 = vadd.f32 %v442, 0.5
    %v445 = vadd.f32 %v443, 0.5
    %v446 = vtanh.pop %v396
    %v447 = vtanh.pop %v397
    %v448 = vmul.f32 %v428, 0.5
    %v449 = vmul.f32 %v429, 0.5
    %v450 = vtanh.pop %v448
    %v451 = vtanh.pop %v449
    %v452 = vmul.f32 %v450, 0.5
    %v453 = vmul.f32 %v451, 0.5
    %v454 = vadd.f32 %v452, 0.5
    %v455 = vadd.f32 %v453, 0.5
    %v457 = vrot.slane %v98, 1
    %v460 = vmul.f32 %v444, %v98
    %v461 = vmul.f32 %v445, %v457
    %v462 = vmul.f32 %v436, %v446
    %v463 = vmul.f32 %v437, %v447
    %v464 = vadd.f32 %v460, %v462
    %v465 = vadd.f32 %v461, %v463
    %v466 = vtanh.pop %v464
    %v467 = vtanh.pop %v465
    %v468 = vmul.f32 %v454, %v466
    %v469 = vmul.f32 %v455, %v467
    %470 = vset.pattern.permute.xlu0 1
    %471 = vperm.xlu0 %470, %v260
    %v472 = vpop.permute.xlu0 %471
    %474 = vset.pattern.permute.xlu0 1
    %475 = vperm.xlu0 %474, %v267
    %v476 = vpop.permute.xlu0 %475
    %v478 = vmul.f32 %v472, %v299
    %v479 = vmul.f32 %v476, %v299
    %v480 = vadd.f32 %v478, %v302
    %v481 = vadd.f32 %v479, %v302
    %v484 = vrot.slane %v469, 7
    %v485 = vsel %vm196, %v484, %v468
    %v486 = vsel %vm117, %v485, 0
    %488 = vmatpush.msra.mxu0 0.0
    %489 = vmatpush.msra.mxu0 0.0
    %490 = vmatpush.msra.mxu0 0.0
    %491 = vmatpush.msra.mxu0 0.0
    %492 = vmatpush.msra.mxu0 0.0
    %493 = vmatpush.msra.mxu0 0.0
    %494 = vmatpush.msra.mxu0 0.0
    %495 = vmatpush.msra.mxu0 0.0
    %496 = vmatpush.msra.mxu0 0.0
    %497 = vmatpush.msra.mxu0 0.0
    %498 = vmatpush.msra.mxu0 0.0
    %499 = vmatpush.msra.mxu0 0.0
    %500 = vmatpush.msra.mxu0 %v273
    %501 = vmatpush.msra.mxu0 %v272
    %502 = vmatpush.msra.mxu0 %v271
    %503 = vmatpush.msra.mxu0 %v270
    %504 = vmatmul.f32.gmra.mxu0 %v486
    %v505 = vpop.f32.mrf.mxu0
    %v506 = vadd.f32 0.0, %v505
    %507 = vdwg.mxu0
    %v509 = vrot.slane %v506, 1
    %v512 = vadd.f32 %v480, %v506
    %v513 = vadd.f32 %v481, %v509
    %v514 = vmul.f32 %v472, %v334
    %v515 = vmul.f32 %v476, %v334
    %v516 = vadd.f32 %v514, %v337
    %v517 = vadd.f32 %v515, %v337
    %518 = vmatpush.msra.mxu0 0.0
    %519 = vmatpush.msra.mxu0 0.0
    %520 = vmatpush.msra.mxu0 0.0
    %521 = vmatpush.msra.mxu0 0.0
    %522 = vmatpush.msra.mxu0 0.0
    %523 = vmatpush.msra.mxu0 0.0
    %524 = vmatpush.msra.mxu0 0.0
    %525 = vmatpush.msra.mxu0 0.0
    %526 = vmatpush.msra.mxu0 0.0
    %527 = vmatpush.msra.mxu0 0.0
    %528 = vmatpush.msra.mxu0 0.0
    %529 = vmatpush.msra.mxu0 0.0
    %530 = vmatpush.msra.mxu0 %v278
    %531 = vmatpush.msra.mxu0 %v277
    %532 = vmatpush.msra.mxu0 %v276
    %533 = vmatpush.msra.mxu0 %v275
    %534 = vmatmul.f32.gmra.mxu0 %v486
    %v535 = vpop.f32.mrf.mxu0
    %v536 = vadd.f32 0.0, %v535
    %537 = vdwg.mxu0
    %v539 = vrot.slane %v536, 1
    %v542 = vadd.f32 %v516, %v536
    %v543 = vadd.f32 %v517, %v539
    %v544 = vmul.f32 %v472, %v366
    %v545 = vmul.f32 %v476, %v366
    %v546 = vadd.f32 %v544, %v369
    %v547 = vadd.f32 %v545, %v369
    %548 = vmatpush.msra.mxu0 0.0
    %549 = vmatpush.msra.mxu0 0.0
    %550 = vmatpush.msra.mxu0 0.0
    %551 = vmatpush.msra.mxu0 0.0
    %552 = vmatpush.msra.mxu0 0.0
    %553 = vmatpush.msra.mxu0 0.0
    %554 = vmatpush.msra.mxu0 0.0
    %555 = vmatpush.msra.mxu0 0.0
    %556 = vmatpush.msra.mxu0 0.0
    %557 = vmatpush.msra.mxu0 0.0
    %558 = vmatpush.msra.mxu0 0.0
    %559 = vmatpush.msra.mxu0 0.0
    %560 = vmatpush.msra.mxu0 %v283
    %561 = vmatpush.msra.mxu0 %v282
    %562 = vmatpush.msra.mxu0 %v281
    %563 = vmatpush.msra.mxu0 %v280
    %564 = vmatmul.f32.gmra.mxu0 %v486
    %v565 = vpop.f32.mrf.mxu0
    %v566 = vadd.f32 0.0, %v565
    %567 = vdwg.mxu0
    %v569 = vrot.slane %v566, 1
    %v572 = vadd.f32 %v546, %v566
    %v573 = vadd.f32 %v547, %v569
    %v574 = vmul.f32 %v472, %v398
    %v575 = vmul.f32 %v476, %v398
    %v576 = vadd.f32 %v574, %v401
    %v577 = vadd.f32 %v575, %v401
    %578 = vmatpush.msra.mxu0 0.0
    %579 = vmatpush.msra.mxu0 0.0
    %580 = vmatpush.msra.mxu0 0.0
    %581 = vmatpush.msra.mxu0 0.0
    %582 = vmatpush.msra.mxu0 0.0
    %583 = vmatpush.msra.mxu0 0.0
    %584 = vmatpush.msra.mxu0 0.0
    %585 = vmatpush.msra.mxu0 0.0
    %586 = vmatpush.msra.mxu0 0.0
    %587 = vmatpush.msra.mxu0 0.0
    %588 = vmatpush.msra.mxu0 0.0
    %589 = vmatpush.msra.mxu0 0.0
    %590 = vmatpush.msra.mxu0 %v288
    %591 = vmatpush.msra.mxu0 %v287
    %592 = vmatpush.msra.mxu0 %v286
    %593 = vmatpush.msra.mxu0 %v285
    %594 = vmatmul.f32.gmra.mxu0 %v486
    %v595 = vpop.f32.mrf.mxu0
    %v596 = vadd.f32 0.0, %v595
    %597 = vdwg.mxu0
    %v599 = vrot.slane %v596, 1
    %v602 = vadd.f32 %v576, %v596
    %v603 = vadd.f32 %v577, %v599
    %v604 = vmul.f32 %v512, 0.5
    %v605 = vmul.f32 %v513, 0.5
    %v606 = vtanh.pop %v604
    %v607 = vtanh.pop %v605
    %v608 = vmul.f32 %v606, 0.5
    %v609 = vmul.f32 %v607, 0.5
    %v610 = vadd.f32 %v608, 0.5
    %v611 = vadd.f32 %v609, 0.5
    %v612 = vmul.f32 %v542, 0.5
    %v613 = vmul.f32 %v543, 0.5
    %v614 = vtanh.pop %v612
    %v615 = vtanh.pop %v613
    %v616 = vmul.f32 %v614, 0.5
    %v617 = vmul.f32 %v615, 0.5
    %v618 = vadd.f32 %v616, 0.5
    %v619 = vadd.f32 %v617, 0.5
    %v620 = vtanh.pop %v572
    %v621 = vtanh.pop %v573
    %v622 = vmul.f32 %v602, 0.5
    %v623 = vmul.f32 %v603, 0.5
    %v624 = vtanh.pop %v622
    %v625 = vtanh.pop %v623
    %v626 = vmul.f32 %v624, 0.5
    %v627 = vmul.f32 %v625, 0.5
    %v628 = vadd.f32 %v626, 0.5
    %v629 = vadd.f32 %v627, 0.5
    %v630 = vmul.f32 %v618, %v464
    %v631 = vmul.f32 %v619, %v465
    %v632 = vmul.f32 %v610, %v620
    %v633 = vmul.f32 %v611, %v621
    %v634 = vadd.f32 %v630, %v632
    %v635 = vadd.f32 %v631, %v633
    %v636 = vtanh.pop %v634
    %v637 = vtanh.pop %v635
    %v638 = vmul.f32 %v628, %v636
    %v639 = vmul.f32 %v629, %v637
    %640 = vset.pattern.permute.xlu0 2
    %641 = vperm.xlu0 %640, %v260
    %v642 = vpop.permute.xlu0 %641
    %644 = vset.pattern.permute.xlu0 2
    %645 = vperm.xlu0 %644, %v267
    %v646 = vpop.permute.xlu0 %645
    %v648 = vmul.f32 %v642, %v299
    %v649 = vmul.f32 %v646, %v299
    %v650 = vadd.f32 %v648, %v302
    %v651 = vadd.f32 %v649, %v302
    %v654 = vrot.slane %v639, 7
    %v655 = vsel %vm196, %v654, %v638
    %v656 = vsel %vm117, %v655, 0
    %658 = vmatpush.msra.mxu0 0.0
    %659 = vmatpush.msra.mxu0 0.0
    %660 = vmatpush.msra.mxu0 0.0
    %661 = vmatpush.msra.mxu0 0.0
    %662 = vmatpush.msra.mxu0 0.0
    %663 = vmatpush.msra.mxu0 0.0
    %664 = vmatpush.msra.mxu0 0.0
    %665 = vmatpush.msra.mxu0 0.0
    %666 = vmatpush.msra.mxu0 0.0
    %667 = vmatpush.msra.mxu0 0.0
    %668 = vmatpush.msra.mxu0 0.0
    %669 = vmatpush.msra.mxu0 0.0
    %670 = vmatpush.msra.mxu0 %v273
    %671 = vmatpush.msra.mxu0 %v272
    %672 = vmatpush.msra.mxu0 %v271
    %673 = vmatpush.msra.mxu0 %v270
    %674 = vmatmul.f32.gmra.mxu0 %v656
    %v675 = vpop.f32.mrf.mxu0
    %v676 = vadd.f32 0.0, %v675
    %677 = vdwg.mxu0
    %v679 = vrot.slane %v676, 1
    %v682 = vadd.f32 %v650, %v676
    %v683 = vadd.f32 %v651, %v679
    %v684 = vmul.f32 %v642, %v334
    %v685 = vmul.f32 %v646, %v334
    %v686 = vadd.f32 %v684, %v337
    %v687 = vadd.f32 %v685, %v337
    %688 = vmatpush.msra.mxu0 0.0
    %689 = vmatpush.msra.mxu0 0.0
    %690 = vmatpush.msra.mxu0 0.0
    %691 = vmatpush.msra.mxu0 0.0
    %692 = vmatpush.msra.mxu0 0.0
    %693 = vmatpush.msra.mxu0 0.0
    %694 = vmatpush.msra.mxu0 0.0
    %695 = vmatpush.msra.mxu0 0.0
    %696 = vmatpush.msra.mxu0 0.0
    %697 = vmatpush.msra.mxu0 0.0
    %698 = vmatpush.msra.mxu0 0.0
    %699 = vmatpush.msra.mxu0 0.0
    %700 = vmatpush.msra.mxu0 %v278
    %701 = vmatpush.msra.mxu0 %v277
    %702 = vmatpush.msra.mxu0 %v276
    %703 = vmatpush.msra.mxu0 %v275
    %704 = vmatmul.f32.gmra.mxu0 %v656
    %v705 = vpop.f32.mrf.mxu0
    %v706 = vadd.f32 0.0, %v705
    %707 = vdwg.mxu0
    %v709 = vrot.slane %v706, 1
    %v712 = vadd.f32 %v686, %v706
    %v713 = vadd.f32 %v687, %v709
    %v714 = vmul.f32 %v642, %v366
    %v715 = vmul.f32 %v646, %v366
    %v716 = vadd.f32 %v714, %v369
    %v717 = vadd.f32 %v715, %v369
    %718 = vmatpush.msra.mxu0 0.0
    %719 = vmatpush.msra.mxu0 0.0
    %720 = vmatpush.msra.mxu0 0.0
    %721 = vmatpush.msra.mxu0 0.0
    %722 = vmatpush.msra.mxu0 0.0
    %723 = vmatpush.msra.mxu0 0.0
    %724 = vmatpush.msra.mxu0 0.0
    %725 = vmatpush.msra.mxu0 0.0
    %726 = vmatpush.msra.mxu0 0.0
    %727 = vmatpush.msra.mxu0 0.0
    %728 = vmatpush.msra.mxu0 0.0
    %729 = vmatpush.msra.mxu0 0.0
    %730 = vmatpush.msra.mxu0 %v283
    %731 = vmatpush.msra.mxu0 %v282
    %732 = vmatpush.msra.mxu0 %v281
    %733 = vmatpush.msra.mxu0 %v280
    %734 = vmatmul.f32.gmra.mxu0 %v656
    %v735 = vpop.f32.mrf.mxu0
    %v736 = vadd.f32 0.0, %v735
    %737 = vdwg.mxu0
    %v739 = vrot.slane %v736, 1
    %v742 = vadd.f32 %v716, %v736
    %v743 = vadd.f32 %v717, %v739
    %v744 = vmul.f32 %v642, %v398
    %v745 = vmul.f32 %v646, %v398
    %v746 = vadd.f32 %v744, %v401
    %v747 = vadd.f32 %v745, %v401
    %748 = vmatpush.msra.mxu0 0.0
    %749 = vmatpush.msra.mxu0 0.0
    %750 = vmatpush.msra.mxu0 0.0
    %751 = vmatpush.msra.mxu0 0.0
    %752 = vmatpush.msra.mxu0 0.0
    %753 = vmatpush.msra.mxu0 0.0
    %754 = vmatpush.msra.mxu0 0.0
    %755 = vmatpush.msra.mxu0 0.0
    %756 = vmatpush.msra.mxu0 0.0
    %757 = vmatpush.msra.mxu0 0.0
    %758 = vmatpush.msra.mxu0 0.0
    %759 = vmatpush.msra.mxu0 0.0
    %760 = vmatpush.msra.mxu0 %v288
    %761 = vmatpush.msra.mxu0 %v287
    %762 = vmatpush.msra.mxu0 %v286
    %763 = vmatpush.msra.mxu0 %v285
    %764 = vmatmul.f32.gmra.mxu0 %v656
    %v765 = vpop.f32.mrf.mxu0
    %v766 = vadd.f32 0.0, %v765
    %767 = vdwg.mxu0
    %v769 = vrot.slane %v766, 1
    %v772 = vadd.f32 %v746, %v766
    %v773 = vadd.f32 %v747, %v769
    %v774 = vmul.f32 %v682, 0.5
    %v775 = vmul.f32 %v683, 0.5
    %v776 = vtanh.pop %v774
    %v777 = vtanh.pop %v775
    %v778 = vmul.f32 %v776, 0.5
    %v779 = vmul.f32 %v777, 0.5
    %v780 = vadd.f32 %v778, 0.5
    %v781 = vadd.f32 %v779, 0.5
    %v782 = vmul.f32 %v712, 0.5
    %v783 = vmul.f32 %v713, 0.5
    %v784 = vtanh.pop %v782
    %v785 = vtanh.pop %v783
    %v786 = vmul.f32 %v784, 0.5
    %v787 = vmul.f32 %v785, 0.5
    %v788 = vadd.f32 %v786, 0.5
    %v789 = vadd.f32 %v787, 0.5
    %v790 = vtanh.pop %v742
    %v791 = vtanh.pop %v743
    %v792 = vmul.f32 %v772, 0.5
    %v793 = vmul.f32 %v773, 0.5
    %v794 = vtanh.pop %v792
    %v795 = vtanh.pop %v793
    %v796 = vmul.f32 %v794, 0.5
    %v797 = vmul.f32 %v795, 0.5
    %v798 = vadd.f32 %v796, 0.5
    %v799 = vadd.f32 %v797, 0.5
    %v800 = vmul.f32 %v788, %v634
    %v801 = vmul.f32 %v789, %v635
    %v802 = vmul.f32 %v780, %v790
    %v803 = vmul.f32 %v781, %v791
    %v804 = vadd.f32 %v800, %v802
    %v805 = vadd.f32 %v801, %v803
    %v806 = vtanh.pop %v804
    %v807 = vtanh.pop %v805
    %v808 = vmul.f32 %v798, %v806
    %v809 = vmul.f32 %v799, %v807
    %810 = vset.pattern.permute.xlu0 3
    %811 = vperm.xlu0 %810, %v260
    %v812 = vpop.permute.xlu0 %811
    %814 = vset.pattern.permute.xlu0 3
    %815 = vperm.xlu0 %814, %v267
    %v816 = vpop.permute.xlu0 %815
    %v818 = vmul.f32 %v812, %v299
    %v819 = vmul.f32 %v816, %v299
    %v820 = vadd.f32 %v818, %v302
    %v821 = vadd.f32 %v819, %v302
    %v824 = vrot.slane %v809, 7
    %v825 = vsel %vm196, %v824, %v808
    %v826 = vsel %vm117, %v825, 0
    %828 = vmatpush.msra.mxu0 0.0
    %829 = vmatpush.msra.mxu0 0.0
    %830 = vmatpush.msra.mxu0 0.0
    %831 = vmatpush.msra.mxu0 0.0
    %832 = vmatpush.msra.mxu0 0.0
    %833 = vmatpush.msra.mxu0 0.0
    %834 = vmatpush.msra.mxu0 0.0
    %835 = vmatpush.msra.mxu0 0.0
    %836 = vmatpush.msra.mxu0 0.0
    %837 = vmatpush.msra.mxu0 0.0
    %838 = vmatpush.msra.mxu0 0.0
    %839 = vmatpush.msra.mxu0 0.0
    %840 = vmatpush.msra.mxu0 %v273
    %841 = vmatpush.msra.mxu0 %v272
    %842 = vmatpush.msra.mxu0 %v271
    %843 = vmatpush.msra.mxu0 %v270
    %844 = vmatmul.f32.gmra.mxu0 %v826
    %v845 = vpop.f32.mrf.mxu0
    %v846 = vadd.f32 0.0, %v845
    %847 = vdwg.mxu0
    %v849 = vrot.slane %v846, 1
    %v852 = vadd.f32 %v820, %v846
    %v853 = vadd.f32 %v821, %v849
    %v854 = vmul.f32 %v812, %v334
    %v855 = vmul.f32 %v816, %v334
    %v856 = vadd.f32 %v854, %v337
    %v857 = vadd.f32 %v855, %v337
    %858 = vmatpush.msra.mxu0 0.0
    %859 = vmatpush.msra.mxu0 0.0
    %860 = vmatpush.msra.mxu0 0.0
    %861 = vmatpush.msra.mxu0 0.0
    %862 = vmatpush.msra.mxu0 0.0
    %863 = vmatpush.msra.mxu0 0.0
    %864 = vmatpush.msra.mxu0 0.0
    %865 = vmatpush.msra.mxu0 0.0
    %866 = vmatpush.msra.mxu0 0.0
    %867 = vmatpush.msra.mxu0 0.0
    %868 = vmatpush.msra.mxu0 0.0
    %869 = vmatpush.msra.mxu0 0.0
    %870 = vmatpush.msra.mxu0 %v278
    %871 = vmatpush.msra.mxu0 %v277
    %872 = vmatpush.msra.mxu0 %v276
    %873 = vmatpush.msra.mxu0 %v275
    %874 = vmatmul.f32.gmra.mxu0 %v826
    %v875 = vpop.f32.mrf.mxu0
    %v876 = vadd.f32 0.0, %v875
    %877 = vdwg.mxu0
    %v879 = vrot.slane %v876, 1
    %v882 = vadd.f32 %v856, %v876
    %v883 = vadd.f32 %v857, %v879
    %v884 = vmul.f32 %v812, %v366
    %v885 = vmul.f32 %v816, %v366
    %v886 = vadd.f32 %v884, %v369
    %v887 = vadd.f32 %v885, %v369
    %888 = vmatpush.msra.mxu0 0.0
    %889 = vmatpush.msra.mxu0 0.0
    %890 = vmatpush.msra.mxu0 0.0
    %891 = vmatpush.msra.mxu0 0.0
    %892 = vmatpush.msra.mxu0 0.0
    %893 = vmatpush.msra.mxu0 0.0
    %894 = vmatpush.msra.mxu0 0.0
    %895 = vmatpush.msra.mxu0 0.0
    %896 = vmatpush.msra.mxu0 0.0
    %897 = vmatpush.msra.mxu0 0.0
    %898 = vmatpush.msra.mxu0 0.0
    %899 = vmatpush.msra.mxu0 0.0
    %900 = vmatpush.msra.mxu0 %v283
    %901 = vmatpush.msra.mxu0 %v282
    %902 = vmatpush.msra.mxu0 %v281
    %903 = vmatpush.msra.mxu0 %v280
    %904 = vmatmul.f32.gmra.mxu0 %v826
    %v905 = vpop.f32.mrf.mxu0
    %v906 = vadd.f32 0.0, %v905
    %907 = vdwg.mxu0
    %v909 = vrot.slane %v906, 1
    %v912 = vadd.f32 %v886, %v906
    %v913 = vadd.f32 %v887, %v909
    %v914 = vmul.f32 %v812, %v398
    %v915 = vmul.f32 %v816, %v398
    %v916 = vadd.f32 %v914, %v401
    %v917 = vadd.f32 %v915, %v401
    %918 = vmatpush.msra.mxu0 0.0
    %919 = vmatpush.msra.mxu0 0.0
    %920 = vmatpush.msra.mxu0 0.0
    %921 = vmatpush.msra.mxu0 0.0
    %922 = vmatpush.msra.mxu0 0.0
    %923 = vmatpush.msra.mxu0 0.0
    %924 = vmatpush.msra.mxu0 0.0
    %925 = vmatpush.msra.mxu0 0.0
    %926 = vmatpush.msra.mxu0 0.0
    %927 = vmatpush.msra.mxu0 0.0
    %928 = vmatpush.msra.mxu0 0.0
    %929 = vmatpush.msra.mxu0 0.0
    %930 = vmatpush.msra.mxu0 %v288
    %931 = vmatpush.msra.mxu0 %v287
    %932 = vmatpush.msra.mxu0 %v286
    %933 = vmatpush.msra.mxu0 %v285
    %934 = vmatmul.f32.gmra.mxu0 %v826
    %v935 = vpop.f32.mrf.mxu0
    %v936 = vadd.f32 0.0, %v935
    %937 = vdwg.mxu0
    %v939 = vrot.slane %v936, 1
    %v942 = vadd.f32 %v916, %v936
    %v943 = vadd.f32 %v917, %v939
    %v944 = vmul.f32 %v852, 0.5
    %v945 = vmul.f32 %v853, 0.5
    %v946 = vtanh.pop %v944
    %v947 = vtanh.pop %v945
    %v948 = vmul.f32 %v946, 0.5
    %v949 = vmul.f32 %v947, 0.5
    %v950 = vadd.f32 %v948, 0.5
    %v951 = vadd.f32 %v949, 0.5
    %v952 = vmul.f32 %v882, 0.5
    %v953 = vmul.f32 %v883, 0.5
    %v954 = vtanh.pop %v952
    %v955 = vtanh.pop %v953
    %v956 = vmul.f32 %v954, 0.5
    %v957 = vmul.f32 %v955, 0.5
    %v958 = vadd.f32 %v956, 0.5
    %v959 = vadd.f32 %v957, 0.5
    %v960 = vtanh.pop %v912
    %v961 = vtanh.pop %v913
    %v962 = vmul.f32 %v942, 0.5
    %v963 = vmul.f32 %v943, 0.5
    %v964 = vtanh.pop %v962
    %v965 = vtanh.pop %v963
    %v966 = vmul.f32 %v964, 0.5
    %v967 = vmul.f32 %v965, 0.5
    %v968 = vadd.f32 %v966, 0.5
    %v969 = vadd.f32 %v967, 0.5
    %v970 = vmul.f32 %v958, %v804
    %v971 = vmul.f32 %v959, %v805
    %v972 = vmul.f32 %v950, %v960
    %v973 = vmul.f32 %v951, %v961
    %v974 = vadd.f32 %v970, %v972
    %v975 = vadd.f32 %v971, %v973
    %v976 = vtanh.pop %v974
    %v977 = vtanh.pop %v975
    %v978 = vmul.f32 %v968, %v976
    %v979 = vmul.f32 %v969, %v977
    %980 = vset.pattern.permute.xlu0 4
    %981 = vperm.xlu0 %980, %v260
    %v982 = vpop.permute.xlu0 %981
    %984 = vset.pattern.permute.xlu0 4
    %985 = vperm.xlu0 %984, %v267
    %v986 = vpop.permute.xlu0 %985
    %v988 = vmul.f32 %v982, %v299
    %v989 = vmul.f32 %v986, %v299
    %v990 = vadd.f32 %v988, %v302
    %v991 = vadd.f32 %v989, %v302
    %v994 = vrot.slane %v979, 7
    %v995 = vsel %vm196, %v994, %v978
    %v996 = vsel %vm117, %v995, 0
    %998 = vmatpush.msra.mxu0 0.0
    %999 = vmatpush.msra.mxu0 0.0
    %1000 = vmatpush.msra.mxu0 0.0
    %1001 = vmatpush.msra.mxu0 0.0
    %1002 = vmatpush.msra.mxu0 0.0
    %1003 = vmatpush.msra.mxu0 0.0
    %1004 = vmatpush.msra.mxu0 0.0
    %1005 = vmatpush.msra.mxu0 0.0
    %1006 = vmatpush.msra.mxu0 0.0
    %1007 = vmatpush.msra.mxu0 0.0
    %1008 = vmatpush.msra.mxu0 0.0
    %1009 = vmatpush.msra.mxu0 0.0
    %1010 = vmatpush.msra.mxu0 %v273
    %1011 = vmatpush.msra.mxu0 %v272
    %1012 = vmatpush.msra.mxu0 %v271
    %1013 = vmatpush.msra.mxu0 %v270
    %1014 = vmatmul.f32.gmra.mxu0 %v996
    %v1015 = vpop.f32.mrf.mxu0
    %v1016 = vadd.f32 0.0, %v1015
    %1017 = vdwg.mxu0
    %v1019 = vrot.slane %v1016, 1
    %v1022 = vadd.f32 %v990, %v1016
    %v1023 = vadd.f32 %v991, %v1019
    %v1024 = vmul.f32 %v982, %v334
    %v1025 = vmul.f32 %v986, %v334
    %v1026 = vadd.f32 %v1024, %v337
    %v1027 = vadd.f32 %v1025, %v337
    %1028 = vmatpush.msra.mxu0 0.0
    %1029 = vmatpush.msra.mxu0 0.0
    %1030 = vmatpush.msra.mxu0 0.0
    %1031 = vmatpush.msra.mxu0 0.0
    %1032 = vmatpush.msra.mxu0 0.0
    %1033 = vmatpush.msra.mxu0 0.0
    %1034 = vmatpush.msra.mxu0 0.0
    %1035 = vmatpush.msra.mxu0 0.0
    %1036 = vmatpush.msra.mxu0 0.0
    %1037 = vmatpush.msra.mxu0 0.0
    %1038 = vmatpush.msra.mxu0 0.0
    %1039 = vmatpush.msra.mxu0 0.0
    %1040 = vmatpush.msra.mxu0 %v278
    %1041 = vmatpush.msra.mxu0 %v277
    %1042 = vmatpush.msra.mxu0 %v276
    %1043 = vmatpush.msra.mxu0 %v275
    %1044 = vmatmul.f32.gmra.mxu0 %v996
    %v1045 = vpop.f32.mrf.mxu0
    %v1046 = vadd.f32 0.0, %v1045
    %1047 = vdwg.mxu0
    %v1049 = vrot.slane %v1046, 1
    %v1052 = vadd.f32 %v1026, %v1046
    %v1053 = vadd.f32 %v1027, %v1049
    %v1054 = vmul.f32 %v982, %v366
    %v1055 = vmul.f32 %v986, %v366
    %v1056 = vadd.f32 %v1054, %v369
    %v1057 = vadd.f32 %v1055, %v369
    %1058 = vmatpush.msra.mxu0 0.0
    %1059 = vmatpush.msra.mxu0 0.0
    %1060 = vmatpush.msra.mxu0 0.0
    %1061 = vmatpush.msra.mxu0 0.0
    %1062 = vmatpush.msra.mxu0 0.0
    %1063 = vmatpush.msra.mxu0 0.0
    %1064 = vmatpush.msra.mxu0 0.0
    %1065 = vmatpush.msra.mxu0 0.0
    %1066 = vmatpush.msra.mxu0 0.0
    %1067 = vmatpush.msra.mxu0 0.0
    %1068 = vmatpush.msra.mxu0 0.0
    %1069 = vmatpush.msra.mxu0 0.0
    %1070 = vmatpush.msra.mxu0 %v283
    %1071 = vmatpush.msra.mxu0 %v282
    %1072 = vmatpush.msra.mxu0 %v281
    %1073 = vmatpush.msra.mxu0 %v280
    %1074 = vmatmul.f32.gmra.mxu0 %v996
    %v1075 = vpop.f32.mrf.mxu0
    %v1076 = vadd.f32 0.0, %v1075
    %1077 = vdwg.mxu0
    %v1079 = vrot.slane %v1076, 1
    %v1082 = vadd.f32 %v1056, %v1076
    %v1083 = vadd.f32 %v1057, %v1079
    %v1084 = vmul.f32 %v982, %v398
    %v1085 = vmul.f32 %v986, %v398
    %v1086 = vadd.f32 %v1084, %v401
    %v1087 = vadd.f32 %v1085, %v401
    %1088 = vmatpush.msra.mxu0 0.0
    %1089 = vmatpush.msra.mxu0 0.0
    %1090 = vmatpush.msra.mxu0 0.0
    %1091 = vmatpush.msra.mxu0 0.0
    %1092 = vmatpush.msra.mxu0 0.0
    %1093 = vmatpush.msra.mxu0 0.0
    %1094 = vmatpush.msra.mxu0 0.0
    %1095 = vmatpush.msra.mxu0 0.0
    %1096 = vmatpush.msra.mxu0 0.0
    %1097 = vmatpush.msra.mxu0 0.0
    %1098 = vmatpush.msra.mxu0 0.0
    %1099 = vmatpush.msra.mxu0 0.0
    %1100 = vmatpush.msra.mxu0 %v288
    %1101 = vmatpush.msra.mxu0 %v287
    %1102 = vmatpush.msra.mxu0 %v286
    %1103 = vmatpush.msra.mxu0 %v285
    %1104 = vmatmul.f32.gmra.mxu0 %v996
    %v1105 = vpop.f32.mrf.mxu0
    %v1106 = vadd.f32 0.0, %v1105
    %1107 = vdwg.mxu0
    %v1109 = vrot.slane %v1106, 1
    %v1112 = vadd.f32 %v1086, %v1106
    %v1113 = vadd.f32 %v1087, %v1109
    %v1114 = vmul.f32 %v1022, 0.5
    %v1115 = vmul.f32 %v1023, 0.5
    %v1116 = vtanh.pop %v1114
    %v1117 = vtanh.pop %v1115
    %v1118 = vmul.f32 %v1116, 0.5
    %v1119 = vmul.f32 %v1117, 0.5
    %v1120 = vadd.f32 %v1118, 0.5
    %v1121 = vadd.f32 %v1119, 0.5
    %v1122 = vmul.f32 %v1052, 0.5
    %v1123 = vmul.f32 %v1053, 0.5
    %v1124 = vtanh.pop %v1122
    %v1125 = vtanh.pop %v1123
    %v1126 = vmul.f32 %v1124, 0.5
    %v1127 = vmul.f32 %v1125, 0.5
    %v1128 = vadd.f32 %v1126, 0.5
    %v1129 = vadd.f32 %v1127, 0.5
    %v1130 = vtanh.pop %v1082
    %v1131 = vtanh.pop %v1083
    %v1132 = vmul.f32 %v1112, 0.5
    %v1133 = vmul.f32 %v1113, 0.5
    %v1134 = vtanh.pop %v1132
    %v1135 = vtanh.pop %v1133
    %v1136 = vmul.f32 %v1134, 0.5
    %v1137 = vmul.f32 %v1135, 0.5
    %v1138 = vadd.f32 %v1136, 0.5
    %v1139 = vadd.f32 %v1137, 0.5
    %v1140 = vmul.f32 %v1128, %v974
    %v1141 = vmul.f32 %v1129, %v975
    %v1142 = vmul.f32 %v1120, %v1130
    %v1143 = vmul.f32 %v1121, %v1131
    %v1144 = vadd.f32 %v1140, %v1142
    %v1145 = vadd.f32 %v1141, %v1143
    %v1146 = vtanh.pop %v1144
    %v1147 = vtanh.pop %v1145
    %v1148 = vmul.f32 %v1138, %v1146
    %v1149 = vmul.f32 %v1139, %v1147
    %1150 = vset.pattern.permute.xlu0 5
    %1151 = vperm.xlu0 %1150, %v260
    %v1152 = vpop.permute.xlu0 %1151
    %1154 = vset.pattern.permute.xlu0 5
    %1155 = vperm.xlu0 %1154, %v267
    %v1156 = vpop.permute.xlu0 %1155
    %v1158 = vmul.f32 %v1152, %v299
    %v1159 = vmul.f32 %v1156, %v299
    %v1160 = vadd.f32 %v1158, %v302
    %v1161 = vadd.f32 %v1159, %v302
    %v1164 = vrot.slane %v1149, 7
    %v1165 = vsel %vm196, %v1164, %v1148
    %v1166 = vsel %vm117, %v1165, 0
    %1168 = vmatpush.msra.mxu0 0.0
    %1169 = vmatpush.msra.mxu0 0.0
    %1170 = vmatpush.msra.mxu0 0.0
    %1171 = vmatpush.msra.mxu0 0.0
    %1172 = vmatpush.msra.mxu0 0.0
    %1173 = vmatpush.msra.mxu0 0.0
    %1174 = vmatpush.msra.mxu0 0.0
    %1175 = vmatpush.msra.mxu0 0.0
    %1176 = vmatpush.msra.mxu0 0.0
    %1177 = vmatpush.msra.mxu0 0.0
    %1178 = vmatpush.msra.mxu0 0.0
    %1179 = vmatpush.msra.mxu0 0.0
    %1180 = vmatpush.msra.mxu0 %v273
    %1181 = vmatpush.msra.mxu0 %v272
    %1182 = vmatpush.msra.mxu0 %v271
    %1183 = vmatpush.msra.mxu0 %v270
    %1184 = vmatmul.f32.gmra.mxu0 %v1166
    %v1185 = vpop.f32.mrf.mxu0
    %v1186 = vadd.f32 0.0, %v1185
    %1187 = vdwg.mxu0
    %v1189 = vrot.slane %v1186, 1
    %v1192 = vadd.f32 %v1160, %v1186
    %v1193 = vadd.f32 %v1161, %v1189
    %v1194 = vmul.f32 %v1152, %v334
    %v1195 = vmul.f32 %v1156, %v334
    %v1196 = vadd.f32 %v1194, %v337
    %v1197 = vadd.f32 %v1195, %v337
    %1198 = vmatpush.msra.mxu0 0.0
    %1199 = vmatpush.msra.mxu0 0.0
    %1200 = vmatpush.msra.mxu0 0.0
    %1201 = vmatpush.msra.mxu0 0.0
    %1202 = vmatpush.msra.mxu0 0.0
    %1203 = vmatpush.msra.mxu0 0.0
    %1204 = vmatpush.msra.mxu0 0.0
    %1205 = vmatpush.msra.mxu0 0.0
    %1206 = vmatpush.msra.mxu0 0.0
    %1207 = vmatpush.msra.mxu0 0.0
    %1208 = vmatpush.msra.mxu0 0.0
    %1209 = vmatpush.msra.mxu0 0.0
    %1210 = vmatpush.msra.mxu0 %v278
    %1211 = vmatpush.msra.mxu0 %v277
    %1212 = vmatpush.msra.mxu0 %v276
    %1213 = vmatpush.msra.mxu0 %v275
    %1214 = vmatmul.f32.gmra.mxu0 %v1166
    %v1215 = vpop.f32.mrf.mxu0
    %v1216 = vadd.f32 0.0, %v1215
    %1217 = vdwg.mxu0
    %v1219 = vrot.slane %v1216, 1
    %v1222 = vadd.f32 %v1196, %v1216
    %v1223 = vadd.f32 %v1197, %v1219
    %v1224 = vmul.f32 %v1152, %v366
    %v1225 = vmul.f32 %v1156, %v366
    %v1226 = vadd.f32 %v1224, %v369
    %v1227 = vadd.f32 %v1225, %v369
    %1228 = vmatpush.msra.mxu0 0.0
    %1229 = vmatpush.msra.mxu0 0.0
    %1230 = vmatpush.msra.mxu0 0.0
    %1231 = vmatpush.msra.mxu0 0.0
    %1232 = vmatpush.msra.mxu0 0.0
    %1233 = vmatpush.msra.mxu0 0.0
    %1234 = vmatpush.msra.mxu0 0.0
    %1235 = vmatpush.msra.mxu0 0.0
    %1236 = vmatpush.msra.mxu0 0.0
    %1237 = vmatpush.msra.mxu0 0.0
    %1238 = vmatpush.msra.mxu0 0.0
    %1239 = vmatpush.msra.mxu0 0.0
    %1240 = vmatpush.msra.mxu0 %v283
    %1241 = vmatpush.msra.mxu0 %v282
    %1242 = vmatpush.msra.mxu0 %v281
    %1243 = vmatpush.msra.mxu0 %v280
    %1244 = vmatmul.f32.gmra.mxu0 %v1166
    %v1245 = vpop.f32.mrf.mxu0
    %v1246 = vadd.f32 0.0, %v1245
    %1247 = vdwg.mxu0
    %v1249 = vrot.slane %v1246, 1
    %v1252 = vadd.f32 %v1226, %v1246
    %v1253 = vadd.f32 %v1227, %v1249
    %v1254 = vmul.f32 %v1152, %v398
    %v1255 = vmul.f32 %v1156, %v398
    %v1256 = vadd.f32 %v1254, %v401
    %v1257 = vadd.f32 %v1255, %v401
    %1258 = vmatpush.msra.mxu0 0.0
    %1259 = vmatpush.msra.mxu0 0.0
    %1260 = vmatpush.msra.mxu0 0.0
    %1261 = vmatpush.msra.mxu0 0.0
    %1262 = vmatpush.msra.mxu0 0.0
    %1263 = vmatpush.msra.mxu0 0.0
    %1264 = vmatpush.msra.mxu0 0.0
    %1265 = vmatpush.msra.mxu0 0.0
    %1266 = vmatpush.msra.mxu0 0.0
    %1267 = vmatpush.msra.mxu0 0.0
    %1268 = vmatpush.msra.mxu0 0.0
    %1269 = vmatpush.msra.mxu0 0.0
    %1270 = vmatpush.msra.mxu0 %v288
    %1271 = vmatpush.msra.mxu0 %v287
    %1272 = vmatpush.msra.mxu0 %v286
    %1273 = vmatpush.msra.mxu0 %v285
    %1274 = vmatmul.f32.gmra.mxu0 %v1166
    %v1275 = vpop.f32.mrf.mxu0
    %v1276 = vadd.f32 0.0, %v1275
    %1277 = vdwg.mxu0
    %v1279 = vrot.slane %v1276, 1
    %v1282 = vadd.f32 %v1256, %v1276
    %v1283 = vadd.f32 %v1257, %v1279
    %v1284 = vmul.f32 %v1192, 0.5
    %v1285 = vmul.f32 %v1193, 0.5
    %v1286 = vtanh.pop %v1284
    %v1287 = vtanh.pop %v1285
    %v1288 = vmul.f32 %v1286, 0.5
    %v1289 = vmul.f32 %v1287, 0.5
    %v1290 = vadd.f32 %v1288, 0.5
    %v1291 = vadd.f32 %v1289, 0.5
    %v1292 = vmul.f32 %v1222, 0.5
    %v1293 = vmul.f32 %v1223, 0.5
    %v1294 = vtanh.pop %v1292
    %v1295 = vtanh.pop %v1293
    %v1296 = vmul.f32 %v1294, 0.5
    %v1297 = vmul.f32 %v1295, 0.5
    %v1298 = vadd.f32 %v1296, 0.5
    %v1299 = vadd.f32 %v1297, 0.5
    %v1300 = vtanh.pop %v1252
    %v1301 = vtanh.pop %v1253
    %v1302 = vmul.f32 %v1282, 0.5
    %v1303 = vmul.f32 %v1283, 0.5
    %v1304 = vtanh.pop %v1302
    %v1305 = vtanh.pop %v1303
    %v1306 = vmul.f32 %v1304, 0.5
    %v1307 = vmul.f32 %v1305, 0.5
    %v1308 = vadd.f32 %v1306, 0.5
    %v1309 = vadd.f32 %v1307, 0.5
    %v1310 = vmul.f32 %v1298, %v1144
    %v1311 = vmul.f32 %v1299, %v1145
    %v1312 = vmul.f32 %v1290, %v1300
    %v1313 = vmul.f32 %v1291, %v1301
    %v1314 = vadd.f32 %v1310, %v1312
    %v1315 = vadd.f32 %v1311, %v1313
    %v1316 = vtanh.pop %v1314
    %v1317 = vtanh.pop %v1315
    %v1318 = vmul.f32 %v1308, %v1316
    %v1319 = vmul.f32 %v1309, %v1317
    %1320 = vset.pattern.permute.xlu0 6
    %1321 = vperm.xlu0 %1320, %v260
    %v1322 = vpop.permute.xlu0 %1321
    %1324 = vset.pattern.permute.xlu0 6
    %1325 = vperm.xlu0 %1324, %v267
    %v1326 = vpop.permute.xlu0 %1325
    %v1328 = vmul.f32 %v1322, %v299
    %v1329 = vmul.f32 %v1326, %v299
    %v1330 = vadd.f32 %v1328, %v302
    %v1331 = vadd.f32 %v1329, %v302
    %v1334 = vrot.slane %v1319, 7
    %v1335 = vsel %vm196, %v1334, %v1318
    %v1336 = vsel %vm117, %v1335, 0
    %1338 = vmatpush.msra.mxu0 0.0
    %1339 = vmatpush.msra.mxu0 0.0
    %1340 = vmatpush.msra.mxu0 0.0
    %1341 = vmatpush.msra.mxu0 0.0
    %1342 = vmatpush.msra.mxu0 0.0
    %1343 = vmatpush.msra.mxu0 0.0
    %1344 = vmatpush.msra.mxu0 0.0
    %1345 = vmatpush.msra.mxu0 0.0
    %1346 = vmatpush.msra.mxu0 0.0
    %1347 = vmatpush.msra.mxu0 0.0
    %1348 = vmatpush.msra.mxu0 0.0
    %1349 = vmatpush.msra.mxu0 0.0
    %1350 = vmatpush.msra.mxu0 %v273
    %1351 = vmatpush.msra.mxu0 %v272
    %1352 = vmatpush.msra.mxu0 %v271
    %1353 = vmatpush.msra.mxu0 %v270
    %1354 = vmatmul.f32.gmra.mxu0 %v1336
    %v1355 = vpop.f32.mrf.mxu0
    %v1356 = vadd.f32 0.0, %v1355
    %1357 = vdwg.mxu0
    %v1359 = vrot.slane %v1356, 1
    %v1362 = vadd.f32 %v1330, %v1356
    %v1363 = vadd.f32 %v1331, %v1359
    %v1364 = vmul.f32 %v1322, %v334
    %v1365 = vmul.f32 %v1326, %v334
    %v1366 = vadd.f32 %v1364, %v337
    %v1367 = vadd.f32 %v1365, %v337
    %1368 = vmatpush.msra.mxu0 0.0
    %1369 = vmatpush.msra.mxu0 0.0
    %1370 = vmatpush.msra.mxu0 0.0
    %1371 = vmatpush.msra.mxu0 0.0
    %1372 = vmatpush.msra.mxu0 0.0
    %1373 = vmatpush.msra.mxu0 0.0
    %1374 = vmatpush.msra.mxu0 0.0
    %1375 = vmatpush.msra.mxu0 0.0
    %1376 = vmatpush.msra.mxu0 0.0
    %1377 = vmatpush.msra.mxu0 0.0
    %1378 = vmatpush.msra.mxu0 0.0
    %1379 = vmatpush.msra.mxu0 0.0
    %1380 = vmatpush.msra.mxu0 %v278
    %1381 = vmatpush.msra.mxu0 %v277
    %1382 = vmatpush.msra.mxu0 %v276
    %1383 = vmatpush.msra.mxu0 %v275
    %1384 = vmatmul.f32.gmra.mxu0 %v1336
    %v1385 = vpop.f32.mrf.mxu0
    %v1386 = vadd.f32 0.0, %v1385
    %1387 = vdwg.mxu0
    %v1389 = vrot.slane %v1386, 1
    %v1392 = vadd.f32 %v1366, %v1386
    %v1393 = vadd.f32 %v1367, %v1389
    %v1394 = vmul.f32 %v1322, %v366
    %v1395 = vmul.f32 %v1326, %v366
    %v1396 = vadd.f32 %v1394, %v369
    %v1397 = vadd.f32 %v1395, %v369
    %1398 = vmatpush.msra.mxu0 0.0
    %1399 = vmatpush.msra.mxu0 0.0
    %1400 = vmatpush.msra.mxu0 0.0
    %1401 = vmatpush.msra.mxu0 0.0
    %1402 = vmatpush.msra.mxu0 0.0
    %1403 = vmatpush.msra.mxu0 0.0
    %1404 = vmatpush.msra.mxu0 0.0
    %1405 = vmatpush.msra.mxu0 0.0
    %1406 = vmatpush.msra.mxu0 0.0
    %1407 = vmatpush.msra.mxu0 0.0
    %1408 = vmatpush.msra.mxu0 0.0
    %1409 = vmatpush.msra.mxu0 0.0
    %1410 = vmatpush.msra.mxu0 %v283
    %1411 = vmatpush.msra.mxu0 %v282
    %1412 = vmatpush.msra.mxu0 %v281
    %1413 = vmatpush.msra.mxu0 %v280
    %1414 = vmatmul.f32.gmra.mxu0 %v1336
    %v1415 = vpop.f32.mrf.mxu0
    %v1416 = vadd.f32 0.0, %v1415
    %1417 = vdwg.mxu0
    %v1419 = vrot.slane %v1416, 1
    %v1422 = vadd.f32 %v1396, %v1416
    %v1423 = vadd.f32 %v1397, %v1419
    %v1424 = vmul.f32 %v1322, %v398
    %v1425 = vmul.f32 %v1326, %v398
    %v1426 = vadd.f32 %v1424, %v401
    %v1427 = vadd.f32 %v1425, %v401
    %1428 = vmatpush.msra.mxu0 0.0
    %1429 = vmatpush.msra.mxu0 0.0
    %1430 = vmatpush.msra.mxu0 0.0
    %1431 = vmatpush.msra.mxu0 0.0
    %1432 = vmatpush.msra.mxu0 0.0
    %1433 = vmatpush.msra.mxu0 0.0
    %1434 = vmatpush.msra.mxu0 0.0
    %1435 = vmatpush.msra.mxu0 0.0
    %1436 = vmatpush.msra.mxu0 0.0
    %1437 = vmatpush.msra.mxu0 0.0
    %1438 = vmatpush.msra.mxu0 0.0
    %1439 = vmatpush.msra.mxu0 0.0
    %1440 = vmatpush.msra.mxu0 %v288
    %1441 = vmatpush.msra.mxu0 %v287
    %1442 = vmatpush.msra.mxu0 %v286
    %1443 = vmatpush.msra.mxu0 %v285
    %1444 = vmatmul.f32.gmra.mxu0 %v1336
    %v1445 = vpop.f32.mrf.mxu0
    %v1446 = vadd.f32 0.0, %v1445
    %1447 = vdwg.mxu0
    %v1449 = vrot.slane %v1446, 1
    %v1452 = vadd.f32 %v1426, %v1446
    %v1453 = vadd.f32 %v1427, %v1449
    %v1454 = vmul.f32 %v1362, 0.5
    %v1455 = vmul.f32 %v1363, 0.5
    %v1456 = vtanh.pop %v1454
    %v1457 = vtanh.pop %v1455
    %v1458 = vmul.f32 %v1456, 0.5
    %v1459 = vmul.f32 %v1457, 0.5
    %v1460 = vadd.f32 %v1458, 0.5
    %v1461 = vadd.f32 %v1459, 0.5
    %v1462 = vmul.f32 %v1392, 0.5
    %v1463 = vmul.f32 %v1393, 0.5
    %v1464 = vtanh.pop %v1462
    %v1465 = vtanh.pop %v1463
    %v1466 = vmul.f32 %v1464, 0.5
    %v1467 = vmul.f32 %v1465, 0.5
    %v1468 = vadd.f32 %v1466, 0.5
    %v1469 = vadd.f32 %v1467, 0.5
    %v1470 = vtanh.pop %v1422
    %v1471 = vtanh.pop %v1423
    %v1472 = vmul.f32 %v1452, 0.5
    %v1473 = vmul.f32 %v1453, 0.5
    %v1474 = vtanh.pop %v1472
    %v1475 = vtanh.pop %v1473
    %v1476 = vmul.f32 %v1474, 0.5
    %v1477 = vmul.f32 %v1475, 0.5
    %v1478 = vadd.f32 %v1476, 0.5
    %v1479 = vadd.f32 %v1477, 0.5
    %v1480 = vmul.f32 %v1468, %v1314
    %v1481 = vmul.f32 %v1469, %v1315
    %v1482 = vmul.f32 %v1460, %v1470
    %v1483 = vmul.f32 %v1461, %v1471
    %v1484 = vadd.f32 %v1480, %v1482
    %v1485 = vadd.f32 %v1481, %v1483
    %v1486 = vtanh.pop %v1484
    %v1487 = vtanh.pop %v1485
    %v1488 = vmul.f32 %v1478, %v1486
    %v1489 = vmul.f32 %v1479, %v1487
    %1490 = vset.pattern.permute.xlu0 7
    %1491 = vperm.xlu0 %1490, %v260
    %v1492 = vpop.permute.xlu0 %1491
    %1494 = vset.pattern.permute.xlu0 7
    %1495 = vperm.xlu0 %1494, %v267
    %v1496 = vpop.permute.xlu0 %1495
    %v1498 = vmul.f32 %v1492, %v299
    %v1499 = vmul.f32 %v1496, %v299
    %v1500 = vadd.f32 %v1498, %v302
    %v1501 = vadd.f32 %v1499, %v302
    %v1504 = vrot.slane %v1489, 7
    %v1505 = vsel %vm196, %v1504, %v1488
    %v1506 = vsel %vm117, %v1505, 0
    %1508 = vmatpush.msra.mxu0 0.0
    %1509 = vmatpush.msra.mxu0 0.0
    %1510 = vmatpush.msra.mxu0 0.0
    %1511 = vmatpush.msra.mxu0 0.0
    %1512 = vmatpush.msra.mxu0 0.0
    %1513 = vmatpush.msra.mxu0 0.0
    %1514 = vmatpush.msra.mxu0 0.0
    %1515 = vmatpush.msra.mxu0 0.0
    %1516 = vmatpush.msra.mxu0 0.0
    %1517 = vmatpush.msra.mxu0 0.0
    %1518 = vmatpush.msra.mxu0 0.0
    %1519 = vmatpush.msra.mxu0 0.0
    %1520 = vmatpush.msra.mxu0 %v273
    %1521 = vmatpush.msra.mxu0 %v272
    %1522 = vmatpush.msra.mxu0 %v271
    %1523 = vmatpush.msra.mxu0 %v270
    %1524 = vmatmul.f32.gmra.mxu0 %v1506
    %v1525 = vpop.f32.mrf.mxu0
    %v1526 = vadd.f32 0.0, %v1525
    %1527 = vdwg.mxu0
    %v1529 = vrot.slane %v1526, 1
    %v1532 = vadd.f32 %v1500, %v1526
    %v1533 = vadd.f32 %v1501, %v1529
    %v1534 = vmul.f32 %v1492, %v334
    %v1535 = vmul.f32 %v1496, %v334
    %v1536 = vadd.f32 %v1534, %v337
    %v1537 = vadd.f32 %v1535, %v337
    %1538 = vmatpush.msra.mxu0 0.0
    %1539 = vmatpush.msra.mxu0 0.0
    %1540 = vmatpush.msra.mxu0 0.0
    %1541 = vmatpush.msra.mxu0 0.0
    %1542 = vmatpush.msra.mxu0 0.0
    %1543 = vmatpush.msra.mxu0 0.0
    %1544 = vmatpush.msra.mxu0 0.0
    %1545 = vmatpush.msra.mxu0 0.0
    %1546 = vmatpush.msra.mxu0 0.0
    %1547 = vmatpush.msra.mxu0 0.0
    %1548 = vmatpush.msra.mxu0 0.0
    %1549 = vmatpush.msra.mxu0 0.0
    %1550 = vmatpush.msra.mxu0 %v278
    %1551 = vmatpush.msra.mxu0 %v277
    %1552 = vmatpush.msra.mxu0 %v276
    %1553 = vmatpush.msra.mxu0 %v275
    %1554 = vmatmul.f32.gmra.mxu0 %v1506
    %v1555 = vpop.f32.mrf.mxu0
    %v1556 = vadd.f32 0.0, %v1555
    %1557 = vdwg.mxu0
    %v1559 = vrot.slane %v1556, 1
    %v1562 = vadd.f32 %v1536, %v1556
    %v1563 = vadd.f32 %v1537, %v1559
    %v1564 = vmul.f32 %v1492, %v366
    %v1565 = vmul.f32 %v1496, %v366
    %v1566 = vadd.f32 %v1564, %v369
    %v1567 = vadd.f32 %v1565, %v369
    %1568 = vmatpush.msra.mxu0 0.0
    %1569 = vmatpush.msra.mxu0 0.0
    %1570 = vmatpush.msra.mxu0 0.0
    %1571 = vmatpush.msra.mxu0 0.0
    %1572 = vmatpush.msra.mxu0 0.0
    %1573 = vmatpush.msra.mxu0 0.0
    %1574 = vmatpush.msra.mxu0 0.0
    %1575 = vmatpush.msra.mxu0 0.0
    %1576 = vmatpush.msra.mxu0 0.0
    %1577 = vmatpush.msra.mxu0 0.0
    %1578 = vmatpush.msra.mxu0 0.0
    %1579 = vmatpush.msra.mxu0 0.0
    %1580 = vmatpush.msra.mxu0 %v283
    %1581 = vmatpush.msra.mxu0 %v282
    %1582 = vmatpush.msra.mxu0 %v281
    %1583 = vmatpush.msra.mxu0 %v280
    %1584 = vmatmul.f32.gmra.mxu0 %v1506
    %v1585 = vpop.f32.mrf.mxu0
    %v1586 = vadd.f32 0.0, %v1585
    %1587 = vdwg.mxu0
    %v1589 = vrot.slane %v1586, 1
    %v1592 = vadd.f32 %v1566, %v1586
    %v1593 = vadd.f32 %v1567, %v1589
    %v1594 = vmul.f32 %v1492, %v398
    %v1595 = vmul.f32 %v1496, %v398
    %v1596 = vadd.f32 %v1594, %v401
    %v1597 = vadd.f32 %v1595, %v401
    %1598 = vmatpush.msra.mxu0 0.0
    %1599 = vmatpush.msra.mxu0 0.0
    %1600 = vmatpush.msra.mxu0 0.0
    %1601 = vmatpush.msra.mxu0 0.0
    %1602 = vmatpush.msra.mxu0 0.0
    %1603 = vmatpush.msra.mxu0 0.0
    %1604 = vmatpush.msra.mxu0 0.0
    %1605 = vmatpush.msra.mxu0 0.0
    %1606 = vmatpush.msra.mxu0 0.0
    %1607 = vmatpush.msra.mxu0 0.0
    %1608 = vmatpush.msra.mxu0 0.0
    %1609 = vmatpush.msra.mxu0 0.0
    %1610 = vmatpush.msra.mxu0 %v288
    %1611 = vmatpush.msra.mxu0 %v287
    %1612 = vmatpush.msra.mxu0 %v286
    %1613 = vmatpush.msra.mxu0 %v285
    %1614 = vmatmul.f32.gmra.mxu0 %v1506
    %v1615 = vpop.f32.mrf.mxu0
    %v1616 = vadd.f32 0.0, %v1615
    %1617 = vdwg.mxu0
    %v1619 = vrot.slane %v1616, 1
    %v1622 = vadd.f32 %v1596, %v1616
    %v1623 = vadd.f32 %v1597, %v1619
    %v1624 = vmul.f32 %v1532, 0.5
    %v1625 = vmul.f32 %v1533, 0.5
    %v1626 = vtanh.pop %v1624
    %v1627 = vtanh.pop %v1625
    %v1628 = vmul.f32 %v1626, 0.5
    %v1629 = vmul.f32 %v1627, 0.5
    %v1630 = vadd.f32 %v1628, 0.5
    %v1631 = vadd.f32 %v1629, 0.5
    %v1632 = vmul.f32 %v1562, 0.5
    %v1633 = vmul.f32 %v1563, 0.5
    %v1634 = vtanh.pop %v1632
    %v1635 = vtanh.pop %v1633
    %v1636 = vmul.f32 %v1634, 0.5
    %v1637 = vmul.f32 %v1635, 0.5
    %v1638 = vadd.f32 %v1636, 0.5
    %v1639 = vadd.f32 %v1637, 0.5
    %v1640 = vtanh.pop %v1592
    %v1641 = vtanh.pop %v1593
    %v1642 = vmul.f32 %v1622, 0.5
    %v1643 = vmul.f32 %v1623, 0.5
    %v1644 = vtanh.pop %v1642
    %v1645 = vtanh.pop %v1643
    %v1646 = vmul.f32 %v1644, 0.5
    %v1647 = vmul.f32 %v1645, 0.5
    %v1648 = vadd.f32 %v1646, 0.5
    %v1649 = vadd.f32 %v1647, 0.5
    %v1650 = vmul.f32 %v1638, %v1484
    %v1651 = vmul.f32 %v1639, %v1485
    %v1652 = vmul.f32 %v1630, %v1640
    %v1653 = vmul.f32 %v1631, %v1641
    %v1654 = vadd.f32 %v1650, %v1652
    %v1655 = vadd.f32 %v1651, %v1653
    %v1656 = vtanh.pop %v1654
    %v1657 = vtanh.pop %v1655
    %v1658 = vmul.f32 %v1648, %v1656
    %v1659 = vmul.f32 %v1649, %v1657
    %1660 = vset.pattern.permute.xlu0 8
    %1661 = vperm.xlu0 %1660, %v260
    %v1662 = vpop.permute.xlu0 %1661
    %1664 = vset.pattern.permute.xlu0 8
    %1665 = vperm.xlu0 %1664, %v267
    %v1666 = vpop.permute.xlu0 %1665
    %v1668 = vmul.f32 %v1662, %v299
    %v1669 = vmul.f32 %v1666, %v299
    %v1670 = vadd.f32 %v1668, %v302
    %v1671 = vadd.f32 %v1669, %v302
    %v1674 = vrot.slane %v1659, 7
    %v1675 = vsel %vm196, %v1674, %v1658
    %v1676 = vsel %vm117, %v1675, 0
    %1678 = vmatpush.msra.mxu0 0.0
    %1679 = vmatpush.msra.mxu0 0.0
    %1680 = vmatpush.msra.mxu0 0.0
    %1681 = vmatpush.msra.mxu0 0.0
    %1682 = vmatpush.msra.mxu0 0.0
    %1683 = vmatpush.msra.mxu0 0.0
    %1684 = vmatpush.msra.mxu0 0.0
    %1685 = vmatpush.msra.mxu0 0.0
    %1686 = vmatpush.msra.mxu0 0.0
    %1687 = vmatpush.msra.mxu0 0.0
    %1688 = vmatpush.msra.mxu0 0.0
    %1689 = vmatpush.msra.mxu0 0.0
    %1690 = vmatpush.msra.mxu0 %v273
    %1691 = vmatpush.msra.mxu0 %v272
    %1692 = vmatpush.msra.mxu0 %v271
    %1693 = vmatpush.msra.mxu0 %v270
    %1694 = vmatmul.f32.gmra.mxu0 %v1676
    %v1695 = vpop.f32.mrf.mxu0
    %v1696 = vadd.f32 0.0, %v1695
    %1697 = vdwg.mxu0
    %v1699 = vrot.slane %v1696, 1
    %v1702 = vadd.f32 %v1670, %v1696
    %v1703 = vadd.f32 %v1671, %v1699
    %v1704 = vmul.f32 %v1662, %v334
    %v1705 = vmul.f32 %v1666, %v334
    %v1706 = vadd.f32 %v1704, %v337
    %v1707 = vadd.f32 %v1705, %v337
    %1708 = vmatpush.msra.mxu0 0.0
    %1709 = vmatpush.msra.mxu0 0.0
    %1710 = vmatpush.msra.mxu0 0.0
    %1711 = vmatpush.msra.mxu0 0.0
    %1712 = vmatpush.msra.mxu0 0.0
    %1713 = vmatpush.msra.mxu0 0.0
    %1714 = vmatpush.msra.mxu0 0.0
    %1715 = vmatpush.msra.mxu0 0.0
    %1716 = vmatpush.msra.mxu0 0.0
    %1717 = vmatpush.msra.mxu0 0.0
    %1718 = vmatpush.msra.mxu0 0.0
    %1719 = vmatpush.msra.mxu0 0.0
    %1720 = vmatpush.msra.mxu0 %v278
    %1721 = vmatpush.msra.mxu0 %v277
    %1722 = vmatpush.msra.mxu0 %v276
    %1723 = vmatpush.msra.mxu0 %v275
    %1724 = vmatmul.f32.gmra.mxu0 %v1676
    %v1725 = vpop.f32.mrf.mxu0
    %v1726 = vadd.f32 0.0, %v1725
    %1727 = vdwg.mxu0
    %v1729 = vrot.slane %v1726, 1
    %v1732 = vadd.f32 %v1706, %v1726
    %v1733 = vadd.f32 %v1707, %v1729
    %v1734 = vmul.f32 %v1662, %v366
    %v1735 = vmul.f32 %v1666, %v366
    %v1736 = vadd.f32 %v1734, %v369
    %v1737 = vadd.f32 %v1735, %v369
    %1738 = vmatpush.msra.mxu0 0.0
    %1739 = vmatpush.msra.mxu0 0.0
    %1740 = vmatpush.msra.mxu0 0.0
    %1741 = vmatpush.msra.mxu0 0.0
    %1742 = vmatpush.msra.mxu0 0.0
    %1743 = vmatpush.msra.mxu0 0.0
    %1744 = vmatpush.msra.mxu0 0.0
    %1745 = vmatpush.msra.mxu0 0.0
    %1746 = vmatpush.msra.mxu0 0.0
    %1747 = vmatpush.msra.mxu0 0.0
    %1748 = vmatpush.msra.mxu0 0.0
    %1749 = vmatpush.msra.mxu0 0.0
    %1750 = vmatpush.msra.mxu0 %v283
    %1751 = vmatpush.msra.mxu0 %v282
    %1752 = vmatpush.msra.mxu0 %v281
    %1753 = vmatpush.msra.mxu0 %v280
    %1754 = vmatmul.f32.gmra.mxu0 %v1676
    %v1755 = vpop.f32.mrf.mxu0
    %v1756 = vadd.f32 0.0, %v1755
    %1757 = vdwg.mxu0
    %v1759 = vrot.slane %v1756, 1
    %v1762 = vadd.f32 %v1736, %v1756
    %v1763 = vadd.f32 %v1737, %v1759
    %v1764 = vmul.f32 %v1662, %v398
    %v1765 = vmul.f32 %v1666, %v398
    %v1766 = vadd.f32 %v1764, %v401
    %v1767 = vadd.f32 %v1765, %v401
    %1768 = vmatpush.msra.mxu0 0.0
    %1769 = vmatpush.msra.mxu0 0.0
    %1770 = vmatpush.msra.mxu0 0.0
    %1771 = vmatpush.msra.mxu0 0.0
    %1772 = vmatpush.msra.mxu0 0.0
    %1773 = vmatpush.msra.mxu0 0.0
    %1774 = vmatpush.msra.mxu0 0.0
    %1775 = vmatpush.msra.mxu0 0.0
    %1776 = vmatpush.msra.mxu0 0.0
    %1777 = vmatpush.msra.mxu0 0.0
    %1778 = vmatpush.msra.mxu0 0.0
    %1779 = vmatpush.msra.mxu0 0.0
    %1780 = vmatpush.msra.mxu0 %v288
    %1781 = vmatpush.msra.mxu0 %v287
    %1782 = vmatpush.msra.mxu0 %v286
    %1783 = vmatpush.msra.mxu0 %v285
    %1784 = vmatmul.f32.gmra.mxu0 %v1676
    %v1785 = vpop.f32.mrf.mxu0
    %v1786 = vadd.f32 0.0, %v1785
    %1787 = vdwg.mxu0
    %v1789 = vrot.slane %v1786, 1
    %v1792 = vadd.f32 %v1766, %v1786
    %v1793 = vadd.f32 %v1767, %v1789
    %v1794 = vmul.f32 %v1702, 0.5
    %v1795 = vmul.f32 %v1703, 0.5
    %v1796 = vtanh.pop %v1794
    %v1797 = vtanh.pop %v1795
    %v1798 = vmul.f32 %v1796, 0.5
    %v1799 = vmul.f32 %v1797, 0.5
    %v1800 = vadd.f32 %v1798, 0.5
    %v1801 = vadd.f32 %v1799, 0.5
    %v1802 = vmul.f32 %v1732, 0.5
    %v1803 = vmul.f32 %v1733, 0.5
    %v1804 = vtanh.pop %v1802
    %v1805 = vtanh.pop %v1803
    %v1806 = vmul.f32 %v1804, 0.5
    %v1807 = vmul.f32 %v1805, 0.5
    %v1808 = vadd.f32 %v1806, 0.5
    %v1809 = vadd.f32 %v1807, 0.5
    %v1810 = vtanh.pop %v1762
    %v1811 = vtanh.pop %v1763
    %v1812 = vmul.f32 %v1792, 0.5
    %v1813 = vmul.f32 %v1793, 0.5
    %v1814 = vtanh.pop %v1812
    %v1815 = vtanh.pop %v1813
    %v1816 = vmul.f32 %v1814, 0.5
    %v1817 = vmul.f32 %v1815, 0.5
    %v1818 = vadd.f32 %v1816, 0.5
    %v1819 = vadd.f32 %v1817, 0.5
    %v1820 = vmul.f32 %v1808, %v1654
    %v1821 = vmul.f32 %v1809, %v1655
    %v1822 = vmul.f32 %v1800, %v1810
    %v1823 = vmul.f32 %v1801, %v1811
    %v1824 = vadd.f32 %v1820, %v1822
    %v1825 = vadd.f32 %v1821, %v1823
    %v1826 = vtanh.pop %v1824
    %v1827 = vtanh.pop %v1825
    %v1828 = vmul.f32 %v1818, %v1826
    %v1829 = vmul.f32 %v1819, %v1827
    %1830 = vset.pattern.permute.xlu0 9
    %1831 = vperm.xlu0 %1830, %v260
    %v1832 = vpop.permute.xlu0 %1831
    %1834 = vset.pattern.permute.xlu0 9
    %1835 = vperm.xlu0 %1834, %v267
    %v1836 = vpop.permute.xlu0 %1835
    %v1838 = vmul.f32 %v1832, %v299
    %v1839 = vmul.f32 %v1836, %v299
    %v1840 = vadd.f32 %v1838, %v302
    %v1841 = vadd.f32 %v1839, %v302
    %v1844 = vrot.slane %v1829, 7
    %v1845 = vsel %vm196, %v1844, %v1828
    %v1846 = vsel %vm117, %v1845, 0
    %1848 = vmatpush.msra.mxu0 0.0
    %1849 = vmatpush.msra.mxu0 0.0
    %1850 = vmatpush.msra.mxu0 0.0
    %1851 = vmatpush.msra.mxu0 0.0
    %1852 = vmatpush.msra.mxu0 0.0
    %1853 = vmatpush.msra.mxu0 0.0
    %1854 = vmatpush.msra.mxu0 0.0
    %1855 = vmatpush.msra.mxu0 0.0
    %1856 = vmatpush.msra.mxu0 0.0
    %1857 = vmatpush.msra.mxu0 0.0
    %1858 = vmatpush.msra.mxu0 0.0
    %1859 = vmatpush.msra.mxu0 0.0
    %1860 = vmatpush.msra.mxu0 %v273
    %1861 = vmatpush.msra.mxu0 %v272
    %1862 = vmatpush.msra.mxu0 %v271
    %1863 = vmatpush.msra.mxu0 %v270
    %1864 = vmatmul.f32.gmra.mxu0 %v1846
    %v1865 = vpop.f32.mrf.mxu0
    %v1866 = vadd.f32 0.0, %v1865
    %1867 = vdwg.mxu0
    %v1869 = vrot.slane %v1866, 1
    %v1872 = vadd.f32 %v1840, %v1866
    %v1873 = vadd.f32 %v1841, %v1869
    %v1874 = vmul.f32 %v1832, %v334
    %v1875 = vmul.f32 %v1836, %v334
    %v1876 = vadd.f32 %v1874, %v337
    %v1877 = vadd.f32 %v1875, %v337
    %1878 = vmatpush.msra.mxu0 0.0
    %1879 = vmatpush.msra.mxu0 0.0
    %1880 = vmatpush.msra.mxu0 0.0
    %1881 = vmatpush.msra.mxu0 0.0
    %1882 = vmatpush.msra.mxu0 0.0
    %1883 = vmatpush.msra.mxu0 0.0
    %1884 = vmatpush.msra.mxu0 0.0
    %1885 = vmatpush.msra.mxu0 0.0
    %1886 = vmatpush.msra.mxu0 0.0
    %1887 = vmatpush.msra.mxu0 0.0
    %1888 = vmatpush.msra.mxu0 0.0
    %1889 = vmatpush.msra.mxu0 0.0
    %1890 = vmatpush.msra.mxu0 %v278
    %1891 = vmatpush.msra.mxu0 %v277
    %1892 = vmatpush.msra.mxu0 %v276
    %1893 = vmatpush.msra.mxu0 %v275
    %1894 = vmatmul.f32.gmra.mxu0 %v1846
    %v1895 = vpop.f32.mrf.mxu0
    %v1896 = vadd.f32 0.0, %v1895
    %1897 = vdwg.mxu0
    %v1899 = vrot.slane %v1896, 1
    %v1902 = vadd.f32 %v1876, %v1896
    %v1903 = vadd.f32 %v1877, %v1899
    %v1904 = vmul.f32 %v1832, %v366
    %v1905 = vmul.f32 %v1836, %v366
    %v1906 = vadd.f32 %v1904, %v369
    %v1907 = vadd.f32 %v1905, %v369
    %1908 = vmatpush.msra.mxu0 0.0
    %1909 = vmatpush.msra.mxu0 0.0
    %1910 = vmatpush.msra.mxu0 0.0
    %1911 = vmatpush.msra.mxu0 0.0
    %1912 = vmatpush.msra.mxu0 0.0
    %1913 = vmatpush.msra.mxu0 0.0
    %1914 = vmatpush.msra.mxu0 0.0
    %1915 = vmatpush.msra.mxu0 0.0
    %1916 = vmatpush.msra.mxu0 0.0
    %1917 = vmatpush.msra.mxu0 0.0
    %1918 = vmatpush.msra.mxu0 0.0
    %1919 = vmatpush.msra.mxu0 0.0
    %1920 = vmatpush.msra.mxu0 %v283
    %1921 = vmatpush.msra.mxu0 %v282
    %1922 = vmatpush.msra.mxu0 %v281
    %1923 = vmatpush.msra.mxu0 %v280
    %1924 = vmatmul.f32.gmra.mxu0 %v1846
    %v1925 = vpop.f32.mrf.mxu0
    %v1926 = vadd.f32 0.0, %v1925
    %1927 = vdwg.mxu0
    %v1929 = vrot.slane %v1926, 1
    %v1932 = vadd.f32 %v1906, %v1926
    %v1933 = vadd.f32 %v1907, %v1929
    %v1934 = vmul.f32 %v1832, %v398
    %v1935 = vmul.f32 %v1836, %v398
    %v1936 = vadd.f32 %v1934, %v401
    %v1937 = vadd.f32 %v1935, %v401
    %1938 = vmatpush.msra.mxu0 0.0
    %1939 = vmatpush.msra.mxu0 0.0
    %1940 = vmatpush.msra.mxu0 0.0
    %1941 = vmatpush.msra.mxu0 0.0
    %1942 = vmatpush.msra.mxu0 0.0
    %1943 = vmatpush.msra.mxu0 0.0
    %1944 = vmatpush.msra.mxu0 0.0
    %1945 = vmatpush.msra.mxu0 0.0
    %1946 = vmatpush.msra.mxu0 0.0
    %1947 = vmatpush.msra.mxu0 0.0
    %1948 = vmatpush.msra.mxu0 0.0
    %1949 = vmatpush.msra.mxu0 0.0
    %1950 = vmatpush.msra.mxu0 %v288
    %1951 = vmatpush.msra.mxu0 %v287
    %1952 = vmatpush.msra.mxu0 %v286
    %1953 = vmatpush.msra.mxu0 %v285
    %1954 = vmatmul.f32.gmra.mxu0 %v1846
    %v1955 = vpop.f32.mrf.mxu0
    %v1956 = vadd.f32 0.0, %v1955
    %1957 = vdwg.mxu0
    %v1959 = vrot.slane %v1956, 1
    %v1962 = vadd.f32 %v1936, %v1956
    %v1963 = vadd.f32 %v1937, %v1959
    %v1964 = vmul.f32 %v1872, 0.5
    %v1965 = vmul.f32 %v1873, 0.5
    %v1966 = vtanh.pop %v1964
    %v1967 = vtanh.pop %v1965
    %v1968 = vmul.f32 %v1966, 0.5
    %v1969 = vmul.f32 %v1967, 0.5
    %v1970 = vadd.f32 %v1968, 0.5
    %v1971 = vadd.f32 %v1969, 0.5
    %v1972 = vmul.f32 %v1902, 0.5
    %v1973 = vmul.f32 %v1903, 0.5
    %v1974 = vtanh.pop %v1972
    %v1975 = vtanh.pop %v1973
    %v1976 = vmul.f32 %v1974, 0.5
    %v1977 = vmul.f32 %v1975, 0.5
    %v1978 = vadd.f32 %v1976, 0.5
    %v1979 = vadd.f32 %v1977, 0.5
    %v1980 = vtanh.pop %v1932
    %v1981 = vtanh.pop %v1933
    %v1982 = vmul.f32 %v1962, 0.5
    %v1983 = vmul.f32 %v1963, 0.5
    %v1984 = vtanh.pop %v1982
    %v1985 = vtanh.pop %v1983
    %v1986 = vmul.f32 %v1984, 0.5
    %v1987 = vmul.f32 %v1985, 0.5
    %v1988 = vadd.f32 %v1986, 0.5
    %v1989 = vadd.f32 %v1987, 0.5
    %v1990 = vmul.f32 %v1978, %v1824
    %v1991 = vmul.f32 %v1979, %v1825
    %v1992 = vmul.f32 %v1970, %v1980
    %v1993 = vmul.f32 %v1971, %v1981
    %v1994 = vadd.f32 %v1990, %v1992
    %v1995 = vadd.f32 %v1991, %v1993
    %v1996 = vtanh.pop %v1994
    %v1997 = vtanh.pop %v1995
    %v1998 = vmul.f32 %v1988, %v1996
    %v1999 = vmul.f32 %v1989, %v1997
    %2000 = vset.pattern.permute.xlu0 10
    %2001 = vperm.xlu0 %2000, %v260
    %v2002 = vpop.permute.xlu0 %2001
    %2004 = vset.pattern.permute.xlu0 10
    %2005 = vperm.xlu0 %2004, %v267
    %v2006 = vpop.permute.xlu0 %2005
    %v2008 = vmul.f32 %v2002, %v299
    %v2009 = vmul.f32 %v2006, %v299
    %v2010 = vadd.f32 %v2008, %v302
    %v2011 = vadd.f32 %v2009, %v302
    %v2014 = vrot.slane %v1999, 7
    %v2015 = vsel %vm196, %v2014, %v1998
    %v2016 = vsel %vm117, %v2015, 0
    %2018 = vmatpush.msra.mxu0 0.0
    %2019 = vmatpush.msra.mxu0 0.0
    %2020 = vmatpush.msra.mxu0 0.0
    %2021 = vmatpush.msra.mxu0 0.0
    %2022 = vmatpush.msra.mxu0 0.0
    %2023 = vmatpush.msra.mxu0 0.0
    %2024 = vmatpush.msra.mxu0 0.0
    %2025 = vmatpush.msra.mxu0 0.0
    %2026 = vmatpush.msra.mxu0 0.0
    %2027 = vmatpush.msra.mxu0 0.0
    %2028 = vmatpush.msra.mxu0 0.0
    %2029 = vmatpush.msra.mxu0 0.0
    %2030 = vmatpush.msra.mxu0 %v273
    %2031 = vmatpush.msra.mxu0 %v272
    %2032 = vmatpush.msra.mxu0 %v271
    %2033 = vmatpush.msra.mxu0 %v270
    %2034 = vmatmul.f32.gmra.mxu0 %v2016
    %v2035 = vpop.f32.mrf.mxu0
    %v2036 = vadd.f32 0.0, %v2035
    %2037 = vdwg.mxu0
    %v2039 = vrot.slane %v2036, 1
    %v2042 = vadd.f32 %v2010, %v2036
    %v2043 = vadd.f32 %v2011, %v2039
    %v2044 = vmul.f32 %v2002, %v334
    %v2045 = vmul.f32 %v2006, %v334
    %v2046 = vadd.f32 %v2044, %v337
    %v2047 = vadd.f32 %v2045, %v337
    %2048 = vmatpush.msra.mxu0 0.0
    %2049 = vmatpush.msra.mxu0 0.0
    %2050 = vmatpush.msra.mxu0 0.0
    %2051 = vmatpush.msra.mxu0 0.0
    %2052 = vmatpush.msra.mxu0 0.0
    %2053 = vmatpush.msra.mxu0 0.0
    %2054 = vmatpush.msra.mxu0 0.0
    %2055 = vmatpush.msra.mxu0 0.0
    %2056 = vmatpush.msra.mxu0 0.0
    %2057 = vmatpush.msra.mxu0 0.0
    %2058 = vmatpush.msra.mxu0 0.0
    %2059 = vmatpush.msra.mxu0 0.0
    %2060 = vmatpush.msra.mxu0 %v278
    %2061 = vmatpush.msra.mxu0 %v277
    %2062 = vmatpush.msra.mxu0 %v276
    %2063 = vmatpush.msra.mxu0 %v275
    %2064 = vmatmul.f32.gmra.mxu0 %v2016
    %v2065 = vpop.f32.mrf.mxu0
    %v2066 = vadd.f32 0.0, %v2065
    %2067 = vdwg.mxu0
    %v2069 = vrot.slane %v2066, 1
    %v2072 = vadd.f32 %v2046, %v2066
    %v2073 = vadd.f32 %v2047, %v2069
    %v2074 = vmul.f32 %v2002, %v366
    %v2075 = vmul.f32 %v2006, %v366
    %v2076 = vadd.f32 %v2074, %v369
    %v2077 = vadd.f32 %v2075, %v369
    %2078 = vmatpush.msra.mxu0 0.0
    %2079 = vmatpush.msra.mxu0 0.0
    %2080 = vmatpush.msra.mxu0 0.0
    %2081 = vmatpush.msra.mxu0 0.0
    %2082 = vmatpush.msra.mxu0 0.0
    %2083 = vmatpush.msra.mxu0 0.0
    %2084 = vmatpush.msra.mxu0 0.0
    %2085 = vmatpush.msra.mxu0 0.0
    %2086 = vmatpush.msra.mxu0 0.0
    %2087 = vmatpush.msra.mxu0 0.0
    %2088 = vmatpush.msra.mxu0 0.0
    %2089 = vmatpush.msra.mxu0 0.0
    %2090 = vmatpush.msra.mxu0 %v283
    %2091 = vmatpush.msra.mxu0 %v282
    %2092 = vmatpush.msra.mxu0 %v281
    %2093 = vmatpush.msra.mxu0 %v280
    %2094 = vmatmul.f32.gmra.mxu0 %v2016
    %v2095 = vpop.f32.mrf.mxu0
    %v2096 = vadd.f32 0.0, %v2095
    %2097 = vdwg.mxu0
    %v2099 = vrot.slane %v2096, 1
    %v2102 = vadd.f32 %v2076, %v2096
    %v2103 = vadd.f32 %v2077, %v2099
    %v2104 = vmul.f32 %v2002, %v398
    %v2105 = vmul.f32 %v2006, %v398
    %v2106 = vadd.f32 %v2104, %v401
    %v2107 = vadd.f32 %v2105, %v401
    %2108 = vmatpush.msra.mxu0 0.0
    %2109 = vmatpush.msra.mxu0 0.0
    %2110 = vmatpush.msra.mxu0 0.0
    %2111 = vmatpush.msra.mxu0 0.0
    %2112 = vmatpush.msra.mxu0 0.0
    %2113 = vmatpush.msra.mxu0 0.0
    %2114 = vmatpush.msra.mxu0 0.0
    %2115 = vmatpush.msra.mxu0 0.0
    %2116 = vmatpush.msra.mxu0 0.0
    %2117 = vmatpush.msra.mxu0 0.0
    %2118 = vmatpush.msra.mxu0 0.0
    %2119 = vmatpush.msra.mxu0 0.0
    %2120 = vmatpush.msra.mxu0 %v288
    %2121 = vmatpush.msra.mxu0 %v287
    %2122 = vmatpush.msra.mxu0 %v286
    %2123 = vmatpush.msra.mxu0 %v285
    %2124 = vmatmul.f32.gmra.mxu0 %v2016
    %v2125 = vpop.f32.mrf.mxu0
    %v2126 = vadd.f32 0.0, %v2125
    %2127 = vdwg.mxu0
    %v2129 = vrot.slane %v2126, 1
    %v2132 = vadd.f32 %v2106, %v2126
    %v2133 = vadd.f32 %v2107, %v2129
    %v2134 = vmul.f32 %v2042, 0.5
    %v2135 = vmul.f32 %v2043, 0.5
    %v2136 = vtanh.pop %v2134
    %v2137 = vtanh.pop %v2135
    %v2138 = vmul.f32 %v2136, 0.5
    %v2139 = vmul.f32 %v2137, 0.5
    %v2140 = vadd.f32 %v2138, 0.5
    %v2141 = vadd.f32 %v2139, 0.5
    %v2142 = vmul.f32 %v2072, 0.5
    %v2143 = vmul.f32 %v2073, 0.5
    %v2144 = vtanh.pop %v2142
    %v2145 = vtanh.pop %v2143
    %v2146 = vmul.f32 %v2144, 0.5
    %v2147 = vmul.f32 %v2145, 0.5
    %v2148 = vadd.f32 %v2146, 0.5
    %v2149 = vadd.f32 %v2147, 0.5
    %v2150 = vtanh.pop %v2102
    %v2151 = vtanh.pop %v2103
    %v2152 = vmul.f32 %v2132, 0.5
    %v2153 = vmul.f32 %v2133, 0.5
    %v2154 = vtanh.pop %v2152
    %v2155 = vtanh.pop %v2153
    %v2156 = vmul.f32 %v2154, 0.5
    %v2157 = vmul.f32 %v2155, 0.5
    %v2158 = vadd.f32 %v2156, 0.5
    %v2159 = vadd.f32 %v2157, 0.5
    %v2160 = vmul.f32 %v2148, %v1994
    %v2161 = vmul.f32 %v2149, %v1995
    %v2162 = vmul.f32 %v2140, %v2150
    %v2163 = vmul.f32 %v2141, %v2151
    %v2164 = vadd.f32 %v2160, %v2162
    %v2165 = vadd.f32 %v2161, %v2163
    %v2166 = vtanh.pop %v2164
    %v2167 = vtanh.pop %v2165
    %v2168 = vmul.f32 %v2158, %v2166
    %v2169 = vmul.f32 %v2159, %v2167
    %2170 = vset.pattern.permute.xlu0 11
    %2171 = vperm.xlu0 %2170, %v260
    %v2172 = vpop.permute.xlu0 %2171
    %2174 = vset.pattern.permute.xlu0 11
    %2175 = vperm.xlu0 %2174, %v267
    %v2176 = vpop.permute.xlu0 %2175
    %v2178 = vmul.f32 %v2172, %v299
    %v2179 = vmul.f32 %v2176, %v299
    %v2180 = vadd.f32 %v2178, %v302
    %v2181 = vadd.f32 %v2179, %v302
    %v2184 = vrot.slane %v2169, 7
    %v2185 = vsel %vm196, %v2184, %v2168
    %v2186 = vsel %vm117, %v2185, 0
    %2188 = vmatpush.msra.mxu0 0.0
    %2189 = vmatpush.msra.mxu0 0.0
    %2190 = vmatpush.msra.mxu0 0.0
    %2191 = vmatpush.msra.mxu0 0.0
    %2192 = vmatpush.msra.mxu0 0.0
    %2193 = vmatpush.msra.mxu0 0.0
    %2194 = vmatpush.msra.mxu0 0.0
    %2195 = vmatpush.msra.mxu0 0.0
    %2196 = vmatpush.msra.mxu0 0.0
    %2197 = vmatpush.msra.mxu0 0.0
    %2198 = vmatpush.msra.mxu0 0.0
    %2199 = vmatpush.msra.mxu0 0.0
    %2200 = vmatpush.msra.mxu0 %v273
    %2201 = vmatpush.msra.mxu0 %v272
    %2202 = vmatpush.msra.mxu0 %v271
    %2203 = vmatpush.msra.mxu0 %v270
    %2204 = vmatmul.f32.gmra.mxu0 %v2186
    %v2205 = vpop.f32.mrf.mxu0
    %v2206 = vadd.f32 0.0, %v2205
    %2207 = vdwg.mxu0
    %v2209 = vrot.slane %v2206, 1
    %v2212 = vadd.f32 %v2180, %v2206
    %v2213 = vadd.f32 %v2181, %v2209
    %v2214 = vmul.f32 %v2172, %v334
    %v2215 = vmul.f32 %v2176, %v334
    %v2216 = vadd.f32 %v2214, %v337
    %v2217 = vadd.f32 %v2215, %v337
    %2218 = vmatpush.msra.mxu0 0.0
    %2219 = vmatpush.msra.mxu0 0.0
    %2220 = vmatpush.msra.mxu0 0.0
    %2221 = vmatpush.msra.mxu0 0.0
    %2222 = vmatpush.msra.mxu0 0.0
    %2223 = vmatpush.msra.mxu0 0.0
    %2224 = vmatpush.msra.mxu0 0.0
    %2225 = vmatpush.msra.mxu0 0.0
    %2226 = vmatpush.msra.mxu0 0.0
    %2227 = vmatpush.msra.mxu0 0.0
    %2228 = vmatpush.msra.mxu0 0.0
    %2229 = vmatpush.msra.mxu0 0.0
    %2230 = vmatpush.msra.mxu0 %v278
    %2231 = vmatpush.msra.mxu0 %v277
    %2232 = vmatpush.msra.mxu0 %v276
    %2233 = vmatpush.msra.mxu0 %v275
    %2234 = vmatmul.f32.gmra.mxu0 %v2186
    %v2235 = vpop.f32.mrf.mxu0
    %v2236 = vadd.f32 0.0, %v2235
    %2237 = vdwg.mxu0
    %v2239 = vrot.slane %v2236, 1
    %v2242 = vadd.f32 %v2216, %v2236
    %v2243 = vadd.f32 %v2217, %v2239
    %v2244 = vmul.f32 %v2172, %v366
    %v2245 = vmul.f32 %v2176, %v366
    %v2246 = vadd.f32 %v2244, %v369
    %v2247 = vadd.f32 %v2245, %v369
    %2248 = vmatpush.msra.mxu0 0.0
    %2249 = vmatpush.msra.mxu0 0.0
    %2250 = vmatpush.msra.mxu0 0.0
    %2251 = vmatpush.msra.mxu0 0.0
    %2252 = vmatpush.msra.mxu0 0.0
    %2253 = vmatpush.msra.mxu0 0.0
    %2254 = vmatpush.msra.mxu0 0.0
    %2255 = vmatpush.msra.mxu0 0.0
    %2256 = vmatpush.msra.mxu0 0.0
    %2257 = vmatpush.msra.mxu0 0.0
    %2258 = vmatpush.msra.mxu0 0.0
    %2259 = vmatpush.msra.mxu0 0.0
    %2260 = vmatpush.msra.mxu0 %v283
    %2261 = vmatpush.msra.mxu0 %v282
    %2262 = vmatpush.msra.mxu0 %v281
    %2263 = vmatpush.msra.mxu0 %v280
    %2264 = vmatmul.f32.gmra.mxu0 %v2186
    %v2265 = vpop.f32.mrf.mxu0
    %v2266 = vadd.f32 0.0, %v2265
    %2267 = vdwg.mxu0
    %v2269 = vrot.slane %v2266, 1
    %v2272 = vadd.f32 %v2246, %v2266
    %v2273 = vadd.f32 %v2247, %v2269
    %v2274 = vmul.f32 %v2172, %v398
    %v2275 = vmul.f32 %v2176, %v398
    %v2276 = vadd.f32 %v2274, %v401
    %v2277 = vadd.f32 %v2275, %v401
    %2278 = vmatpush.msra.mxu0 0.0
    %2279 = vmatpush.msra.mxu0 0.0
    %2280 = vmatpush.msra.mxu0 0.0
    %2281 = vmatpush.msra.mxu0 0.0
    %2282 = vmatpush.msra.mxu0 0.0
    %2283 = vmatpush.msra.mxu0 0.0
    %2284 = vmatpush.msra.mxu0 0.0
    %2285 = vmatpush.msra.mxu0 0.0
    %2286 = vmatpush.msra.mxu0 0.0
    %2287 = vmatpush.msra.mxu0 0.0
    %2288 = vmatpush.msra.mxu0 0.0
    %2289 = vmatpush.msra.mxu0 0.0
    %2290 = vmatpush.msra.mxu0 %v288
    %2291 = vmatpush.msra.mxu0 %v287
    %2292 = vmatpush.msra.mxu0 %v286
    %2293 = vmatpush.msra.mxu0 %v285
    %2294 = vmatmul.f32.gmra.mxu0 %v2186
    %v2295 = vpop.f32.mrf.mxu0
    %v2296 = vadd.f32 0.0, %v2295
    %2297 = vdwg.mxu0
    %v2299 = vrot.slane %v2296, 1
    %v2302 = vadd.f32 %v2276, %v2296
    %v2303 = vadd.f32 %v2277, %v2299
    %v2304 = vmul.f32 %v2212, 0.5
    %v2305 = vmul.f32 %v2213, 0.5
    %v2306 = vtanh.pop %v2304
    %v2307 = vtanh.pop %v2305
    %v2308 = vmul.f32 %v2306, 0.5
    %v2309 = vmul.f32 %v2307, 0.5
    %v2310 = vadd.f32 %v2308, 0.5
    %v2311 = vadd.f32 %v2309, 0.5
    %v2312 = vmul.f32 %v2242, 0.5
    %v2313 = vmul.f32 %v2243, 0.5
    %v2314 = vtanh.pop %v2312
    %v2315 = vtanh.pop %v2313
    %v2316 = vmul.f32 %v2314, 0.5
    %v2317 = vmul.f32 %v2315, 0.5
    %v2318 = vadd.f32 %v2316, 0.5
    %v2319 = vadd.f32 %v2317, 0.5
    %v2320 = vtanh.pop %v2272
    %v2321 = vtanh.pop %v2273
    %v2322 = vmul.f32 %v2302, 0.5
    %v2323 = vmul.f32 %v2303, 0.5
    %v2324 = vtanh.pop %v2322
    %v2325 = vtanh.pop %v2323
    %v2326 = vmul.f32 %v2324, 0.5
    %v2327 = vmul.f32 %v2325, 0.5
    %v2328 = vadd.f32 %v2326, 0.5
    %v2329 = vadd.f32 %v2327, 0.5
    %v2330 = vmul.f32 %v2318, %v2164
    %v2331 = vmul.f32 %v2319, %v2165
    %v2332 = vmul.f32 %v2310, %v2320
    %v2333 = vmul.f32 %v2311, %v2321
    %v2334 = vadd.f32 %v2330, %v2332
    %v2335 = vadd.f32 %v2331, %v2333
    %v2336 = vtanh.pop %v2334
    %v2337 = vtanh.pop %v2335
    %v2338 = vmul.f32 %v2328, %v2336
    %v2339 = vmul.f32 %v2329, %v2337
    %2340 = vset.pattern.permute.xlu0 12
    %2341 = vperm.xlu0 %2340, %v260
    %v2342 = vpop.permute.xlu0 %2341
    %2344 = vset.pattern.permute.xlu0 12
    %2345 = vperm.xlu0 %2344, %v267
    %v2346 = vpop.permute.xlu0 %2345
    %v2348 = vmul.f32 %v2342, %v299
    %v2349 = vmul.f32 %v2346, %v299
    %v2350 = vadd.f32 %v2348, %v302
    %v2351 = vadd.f32 %v2349, %v302
    %v2354 = vrot.slane %v2339, 7
    %v2355 = vsel %vm196, %v2354, %v2338
    %v2356 = vsel %vm117, %v2355, 0
    %2358 = vmatpush.msra.mxu0 0.0
    %2359 = vmatpush.msra.mxu0 0.0
    %2360 = vmatpush.msra.mxu0 0.0
    %2361 = vmatpush.msra.mxu0 0.0
    %2362 = vmatpush.msra.mxu0 0.0
    %2363 = vmatpush.msra.mxu0 0.0
    %2364 = vmatpush.msra.mxu0 0.0
    %2365 = vmatpush.msra.mxu0 0.0
    %2366 = vmatpush.msra.mxu0 0.0
    %2367 = vmatpush.msra.mxu0 0.0
    %2368 = vmatpush.msra.mxu0 0.0
    %2369 = vmatpush.msra.mxu0 0.0
    %2370 = vmatpush.msra.mxu0 %v273
    %2371 = vmatpush.msra.mxu0 %v272
    %2372 = vmatpush.msra.mxu0 %v271
    %2373 = vmatpush.msra.mxu0 %v270
    %2374 = vmatmul.f32.gmra.mxu0 %v2356
    %v2375 = vpop.f32.mrf.mxu0
    %v2376 = vadd.f32 0.0, %v2375
    %2377 = vdwg.mxu0
    %v2379 = vrot.slane %v2376, 1
    %v2382 = vadd.f32 %v2350, %v2376
    %v2383 = vadd.f32 %v2351, %v2379
    %v2384 = vmul.f32 %v2342, %v334
    %v2385 = vmul.f32 %v2346, %v334
    %v2386 = vadd.f32 %v2384, %v337
    %v2387 = vadd.f32 %v2385, %v337
    %2388 = vmatpush.msra.mxu0 0.0
    %2389 = vmatpush.msra.mxu0 0.0
    %2390 = vmatpush.msra.mxu0 0.0
    %2391 = vmatpush.msra.mxu0 0.0
    %2392 = vmatpush.msra.mxu0 0.0
    %2393 = vmatpush.msra.mxu0 0.0
    %2394 = vmatpush.msra.mxu0 0.0
    %2395 = vmatpush.msra.mxu0 0.0
    %2396 = vmatpush.msra.mxu0 0.0
    %2397 = vmatpush.msra.mxu0 0.0
    %2398 = vmatpush.msra.mxu0 0.0
    %2399 = vmatpush.msra.mxu0 0.0
    %2400 = vmatpush.msra.mxu0 %v278
    %2401 = vmatpush.msra.mxu0 %v277
    %2402 = vmatpush.msra.mxu0 %v276
    %2403 = vmatpush.msra.mxu0 %v275
    %2404 = vmatmul.f32.gmra.mxu0 %v2356
    %v2405 = vpop.f32.mrf.mxu0
    %v2406 = vadd.f32 0.0, %v2405
    %2407 = vdwg.mxu0
    %v2409 = vrot.slane %v2406, 1
    %v2412 = vadd.f32 %v2386, %v2406
    %v2413 = vadd.f32 %v2387, %v2409
    %v2414 = vmul.f32 %v2342, %v366
    %v2415 = vmul.f32 %v2346, %v366
    %v2416 = vadd.f32 %v2414, %v369
    %v2417 = vadd.f32 %v2415, %v369
    %2418 = vmatpush.msra.mxu0 0.0
    %2419 = vmatpush.msra.mxu0 0.0
    %2420 = vmatpush.msra.mxu0 0.0
    %2421 = vmatpush.msra.mxu0 0.0
    %2422 = vmatpush.msra.mxu0 0.0
    %2423 = vmatpush.msra.mxu0 0.0
    %2424 = vmatpush.msra.mxu0 0.0
    %2425 = vmatpush.msra.mxu0 0.0
    %2426 = vmatpush.msra.mxu0 0.0
    %2427 = vmatpush.msra.mxu0 0.0
    %2428 = vmatpush.msra.mxu0 0.0
    %2429 = vmatpush.msra.mxu0 0.0
    %2430 = vmatpush.msra.mxu0 %v283
    %2431 = vmatpush.msra.mxu0 %v282
    %2432 = vmatpush.msra.mxu0 %v281
    %2433 = vmatpush.msra.mxu0 %v280
    %2434 = vmatmul.f32.gmra.mxu0 %v2356
    %v2435 = vpop.f32.mrf.mxu0
    %v2436 = vadd.f32 0.0, %v2435
    %2437 = vdwg.mxu0
    %v2439 = vrot.slane %v2436, 1
    %v2442 = vadd.f32 %v2416, %v2436
    %v2443 = vadd.f32 %v2417, %v2439
    %v2444 = vmul.f32 %v2342, %v398
    %v2445 = vmul.f32 %v2346, %v398
    %v2446 = vadd.f32 %v2444, %v401
    %v2447 = vadd.f32 %v2445, %v401
    %2448 = vmatpush.msra.mxu0 0.0
    %2449 = vmatpush.msra.mxu0 0.0
    %2450 = vmatpush.msra.mxu0 0.0
    %2451 = vmatpush.msra.mxu0 0.0
    %2452 = vmatpush.msra.mxu0 0.0
    %2453 = vmatpush.msra.mxu0 0.0
    %2454 = vmatpush.msra.mxu0 0.0
    %2455 = vmatpush.msra.mxu0 0.0
    %2456 = vmatpush.msra.mxu0 0.0
    %2457 = vmatpush.msra.mxu0 0.0
    %2458 = vmatpush.msra.mxu0 0.0
    %2459 = vmatpush.msra.mxu0 0.0
    %2460 = vmatpush.msra.mxu0 %v288
    %2461 = vmatpush.msra.mxu0 %v287
    %2462 = vmatpush.msra.mxu0 %v286
    %2463 = vmatpush.msra.mxu0 %v285
    %2464 = vmatmul.f32.gmra.mxu0 %v2356
    %v2465 = vpop.f32.mrf.mxu0
    %v2466 = vadd.f32 0.0, %v2465
    %2467 = vdwg.mxu0
    %v2469 = vrot.slane %v2466, 1
    %v2472 = vadd.f32 %v2446, %v2466
    %v2473 = vadd.f32 %v2447, %v2469
    %v2474 = vmul.f32 %v2382, 0.5
    %v2475 = vmul.f32 %v2383, 0.5
    %v2476 = vtanh.pop %v2474
    %v2477 = vtanh.pop %v2475
    %v2478 = vmul.f32 %v2476, 0.5
    %v2479 = vmul.f32 %v2477, 0.5
    %v2480 = vadd.f32 %v2478, 0.5
    %v2481 = vadd.f32 %v2479, 0.5
    %v2482 = vmul.f32 %v2412, 0.5
    %v2483 = vmul.f32 %v2413, 0.5
    %v2484 = vtanh.pop %v2482
    %v2485 = vtanh.pop %v2483
    %v2486 = vmul.f32 %v2484, 0.5
    %v2487 = vmul.f32 %v2485, 0.5
    %v2488 = vadd.f32 %v2486, 0.5
    %v2489 = vadd.f32 %v2487, 0.5
    %v2490 = vtanh.pop %v2442
    %v2491 = vtanh.pop %v2443
    %v2492 = vmul.f32 %v2472, 0.5
    %v2493 = vmul.f32 %v2473, 0.5
    %v2494 = vtanh.pop %v2492
    %v2495 = vtanh.pop %v2493
    %v2496 = vmul.f32 %v2494, 0.5
    %v2497 = vmul.f32 %v2495, 0.5
    %v2498 = vadd.f32 %v2496, 0.5
    %v2499 = vadd.f32 %v2497, 0.5
    %v2500 = vmul.f32 %v2488, %v2334
    %v2501 = vmul.f32 %v2489, %v2335
    %v2502 = vmul.f32 %v2480, %v2490
    %v2503 = vmul.f32 %v2481, %v2491
    %v2504 = vadd.f32 %v2500, %v2502
    %v2505 = vadd.f32 %v2501, %v2503
    %v2506 = vtanh.pop %v2504
    %v2507 = vtanh.pop %v2505
    %v2508 = vmul.f32 %v2498, %v2506
    %v2509 = vmul.f32 %v2499, %v2507
    %2510 = vset.pattern.permute.xlu0 13
    %2511 = vperm.xlu0 %2510, %v260
    %v2512 = vpop.permute.xlu0 %2511
    %2514 = vset.pattern.permute.xlu0 13
    %2515 = vperm.xlu0 %2514, %v267
    %v2516 = vpop.permute.xlu0 %2515
    %v2518 = vmul.f32 %v2512, %v299
    %v2519 = vmul.f32 %v2516, %v299
    %v2520 = vadd.f32 %v2518, %v302
    %v2521 = vadd.f32 %v2519, %v302
    %v2524 = vrot.slane %v2509, 7
    %v2525 = vsel %vm196, %v2524, %v2508
    %v2526 = vsel %vm117, %v2525, 0
    %2528 = vmatpush.msra.mxu0 0.0
    %2529 = vmatpush.msra.mxu0 0.0
    %2530 = vmatpush.msra.mxu0 0.0
    %2531 = vmatpush.msra.mxu0 0.0
    %2532 = vmatpush.msra.mxu0 0.0
    %2533 = vmatpush.msra.mxu0 0.0
    %2534 = vmatpush.msra.mxu0 0.0
    %2535 = vmatpush.msra.mxu0 0.0
    %2536 = vmatpush.msra.mxu0 0.0
    %2537 = vmatpush.msra.mxu0 0.0
    %2538 = vmatpush.msra.mxu0 0.0
    %2539 = vmatpush.msra.mxu0 0.0
    %2540 = vmatpush.msra.mxu0 %v273
    %2541 = vmatpush.msra.mxu0 %v272
    %2542 = vmatpush.msra.mxu0 %v271
    %2543 = vmatpush.msra.mxu0 %v270
    %2544 = vmatmul.f32.gmra.mxu0 %v2526
    %v2545 = vpop.f32.mrf.mxu0
    %v2546 = vadd.f32 0.0, %v2545
    %2547 = vdwg.mxu0
    %v2549 = vrot.slane %v2546, 1
    %v2552 = vadd.f32 %v2520, %v2546
    %v2553 = vadd.f32 %v2521, %v2549
    %v2554 = vmul.f32 %v2512, %v334
    %v2555 = vmul.f32 %v2516, %v334
    %v2556 = vadd.f32 %v2554, %v337
    %v2557 = vadd.f32 %v2555, %v337
    %2558 = vmatpush.msra.mxu0 0.0
    %2559 = vmatpush.msra.mxu0 0.0
    %2560 = vmatpush.msra.mxu0 0.0
    %2561 = vmatpush.msra.mxu0 0.0
    %2562 = vmatpush.msra.mxu0 0.0
    %2563 = vmatpush.msra.mxu0 0.0
    %2564 = vmatpush.msra.mxu0 0.0
    %2565 = vmatpush.msra.mxu0 0.0
    %2566 = vmatpush.msra.mxu0 0.0
    %2567 = vmatpush.msra.mxu0 0.0
    %2568 = vmatpush.msra.mxu0 0.0
    %2569 = vmatpush.msra.mxu0 0.0
    %2570 = vmatpush.msra.mxu0 %v278
    %2571 = vmatpush.msra.mxu0 %v277
    %2572 = vmatpush.msra.mxu0 %v276
    %2573 = vmatpush.msra.mxu0 %v275
    %2574 = vmatmul.f32.gmra.mxu0 %v2526
    %v2575 = vpop.f32.mrf.mxu0
    %v2576 = vadd.f32 0.0, %v2575
    %2577 = vdwg.mxu0
    %v2579 = vrot.slane %v2576, 1
    %v2582 = vadd.f32 %v2556, %v2576
    %v2583 = vadd.f32 %v2557, %v2579
    %v2584 = vmul.f32 %v2512, %v366
    %v2585 = vmul.f32 %v2516, %v366
    %v2586 = vadd.f32 %v2584, %v369
    %v2587 = vadd.f32 %v2585, %v369
    %2588 = vmatpush.msra.mxu0 0.0
    %2589 = vmatpush.msra.mxu0 0.0
    %2590 = vmatpush.msra.mxu0 0.0
    %2591 = vmatpush.msra.mxu0 0.0
    %2592 = vmatpush.msra.mxu0 0.0
    %2593 = vmatpush.msra.mxu0 0.0
    %2594 = vmatpush.msra.mxu0 0.0
    %2595 = vmatpush.msra.mxu0 0.0
    %2596 = vmatpush.msra.mxu0 0.0
    %2597 = vmatpush.msra.mxu0 0.0
    %2598 = vmatpush.msra.mxu0 0.0
    %2599 = vmatpush.msra.mxu0 0.0
    %2600 = vmatpush.msra.mxu0 %v283
    %2601 = vmatpush.msra.mxu0 %v282
    %2602 = vmatpush.msra.mxu0 %v281
    %2603 = vmatpush.msra.mxu0 %v280
    %2604 = vmatmul.f32.gmra.mxu0 %v2526
    %v2605 = vpop.f32.mrf.mxu0
    %v2606 = vadd.f32 0.0, %v2605
    %2607 = vdwg.mxu0
    %v2609 = vrot.slane %v2606, 1
    %v2612 = vadd.f32 %v2586, %v2606
    %v2613 = vadd.f32 %v2587, %v2609
    %v2614 = vmul.f32 %v2512, %v398
    %v2615 = vmul.f32 %v2516, %v398
    %v2616 = vadd.f32 %v2614, %v401
    %v2617 = vadd.f32 %v2615, %v401
    %2618 = vmatpush.msra.mxu0 0.0
    %2619 = vmatpush.msra.mxu0 0.0
    %2620 = vmatpush.msra.mxu0 0.0
    %2621 = vmatpush.msra.mxu0 0.0
    %2622 = vmatpush.msra.mxu0 0.0
    %2623 = vmatpush.msra.mxu0 0.0
    %2624 = vmatpush.msra.mxu0 0.0
    %2625 = vmatpush.msra.mxu0 0.0
    %2626 = vmatpush.msra.mxu0 0.0
    %2627 = vmatpush.msra.mxu0 0.0
    %2628 = vmatpush.msra.mxu0 0.0
    %2629 = vmatpush.msra.mxu0 0.0
    %2630 = vmatpush.msra.mxu0 %v288
    %2631 = vmatpush.msra.mxu0 %v287
    %2632 = vmatpush.msra.mxu0 %v286
    %2633 = vmatpush.msra.mxu0 %v285
    %2634 = vmatmul.f32.gmra.mxu0 %v2526
    %v2635 = vpop.f32.mrf.mxu0
    %v2636 = vadd.f32 0.0, %v2635
    %2637 = vdwg.mxu0
    %v2639 = vrot.slane %v2636, 1
    %v2642 = vadd.f32 %v2616, %v2636
    %v2643 = vadd.f32 %v2617, %v2639
    %v2644 = vmul.f32 %v2552, 0.5
    %v2645 = vmul.f32 %v2553, 0.5
    %v2646 = vtanh.pop %v2644
    %v2647 = vtanh.pop %v2645
    %v2648 = vmul.f32 %v2646, 0.5
    %v2649 = vmul.f32 %v2647, 0.5
    %v2650 = vadd.f32 %v2648, 0.5
    %v2651 = vadd.f32 %v2649, 0.5
    %v2652 = vmul.f32 %v2582, 0.5
    %v2653 = vmul.f32 %v2583, 0.5
    %v2654 = vtanh.pop %v2652
    %v2655 = vtanh.pop %v2653
    %v2656 = vmul.f32 %v2654, 0.5
    %v2657 = vmul.f32 %v2655, 0.5
    %v2658 = vadd.f32 %v2656, 0.5
    %v2659 = vadd.f32 %v2657, 0.5
    %v2660 = vtanh.pop %v2612
    %v2661 = vtanh.pop %v2613
    %v2662 = vmul.f32 %v2642, 0.5
    %v2663 = vmul.f32 %v2643, 0.5
    %v2664 = vtanh.pop %v2662
    %v2665 = vtanh.pop %v2663
    %v2666 = vmul.f32 %v2664, 0.5
    %v2667 = vmul.f32 %v2665, 0.5
    %v2668 = vadd.f32 %v2666, 0.5
    %v2669 = vadd.f32 %v2667, 0.5
    %v2670 = vmul.f32 %v2658, %v2504
    %v2671 = vmul.f32 %v2659, %v2505
    %v2672 = vmul.f32 %v2650, %v2660
    %v2673 = vmul.f32 %v2651, %v2661
    %v2674 = vadd.f32 %v2670, %v2672
    %v2675 = vadd.f32 %v2671, %v2673
    %v2676 = vtanh.pop %v2674
    %v2677 = vtanh.pop %v2675
    %v2678 = vmul.f32 %v2668, %v2676
    %v2679 = vmul.f32 %v2669, %v2677
    %2680 = vset.pattern.permute.xlu0 14
    %2681 = vperm.xlu0 %2680, %v260
    %v2682 = vpop.permute.xlu0 %2681
    %2684 = vset.pattern.permute.xlu0 14
    %2685 = vperm.xlu0 %2684, %v267
    %v2686 = vpop.permute.xlu0 %2685
    %v2688 = vmul.f32 %v2682, %v299
    %v2689 = vmul.f32 %v2686, %v299
    %v2690 = vadd.f32 %v2688, %v302
    %v2691 = vadd.f32 %v2689, %v302
    %v2694 = vrot.slane %v2679, 7
    %v2695 = vsel %vm196, %v2694, %v2678
    %v2696 = vsel %vm117, %v2695, 0
    %2698 = vmatpush.msra.mxu0 0.0
    %2699 = vmatpush.msra.mxu0 0.0
    %2700 = vmatpush.msra.mxu0 0.0
    %2701 = vmatpush.msra.mxu0 0.0
    %2702 = vmatpush.msra.mxu0 0.0
    %2703 = vmatpush.msra.mxu0 0.0
    %2704 = vmatpush.msra.mxu0 0.0
    %2705 = vmatpush.msra.mxu0 0.0
    %2706 = vmatpush.msra.mxu0 0.0
    %2707 = vmatpush.msra.mxu0 0.0
    %2708 = vmatpush.msra.mxu0 0.0
    %2709 = vmatpush.msra.mxu0 0.0
    %2710 = vmatpush.msra.mxu0 %v273
    %2711 = vmatpush.msra.mxu0 %v272
    %2712 = vmatpush.msra.mxu0 %v271
    %2713 = vmatpush.msra.mxu0 %v270
    %2714 = vmatmul.f32.gmra.mxu0 %v2696
    %v2715 = vpop.f32.mrf.mxu0
    %v2716 = vadd.f32 0.0, %v2715
    %2717 = vdwg.mxu0
    %v2719 = vrot.slane %v2716, 1
    %v2722 = vadd.f32 %v2690, %v2716
    %v2723 = vadd.f32 %v2691, %v2719
    %v2724 = vmul.f32 %v2682, %v334
    %v2725 = vmul.f32 %v2686, %v334
    %v2726 = vadd.f32 %v2724, %v337
    %v2727 = vadd.f32 %v2725, %v337
    %2728 = vmatpush.msra.mxu0 0.0
    %2729 = vmatpush.msra.mxu0 0.0
    %2730 = vmatpush.msra.mxu0 0.0
    %2731 = vmatpush.msra.mxu0 0.0
    %2732 = vmatpush.msra.mxu0 0.0
    %2733 = vmatpush.msra.mxu0 0.0
    %2734 = vmatpush.msra.mxu0 0.0
    %2735 = vmatpush.msra.mxu0 0.0
    %2736 = vmatpush.msra.mxu0 0.0
    %2737 = vmatpush.msra.mxu0 0.0
    %2738 = vmatpush.msra.mxu0 0.0
    %2739 = vmatpush.msra.mxu0 0.0
    %2740 = vmatpush.msra.mxu0 %v278
    %2741 = vmatpush.msra.mxu0 %v277
    %2742 = vmatpush.msra.mxu0 %v276
    %2743 = vmatpush.msra.mxu0 %v275
    %2744 = vmatmul.f32.gmra.mxu0 %v2696
    %v2745 = vpop.f32.mrf.mxu0
    %v2746 = vadd.f32 0.0, %v2745
    %2747 = vdwg.mxu0
    %v2749 = vrot.slane %v2746, 1
    %v2752 = vadd.f32 %v2726, %v2746
    %v2753 = vadd.f32 %v2727, %v2749
    %v2754 = vmul.f32 %v2682, %v366
    %v2755 = vmul.f32 %v2686, %v366
    %v2756 = vadd.f32 %v2754, %v369
    %v2757 = vadd.f32 %v2755, %v369
    %2758 = vmatpush.msra.mxu0 0.0
    %2759 = vmatpush.msra.mxu0 0.0
    %2760 = vmatpush.msra.mxu0 0.0
    %2761 = vmatpush.msra.mxu0 0.0
    %2762 = vmatpush.msra.mxu0 0.0
    %2763 = vmatpush.msra.mxu0 0.0
    %2764 = vmatpush.msra.mxu0 0.0
    %2765 = vmatpush.msra.mxu0 0.0
    %2766 = vmatpush.msra.mxu0 0.0
    %2767 = vmatpush.msra.mxu0 0.0
    %2768 = vmatpush.msra.mxu0 0.0
    %2769 = vmatpush.msra.mxu0 0.0
    %2770 = vmatpush.msra.mxu0 %v283
    %2771 = vmatpush.msra.mxu0 %v282
    %2772 = vmatpush.msra.mxu0 %v281
    %2773 = vmatpush.msra.mxu0 %v280
    %2774 = vmatmul.f32.gmra.mxu0 %v2696
    %v2775 = vpop.f32.mrf.mxu0
    %v2776 = vadd.f32 0.0, %v2775
    %2777 = vdwg.mxu0
    %v2779 = vrot.slane %v2776, 1
    %v2782 = vadd.f32 %v2756, %v2776
    %v2783 = vadd.f32 %v2757, %v2779
    %v2784 = vmul.f32 %v2682, %v398
    %v2785 = vmul.f32 %v2686, %v398
    %v2786 = vadd.f32 %v2784, %v401
    %v2787 = vadd.f32 %v2785, %v401
    %2788 = vmatpush.msra.mxu0 0.0
    %2789 = vmatpush.msra.mxu0 0.0
    %2790 = vmatpush.msra.mxu0 0.0
    %2791 = vmatpush.msra.mxu0 0.0
    %2792 = vmatpush.msra.mxu0 0.0
    %2793 = vmatpush.msra.mxu0 0.0
    %2794 = vmatpush.msra.mxu0 0.0
    %2795 = vmatpush.msra.mxu0 0.0
    %2796 = vmatpush.msra.mxu0 0.0
    %2797 = vmatpush.msra.mxu0 0.0
    %2798 = vmatpush.msra.mxu0 0.0
    %2799 = vmatpush.msra.mxu0 0.0
    %2800 = vmatpush.msra.mxu0 %v288
    %2801 = vmatpush.msra.mxu0 %v287
    %2802 = vmatpush.msra.mxu0 %v286
    %2803 = vmatpush.msra.mxu0 %v285
    %2804 = vmatmul.f32.gmra.mxu0 %v2696
    %v2805 = vpop.f32.mrf.mxu0
    %v2806 = vadd.f32 0.0, %v2805
    %2807 = vdwg.mxu0
    %v2809 = vrot.slane %v2806, 1
    %v2812 = vadd.f32 %v2786, %v2806
    %v2813 = vadd.f32 %v2787, %v2809
    %v2814 = vmul.f32 %v2722, 0.5
    %v2815 = vmul.f32 %v2723, 0.5
    %v2816 = vtanh.pop %v2814
    %v2817 = vtanh.pop %v2815
    %v2818 = vmul.f32 %v2816, 0.5
    %v2819 = vmul.f32 %v2817, 0.5
    %v2820 = vadd.f32 %v2818, 0.5
    %v2821 = vadd.f32 %v2819, 0.5
    %v2822 = vmul.f32 %v2752, 0.5
    %v2823 = vmul.f32 %v2753, 0.5
    %v2824 = vtanh.pop %v2822
    %v2825 = vtanh.pop %v2823
    %v2826 = vmul.f32 %v2824, 0.5
    %v2827 = vmul.f32 %v2825, 0.5
    %v2828 = vadd.f32 %v2826, 0.5
    %v2829 = vadd.f32 %v2827, 0.5
    %v2830 = vtanh.pop %v2782
    %v2831 = vtanh.pop %v2783
    %v2832 = vmul.f32 %v2812, 0.5
    %v2833 = vmul.f32 %v2813, 0.5
    %v2834 = vtanh.pop %v2832
    %v2835 = vtanh.pop %v2833
    %v2836 = vmul.f32 %v2834, 0.5
    %v2837 = vmul.f32 %v2835, 0.5
    %v2838 = vadd.f32 %v2836, 0.5
    %v2839 = vadd.f32 %v2837, 0.5
    %v2840 = vmul.f32 %v2828, %v2674
    %v2841 = vmul.f32 %v2829, %v2675
    %v2842 = vmul.f32 %v2820, %v2830
    %v2843 = vmul.f32 %v2821, %v2831
    %v2844 = vadd.f32 %v2840, %v2842
    %v2845 = vadd.f32 %v2841, %v2843
    %v2846 = vtanh.pop %v2844
    %v2847 = vtanh.pop %v2845
    %v2848 = vmul.f32 %v2838, %v2846
    %v2849 = vmul.f32 %v2839, %v2847
    %2850 = vset.pattern.permute.xlu0 15
    %2851 = vperm.xlu0 %2850, %v260
    %v2852 = vpop.permute.xlu0 %2851
    %2854 = vset.pattern.permute.xlu0 15
    %2855 = vperm.xlu0 %2854, %v267
    %v2856 = vpop.permute.xlu0 %2855
    %v2858 = vmul.f32 %v2852, %v299
    %v2859 = vmul.f32 %v2856, %v299
    %v2860 = vadd.f32 %v2858, %v302
    %v2861 = vadd.f32 %v2859, %v302
    %v2864 = vrot.slane %v2849, 7
    %v2865 = vsel %vm196, %v2864, %v2848
    %v2866 = vsel %vm117, %v2865, 0
    %2868 = vmatpush.msra.mxu0 0.0
    %2869 = vmatpush.msra.mxu0 0.0
    %2870 = vmatpush.msra.mxu0 0.0
    %2871 = vmatpush.msra.mxu0 0.0
    %2872 = vmatpush.msra.mxu0 0.0
    %2873 = vmatpush.msra.mxu0 0.0
    %2874 = vmatpush.msra.mxu0 0.0
    %2875 = vmatpush.msra.mxu0 0.0
    %2876 = vmatpush.msra.mxu0 0.0
    %2877 = vmatpush.msra.mxu0 0.0
    %2878 = vmatpush.msra.mxu0 0.0
    %2879 = vmatpush.msra.mxu0 0.0
    %2880 = vmatpush.msra.mxu0 %v273
    %2881 = vmatpush.msra.mxu0 %v272
    %2882 = vmatpush.msra.mxu0 %v271
    %2883 = vmatpush.msra.mxu0 %v270
    %2884 = vmatmul.f32.gmra.mxu0 %v2866
    %v2885 = vpop.f32.mrf.mxu0
    %v2886 = vadd.f32 0.0, %v2885
    %2887 = vdwg.mxu0
    %v2889 = vrot.slane %v2886, 1
    %v2892 = vadd.f32 %v2860, %v2886
    %v2893 = vadd.f32 %v2861, %v2889
    %v2894 = vmul.f32 %v2852, %v334
    %v2895 = vmul.f32 %v2856, %v334
    %v2896 = vadd.f32 %v2894, %v337
    %v2897 = vadd.f32 %v2895, %v337
    %2898 = vmatpush.msra.mxu0 0.0
    %2899 = vmatpush.msra.mxu0 0.0
    %2900 = vmatpush.msra.mxu0 0.0
    %2901 = vmatpush.msra.mxu0 0.0
    %2902 = vmatpush.msra.mxu0 0.0
    %2903 = vmatpush.msra.mxu0 0.0
    %2904 = vmatpush.msra.mxu0 0.0
    %2905 = vmatpush.msra.mxu0 0.0
    %2906 = vmatpush.msra.mxu0 0.0
    %2907 = vmatpush.msra.mxu0 0.0
    %2908 = vmatpush.msra.mxu0 0.0
    %2909 = vmatpush.msra.mxu0 0.0
    %2910 = vmatpush.msra.mxu0 %v278
    %2911 = vmatpush.msra.mxu0 %v277
    %2912 = vmatpush.msra.mxu0 %v276
    %2913 = vmatpush.msra.mxu0 %v275
    %2914 = vmatmul.f32.gmra.mxu0 %v2866
    %v2915 = vpop.f32.mrf.mxu0
    %v2916 = vadd.f32 0.0, %v2915
    %2917 = vdwg.mxu0
    %v2919 = vrot.slane %v2916, 1
    %v2922 = vadd.f32 %v2896, %v2916
    %v2923 = vadd.f32 %v2897, %v2919
    %v2924 = vmul.f32 %v2852, %v366
    %v2925 = vmul.f32 %v2856, %v366
    %v2926 = vadd.f32 %v2924, %v369
    %v2927 = vadd.f32 %v2925, %v369
    %2928 = vmatpush.msra.mxu0 0.0
    %2929 = vmatpush.msra.mxu0 0.0
    %2930 = vmatpush.msra.mxu0 0.0
    %2931 = vmatpush.msra.mxu0 0.0
    %2932 = vmatpush.msra.mxu0 0.0
    %2933 = vmatpush.msra.mxu0 0.0
    %2934 = vmatpush.msra.mxu0 0.0
    %2935 = vmatpush.msra.mxu0 0.0
    %2936 = vmatpush.msra.mxu0 0.0
    %2937 = vmatpush.msra.mxu0 0.0
    %2938 = vmatpush.msra.mxu0 0.0
    %2939 = vmatpush.msra.mxu0 0.0
    %2940 = vmatpush.msra.mxu0 %v283
    %2941 = vmatpush.msra.mxu0 %v282
    %2942 = vmatpush.msra.mxu0 %v281
    %2943 = vmatpush.msra.mxu0 %v280
    %2944 = vmatmul.f32.gmra.mxu0 %v2866
    %v2945 = vpop.f32.mrf.mxu0
    %v2946 = vadd.f32 0.0, %v2945
    %2947 = vdwg.mxu0
    %v2949 = vrot.slane %v2946, 1
    %v2952 = vadd.f32 %v2926, %v2946
    %v2953 = vadd.f32 %v2927, %v2949
    %v2954 = vmul.f32 %v2852, %v398
    %v2955 = vmul.f32 %v2856, %v398
    %v2956 = vadd.f32 %v2954, %v401
    %v2957 = vadd.f32 %v2955, %v401
    %2958 = vmatpush.msra.mxu0 0.0
    %2959 = vmatpush.msra.mxu0 0.0
    %2960 = vmatpush.msra.mxu0 0.0
    %2961 = vmatpush.msra.mxu0 0.0
    %2962 = vmatpush.msra.mxu0 0.0
    %2963 = vmatpush.msra.mxu0 0.0
    %2964 = vmatpush.msra.mxu0 0.0
    %2965 = vmatpush.msra.mxu0 0.0
    %2966 = vmatpush.msra.mxu0 0.0
    %2967 = vmatpush.msra.mxu0 0.0
    %2968 = vmatpush.msra.mxu0 0.0
    %2969 = vmatpush.msra.mxu0 0.0
    %2970 = vmatpush.msra.mxu0 %v288
    %2971 = vmatpush.msra.mxu0 %v287
    %2972 = vmatpush.msra.mxu0 %v286
    %2973 = vmatpush.msra.mxu0 %v285
    %2974 = vmatmul.f32.gmra.mxu0 %v2866
    %v2975 = vpop.f32.mrf.mxu0
    %v2976 = vadd.f32 0.0, %v2975
    %2977 = vdwg.mxu0
    %v2979 = vrot.slane %v2976, 1
    %v2982 = vadd.f32 %v2956, %v2976
    %v2983 = vadd.f32 %v2957, %v2979
    %v2984 = vmul.f32 %v2892, 0.5
    %v2985 = vmul.f32 %v2893, 0.5
    %v2986 = vtanh.pop %v2984
    %v2987 = vtanh.pop %v2985
    %v2988 = vmul.f32 %v2986, 0.5
    %v2989 = vmul.f32 %v2987, 0.5
    %v2990 = vadd.f32 %v2988, 0.5
    %v2991 = vadd.f32 %v2989, 0.5
    %v2992 = vmul.f32 %v2922, 0.5
    %v2993 = vmul.f32 %v2923, 0.5
    %v2994 = vtanh.pop %v2992
    %v2995 = vtanh.pop %v2993
    %v2996 = vmul.f32 %v2994, 0.5
    %v2997 = vmul.f32 %v2995, 0.5
    %v2998 = vadd.f32 %v2996, 0.5
    %v2999 = vadd.f32 %v2997, 0.5
    %v3000 = vtanh.pop %v2952
    %v3001 = vtanh.pop %v2953
    %v3002 = vmul.f32 %v2982, 0.5
    %v3003 = vmul.f32 %v2983, 0.5
    %v3004 = vtanh.pop %v3002
    %v3005 = vtanh.pop %v3003
    %v3006 = vmul.f32 %v3004, 0.5
    %v3007 = vmul.f32 %v3005, 0.5
    %v3008 = vadd.f32 %v3006, 0.5
    %v3009 = vadd.f32 %v3007, 0.5
    %v3010 = vmul.f32 %v2998, %v2844
    %v3011 = vmul.f32 %v2999, %v2845
    %v3012 = vmul.f32 %v2990, %v3000
    %v3013 = vmul.f32 %v2991, %v3001
    %v3014 = vadd.f32 %v3010, %v3012
    %v3015 = vadd.f32 %v3011, %v3013
    %v3016 = vtanh.pop %v3014
    %v3017 = vtanh.pop %v3015
    %v3018 = vmul.f32 %v3008, %v3016
    %v3019 = vmul.f32 %v3009, %v3017
    %3020 = vset.pattern.permute.xlu0 16
    %3021 = vperm.xlu0 %3020, %v260
    %v3022 = vpop.permute.xlu0 %3021
    %3024 = vset.pattern.permute.xlu0 16
    %3025 = vperm.xlu0 %3024, %v267
    %v3026 = vpop.permute.xlu0 %3025
    %v3028 = vmul.f32 %v3022, %v299
    %v3029 = vmul.f32 %v3026, %v299
    %v3030 = vadd.f32 %v3028, %v302
    %v3031 = vadd.f32 %v3029, %v302
    %v3034 = vrot.slane %v3019, 7
    %v3035 = vsel %vm196, %v3034, %v3018
    %v3036 = vsel %vm117, %v3035, 0
    %3038 = vmatpush.msra.mxu0 0.0
    %3039 = vmatpush.msra.mxu0 0.0
    %3040 = vmatpush.msra.mxu0 0.0
    %3041 = vmatpush.msra.mxu0 0.0
    %3042 = vmatpush.msra.mxu0 0.0
    %3043 = vmatpush.msra.mxu0 0.0
    %3044 = vmatpush.msra.mxu0 0.0
    %3045 = vmatpush.msra.mxu0 0.0
    %3046 = vmatpush.msra.mxu0 0.0
    %3047 = vmatpush.msra.mxu0 0.0
    %3048 = vmatpush.msra.mxu0 0.0
    %3049 = vmatpush.msra.mxu0 0.0
    %3050 = vmatpush.msra.mxu0 %v273
    %3051 = vmatpush.msra.mxu0 %v272
    %3052 = vmatpush.msra.mxu0 %v271
    %3053 = vmatpush.msra.mxu0 %v270
    %3054 = vmatmul.f32.gmra.mxu0 %v3036
    %v3055 = vpop.f32.mrf.mxu0
    %v3056 = vadd.f32 0.0, %v3055
    %3057 = vdwg.mxu0
    %v3059 = vrot.slane %v3056, 1
    %v3062 = vadd.f32 %v3030, %v3056
    %v3063 = vadd.f32 %v3031, %v3059
    %v3064 = vmul.f32 %v3022, %v334
    %v3065 = vmul.f32 %v3026, %v334
    %v3066 = vadd.f32 %v3064, %v337
    %v3067 = vadd.f32 %v3065, %v337
    %3068 = vmatpush.msra.mxu0 0.0
    %3069 = vmatpush.msra.mxu0 0.0
    %3070 = vmatpush.msra.mxu0 0.0
    %3071 = vmatpush.msra.mxu0 0.0
    %3072 = vmatpush.msra.mxu0 0.0
    %3073 = vmatpush.msra.mxu0 0.0
    %3074 = vmatpush.msra.mxu0 0.0
    %3075 = vmatpush.msra.mxu0 0.0
    %3076 = vmatpush.msra.mxu0 0.0
    %3077 = vmatpush.msra.mxu0 0.0
    %3078 = vmatpush.msra.mxu0 0.0
    %3079 = vmatpush.msra.mxu0 0.0
    %3080 = vmatpush.msra.mxu0 %v278
    %3081 = vmatpush.msra.mxu0 %v277
    %3082 = vmatpush.msra.mxu0 %v276
    %3083 = vmatpush.msra.mxu0 %v275
    %3084 = vmatmul.f32.gmra.mxu0 %v3036
    %v3085 = vpop.f32.mrf.mxu0
    %v3086 = vadd.f32 0.0, %v3085
    %3087 = vdwg.mxu0
    %v3089 = vrot.slane %v3086, 1
    %v3092 = vadd.f32 %v3066, %v3086
    %v3093 = vadd.f32 %v3067, %v3089
    %v3094 = vmul.f32 %v3022, %v366
    %v3095 = vmul.f32 %v3026, %v366
    %v3096 = vadd.f32 %v3094, %v369
    %v3097 = vadd.f32 %v3095, %v369
    %3098 = vmatpush.msra.mxu0 0.0
    %3099 = vmatpush.msra.mxu0 0.0
    %3100 = vmatpush.msra.mxu0 0.0
    %3101 = vmatpush.msra.mxu0 0.0
    %3102 = vmatpush.msra.mxu0 0.0
    %3103 = vmatpush.msra.mxu0 0.0
    %3104 = vmatpush.msra.mxu0 0.0
    %3105 = vmatpush.msra.mxu0 0.0
    %3106 = vmatpush.msra.mxu0 0.0
    %3107 = vmatpush.msra.mxu0 0.0
    %3108 = vmatpush.msra.mxu0 0.0
    %3109 = vmatpush.msra.mxu0 0.0
    %3110 = vmatpush.msra.mxu0 %v283
    %3111 = vmatpush.msra.mxu0 %v282
    %3112 = vmatpush.msra.mxu0 %v281
    %3113 = vmatpush.msra.mxu0 %v280
    %3114 = vmatmul.f32.gmra.mxu0 %v3036
    %v3115 = vpop.f32.mrf.mxu0
    %v3116 = vadd.f32 0.0, %v3115
    %3117 = vdwg.mxu0
    %v3119 = vrot.slane %v3116, 1
    %v3122 = vadd.f32 %v3096, %v3116
    %v3123 = vadd.f32 %v3097, %v3119
    %v3124 = vmul.f32 %v3022, %v398
    %v3125 = vmul.f32 %v3026, %v398
    %v3126 = vadd.f32 %v3124, %v401
    %v3127 = vadd.f32 %v3125, %v401
    %3128 = vmatpush.msra.mxu0 0.0
    %3129 = vmatpush.msra.mxu0 0.0
    %3130 = vmatpush.msra.mxu0 0.0
    %3131 = vmatpush.msra.mxu0 0.0
    %3132 = vmatpush.msra.mxu0 0.0
    %3133 = vmatpush.msra.mxu0 0.0
    %3134 = vmatpush.msra.mxu0 0.0
    %3135 = vmatpush.msra.mxu0 0.0
    %3136 = vmatpush.msra.mxu0 0.0
    %3137 = vmatpush.msra.mxu0 0.0
    %3138 = vmatpush.msra.mxu0 0.0
    %3139 = vmatpush.msra.mxu0 0.0
    %3140 = vmatpush.msra.mxu0 %v288
    %3141 = vmatpush.msra.mxu0 %v287
    %3142 = vmatpush.msra.mxu0 %v286
    %3143 = vmatpush.msra.mxu0 %v285
    %3144 = vmatmul.f32.gmra.mxu0 %v3036
    %v3145 = vpop.f32.mrf.mxu0
    %v3146 = vadd.f32 0.0, %v3145
    %3147 = vdwg.mxu0
    %v3149 = vrot.slane %v3146, 1
    %v3152 = vadd.f32 %v3126, %v3146
    %v3153 = vadd.f32 %v3127, %v3149
    %v3154 = vmul.f32 %v3062, 0.5
    %v3155 = vmul.f32 %v3063, 0.5
    %v3156 = vtanh.pop %v3154
    %v3157 = vtanh.pop %v3155
    %v3158 = vmul.f32 %v3156, 0.5
    %v3159 = vmul.f32 %v3157, 0.5
    %v3160 = vadd.f32 %v3158, 0.5
    %v3161 = vadd.f32 %v3159, 0.5
    %v3162 = vmul.f32 %v3092, 0.5
    %v3163 = vmul.f32 %v3093, 0.5
    %v3164 = vtanh.pop %v3162
    %v3165 = vtanh.pop %v3163
    %v3166 = vmul.f32 %v3164, 0.5
    %v3167 = vmul.f32 %v3165, 0.5
    %v3168 = vadd.f32 %v3166, 0.5
    %v3169 = vadd.f32 %v3167, 0.5
    %v3170 = vtanh.pop %v3122
    %v3171 = vtanh.pop %v3123
    %v3172 = vmul.f32 %v3152, 0.5
    %v3173 = vmul.f32 %v3153, 0.5
    %v3174 = vtanh.pop %v3172
    %v3175 = vtanh.pop %v3173
    %v3176 = vmul.f32 %v3174, 0.5
    %v3177 = vmul.f32 %v3175, 0.5
    %v3178 = vadd.f32 %v3176, 0.5
    %v3179 = vadd.f32 %v3177, 0.5
    %v3180 = vmul.f32 %v3168, %v3014
    %v3181 = vmul.f32 %v3169, %v3015
    %v3182 = vmul.f32 %v3160, %v3170
    %v3183 = vmul.f32 %v3161, %v3171
    %v3184 = vadd.f32 %v3180, %v3182
    %v3185 = vadd.f32 %v3181, %v3183
    %v3186 = vtanh.pop %v3184
    %v3187 = vtanh.pop %v3185
    %v3188 = vmul.f32 %v3178, %v3186
    %v3189 = vmul.f32 %v3179, %v3187
    %3190 = vset.pattern.permute.xlu0 17
    %3191 = vperm.xlu0 %3190, %v260
    %v3192 = vpop.permute.xlu0 %3191
    %3194 = vset.pattern.permute.xlu0 17
    %3195 = vperm.xlu0 %3194, %v267
    %v3196 = vpop.permute.xlu0 %3195
    %v3198 = vmul.f32 %v3192, %v299
    %v3199 = vmul.f32 %v3196, %v299
    %v3200 = vadd.f32 %v3198, %v302
    %v3201 = vadd.f32 %v3199, %v302
    %v3204 = vrot.slane %v3189, 7
    %v3205 = vsel %vm196, %v3204, %v3188
    %v3206 = vsel %vm117, %v3205, 0
    %3208 = vmatpush.msra.mxu0 0.0
    %3209 = vmatpush.msra.mxu0 0.0
    %3210 = vmatpush.msra.mxu0 0.0
    %3211 = vmatpush.msra.mxu0 0.0
    %3212 = vmatpush.msra.mxu0 0.0
    %3213 = vmatpush.msra.mxu0 0.0
    %3214 = vmatpush.msra.mxu0 0.0
    %3215 = vmatpush.msra.mxu0 0.0
    %3216 = vmatpush.msra.mxu0 0.0
    %3217 = vmatpush.msra.mxu0 0.0
    %3218 = vmatpush.msra.mxu0 0.0
    %3219 = vmatpush.msra.mxu0 0.0
    %3220 = vmatpush.msra.mxu0 %v273
    %3221 = vmatpush.msra.mxu0 %v272
    %3222 = vmatpush.msra.mxu0 %v271
    %3223 = vmatpush.msra.mxu0 %v270
    %3224 = vmatmul.f32.gmra.mxu0 %v3206
    %v3225 = vpop.f32.mrf.mxu0
    %v3226 = vadd.f32 0.0, %v3225
    %3227 = vdwg.mxu0
    %v3229 = vrot.slane %v3226, 1
    %v3232 = vadd.f32 %v3200, %v3226
    %v3233 = vadd.f32 %v3201, %v3229
    %v3234 = vmul.f32 %v3192, %v334
    %v3235 = vmul.f32 %v3196, %v334
    %v3236 = vadd.f32 %v3234, %v337
    %v3237 = vadd.f32 %v3235, %v337
    %3238 = vmatpush.msra.mxu0 0.0
    %3239 = vmatpush.msra.mxu0 0.0
    %3240 = vmatpush.msra.mxu0 0.0
    %3241 = vmatpush.msra.mxu0 0.0
    %3242 = vmatpush.msra.mxu0 0.0
    %3243 = vmatpush.msra.mxu0 0.0
    %3244 = vmatpush.msra.mxu0 0.0
    %3245 = vmatpush.msra.mxu0 0.0
    %3246 = vmatpush.msra.mxu0 0.0
    %3247 = vmatpush.msra.mxu0 0.0
    %3248 = vmatpush.msra.mxu0 0.0
    %3249 = vmatpush.msra.mxu0 0.0
    %3250 = vmatpush.msra.mxu0 %v278
    %3251 = vmatpush.msra.mxu0 %v277
    %3252 = vmatpush.msra.mxu0 %v276
    %3253 = vmatpush.msra.mxu0 %v275
    %3254 = vmatmul.f32.gmra.mxu0 %v3206
    %v3255 = vpop.f32.mrf.mxu0
    %v3256 = vadd.f32 0.0, %v3255
    %3257 = vdwg.mxu0
    %v3259 = vrot.slane %v3256, 1
    %v3262 = vadd.f32 %v3236, %v3256
    %v3263 = vadd.f32 %v3237, %v3259
    %v3264 = vmul.f32 %v3192, %v366
    %v3265 = vmul.f32 %v3196, %v366
    %v3266 = vadd.f32 %v3264, %v369
    %v3267 = vadd.f32 %v3265, %v369
    %3268 = vmatpush.msra.mxu0 0.0
    %3269 = vmatpush.msra.mxu0 0.0
    %3270 = vmatpush.msra.mxu0 0.0
    %3271 = vmatpush.msra.mxu0 0.0
    %3272 = vmatpush.msra.mxu0 0.0
    %3273 = vmatpush.msra.mxu0 0.0
    %3274 = vmatpush.msra.mxu0 0.0
    %3275 = vmatpush.msra.mxu0 0.0
    %3276 = vmatpush.msra.mxu0 0.0
    %3277 = vmatpush.msra.mxu0 0.0
    %3278 = vmatpush.msra.mxu0 0.0
    %3279 = vmatpush.msra.mxu0 0.0
    %3280 = vmatpush.msra.mxu0 %v283
    %3281 = vmatpush.msra.mxu0 %v282
    %3282 = vmatpush.msra.mxu0 %v281
    %3283 = vmatpush.msra.mxu0 %v280
    %3284 = vmatmul.f32.gmra.mxu0 %v3206
    %v3285 = vpop.f32.mrf.mxu0
    %v3286 = vadd.f32 0.0, %v3285
    %3287 = vdwg.mxu0
    %v3289 = vrot.slane %v3286, 1
    %v3292 = vadd.f32 %v3266, %v3286
    %v3293 = vadd.f32 %v3267, %v3289
    %v3294 = vmul.f32 %v3192, %v398
    %v3295 = vmul.f32 %v3196, %v398
    %v3296 = vadd.f32 %v3294, %v401
    %v3297 = vadd.f32 %v3295, %v401
    %3298 = vmatpush.msra.mxu0 0.0
    %3299 = vmatpush.msra.mxu0 0.0
    %3300 = vmatpush.msra.mxu0 0.0
    %3301 = vmatpush.msra.mxu0 0.0
    %3302 = vmatpush.msra.mxu0 0.0
    %3303 = vmatpush.msra.mxu0 0.0
    %3304 = vmatpush.msra.mxu0 0.0
    %3305 = vmatpush.msra.mxu0 0.0
    %3306 = vmatpush.msra.mxu0 0.0
    %3307 = vmatpush.msra.mxu0 0.0
    %3308 = vmatpush.msra.mxu0 0.0
    %3309 = vmatpush.msra.mxu0 0.0
    %3310 = vmatpush.msra.mxu0 %v288
    %3311 = vmatpush.msra.mxu0 %v287
    %3312 = vmatpush.msra.mxu0 %v286
    %3313 = vmatpush.msra.mxu0 %v285
    %3314 = vmatmul.f32.gmra.mxu0 %v3206
    %v3315 = vpop.f32.mrf.mxu0
    %v3316 = vadd.f32 0.0, %v3315
    %3317 = vdwg.mxu0
    %v3319 = vrot.slane %v3316, 1
    %v3322 = vadd.f32 %v3296, %v3316
    %v3323 = vadd.f32 %v3297, %v3319
    %v3324 = vmul.f32 %v3232, 0.5
    %v3325 = vmul.f32 %v3233, 0.5
    %v3326 = vtanh.pop %v3324
    %v3327 = vtanh.pop %v3325
    %v3328 = vmul.f32 %v3326, 0.5
    %v3329 = vmul.f32 %v3327, 0.5
    %v3330 = vadd.f32 %v3328, 0.5
    %v3331 = vadd.f32 %v3329, 0.5
    %v3332 = vmul.f32 %v3262, 0.5
    %v3333 = vmul.f32 %v3263, 0.5
    %v3334 = vtanh.pop %v3332
    %v3335 = vtanh.pop %v3333
    %v3336 = vmul.f32 %v3334, 0.5
    %v3337 = vmul.f32 %v3335, 0.5
    %v3338 = vadd.f32 %v3336, 0.5
    %v3339 = vadd.f32 %v3337, 0.5
    %v3340 = vtanh.pop %v3292
    %v3341 = vtanh.pop %v3293
    %v3342 = vmul.f32 %v3322, 0.5
    %v3343 = vmul.f32 %v3323, 0.5
    %v3344 = vtanh.pop %v3342
    %v3345 = vtanh.pop %v3343
    %v3346 = vmul.f32 %v3344, 0.5
    %v3347 = vmul.f32 %v3345, 0.5
    %v3348 = vadd.f32 %v3346, 0.5
    %v3349 = vadd.f32 %v3347, 0.5
    %v3350 = vmul.f32 %v3338, %v3184
    %v3351 = vmul.f32 %v3339, %v3185
    %v3352 = vmul.f32 %v3330, %v3340
    %v3353 = vmul.f32 %v3331, %v3341
    %v3354 = vadd.f32 %v3350, %v3352
    %v3355 = vadd.f32 %v3351, %v3353
    %v3356 = vtanh.pop %v3354
    %v3357 = vtanh.pop %v3355
    %v3358 = vmul.f32 %v3348, %v3356
    %v3359 = vmul.f32 %v3349, %v3357
    %3360 = vset.pattern.permute.xlu0 18
    %3361 = vperm.xlu0 %3360, %v260
    %v3362 = vpop.permute.xlu0 %3361
    %3364 = vset.pattern.permute.xlu0 18
    %3365 = vperm.xlu0 %3364, %v267
    %v3366 = vpop.permute.xlu0 %3365
    %v3368 = vmul.f32 %v3362, %v299
    %v3369 = vmul.f32 %v3366, %v299
    %v3370 = vadd.f32 %v3368, %v302
    %v3371 = vadd.f32 %v3369, %v302
    %v3374 = vrot.slane %v3359, 7
    %v3375 = vsel %vm196, %v3374, %v3358
    %v3376 = vsel %vm117, %v3375, 0
    %3378 = vmatpush.msra.mxu0 0.0
    %3379 = vmatpush.msra.mxu0 0.0
    %3380 = vmatpush.msra.mxu0 0.0
    %3381 = vmatpush.msra.mxu0 0.0
    %3382 = vmatpush.msra.mxu0 0.0
    %3383 = vmatpush.msra.mxu0 0.0
    %3384 = vmatpush.msra.mxu0 0.0
    %3385 = vmatpush.msra.mxu0 0.0
    %3386 = vmatpush.msra.mxu0 0.0
    %3387 = vmatpush.msra.mxu0 0.0
    %3388 = vmatpush.msra.mxu0 0.0
    %3389 = vmatpush.msra.mxu0 0.0
    %3390 = vmatpush.msra.mxu0 %v273
    %3391 = vmatpush.msra.mxu0 %v272
    %3392 = vmatpush.msra.mxu0 %v271
    %3393 = vmatpush.msra.mxu0 %v270
    %3394 = vmatmul.f32.gmra.mxu0 %v3376
    %v3395 = vpop.f32.mrf.mxu0
    %v3396 = vadd.f32 0.0, %v3395
    %3397 = vdwg.mxu0
    %v3399 = vrot.slane %v3396, 1
    %v3402 = vadd.f32 %v3370, %v3396
    %v3403 = vadd.f32 %v3371, %v3399
    %v3404 = vmul.f32 %v3362, %v334
    %v3405 = vmul.f32 %v3366, %v334
    %v3406 = vadd.f32 %v3404, %v337
    %v3407 = vadd.f32 %v3405, %v337
    %3408 = vmatpush.msra.mxu0 0.0
    %3409 = vmatpush.msra.mxu0 0.0
    %3410 = vmatpush.msra.mxu0 0.0
    %3411 = vmatpush.msra.mxu0 0.0
    %3412 = vmatpush.msra.mxu0 0.0
    %3413 = vmatpush.msra.mxu0 0.0
    %3414 = vmatpush.msra.mxu0 0.0
    %3415 = vmatpush.msra.mxu0 0.0
    %3416 = vmatpush.msra.mxu0 0.0
    %3417 = vmatpush.msra.mxu0 0.0
    %3418 = vmatpush.msra.mxu0 0.0
    %3419 = vmatpush.msra.mxu0 0.0
    %3420 = vmatpush.msra.mxu0 %v278
    %3421 = vmatpush.msra.mxu0 %v277
    %3422 = vmatpush.msra.mxu0 %v276
    %3423 = vmatpush.msra.mxu0 %v275
    %3424 = vmatmul.f32.gmra.mxu0 %v3376
    %v3425 = vpop.f32.mrf.mxu0
    %v3426 = vadd.f32 0.0, %v3425
    %3427 = vdwg.mxu0
    %v3429 = vrot.slane %v3426, 1
    %v3432 = vadd.f32 %v3406, %v3426
    %v3433 = vadd.f32 %v3407, %v3429
    %v3434 = vmul.f32 %v3362, %v366
    %v3435 = vmul.f32 %v3366, %v366
    %v3436 = vadd.f32 %v3434, %v369
    %v3437 = vadd.f32 %v3435, %v369
    %3438 = vmatpush.msra.mxu0 0.0
    %3439 = vmatpush.msra.mxu0 0.0
    %3440 = vmatpush.msra.mxu0 0.0
    %3441 = vmatpush.msra.mxu0 0.0
    %3442 = vmatpush.msra.mxu0 0.0
    %3443 = vmatpush.msra.mxu0 0.0
    %3444 = vmatpush.msra.mxu0 0.0
    %3445 = vmatpush.msra.mxu0 0.0
    %3446 = vmatpush.msra.mxu0 0.0
    %3447 = vmatpush.msra.mxu0 0.0
    %3448 = vmatpush.msra.mxu0 0.0
    %3449 = vmatpush.msra.mxu0 0.0
    %3450 = vmatpush.msra.mxu0 %v283
    %3451 = vmatpush.msra.mxu0 %v282
    %3452 = vmatpush.msra.mxu0 %v281
    %3453 = vmatpush.msra.mxu0 %v280
    %3454 = vmatmul.f32.gmra.mxu0 %v3376
    %v3455 = vpop.f32.mrf.mxu0
    %v3456 = vadd.f32 0.0, %v3455
    %3457 = vdwg.mxu0
    %v3459 = vrot.slane %v3456, 1
    %v3462 = vadd.f32 %v3436, %v3456
    %v3463 = vadd.f32 %v3437, %v3459
    %v3464 = vmul.f32 %v3362, %v398
    %v3465 = vmul.f32 %v3366, %v398
    %v3466 = vadd.f32 %v3464, %v401
    %v3467 = vadd.f32 %v3465, %v401
    %3468 = vmatpush.msra.mxu0 0.0
    %3469 = vmatpush.msra.mxu0 0.0
    %3470 = vmatpush.msra.mxu0 0.0
    %3471 = vmatpush.msra.mxu0 0.0
    %3472 = vmatpush.msra.mxu0 0.0
    %3473 = vmatpush.msra.mxu0 0.0
    %3474 = vmatpush.msra.mxu0 0.0
    %3475 = vmatpush.msra.mxu0 0.0
    %3476 = vmatpush.msra.mxu0 0.0
    %3477 = vmatpush.msra.mxu0 0.0
    %3478 = vmatpush.msra.mxu0 0.0
    %3479 = vmatpush.msra.mxu0 0.0
    %3480 = vmatpush.msra.mxu0 %v288
    %3481 = vmatpush.msra.mxu0 %v287
    %3482 = vmatpush.msra.mxu0 %v286
    %3483 = vmatpush.msra.mxu0 %v285
    %3484 = vmatmul.f32.gmra.mxu0 %v3376
    %v3485 = vpop.f32.mrf.mxu0
    %v3486 = vadd.f32 0.0, %v3485
    %3487 = vdwg.mxu0
    %v3489 = vrot.slane %v3486, 1
    %v3492 = vadd.f32 %v3466, %v3486
    %v3493 = vadd.f32 %v3467, %v3489
    %v3494 = vmul.f32 %v3402, 0.5
    %v3495 = vmul.f32 %v3403, 0.5
    %v3496 = vtanh.pop %v3494
    %v3497 = vtanh.pop %v3495
    %v3498 = vmul.f32 %v3496, 0.5
    %v3499 = vmul.f32 %v3497, 0.5
    %v3500 = vadd.f32 %v3498, 0.5
    %v3501 = vadd.f32 %v3499, 0.5
    %v3502 = vmul.f32 %v3432, 0.5
    %v3503 = vmul.f32 %v3433, 0.5
    %v3504 = vtanh.pop %v3502
    %v3505 = vtanh.pop %v3503
    %v3506 = vmul.f32 %v3504, 0.5
    %v3507 = vmul.f32 %v3505, 0.5
    %v3508 = vadd.f32 %v3506, 0.5
    %v3509 = vadd.f32 %v3507, 0.5
    %v3510 = vtanh.pop %v3462
    %v3511 = vtanh.pop %v3463
    %v3512 = vmul.f32 %v3492, 0.5
    %v3513 = vmul.f32 %v3493, 0.5
    %v3514 = vtanh.pop %v3512
    %v3515 = vtanh.pop %v3513
    %v3516 = vmul.f32 %v3514, 0.5
    %v3517 = vmul.f32 %v3515, 0.5
    %v3518 = vadd.f32 %v3516, 0.5
    %v3519 = vadd.f32 %v3517, 0.5
    %v3520 = vmul.f32 %v3508, %v3354
    %v3521 = vmul.f32 %v3509, %v3355
    %v3522 = vmul.f32 %v3500, %v3510
    %v3523 = vmul.f32 %v3501, %v3511
    %v3524 = vadd.f32 %v3520, %v3522
    %v3525 = vadd.f32 %v3521, %v3523
    %v3526 = vtanh.pop %v3524
    %v3527 = vtanh.pop %v3525
    %v3528 = vmul.f32 %v3518, %v3526
    %v3529 = vmul.f32 %v3519, %v3527
    %3530 = vset.pattern.permute.xlu0 19
    %3531 = vperm.xlu0 %3530, %v260
    %v3532 = vpop.permute.xlu0 %3531
    %3534 = vset.pattern.permute.xlu0 19
    %3535 = vperm.xlu0 %3534, %v267
    %v3536 = vpop.permute.xlu0 %3535
    %v3538 = vmul.f32 %v3532, %v299
    %v3539 = vmul.f32 %v3536, %v299
    %v3540 = vadd.f32 %v3538, %v302
    %v3541 = vadd.f32 %v3539, %v302
    %v3544 = vrot.slane %v3529, 7
    %v3545 = vsel %vm196, %v3544, %v3528
    %v3546 = vsel %vm117, %v3545, 0
    %3548 = vmatpush.msra.mxu0 0.0
    %3549 = vmatpush.msra.mxu0 0.0
    %3550 = vmatpush.msra.mxu0 0.0
    %3551 = vmatpush.msra.mxu0 0.0
    %3552 = vmatpush.msra.mxu0 0.0
    %3553 = vmatpush.msra.mxu0 0.0
    %3554 = vmatpush.msra.mxu0 0.0
    %3555 = vmatpush.msra.mxu0 0.0
    %3556 = vmatpush.msra.mxu0 0.0
    %3557 = vmatpush.msra.mxu0 0.0
    %3558 = vmatpush.msra.mxu0 0.0
    %3559 = vmatpush.msra.mxu0 0.0
    %3560 = vmatpush.msra.mxu0 %v273
    %3561 = vmatpush.msra.mxu0 %v272
    %3562 = vmatpush.msra.mxu0 %v271
    %3563 = vmatpush.msra.mxu0 %v270
    %3564 = vmatmul.f32.gmra.mxu0 %v3546
    %v3565 = vpop.f32.mrf.mxu0
    %v3566 = vadd.f32 0.0, %v3565
    %3567 = vdwg.mxu0
    %v3569 = vrot.slane %v3566, 1
    %v3572 = vadd.f32 %v3540, %v3566
    %v3573 = vadd.f32 %v3541, %v3569
    %v3574 = vmul.f32 %v3532, %v334
    %v3575 = vmul.f32 %v3536, %v334
    %v3576 = vadd.f32 %v3574, %v337
    %v3577 = vadd.f32 %v3575, %v337
    %3578 = vmatpush.msra.mxu0 0.0
    %3579 = vmatpush.msra.mxu0 0.0
    %3580 = vmatpush.msra.mxu0 0.0
    %3581 = vmatpush.msra.mxu0 0.0
    %3582 = vmatpush.msra.mxu0 0.0
    %3583 = vmatpush.msra.mxu0 0.0
    %3584 = vmatpush.msra.mxu0 0.0
    %3585 = vmatpush.msra.mxu0 0.0
    %3586 = vmatpush.msra.mxu0 0.0
    %3587 = vmatpush.msra.mxu0 0.0
    %3588 = vmatpush.msra.mxu0 0.0
    %3589 = vmatpush.msra.mxu0 0.0
    %3590 = vmatpush.msra.mxu0 %v278
    %3591 = vmatpush.msra.mxu0 %v277
    %3592 = vmatpush.msra.mxu0 %v276
    %3593 = vmatpush.msra.mxu0 %v275
    %3594 = vmatmul.f32.gmra.mxu0 %v3546
    %v3595 = vpop.f32.mrf.mxu0
    %v3596 = vadd.f32 0.0, %v3595
    %3597 = vdwg.mxu0
    %v3599 = vrot.slane %v3596, 1
    %v3602 = vadd.f32 %v3576, %v3596
    %v3603 = vadd.f32 %v3577, %v3599
    %v3604 = vmul.f32 %v3532, %v366
    %v3605 = vmul.f32 %v3536, %v366
    %v3606 = vadd.f32 %v3604, %v369
    %v3607 = vadd.f32 %v3605, %v369
    %3608 = vmatpush.msra.mxu0 0.0
    %3609 = vmatpush.msra.mxu0 0.0
    %3610 = vmatpush.msra.mxu0 0.0
    %3611 = vmatpush.msra.mxu0 0.0
    %3612 = vmatpush.msra.mxu0 0.0
    %3613 = vmatpush.msra.mxu0 0.0
    %3614 = vmatpush.msra.mxu0 0.0
    %3615 = vmatpush.msra.mxu0 0.0
    %3616 = vmatpush.msra.mxu0 0.0
    %3617 = vmatpush.msra.mxu0 0.0
    %3618 = vmatpush.msra.mxu0 0.0
    %3619 = vmatpush.msra.mxu0 0.0
    %3620 = vmatpush.msra.mxu0 %v283
    %3621 = vmatpush.msra.mxu0 %v282
    %3622 = vmatpush.msra.mxu0 %v281
    %3623 = vmatpush.msra.mxu0 %v280
    %3624 = vmatmul.f32.gmra.mxu0 %v3546
    %v3625 = vpop.f32.mrf.mxu0
    %v3626 = vadd.f32 0.0, %v3625
    %3627 = vdwg.mxu0
    %v3629 = vrot.slane %v3626, 1
    %v3632 = vadd.f32 %v3606, %v3626
    %v3633 = vadd.f32 %v3607, %v3629
    %v3634 = vmul.f32 %v3532, %v398
    %v3635 = vmul.f32 %v3536, %v398
    %v3636 = vadd.f32 %v3634, %v401
    %v3637 = vadd.f32 %v3635, %v401
    %3638 = vmatpush.msra.mxu0 0.0
    %3639 = vmatpush.msra.mxu0 0.0
    %3640 = vmatpush.msra.mxu0 0.0
    %3641 = vmatpush.msra.mxu0 0.0
    %3642 = vmatpush.msra.mxu0 0.0
    %3643 = vmatpush.msra.mxu0 0.0
    %3644 = vmatpush.msra.mxu0 0.0
    %3645 = vmatpush.msra.mxu0 0.0
    %3646 = vmatpush.msra.mxu0 0.0
    %3647 = vmatpush.msra.mxu0 0.0
    %3648 = vmatpush.msra.mxu0 0.0
    %3649 = vmatpush.msra.mxu0 0.0
    %3650 = vmatpush.msra.mxu0 %v288
    %3651 = vmatpush.msra.mxu0 %v287
    %3652 = vmatpush.msra.mxu0 %v286
    %3653 = vmatpush.msra.mxu0 %v285
    %3654 = vmatmul.f32.gmra.mxu0 %v3546
    %v3655 = vpop.f32.mrf.mxu0
    %v3656 = vadd.f32 0.0, %v3655
    %3657 = vdwg.mxu0
    %v3659 = vrot.slane %v3656, 1
    %v3662 = vadd.f32 %v3636, %v3656
    %v3663 = vadd.f32 %v3637, %v3659
    %v3664 = vmul.f32 %v3572, 0.5
    %v3665 = vmul.f32 %v3573, 0.5
    %v3666 = vtanh.pop %v3664
    %v3667 = vtanh.pop %v3665
    %v3668 = vmul.f32 %v3666, 0.5
    %v3669 = vmul.f32 %v3667, 0.5
    %v3670 = vadd.f32 %v3668, 0.5
    %v3671 = vadd.f32 %v3669, 0.5
    %v3672 = vmul.f32 %v3602, 0.5
    %v3673 = vmul.f32 %v3603, 0.5
    %v3674 = vtanh.pop %v3672
    %v3675 = vtanh.pop %v3673
    %v3676 = vmul.f32 %v3674, 0.5
    %v3677 = vmul.f32 %v3675, 0.5
    %v3678 = vadd.f32 %v3676, 0.5
    %v3679 = vadd.f32 %v3677, 0.5
    %v3680 = vtanh.pop %v3632
    %v3681 = vtanh.pop %v3633
    %v3682 = vmul.f32 %v3662, 0.5
    %v3683 = vmul.f32 %v3663, 0.5
    %v3684 = vtanh.pop %v3682
    %v3685 = vtanh.pop %v3683
    %v3686 = vmul.f32 %v3684, 0.5
    %v3687 = vmul.f32 %v3685, 0.5
    %v3688 = vadd.f32 %v3686, 0.5
    %v3689 = vadd.f32 %v3687, 0.5
    %v3690 = vmul.f32 %v3678, %v3524
    %v3691 = vmul.f32 %v3679, %v3525
    %v3692 = vmul.f32 %v3670, %v3680
    %v3693 = vmul.f32 %v3671, %v3681
    %v3694 = vadd.f32 %v3690, %v3692
    %v3695 = vadd.f32 %v3691, %v3693
    %v3696 = vtanh.pop %v3694
    %v3697 = vtanh.pop %v3695
    %v3698 = vmul.f32 %v3688, %v3696
    %v3699 = vmul.f32 %v3689, %v3697
    %3700 = vset.pattern.permute.xlu0 20
    %3701 = vperm.xlu0 %3700, %v260
    %v3702 = vpop.permute.xlu0 %3701
    %3704 = vset.pattern.permute.xlu0 20
    %3705 = vperm.xlu0 %3704, %v267
    %v3706 = vpop.permute.xlu0 %3705
    %v3708 = vmul.f32 %v3702, %v299
    %v3709 = vmul.f32 %v3706, %v299
    %v3710 = vadd.f32 %v3708, %v302
    %v3711 = vadd.f32 %v3709, %v302
    %v3714 = vrot.slane %v3699, 7
    %v3715 = vsel %vm196, %v3714, %v3698
    %v3716 = vsel %vm117, %v3715, 0
    %3718 = vmatpush.msra.mxu0 0.0
    %3719 = vmatpush.msra.mxu0 0.0
    %3720 = vmatpush.msra.mxu0 0.0
    %3721 = vmatpush.msra.mxu0 0.0
    %3722 = vmatpush.msra.mxu0 0.0
    %3723 = vmatpush.msra.mxu0 0.0
    %3724 = vmatpush.msra.mxu0 0.0
    %3725 = vmatpush.msra.mxu0 0.0
    %3726 = vmatpush.msra.mxu0 0.0
    %3727 = vmatpush.msra.mxu0 0.0
    %3728 = vmatpush.msra.mxu0 0.0
    %3729 = vmatpush.msra.mxu0 0.0
    %3730 = vmatpush.msra.mxu0 %v273
    %3731 = vmatpush.msra.mxu0 %v272
    %3732 = vmatpush.msra.mxu0 %v271
    %3733 = vmatpush.msra.mxu0 %v270
    %3734 = vmatmul.f32.gmra.mxu0 %v3716
    %v3735 = vpop.f32.mrf.mxu0
    %v3736 = vadd.f32 0.0, %v3735
    %3737 = vdwg.mxu0
    %v3739 = vrot.slane %v3736, 1
    %v3742 = vadd.f32 %v3710, %v3736
    %v3743 = vadd.f32 %v3711, %v3739
    %v3744 = vmul.f32 %v3702, %v334
    %v3745 = vmul.f32 %v3706, %v334
    %v3746 = vadd.f32 %v3744, %v337
    %v3747 = vadd.f32 %v3745, %v337
    %3748 = vmatpush.msra.mxu0 0.0
    %3749 = vmatpush.msra.mxu0 0.0
    %3750 = vmatpush.msra.mxu0 0.0
    %3751 = vmatpush.msra.mxu0 0.0
    %3752 = vmatpush.msra.mxu0 0.0
    %3753 = vmatpush.msra.mxu0 0.0
    %3754 = vmatpush.msra.mxu0 0.0
    %3755 = vmatpush.msra.mxu0 0.0
    %3756 = vmatpush.msra.mxu0 0.0
    %3757 = vmatpush.msra.mxu0 0.0
    %3758 = vmatpush.msra.mxu0 0.0
    %3759 = vmatpush.msra.mxu0 0.0
    %3760 = vmatpush.msra.mxu0 %v278
    %3761 = vmatpush.msra.mxu0 %v277
    %3762 = vmatpush.msra.mxu0 %v276
    %3763 = vmatpush.msra.mxu0 %v275
    %3764 = vmatmul.f32.gmra.mxu0 %v3716
    %v3765 = vpop.f32.mrf.mxu0
    %v3766 = vadd.f32 0.0, %v3765
    %3767 = vdwg.mxu0
    %v3769 = vrot.slane %v3766, 1
    %v3772 = vadd.f32 %v3746, %v3766
    %v3773 = vadd.f32 %v3747, %v3769
    %v3774 = vmul.f32 %v3702, %v366
    %v3775 = vmul.f32 %v3706, %v366
    %v3776 = vadd.f32 %v3774, %v369
    %v3777 = vadd.f32 %v3775, %v369
    %3778 = vmatpush.msra.mxu0 0.0
    %3779 = vmatpush.msra.mxu0 0.0
    %3780 = vmatpush.msra.mxu0 0.0
    %3781 = vmatpush.msra.mxu0 0.0
    %3782 = vmatpush.msra.mxu0 0.0
    %3783 = vmatpush.msra.mxu0 0.0
    %3784 = vmatpush.msra.mxu0 0.0
    %3785 = vmatpush.msra.mxu0 0.0
    %3786 = vmatpush.msra.mxu0 0.0
    %3787 = vmatpush.msra.mxu0 0.0
    %3788 = vmatpush.msra.mxu0 0.0
    %3789 = vmatpush.msra.mxu0 0.0
    %3790 = vmatpush.msra.mxu0 %v283
    %3791 = vmatpush.msra.mxu0 %v282
    %3792 = vmatpush.msra.mxu0 %v281
    %3793 = vmatpush.msra.mxu0 %v280
    %3794 = vmatmul.f32.gmra.mxu0 %v3716
    %v3795 = vpop.f32.mrf.mxu0
    %v3796 = vadd.f32 0.0, %v3795
    %3797 = vdwg.mxu0
    %v3799 = vrot.slane %v3796, 1
    %v3802 = vadd.f32 %v3776, %v3796
    %v3803 = vadd.f32 %v3777, %v3799
    %v3804 = vmul.f32 %v3702, %v398
    %v3805 = vmul.f32 %v3706, %v398
    %v3806 = vadd.f32 %v3804, %v401
    %v3807 = vadd.f32 %v3805, %v401
    %3808 = vmatpush.msra.mxu0 0.0
    %3809 = vmatpush.msra.mxu0 0.0
    %3810 = vmatpush.msra.mxu0 0.0
    %3811 = vmatpush.msra.mxu0 0.0
    %3812 = vmatpush.msra.mxu0 0.0
    %3813 = vmatpush.msra.mxu0 0.0
    %3814 = vmatpush.msra.mxu0 0.0
    %3815 = vmatpush.msra.mxu0 0.0
    %3816 = vmatpush.msra.mxu0 0.0
    %3817 = vmatpush.msra.mxu0 0.0
    %3818 = vmatpush.msra.mxu0 0.0
    %3819 = vmatpush.msra.mxu0 0.0
    %3820 = vmatpush.msra.mxu0 %v288
    %3821 = vmatpush.msra.mxu0 %v287
    %3822 = vmatpush.msra.mxu0 %v286
    %3823 = vmatpush.msra.mxu0 %v285
    %3824 = vmatmul.f32.gmra.mxu0 %v3716
    %v3825 = vpop.f32.mrf.mxu0
    %v3826 = vadd.f32 0.0, %v3825
    %3827 = vdwg.mxu0
    %v3829 = vrot.slane %v3826, 1
    %v3832 = vadd.f32 %v3806, %v3826
    %v3833 = vadd.f32 %v3807, %v3829
    %v3834 = vmul.f32 %v3742, 0.5
    %v3835 = vmul.f32 %v3743, 0.5
    %v3836 = vtanh.pop %v3834
    %v3837 = vtanh.pop %v3835
    %v3838 = vmul.f32 %v3836, 0.5
    %v3839 = vmul.f32 %v3837, 0.5
    %v3840 = vadd.f32 %v3838, 0.5
    %v3841 = vadd.f32 %v3839, 0.5
    %v3842 = vmul.f32 %v3772, 0.5
    %v3843 = vmul.f32 %v3773, 0.5
    %v3844 = vtanh.pop %v3842
    %v3845 = vtanh.pop %v3843
    %v3846 = vmul.f32 %v3844, 0.5
    %v3847 = vmul.f32 %v3845, 0.5
    %v3848 = vadd.f32 %v3846, 0.5
    %v3849 = vadd.f32 %v3847, 0.5
    %v3850 = vtanh.pop %v3802
    %v3851 = vtanh.pop %v3803
    %v3852 = vmul.f32 %v3832, 0.5
    %v3853 = vmul.f32 %v3833, 0.5
    %v3854 = vtanh.pop %v3852
    %v3855 = vtanh.pop %v3853
    %v3856 = vmul.f32 %v3854, 0.5
    %v3857 = vmul.f32 %v3855, 0.5
    %v3858 = vadd.f32 %v3856, 0.5
    %v3859 = vadd.f32 %v3857, 0.5
    %v3860 = vmul.f32 %v3848, %v3694
    %v3861 = vmul.f32 %v3849, %v3695
    %v3862 = vmul.f32 %v3840, %v3850
    %v3863 = vmul.f32 %v3841, %v3851
    %v3864 = vadd.f32 %v3860, %v3862
    %v3865 = vadd.f32 %v3861, %v3863
    %v3866 = vtanh.pop %v3864
    %v3867 = vtanh.pop %v3865
    %v3868 = vmul.f32 %v3858, %v3866
    %v3869 = vmul.f32 %v3859, %v3867
    %3870 = vset.pattern.permute.xlu0 21
    %3871 = vperm.xlu0 %3870, %v260
    %v3872 = vpop.permute.xlu0 %3871
    %3874 = vset.pattern.permute.xlu0 21
    %3875 = vperm.xlu0 %3874, %v267
    %v3876 = vpop.permute.xlu0 %3875
    %v3878 = vmul.f32 %v3872, %v299
    %v3879 = vmul.f32 %v3876, %v299
    %v3880 = vadd.f32 %v3878, %v302
    %v3881 = vadd.f32 %v3879, %v302
    %v3884 = vrot.slane %v3869, 7
    %v3885 = vsel %vm196, %v3884, %v3868
    %v3886 = vsel %vm117, %v3885, 0
    %3888 = vmatpush.msra.mxu0 0.0
    %3889 = vmatpush.msra.mxu0 0.0
    %3890 = vmatpush.msra.mxu0 0.0
    %3891 = vmatpush.msra.mxu0 0.0
    %3892 = vmatpush.msra.mxu0 0.0
    %3893 = vmatpush.msra.mxu0 0.0
    %3894 = vmatpush.msra.mxu0 0.0
    %3895 = vmatpush.msra.mxu0 0.0
    %3896 = vmatpush.msra.mxu0 0.0
    %3897 = vmatpush.msra.mxu0 0.0
    %3898 = vmatpush.msra.mxu0 0.0
    %3899 = vmatpush.msra.mxu0 0.0
    %3900 = vmatpush.msra.mxu0 %v273
    %3901 = vmatpush.msra.mxu0 %v272
    %3902 = vmatpush.msra.mxu0 %v271
    %3903 = vmatpush.msra.mxu0 %v270
    %3904 = vmatmul.f32.gmra.mxu0 %v3886
    %v3905 = vpop.f32.mrf.mxu0
    %v3906 = vadd.f32 0.0, %v3905
    %3907 = vdwg.mxu0
    %v3909 = vrot.slane %v3906, 1
    %v3912 = vadd.f32 %v3880, %v3906
    %v3913 = vadd.f32 %v3881, %v3909
    %v3914 = vmul.f32 %v3872, %v334
    %v3915 = vmul.f32 %v3876, %v334
    %v3916 = vadd.f32 %v3914, %v337
    %v3917 = vadd.f32 %v3915, %v337
    %3918 = vmatpush.msra.mxu0 0.0
    %3919 = vmatpush.msra.mxu0 0.0
    %3920 = vmatpush.msra.mxu0 0.0
    %3921 = vmatpush.msra.mxu0 0.0
    %3922 = vmatpush.msra.mxu0 0.0
    %3923 = vmatpush.msra.mxu0 0.0
    %3924 = vmatpush.msra.mxu0 0.0
    %3925 = vmatpush.msra.mxu0 0.0
    %3926 = vmatpush.msra.mxu0 0.0
    %3927 = vmatpush.msra.mxu0 0.0
    %3928 = vmatpush.msra.mxu0 0.0
    %3929 = vmatpush.msra.mxu0 0.0
    %3930 = vmatpush.msra.mxu0 %v278
    %3931 = vmatpush.msra.mxu0 %v277
    %3932 = vmatpush.msra.mxu0 %v276
    %3933 = vmatpush.msra.mxu0 %v275
    %3934 = vmatmul.f32.gmra.mxu0 %v3886
    %v3935 = vpop.f32.mrf.mxu0
    %v3936 = vadd.f32 0.0, %v3935
    %3937 = vdwg.mxu0
    %v3939 = vrot.slane %v3936, 1
    %v3942 = vadd.f32 %v3916, %v3936
    %v3943 = vadd.f32 %v3917, %v3939
    %v3944 = vmul.f32 %v3872, %v366
    %v3945 = vmul.f32 %v3876, %v366
    %v3946 = vadd.f32 %v3944, %v369
    %v3947 = vadd.f32 %v3945, %v369
    %3948 = vmatpush.msra.mxu0 0.0
    %3949 = vmatpush.msra.mxu0 0.0
    %3950 = vmatpush.msra.mxu0 0.0
    %3951 = vmatpush.msra.mxu0 0.0
    %3952 = vmatpush.msra.mxu0 0.0
    %3953 = vmatpush.msra.mxu0 0.0
    %3954 = vmatpush.msra.mxu0 0.0
    %3955 = vmatpush.msra.mxu0 0.0
    %3956 = vmatpush.msra.mxu0 0.0
    %3957 = vmatpush.msra.mxu0 0.0
    %3958 = vmatpush.msra.mxu0 0.0
    %3959 = vmatpush.msra.mxu0 0.0
    %3960 = vmatpush.msra.mxu0 %v283
    %3961 = vmatpush.msra.mxu0 %v282
    %3962 = vmatpush.msra.mxu0 %v281
    %3963 = vmatpush.msra.mxu0 %v280
    %3964 = vmatmul.f32.gmra.mxu0 %v3886
    %v3965 = vpop.f32.mrf.mxu0
    %v3966 = vadd.f32 0.0, %v3965
    %3967 = vdwg.mxu0
    %v3969 = vrot.slane %v3966, 1
    %v3972 = vadd.f32 %v3946, %v3966
    %v3973 = vadd.f32 %v3947, %v3969
    %v3974 = vmul.f32 %v3872, %v398
    %v3975 = vmul.f32 %v3876, %v398
    %v3976 = vadd.f32 %v3974, %v401
    %v3977 = vadd.f32 %v3975, %v401
    %3978 = vmatpush.msra.mxu0 0.0
    %3979 = vmatpush.msra.mxu0 0.0
    %3980 = vmatpush.msra.mxu0 0.0
    %3981 = vmatpush.msra.mxu0 0.0
    %3982 = vmatpush.msra.mxu0 0.0
    %3983 = vmatpush.msra.mxu0 0.0
    %3984 = vmatpush.msra.mxu0 0.0
    %3985 = vmatpush.msra.mxu0 0.0
    %3986 = vmatpush.msra.mxu0 0.0
    %3987 = vmatpush.msra.mxu0 0.0
    %3988 = vmatpush.msra.mxu0 0.0
    %3989 = vmatpush.msra.mxu0 0.0
    %3990 = vmatpush.msra.mxu0 %v288
    %3991 = vmatpush.msra.mxu0 %v287
    %3992 = vmatpush.msra.mxu0 %v286
    %3993 = vmatpush.msra.mxu0 %v285
    %3994 = vmatmul.f32.gmra.mxu0 %v3886
    %v3995 = vpop.f32.mrf.mxu0
    %v3996 = vadd.f32 0.0, %v3995
    %3997 = vdwg.mxu0
    %v3999 = vrot.slane %v3996, 1
    %v4002 = vadd.f32 %v3976, %v3996
    %v4003 = vadd.f32 %v3977, %v3999
    %v4004 = vmul.f32 %v3912, 0.5
    %v4005 = vmul.f32 %v3913, 0.5
    %v4006 = vtanh.pop %v4004
    %v4007 = vtanh.pop %v4005
    %v4008 = vmul.f32 %v4006, 0.5
    %v4009 = vmul.f32 %v4007, 0.5
    %v4010 = vadd.f32 %v4008, 0.5
    %v4011 = vadd.f32 %v4009, 0.5
    %v4012 = vmul.f32 %v3942, 0.5
    %v4013 = vmul.f32 %v3943, 0.5
    %v4014 = vtanh.pop %v4012
    %v4015 = vtanh.pop %v4013
    %v4016 = vmul.f32 %v4014, 0.5
    %v4017 = vmul.f32 %v4015, 0.5
    %v4018 = vadd.f32 %v4016, 0.5
    %v4019 = vadd.f32 %v4017, 0.5
    %v4020 = vtanh.pop %v3972
    %v4021 = vtanh.pop %v3973
    %v4022 = vmul.f32 %v4002, 0.5
    %v4023 = vmul.f32 %v4003, 0.5
    %v4024 = vtanh.pop %v4022
    %v4025 = vtanh.pop %v4023
    %v4026 = vmul.f32 %v4024, 0.5
    %v4027 = vmul.f32 %v4025, 0.5
    %v4028 = vadd.f32 %v4026, 0.5
    %v4029 = vadd.f32 %v4027, 0.5
    %v4030 = vmul.f32 %v4018, %v3864
    %v4031 = vmul.f32 %v4019, %v3865
    %v4032 = vmul.f32 %v4010, %v4020
    %v4033 = vmul.f32 %v4011, %v4021
    %v4034 = vadd.f32 %v4030, %v4032
    %v4035 = vadd.f32 %v4031, %v4033
    %v4036 = vtanh.pop %v4034
    %v4037 = vtanh.pop %v4035
    %v4038 = vmul.f32 %v4028, %v4036
    %v4039 = vmul.f32 %v4029, %v4037
    %4040 = vset.pattern.permute.xlu0 22
    %4041 = vperm.xlu0 %4040, %v260
    %v4042 = vpop.permute.xlu0 %4041
    %4044 = vset.pattern.permute.xlu0 22
    %4045 = vperm.xlu0 %4044, %v267
    %v4046 = vpop.permute.xlu0 %4045
    %v4048 = vmul.f32 %v4042, %v299
    %v4049 = vmul.f32 %v4046, %v299
    %v4050 = vadd.f32 %v4048, %v302
    %v4051 = vadd.f32 %v4049, %v302
    %v4054 = vrot.slane %v4039, 7
    %v4055 = vsel %vm196, %v4054, %v4038
    %v4056 = vsel %vm117, %v4055, 0
    %4058 = vmatpush.msra.mxu0 0.0
    %4059 = vmatpush.msra.mxu0 0.0
    %4060 = vmatpush.msra.mxu0 0.0
    %4061 = vmatpush.msra.mxu0 0.0
    %4062 = vmatpush.msra.mxu0 0.0
    %4063 = vmatpush.msra.mxu0 0.0
    %4064 = vmatpush.msra.mxu0 0.0
    %4065 = vmatpush.msra.mxu0 0.0
    %4066 = vmatpush.msra.mxu0 0.0
    %4067 = vmatpush.msra.mxu0 0.0
    %4068 = vmatpush.msra.mxu0 0.0
    %4069 = vmatpush.msra.mxu0 0.0
    %4070 = vmatpush.msra.mxu0 %v273
    %4071 = vmatpush.msra.mxu0 %v272
    %4072 = vmatpush.msra.mxu0 %v271
    %4073 = vmatpush.msra.mxu0 %v270
    %4074 = vmatmul.f32.gmra.mxu0 %v4056
    %v4075 = vpop.f32.mrf.mxu0
    %v4076 = vadd.f32 0.0, %v4075
    %4077 = vdwg.mxu0
    %v4079 = vrot.slane %v4076, 1
    %v4082 = vadd.f32 %v4050, %v4076
    %v4083 = vadd.f32 %v4051, %v4079
    %v4084 = vmul.f32 %v4042, %v334
    %v4085 = vmul.f32 %v4046, %v334
    %v4086 = vadd.f32 %v4084, %v337
    %v4087 = vadd.f32 %v4085, %v337
    %4088 = vmatpush.msra.mxu0 0.0
    %4089 = vmatpush.msra.mxu0 0.0
    %4090 = vmatpush.msra.mxu0 0.0
    %4091 = vmatpush.msra.mxu0 0.0
    %4092 = vmatpush.msra.mxu0 0.0
    %4093 = vmatpush.msra.mxu0 0.0
    %4094 = vmatpush.msra.mxu0 0.0
    %4095 = vmatpush.msra.mxu0 0.0
    %4096 = vmatpush.msra.mxu0 0.0
    %4097 = vmatpush.msra.mxu0 0.0
    %4098 = vmatpush.msra.mxu0 0.0
    %4099 = vmatpush.msra.mxu0 0.0
    %4100 = vmatpush.msra.mxu0 %v278
    %4101 = vmatpush.msra.mxu0 %v277
    %4102 = vmatpush.msra.mxu0 %v276
    %4103 = vmatpush.msra.mxu0 %v275
    %4104 = vmatmul.f32.gmra.mxu0 %v4056
    %v4105 = vpop.f32.mrf.mxu0
    %v4106 = vadd.f32 0.0, %v4105
    %4107 = vdwg.mxu0
    %v4109 = vrot.slane %v4106, 1
    %v4112 = vadd.f32 %v4086, %v4106
    %v4113 = vadd.f32 %v4087, %v4109
    %v4114 = vmul.f32 %v4042, %v366
    %v4115 = vmul.f32 %v4046, %v366
    %v4116 = vadd.f32 %v4114, %v369
    %v4117 = vadd.f32 %v4115, %v369
    %4118 = vmatpush.msra.mxu0 0.0
    %4119 = vmatpush.msra.mxu0 0.0
    %4120 = vmatpush.msra.mxu0 0.0
    %4121 = vmatpush.msra.mxu0 0.0
    %4122 = vmatpush.msra.mxu0 0.0
    %4123 = vmatpush.msra.mxu0 0.0
    %4124 = vmatpush.msra.mxu0 0.0
    %4125 = vmatpush.msra.mxu0 0.0
    %4126 = vmatpush.msra.mxu0 0.0
    %4127 = vmatpush.msra.mxu0 0.0
    %4128 = vmatpush.msra.mxu0 0.0
    %4129 = vmatpush.msra.mxu0 0.0
    %4130 = vmatpush.msra.mxu0 %v283
    %4131 = vmatpush.msra.mxu0 %v282
    %4132 = vmatpush.msra.mxu0 %v281
    %4133 = vmatpush.msra.mxu0 %v280
    %4134 = vmatmul.f32.gmra.mxu0 %v4056
    %v4135 = vpop.f32.mrf.mxu0
    %v4136 = vadd.f32 0.0, %v4135
    %4137 = vdwg.mxu0
    %v4139 = vrot.slane %v4136, 1
    %v4142 = vadd.f32 %v4116, %v4136
    %v4143 = vadd.f32 %v4117, %v4139
    %v4144 = vmul.f32 %v4042, %v398
    %v4145 = vmul.f32 %v4046, %v398
    %v4146 = vadd.f32 %v4144, %v401
    %v4147 = vadd.f32 %v4145, %v401
    %4148 = vmatpush.msra.mxu0 0.0
    %4149 = vmatpush.msra.mxu0 0.0
    %4150 = vmatpush.msra.mxu0 0.0
    %4151 = vmatpush.msra.mxu0 0.0
    %4152 = vmatpush.msra.mxu0 0.0
    %4153 = vmatpush.msra.mxu0 0.0
    %4154 = vmatpush.msra.mxu0 0.0
    %4155 = vmatpush.msra.mxu0 0.0
    %4156 = vmatpush.msra.mxu0 0.0
    %4157 = vmatpush.msra.mxu0 0.0
    %4158 = vmatpush.msra.mxu0 0.0
    %4159 = vmatpush.msra.mxu0 0.0
    %4160 = vmatpush.msra.mxu0 %v288
    %4161 = vmatpush.msra.mxu0 %v287
    %4162 = vmatpush.msra.mxu0 %v286
    %4163 = vmatpush.msra.mxu0 %v285
    %4164 = vmatmul.f32.gmra.mxu0 %v4056
    %v4165 = vpop.f32.mrf.mxu0
    %v4166 = vadd.f32 0.0, %v4165
    %4167 = vdwg.mxu0
    %v4169 = vrot.slane %v4166, 1
    %v4172 = vadd.f32 %v4146, %v4166
    %v4173 = vadd.f32 %v4147, %v4169
    %v4174 = vmul.f32 %v4082, 0.5
    %v4175 = vmul.f32 %v4083, 0.5
    %v4176 = vtanh.pop %v4174
    %v4177 = vtanh.pop %v4175
    %v4178 = vmul.f32 %v4176, 0.5
    %v4179 = vmul.f32 %v4177, 0.5
    %v4180 = vadd.f32 %v4178, 0.5
    %v4181 = vadd.f32 %v4179, 0.5
    %v4182 = vmul.f32 %v4112, 0.5
    %v4183 = vmul.f32 %v4113, 0.5
    %v4184 = vtanh.pop %v4182
    %v4185 = vtanh.pop %v4183
    %v4186 = vmul.f32 %v4184, 0.5
    %v4187 = vmul.f32 %v4185, 0.5
    %v4188 = vadd.f32 %v4186, 0.5
    %v4189 = vadd.f32 %v4187, 0.5
    %v4190 = vtanh.pop %v4142
    %v4191 = vtanh.pop %v4143
    %v4192 = vmul.f32 %v4172, 0.5
    %v4193 = vmul.f32 %v4173, 0.5
    %v4194 = vtanh.pop %v4192
    %v4195 = vtanh.pop %v4193
    %v4196 = vmul.f32 %v4194, 0.5
    %v4197 = vmul.f32 %v4195, 0.5
    %v4198 = vadd.f32 %v4196, 0.5
    %v4199 = vadd.f32 %v4197, 0.5
    %v4200 = vmul.f32 %v4188, %v4034
    %v4201 = vmul.f32 %v4189, %v4035
    %v4202 = vmul.f32 %v4180, %v4190
    %v4203 = vmul.f32 %v4181, %v4191
    %v4204 = vadd.f32 %v4200, %v4202
    %v4205 = vadd.f32 %v4201, %v4203
    %v4206 = vtanh.pop %v4204
    %v4207 = vtanh.pop %v4205
    %v4208 = vmul.f32 %v4198, %v4206
    %v4209 = vmul.f32 %v4199, %v4207
    %4210 = vset.pattern.permute.xlu0 23
    %4211 = vperm.xlu0 %4210, %v260
    %v4212 = vpop.permute.xlu0 %4211
    %4214 = vset.pattern.permute.xlu0 23
    %4215 = vperm.xlu0 %4214, %v267
    %v4216 = vpop.permute.xlu0 %4215
    %v4218 = vmul.f32 %v4212, %v299
    %v4219 = vmul.f32 %v4216, %v299
    %v4220 = vadd.f32 %v4218, %v302
    %v4221 = vadd.f32 %v4219, %v302
    %v4224 = vrot.slane %v4209, 7
    %v4225 = vsel %vm196, %v4224, %v4208
    %v4226 = vsel %vm117, %v4225, 0
    %4228 = vmatpush.msra.mxu0 0.0
    %4229 = vmatpush.msra.mxu0 0.0
    %4230 = vmatpush.msra.mxu0 0.0
    %4231 = vmatpush.msra.mxu0 0.0
    %4232 = vmatpush.msra.mxu0 0.0
    %4233 = vmatpush.msra.mxu0 0.0
    %4234 = vmatpush.msra.mxu0 0.0
    %4235 = vmatpush.msra.mxu0 0.0
    %4236 = vmatpush.msra.mxu0 0.0
    %4237 = vmatpush.msra.mxu0 0.0
    %4238 = vmatpush.msra.mxu0 0.0
    %4239 = vmatpush.msra.mxu0 0.0
    %4240 = vmatpush.msra.mxu0 %v273
    %4241 = vmatpush.msra.mxu0 %v272
    %4242 = vmatpush.msra.mxu0 %v271
    %4243 = vmatpush.msra.mxu0 %v270
    %4244 = vmatmul.f32.gmra.mxu0 %v4226
    %v4245 = vpop.f32.mrf.mxu0
    %v4246 = vadd.f32 0.0, %v4245
    %4247 = vdwg.mxu0
    %v4249 = vrot.slane %v4246, 1
    %v4252 = vadd.f32 %v4220, %v4246
    %v4253 = vadd.f32 %v4221, %v4249
    %v4254 = vmul.f32 %v4212, %v334
    %v4255 = vmul.f32 %v4216, %v334
    %v4256 = vadd.f32 %v4254, %v337
    %v4257 = vadd.f32 %v4255, %v337
    %4258 = vmatpush.msra.mxu0 0.0
    %4259 = vmatpush.msra.mxu0 0.0
    %4260 = vmatpush.msra.mxu0 0.0
    %4261 = vmatpush.msra.mxu0 0.0
    %4262 = vmatpush.msra.mxu0 0.0
    %4263 = vmatpush.msra.mxu0 0.0
    %4264 = vmatpush.msra.mxu0 0.0
    %4265 = vmatpush.msra.mxu0 0.0
    %4266 = vmatpush.msra.mxu0 0.0
    %4267 = vmatpush.msra.mxu0 0.0
    %4268 = vmatpush.msra.mxu0 0.0
    %4269 = vmatpush.msra.mxu0 0.0
    %4270 = vmatpush.msra.mxu0 %v278
    %4271 = vmatpush.msra.mxu0 %v277
    %4272 = vmatpush.msra.mxu0 %v276
    %4273 = vmatpush.msra.mxu0 %v275
    %4274 = vmatmul.f32.gmra.mxu0 %v4226
    %v4275 = vpop.f32.mrf.mxu0
    %v4276 = vadd.f32 0.0, %v4275
    %4277 = vdwg.mxu0
    %v4279 = vrot.slane %v4276, 1
    %v4282 = vadd.f32 %v4256, %v4276
    %v4283 = vadd.f32 %v4257, %v4279
    %v4284 = vmul.f32 %v4212, %v366
    %v4285 = vmul.f32 %v4216, %v366
    %v4286 = vadd.f32 %v4284, %v369
    %v4287 = vadd.f32 %v4285, %v369
    %4288 = vmatpush.msra.mxu0 0.0
    %4289 = vmatpush.msra.mxu0 0.0
    %4290 = vmatpush.msra.mxu0 0.0
    %4291 = vmatpush.msra.mxu0 0.0
    %4292 = vmatpush.msra.mxu0 0.0
    %4293 = vmatpush.msra.mxu0 0.0
    %4294 = vmatpush.msra.mxu0 0.0
    %4295 = vmatpush.msra.mxu0 0.0
    %4296 = vmatpush.msra.mxu0 0.0
    %4297 = vmatpush.msra.mxu0 0.0
    %4298 = vmatpush.msra.mxu0 0.0
    %4299 = vmatpush.msra.mxu0 0.0
    %4300 = vmatpush.msra.mxu0 %v283
    %4301 = vmatpush.msra.mxu0 %v282
    %4302 = vmatpush.msra.mxu0 %v281
    %4303 = vmatpush.msra.mxu0 %v280
    %4304 = vmatmul.f32.gmra.mxu0 %v4226
    %v4305 = vpop.f32.mrf.mxu0
    %v4306 = vadd.f32 0.0, %v4305
    %4307 = vdwg.mxu0
    %v4309 = vrot.slane %v4306, 1
    %v4312 = vadd.f32 %v4286, %v4306
    %v4313 = vadd.f32 %v4287, %v4309
    %v4314 = vmul.f32 %v4212, %v398
    %v4315 = vmul.f32 %v4216, %v398
    %v4316 = vadd.f32 %v4314, %v401
    %v4317 = vadd.f32 %v4315, %v401
    %4318 = vmatpush.msra.mxu0 0.0
    %4319 = vmatpush.msra.mxu0 0.0
    %4320 = vmatpush.msra.mxu0 0.0
    %4321 = vmatpush.msra.mxu0 0.0
    %4322 = vmatpush.msra.mxu0 0.0
    %4323 = vmatpush.msra.mxu0 0.0
    %4324 = vmatpush.msra.mxu0 0.0
    %4325 = vmatpush.msra.mxu0 0.0
    %4326 = vmatpush.msra.mxu0 0.0
    %4327 = vmatpush.msra.mxu0 0.0
    %4328 = vmatpush.msra.mxu0 0.0
    %4329 = vmatpush.msra.mxu0 0.0
    %4330 = vmatpush.msra.mxu0 %v288
    %4331 = vmatpush.msra.mxu0 %v287
    %4332 = vmatpush.msra.mxu0 %v286
    %4333 = vmatpush.msra.mxu0 %v285
    %4334 = vmatmul.f32.gmra.mxu0 %v4226
    %v4335 = vpop.f32.mrf.mxu0
    %v4336 = vadd.f32 0.0, %v4335
    %4337 = vdwg.mxu0
    %v4339 = vrot.slane %v4336, 1
    %v4342 = vadd.f32 %v4316, %v4336
    %v4343 = vadd.f32 %v4317, %v4339
    %v4344 = vmul.f32 %v4252, 0.5
    %v4345 = vmul.f32 %v4253, 0.5
    %v4346 = vtanh.pop %v4344
    %v4347 = vtanh.pop %v4345
    %v4348 = vmul.f32 %v4346, 0.5
    %v4349 = vmul.f32 %v4347, 0.5
    %v4350 = vadd.f32 %v4348, 0.5
    %v4351 = vadd.f32 %v4349, 0.5
    %v4352 = vmul.f32 %v4282, 0.5
    %v4353 = vmul.f32 %v4283, 0.5
    %v4354 = vtanh.pop %v4352
    %v4355 = vtanh.pop %v4353
    %v4356 = vmul.f32 %v4354, 0.5
    %v4357 = vmul.f32 %v4355, 0.5
    %v4358 = vadd.f32 %v4356, 0.5
    %v4359 = vadd.f32 %v4357, 0.5
    %v4360 = vtanh.pop %v4312
    %v4361 = vtanh.pop %v4313
    %v4362 = vmul.f32 %v4342, 0.5
    %v4363 = vmul.f32 %v4343, 0.5
    %v4364 = vtanh.pop %v4362
    %v4365 = vtanh.pop %v4363
    %v4366 = vmul.f32 %v4364, 0.5
    %v4367 = vmul.f32 %v4365, 0.5
    %v4368 = vadd.f32 %v4366, 0.5
    %v4369 = vadd.f32 %v4367, 0.5
    %v4370 = vmul.f32 %v4358, %v4204
    %v4371 = vmul.f32 %v4359, %v4205
    %v4372 = vmul.f32 %v4350, %v4360
    %v4373 = vmul.f32 %v4351, %v4361
    %v4374 = vadd.f32 %v4370, %v4372
    %v4375 = vadd.f32 %v4371, %v4373
    %v4376 = vtanh.pop %v4374
    %v4377 = vtanh.pop %v4375
    %v4378 = vmul.f32 %v4368, %v4376
    %v4379 = vmul.f32 %v4369, %v4377
    %4380 = vset.pattern.permute.xlu0 24
    %4381 = vperm.xlu0 %4380, %v260
    %v4382 = vpop.permute.xlu0 %4381
    %4384 = vset.pattern.permute.xlu0 24
    %4385 = vperm.xlu0 %4384, %v267
    %v4386 = vpop.permute.xlu0 %4385
    %v4388 = vmul.f32 %v4382, %v299
    %v4389 = vmul.f32 %v4386, %v299
    %v4390 = vadd.f32 %v4388, %v302
    %v4391 = vadd.f32 %v4389, %v302
    %v4394 = vrot.slane %v4379, 7
    %v4395 = vsel %vm196, %v4394, %v4378
    %v4396 = vsel %vm117, %v4395, 0
    %4398 = vmatpush.msra.mxu0 0.0
    %4399 = vmatpush.msra.mxu0 0.0
    %4400 = vmatpush.msra.mxu0 0.0
    %4401 = vmatpush.msra.mxu0 0.0
    %4402 = vmatpush.msra.mxu0 0.0
    %4403 = vmatpush.msra.mxu0 0.0
    %4404 = vmatpush.msra.mxu0 0.0
    %4405 = vmatpush.msra.mxu0 0.0
    %4406 = vmatpush.msra.mxu0 0.0
    %4407 = vmatpush.msra.mxu0 0.0
    %4408 = vmatpush.msra.mxu0 0.0
    %4409 = vmatpush.msra.mxu0 0.0
    %4410 = vmatpush.msra.mxu0 %v273
    %4411 = vmatpush.msra.mxu0 %v272
    %4412 = vmatpush.msra.mxu0 %v271
    %4413 = vmatpush.msra.mxu0 %v270
    %4414 = vmatmul.f32.gmra.mxu0 %v4396
    %v4415 = vpop.f32.mrf.mxu0
    %v4416 = vadd.f32 0.0, %v4415
    %4417 = vdwg.mxu0
    %v4419 = vrot.slane %v4416, 1
    %v4422 = vadd.f32 %v4390, %v4416
    %v4423 = vadd.f32 %v4391, %v4419
    %v4424 = vmul.f32 %v4382, %v334
    %v4425 = vmul.f32 %v4386, %v334
    %v4426 = vadd.f32 %v4424, %v337
    %v4427 = vadd.f32 %v4425, %v337
    %4428 = vmatpush.msra.mxu0 0.0
    %4429 = vmatpush.msra.mxu0 0.0
    %4430 = vmatpush.msra.mxu0 0.0
    %4431 = vmatpush.msra.mxu0 0.0
    %4432 = vmatpush.msra.mxu0 0.0
    %4433 = vmatpush.msra.mxu0 0.0
    %4434 = vmatpush.msra.mxu0 0.0
    %4435 = vmatpush.msra.mxu0 0.0
    %4436 = vmatpush.msra.mxu0 0.0
    %4437 = vmatpush.msra.mxu0 0.0
    %4438 = vmatpush.msra.mxu0 0.0
    %4439 = vmatpush.msra.mxu0 0.0
    %4440 = vmatpush.msra.mxu0 %v278
    %4441 = vmatpush.msra.mxu0 %v277
    %4442 = vmatpush.msra.mxu0 %v276
    %4443 = vmatpush.msra.mxu0 %v275
    %4444 = vmatmul.f32.gmra.mxu0 %v4396
    %v4445 = vpop.f32.mrf.mxu0
    %v4446 = vadd.f32 0.0, %v4445
    %4447 = vdwg.mxu0
    %v4449 = vrot.slane %v4446, 1
    %v4452 = vadd.f32 %v4426, %v4446
    %v4453 = vadd.f32 %v4427, %v4449
    %v4454 = vmul.f32 %v4382, %v366
    %v4455 = vmul.f32 %v4386, %v366
    %v4456 = vadd.f32 %v4454, %v369
    %v4457 = vadd.f32 %v4455, %v369
    %4458 = vmatpush.msra.mxu0 0.0
    %4459 = vmatpush.msra.mxu0 0.0
    %4460 = vmatpush.msra.mxu0 0.0
    %4461 = vmatpush.msra.mxu0 0.0
    %4462 = vmatpush.msra.mxu0 0.0
    %4463 = vmatpush.msra.mxu0 0.0
    %4464 = vmatpush.msra.mxu0 0.0
    %4465 = vmatpush.msra.mxu0 0.0
    %4466 = vmatpush.msra.mxu0 0.0
    %4467 = vmatpush.msra.mxu0 0.0
    %4468 = vmatpush.msra.mxu0 0.0
    %4469 = vmatpush.msra.mxu0 0.0
    %4470 = vmatpush.msra.mxu0 %v283
    %4471 = vmatpush.msra.mxu0 %v282
    %4472 = vmatpush.msra.mxu0 %v281
    %4473 = vmatpush.msra.mxu0 %v280
    %4474 = vmatmul.f32.gmra.mxu0 %v4396
    %v4475 = vpop.f32.mrf.mxu0
    %v4476 = vadd.f32 0.0, %v4475
    %4477 = vdwg.mxu0
    %v4479 = vrot.slane %v4476, 1
    %v4482 = vadd.f32 %v4456, %v4476
    %v4483 = vadd.f32 %v4457, %v4479
    %v4484 = vmul.f32 %v4382, %v398
    %v4485 = vmul.f32 %v4386, %v398
    %v4486 = vadd.f32 %v4484, %v401
    %v4487 = vadd.f32 %v4485, %v401
    %4488 = vmatpush.msra.mxu0 0.0
    %4489 = vmatpush.msra.mxu0 0.0
    %4490 = vmatpush.msra.mxu0 0.0
    %4491 = vmatpush.msra.mxu0 0.0
    %4492 = vmatpush.msra.mxu0 0.0
    %4493 = vmatpush.msra.mxu0 0.0
    %4494 = vmatpush.msra.mxu0 0.0
    %4495 = vmatpush.msra.mxu0 0.0
    %4496 = vmatpush.msra.mxu0 0.0
    %4497 = vmatpush.msra.mxu0 0.0
    %4498 = vmatpush.msra.mxu0 0.0
    %4499 = vmatpush.msra.mxu0 0.0
    %4500 = vmatpush.msra.mxu0 %v288
    %4501 = vmatpush.msra.mxu0 %v287
    %4502 = vmatpush.msra.mxu0 %v286
    %4503 = vmatpush.msra.mxu0 %v285
    %4504 = vmatmul.f32.gmra.mxu0 %v4396
    %v4505 = vpop.f32.mrf.mxu0
    %v4506 = vadd.f32 0.0, %v4505
    %4507 = vdwg.mxu0
    %v4509 = vrot.slane %v4506, 1
    %v4512 = vadd.f32 %v4486, %v4506
    %v4513 = vadd.f32 %v4487, %v4509
    %v4514 = vmul.f32 %v4422, 0.5
    %v4515 = vmul.f32 %v4423, 0.5
    %v4516 = vtanh.pop %v4514
    %v4517 = vtanh.pop %v4515
    %v4518 = vmul.f32 %v4516, 0.5
    %v4519 = vmul.f32 %v4517, 0.5
    %v4520 = vadd.f32 %v4518, 0.5
    %v4521 = vadd.f32 %v4519, 0.5
    %v4522 = vmul.f32 %v4452, 0.5
    %v4523 = vmul.f32 %v4453, 0.5
    %v4524 = vtanh.pop %v4522
    %v4525 = vtanh.pop %v4523
    %v4526 = vmul.f32 %v4524, 0.5
    %v4527 = vmul.f32 %v4525, 0.5
    %v4528 = vadd.f32 %v4526, 0.5
    %v4529 = vadd.f32 %v4527, 0.5
    %v4530 = vtanh.pop %v4482
    %v4531 = vtanh.pop %v4483
    %v4532 = vmul.f32 %v4512, 0.5
    %v4533 = vmul.f32 %v4513, 0.5
    %v4534 = vtanh.pop %v4532
    %v4535 = vtanh.pop %v4533
    %v4536 = vmul.f32 %v4534, 0.5
    %v4537 = vmul.f32 %v4535, 0.5
    %v4538 = vadd.f32 %v4536, 0.5
    %v4539 = vadd.f32 %v4537, 0.5
    %v4540 = vmul.f32 %v4528, %v4374
    %v4541 = vmul.f32 %v4529, %v4375
    %v4542 = vmul.f32 %v4520, %v4530
    %v4543 = vmul.f32 %v4521, %v4531
    %v4544 = vadd.f32 %v4540, %v4542
    %v4545 = vadd.f32 %v4541, %v4543
    %v4546 = vtanh.pop %v4544
    %v4547 = vtanh.pop %v4545
    %v4548 = vmul.f32 %v4538, %v4546
    %v4549 = vmul.f32 %v4539, %v4547
    %4550 = vset.pattern.permute.xlu0 25
    %4551 = vperm.xlu0 %4550, %v260
    %v4552 = vpop.permute.xlu0 %4551
    %4554 = vset.pattern.permute.xlu0 25
    %4555 = vperm.xlu0 %4554, %v267
    %v4556 = vpop.permute.xlu0 %4555
    %v4558 = vmul.f32 %v4552, %v299
    %v4559 = vmul.f32 %v4556, %v299
    %v4560 = vadd.f32 %v4558, %v302
    %v4561 = vadd.f32 %v4559, %v302
    %v4564 = vrot.slane %v4549, 7
    %v4565 = vsel %vm196, %v4564, %v4548
    %v4566 = vsel %vm117, %v4565, 0
    %4568 = vmatpush.msra.mxu0 0.0
    %4569 = vmatpush.msra.mxu0 0.0
    %4570 = vmatpush.msra.mxu0 0.0
    %4571 = vmatpush.msra.mxu0 0.0
    %4572 = vmatpush.msra.mxu0 0.0
    %4573 = vmatpush.msra.mxu0 0.0
    %4574 = vmatpush.msra.mxu0 0.0
    %4575 = vmatpush.msra.mxu0 0.0
    %4576 = vmatpush.msra.mxu0 0.0
    %4577 = vmatpush.msra.mxu0 0.0
    %4578 = vmatpush.msra.mxu0 0.0
    %4579 = vmatpush.msra.mxu0 0.0
    %4580 = vmatpush.msra.mxu0 %v273
    %4581 = vmatpush.msra.mxu0 %v272
    %4582 = vmatpush.msra.mxu0 %v271
    %4583 = vmatpush.msra.mxu0 %v270
    %4584 = vmatmul.f32.gmra.mxu0 %v4566
    %v4585 = vpop.f32.mrf.mxu0
    %v4586 = vadd.f32 0.0, %v4585
    %4587 = vdwg.mxu0
    %v4589 = vrot.slane %v4586, 1
    %v4592 = vadd.f32 %v4560, %v4586
    %v4593 = vadd.f32 %v4561, %v4589
    %v4594 = vmul.f32 %v4552, %v334
    %v4595 = vmul.f32 %v4556, %v334
    %v4596 = vadd.f32 %v4594, %v337
    %v4597 = vadd.f32 %v4595, %v337
    %4598 = vmatpush.msra.mxu0 0.0
    %4599 = vmatpush.msra.mxu0 0.0
    %4600 = vmatpush.msra.mxu0 0.0
    %4601 = vmatpush.msra.mxu0 0.0
    %4602 = vmatpush.msra.mxu0 0.0
    %4603 = vmatpush.msra.mxu0 0.0
    %4604 = vmatpush.msra.mxu0 0.0
    %4605 = vmatpush.msra.mxu0 0.0
    %4606 = vmatpush.msra.mxu0 0.0
    %4607 = vmatpush.msra.mxu0 0.0
    %4608 = vmatpush.msra.mxu0 0.0
    %4609 = vmatpush.msra.mxu0 0.0
    %4610 = vmatpush.msra.mxu0 %v278
    %4611 = vmatpush.msra.mxu0 %v277
    %4612 = vmatpush.msra.mxu0 %v276
    %4613 = vmatpush.msra.mxu0 %v275
    %4614 = vmatmul.f32.gmra.mxu0 %v4566
    %v4615 = vpop.f32.mrf.mxu0
    %v4616 = vadd.f32 0.0, %v4615
    %4617 = vdwg.mxu0
    %v4619 = vrot.slane %v4616, 1
    %v4622 = vadd.f32 %v4596, %v4616
    %v4623 = vadd.f32 %v4597, %v4619
    %v4624 = vmul.f32 %v4552, %v366
    %v4625 = vmul.f32 %v4556, %v366
    %v4626 = vadd.f32 %v4624, %v369
    %v4627 = vadd.f32 %v4625, %v369
    %4628 = vmatpush.msra.mxu0 0.0
    %4629 = vmatpush.msra.mxu0 0.0
    %4630 = vmatpush.msra.mxu0 0.0
    %4631 = vmatpush.msra.mxu0 0.0
    %4632 = vmatpush.msra.mxu0 0.0
    %4633 = vmatpush.msra.mxu0 0.0
    %4634 = vmatpush.msra.mxu0 0.0
    %4635 = vmatpush.msra.mxu0 0.0
    %4636 = vmatpush.msra.mxu0 0.0
    %4637 = vmatpush.msra.mxu0 0.0
    %4638 = vmatpush.msra.mxu0 0.0
    %4639 = vmatpush.msra.mxu0 0.0
    %4640 = vmatpush.msra.mxu0 %v283
    %4641 = vmatpush.msra.mxu0 %v282
    %4642 = vmatpush.msra.mxu0 %v281
    %4643 = vmatpush.msra.mxu0 %v280
    %4644 = vmatmul.f32.gmra.mxu0 %v4566
    %v4645 = vpop.f32.mrf.mxu0
    %v4646 = vadd.f32 0.0, %v4645
    %4647 = vdwg.mxu0
    %v4649 = vrot.slane %v4646, 1
    %v4652 = vadd.f32 %v4626, %v4646
    %v4653 = vadd.f32 %v4627, %v4649
    %v4654 = vmul.f32 %v4552, %v398
    %v4655 = vmul.f32 %v4556, %v398
    %v4656 = vadd.f32 %v4654, %v401
    %v4657 = vadd.f32 %v4655, %v401
    %4658 = vmatpush.msra.mxu0 0.0
    %4659 = vmatpush.msra.mxu0 0.0
    %4660 = vmatpush.msra.mxu0 0.0
    %4661 = vmatpush.msra.mxu0 0.0
    %4662 = vmatpush.msra.mxu0 0.0
    %4663 = vmatpush.msra.mxu0 0.0
    %4664 = vmatpush.msra.mxu0 0.0
    %4665 = vmatpush.msra.mxu0 0.0
    %4666 = vmatpush.msra.mxu0 0.0
    %4667 = vmatpush.msra.mxu0 0.0
    %4668 = vmatpush.msra.mxu0 0.0
    %4669 = vmatpush.msra.mxu0 0.0
    %4670 = vmatpush.msra.mxu0 %v288
    %4671 = vmatpush.msra.mxu0 %v287
    %4672 = vmatpush.msra.mxu0 %v286
    %4673 = vmatpush.msra.mxu0 %v285
    %4674 = vmatmul.f32.gmra.mxu0 %v4566
    %v4675 = vpop.f32.mrf.mxu0
    %v4676 = vadd.f32 0.0, %v4675
    %4677 = vdwg.mxu0
    %v4679 = vrot.slane %v4676, 1
    %v4682 = vadd.f32 %v4656, %v4676
    %v4683 = vadd.f32 %v4657, %v4679
    %v4684 = vmul.f32 %v4592, 0.5
    %v4685 = vmul.f32 %v4593, 0.5
    %v4686 = vtanh.pop %v4684
    %v4687 = vtanh.pop %v4685
    %v4688 = vmul.f32 %v4686, 0.5
    %v4689 = vmul.f32 %v4687, 0.5
    %v4690 = vadd.f32 %v4688, 0.5
    %v4691 = vadd.f32 %v4689, 0.5
    %v4692 = vmul.f32 %v4622, 0.5
    %v4693 = vmul.f32 %v4623, 0.5
    %v4694 = vtanh.pop %v4692
    %v4695 = vtanh.pop %v4693
    %v4696 = vmul.f32 %v4694, 0.5
    %v4697 = vmul.f32 %v4695, 0.5
    %v4698 = vadd.f32 %v4696, 0.5
    %v4699 = vadd.f32 %v4697, 0.5
    %v4700 = vtanh.pop %v4652
    %v4701 = vtanh.pop %v4653
    %v4702 = vmul.f32 %v4682, 0.5
    %v4703 = vmul.f32 %v4683, 0.5
    %v4704 = vtanh.pop %v4702
    %v4705 = vtanh.pop %v4703
    %v4706 = vmul.f32 %v4704, 0.5
    %v4707 = vmul.f32 %v4705, 0.5
    %v4708 = vadd.f32 %v4706, 0.5
    %v4709 = vadd.f32 %v4707, 0.5
    %v4710 = vmul.f32 %v4698, %v4544
    %v4711 = vmul.f32 %v4699, %v4545
    %v4712 = vmul.f32 %v4690, %v4700
    %v4713 = vmul.f32 %v4691, %v4701
    %v4714 = vadd.f32 %v4710, %v4712
    %v4715 = vadd.f32 %v4711, %v4713
    %v4716 = vtanh.pop %v4714
    %v4717 = vtanh.pop %v4715
    %v4718 = vmul.f32 %v4708, %v4716
    %v4719 = vmul.f32 %v4709, %v4717
    %4720 = vset.pattern.permute.xlu0 26
    %4721 = vperm.xlu0 %4720, %v260
    %v4722 = vpop.permute.xlu0 %4721
    %4724 = vset.pattern.permute.xlu0 26
    %4725 = vperm.xlu0 %4724, %v267
    %v4726 = vpop.permute.xlu0 %4725
    %v4728 = vmul.f32 %v4722, %v299
    %v4729 = vmul.f32 %v4726, %v299
    %v4730 = vadd.f32 %v4728, %v302
    %v4731 = vadd.f32 %v4729, %v302
    %v4734 = vrot.slane %v4719, 7
    %v4735 = vsel %vm196, %v4734, %v4718
    %v4736 = vsel %vm117, %v4735, 0
    %4738 = vmatpush.msra.mxu0 0.0
    %4739 = vmatpush.msra.mxu0 0.0
    %4740 = vmatpush.msra.mxu0 0.0
    %4741 = vmatpush.msra.mxu0 0.0
    %4742 = vmatpush.msra.mxu0 0.0
    %4743 = vmatpush.msra.mxu0 0.0
    %4744 = vmatpush.msra.mxu0 0.0
    %4745 = vmatpush.msra.mxu0 0.0
    %4746 = vmatpush.msra.mxu0 0.0
    %4747 = vmatpush.msra.mxu0 0.0
    %4748 = vmatpush.msra.mxu0 0.0
    %4749 = vmatpush.msra.mxu0 0.0
    %4750 = vmatpush.msra.mxu0 %v273
    %4751 = vmatpush.msra.mxu0 %v272
    %4752 = vmatpush.msra.mxu0 %v271
    %4753 = vmatpush.msra.mxu0 %v270
    %4754 = vmatmul.f32.gmra.mxu0 %v4736
    %v4755 = vpop.f32.mrf.mxu0
    %v4756 = vadd.f32 0.0, %v4755
    %4757 = vdwg.mxu0
    %v4759 = vrot.slane %v4756, 1
    %v4762 = vadd.f32 %v4730, %v4756
    %v4763 = vadd.f32 %v4731, %v4759
    %v4764 = vmul.f32 %v4722, %v334
    %v4765 = vmul.f32 %v4726, %v334
    %v4766 = vadd.f32 %v4764, %v337
    %v4767 = vadd.f32 %v4765, %v337
    %4768 = vmatpush.msra.mxu0 0.0
    %4769 = vmatpush.msra.mxu0 0.0
    %4770 = vmatpush.msra.mxu0 0.0
    %4771 = vmatpush.msra.mxu0 0.0
    %4772 = vmatpush.msra.mxu0 0.0
    %4773 = vmatpush.msra.mxu0 0.0
    %4774 = vmatpush.msra.mxu0 0.0
    %4775 = vmatpush.msra.mxu0 0.0
    %4776 = vmatpush.msra.mxu0 0.0
    %4777 = vmatpush.msra.mxu0 0.0
    %4778 = vmatpush.msra.mxu0 0.0
    %4779 = vmatpush.msra.mxu0 0.0
    %4780 = vmatpush.msra.mxu0 %v278
    %4781 = vmatpush.msra.mxu0 %v277
    %4782 = vmatpush.msra.mxu0 %v276
    %4783 = vmatpush.msra.mxu0 %v275
    %4784 = vmatmul.f32.gmra.mxu0 %v4736
    %v4785 = vpop.f32.mrf.mxu0
    %v4786 = vadd.f32 0.0, %v4785
    %4787 = vdwg.mxu0
    %v4789 = vrot.slane %v4786, 1
    %v4792 = vadd.f32 %v4766, %v4786
    %v4793 = vadd.f32 %v4767, %v4789
    %v4794 = vmul.f32 %v4722, %v366
    %v4795 = vmul.f32 %v4726, %v366
    %v4796 = vadd.f32 %v4794, %v369
    %v4797 = vadd.f32 %v4795, %v369
    %4798 = vmatpush.msra.mxu0 0.0
    %4799 = vmatpush.msra.mxu0 0.0
    %4800 = vmatpush.msra.mxu0 0.0
    %4801 = vmatpush.msra.mxu0 0.0
    %4802 = vmatpush.msra.mxu0 0.0
    %4803 = vmatpush.msra.mxu0 0.0
    %4804 = vmatpush.msra.mxu0 0.0
    %4805 = vmatpush.msra.mxu0 0.0
    %4806 = vmatpush.msra.mxu0 0.0
    %4807 = vmatpush.msra.mxu0 0.0
    %4808 = vmatpush.msra.mxu0 0.0
    %4809 = vmatpush.msra.mxu0 0.0
    %4810 = vmatpush.msra.mxu0 %v283
    %4811 = vmatpush.msra.mxu0 %v282
    %4812 = vmatpush.msra.mxu0 %v281
    %4813 = vmatpush.msra.mxu0 %v280
    %4814 = vmatmul.f32.gmra.mxu0 %v4736
    %v4815 = vpop.f32.mrf.mxu0
    %v4816 = vadd.f32 0.0, %v4815
    %4817 = vdwg.mxu0
    %v4819 = vrot.slane %v4816, 1
    %v4822 = vadd.f32 %v4796, %v4816
    %v4823 = vadd.f32 %v4797, %v4819
    %v4824 = vmul.f32 %v4722, %v398
    %v4825 = vmul.f32 %v4726, %v398
    %v4826 = vadd.f32 %v4824, %v401
    %v4827 = vadd.f32 %v4825, %v401
    %4828 = vmatpush.msra.mxu0 0.0
    %4829 = vmatpush.msra.mxu0 0.0
    %4830 = vmatpush.msra.mxu0 0.0
    %4831 = vmatpush.msra.mxu0 0.0
    %4832 = vmatpush.msra.mxu0 0.0
    %4833 = vmatpush.msra.mxu0 0.0
    %4834 = vmatpush.msra.mxu0 0.0
    %4835 = vmatpush.msra.mxu0 0.0
    %4836 = vmatpush.msra.mxu0 0.0
    %4837 = vmatpush.msra.mxu0 0.0
    %4838 = vmatpush.msra.mxu0 0.0
    %4839 = vmatpush.msra.mxu0 0.0
    %4840 = vmatpush.msra.mxu0 %v288
    %4841 = vmatpush.msra.mxu0 %v287
    %4842 = vmatpush.msra.mxu0 %v286
    %4843 = vmatpush.msra.mxu0 %v285
    %4844 = vmatmul.f32.gmra.mxu0 %v4736
    %v4845 = vpop.f32.mrf.mxu0
    %v4846 = vadd.f32 0.0, %v4845
    %4847 = vdwg.mxu0
    %v4849 = vrot.slane %v4846, 1
    %v4852 = vadd.f32 %v4826, %v4846
    %v4853 = vadd.f32 %v4827, %v4849
    %v4854 = vmul.f32 %v4762, 0.5
    %v4855 = vmul.f32 %v4763, 0.5
    %v4856 = vtanh.pop %v4854
    %v4857 = vtanh.pop %v4855
    %v4858 = vmul.f32 %v4856, 0.5
    %v4859 = vmul.f32 %v4857, 0.5
    %v4860 = vadd.f32 %v4858, 0.5
    %v4861 = vadd.f32 %v4859, 0.5
    %v4862 = vmul.f32 %v4792, 0.5
    %v4863 = vmul.f32 %v4793, 0.5
    %v4864 = vtanh.pop %v4862
    %v4865 = vtanh.pop %v4863
    %v4866 = vmul.f32 %v4864, 0.5
    %v4867 = vmul.f32 %v4865, 0.5
    %v4868 = vadd.f32 %v4866, 0.5
    %v4869 = vadd.f32 %v4867, 0.5
    %v4870 = vtanh.pop %v4822
    %v4871 = vtanh.pop %v4823
    %v4872 = vmul.f32 %v4852, 0.5
    %v4873 = vmul.f32 %v4853, 0.5
    %v4874 = vtanh.pop %v4872
    %v4875 = vtanh.pop %v4873
    %v4876 = vmul.f32 %v4874, 0.5
    %v4877 = vmul.f32 %v4875, 0.5
    %v4878 = vadd.f32 %v4876, 0.5
    %v4879 = vadd.f32 %v4877, 0.5
    %v4880 = vmul.f32 %v4868, %v4714
    %v4881 = vmul.f32 %v4869, %v4715
    %v4882 = vmul.f32 %v4860, %v4870
    %v4883 = vmul.f32 %v4861, %v4871
    %v4884 = vadd.f32 %v4880, %v4882
    %v4885 = vadd.f32 %v4881, %v4883
    %v4886 = vtanh.pop %v4884
    %v4887 = vtanh.pop %v4885
    %v4888 = vmul.f32 %v4878, %v4886
    %v4889 = vmul.f32 %v4879, %v4887
    %4890 = vset.pattern.permute.xlu0 27
    %4891 = vperm.xlu0 %4890, %v260
    %v4892 = vpop.permute.xlu0 %4891
    %4894 = vset.pattern.permute.xlu0 27
    %4895 = vperm.xlu0 %4894, %v267
    %v4896 = vpop.permute.xlu0 %4895
    %v4898 = vmul.f32 %v4892, %v299
    %v4899 = vmul.f32 %v4896, %v299
    %v4900 = vadd.f32 %v4898, %v302
    %v4901 = vadd.f32 %v4899, %v302
    %v4904 = vrot.slane %v4889, 7
    %v4905 = vsel %vm196, %v4904, %v4888
    %v4906 = vsel %vm117, %v4905, 0
    %4908 = vmatpush.msra.mxu0 0.0
    %4909 = vmatpush.msra.mxu0 0.0
    %4910 = vmatpush.msra.mxu0 0.0
    %4911 = vmatpush.msra.mxu0 0.0
    %4912 = vmatpush.msra.mxu0 0.0
    %4913 = vmatpush.msra.mxu0 0.0
    %4914 = vmatpush.msra.mxu0 0.0
    %4915 = vmatpush.msra.mxu0 0.0
    %4916 = vmatpush.msra.mxu0 0.0
    %4917 = vmatpush.msra.mxu0 0.0
    %4918 = vmatpush.msra.mxu0 0.0
    %4919 = vmatpush.msra.mxu0 0.0
    %4920 = vmatpush.msra.mxu0 %v273
    %4921 = vmatpush.msra.mxu0 %v272
    %4922 = vmatpush.msra.mxu0 %v271
    %4923 = vmatpush.msra.mxu0 %v270
    %4924 = vmatmul.f32.gmra.mxu0 %v4906
    %v4925 = vpop.f32.mrf.mxu0
    %v4926 = vadd.f32 0.0, %v4925
    %4927 = vdwg.mxu0
    %v4929 = vrot.slane %v4926, 1
    %v4932 = vadd.f32 %v4900, %v4926
    %v4933 = vadd.f32 %v4901, %v4929
    %v4934 = vmul.f32 %v4892, %v334
    %v4935 = vmul.f32 %v4896, %v334
    %v4936 = vadd.f32 %v4934, %v337
    %v4937 = vadd.f32 %v4935, %v337
    %4938 = vmatpush.msra.mxu0 0.0
    %4939 = vmatpush.msra.mxu0 0.0
    %4940 = vmatpush.msra.mxu0 0.0
    %4941 = vmatpush.msra.mxu0 0.0
    %4942 = vmatpush.msra.mxu0 0.0
    %4943 = vmatpush.msra.mxu0 0.0
    %4944 = vmatpush.msra.mxu0 0.0
    %4945 = vmatpush.msra.mxu0 0.0
    %4946 = vmatpush.msra.mxu0 0.0
    %4947 = vmatpush.msra.mxu0 0.0
    %4948 = vmatpush.msra.mxu0 0.0
    %4949 = vmatpush.msra.mxu0 0.0
    %4950 = vmatpush.msra.mxu0 %v278
    %4951 = vmatpush.msra.mxu0 %v277
    %4952 = vmatpush.msra.mxu0 %v276
    %4953 = vmatpush.msra.mxu0 %v275
    %4954 = vmatmul.f32.gmra.mxu0 %v4906
    %v4955 = vpop.f32.mrf.mxu0
    %v4956 = vadd.f32 0.0, %v4955
    %4957 = vdwg.mxu0
    %v4959 = vrot.slane %v4956, 1
    %v4962 = vadd.f32 %v4936, %v4956
    %v4963 = vadd.f32 %v4937, %v4959
    %v4964 = vmul.f32 %v4892, %v366
    %v4965 = vmul.f32 %v4896, %v366
    %v4966 = vadd.f32 %v4964, %v369
    %v4967 = vadd.f32 %v4965, %v369
    %4968 = vmatpush.msra.mxu0 0.0
    %4969 = vmatpush.msra.mxu0 0.0
    %4970 = vmatpush.msra.mxu0 0.0
    %4971 = vmatpush.msra.mxu0 0.0
    %4972 = vmatpush.msra.mxu0 0.0
    %4973 = vmatpush.msra.mxu0 0.0
    %4974 = vmatpush.msra.mxu0 0.0
    %4975 = vmatpush.msra.mxu0 0.0
    %4976 = vmatpush.msra.mxu0 0.0
    %4977 = vmatpush.msra.mxu0 0.0
    %4978 = vmatpush.msra.mxu0 0.0
    %4979 = vmatpush.msra.mxu0 0.0
    %4980 = vmatpush.msra.mxu0 %v283
    %4981 = vmatpush.msra.mxu0 %v282
    %4982 = vmatpush.msra.mxu0 %v281
    %4983 = vmatpush.msra.mxu0 %v280
    %4984 = vmatmul.f32.gmra.mxu0 %v4906
    %v4985 = vpop.f32.mrf.mxu0
    %v4986 = vadd.f32 0.0, %v4985
    %4987 = vdwg.mxu0
    %v4989 = vrot.slane %v4986, 1
    %v4992 = vadd.f32 %v4966, %v4986
    %v4993 = vadd.f32 %v4967, %v4989
    %v4994 = vmul.f32 %v4892, %v398
    %v4995 = vmul.f32 %v4896, %v398
    %v4996 = vadd.f32 %v4994, %v401
    %v4997 = vadd.f32 %v4995, %v401
    %4998 = vmatpush.msra.mxu0 0.0
    %4999 = vmatpush.msra.mxu0 0.0
    %5000 = vmatpush.msra.mxu0 0.0
    %5001 = vmatpush.msra.mxu0 0.0
    %5002 = vmatpush.msra.mxu0 0.0
    %5003 = vmatpush.msra.mxu0 0.0
    %5004 = vmatpush.msra.mxu0 0.0
    %5005 = vmatpush.msra.mxu0 0.0
    %5006 = vmatpush.msra.mxu0 0.0
    %5007 = vmatpush.msra.mxu0 0.0
    %5008 = vmatpush.msra.mxu0 0.0
    %5009 = vmatpush.msra.mxu0 0.0
    %5010 = vmatpush.msra.mxu0 %v288
    %5011 = vmatpush.msra.mxu0 %v287
    %5012 = vmatpush.msra.mxu0 %v286
    %5013 = vmatpush.msra.mxu0 %v285
    %5014 = vmatmul.f32.gmra.mxu0 %v4906
    %v5015 = vpop.f32.mrf.mxu0
    %v5016 = vadd.f32 0.0, %v5015
    %5017 = vdwg.mxu0
    %v5019 = vrot.slane %v5016, 1
    %v5022 = vadd.f32 %v4996, %v5016
    %v5023 = vadd.f32 %v4997, %v5019
    %v5024 = vmul.f32 %v4932, 0.5
    %v5025 = vmul.f32 %v4933, 0.5
    %v5026 = vtanh.pop %v5024
    %v5027 = vtanh.pop %v5025
    %v5028 = vmul.f32 %v5026, 0.5
    %v5029 = vmul.f32 %v5027, 0.5
    %v5030 = vadd.f32 %v5028, 0.5
    %v5031 = vadd.f32 %v5029, 0.5
    %v5032 = vmul.f32 %v4962, 0.5
    %v5033 = vmul.f32 %v4963, 0.5
    %v5034 = vtanh.pop %v5032
    %v5035 = vtanh.pop %v5033
    %v5036 = vmul.f32 %v5034, 0.5
    %v5037 = vmul.f32 %v5035, 0.5
    %v5038 = vadd.f32 %v5036, 0.5
    %v5039 = vadd.f32 %v5037, 0.5
    %v5040 = vtanh.pop %v4992
    %v5041 = vtanh.pop %v4993
    %v5042 = vmul.f32 %v5022, 0.5
    %v5043 = vmul.f32 %v5023, 0.5
    %v5044 = vtanh.pop %v5042
    %v5045 = vtanh.pop %v5043
    %v5046 = vmul.f32 %v5044, 0.5
    %v5047 = vmul.f32 %v5045, 0.5
    %v5048 = vadd.f32 %v5046, 0.5
    %v5049 = vadd.f32 %v5047, 0.5
    %v5050 = vmul.f32 %v5038, %v4884
    %v5051 = vmul.f32 %v5039, %v4885
    %v5052 = vmul.f32 %v5030, %v5040
    %v5053 = vmul.f32 %v5031, %v5041
    %v5054 = vadd.f32 %v5050, %v5052
    %v5055 = vadd.f32 %v5051, %v5053
    %v5056 = vtanh.pop %v5054
    %v5057 = vtanh.pop %v5055
    %v5058 = vmul.f32 %v5048, %v5056
    %v5059 = vmul.f32 %v5049, %v5057
    %5060 = vset.pattern.permute.xlu0 28
    %5061 = vperm.xlu0 %5060, %v260
    %v5062 = vpop.permute.xlu0 %5061
    %5064 = vset.pattern.permute.xlu0 28
    %5065 = vperm.xlu0 %5064, %v267
    %v5066 = vpop.permute.xlu0 %5065
    %v5068 = vmul.f32 %v5062, %v299
    %v5069 = vmul.f32 %v5066, %v299
    %v5070 = vadd.f32 %v5068, %v302
    %v5071 = vadd.f32 %v5069, %v302
    %v5074 = vrot.slane %v5059, 7
    %v5075 = vsel %vm196, %v5074, %v5058
    %v5076 = vsel %vm117, %v5075, 0
    %5078 = vmatpush.msra.mxu0 0.0
    %5079 = vmatpush.msra.mxu0 0.0
    %5080 = vmatpush.msra.mxu0 0.0
    %5081 = vmatpush.msra.mxu0 0.0
    %5082 = vmatpush.msra.mxu0 0.0
    %5083 = vmatpush.msra.mxu0 0.0
    %5084 = vmatpush.msra.mxu0 0.0
    %5085 = vmatpush.msra.mxu0 0.0
    %5086 = vmatpush.msra.mxu0 0.0
    %5087 = vmatpush.msra.mxu0 0.0
    %5088 = vmatpush.msra.mxu0 0.0
    %5089 = vmatpush.msra.mxu0 0.0
    %5090 = vmatpush.msra.mxu0 %v273
    %5091 = vmatpush.msra.mxu0 %v272
    %5092 = vmatpush.msra.mxu0 %v271
    %5093 = vmatpush.msra.mxu0 %v270
    %5094 = vmatmul.f32.gmra.mxu0 %v5076
    %v5095 = vpop.f32.mrf.mxu0
    %v5096 = vadd.f32 0.0, %v5095
    %5097 = vdwg.mxu0
    %v5099 = vrot.slane %v5096, 1
    %v5102 = vadd.f32 %v5070, %v5096
    %v5103 = vadd.f32 %v5071, %v5099
    %v5104 = vmul.f32 %v5062, %v334
    %v5105 = vmul.f32 %v5066, %v334
    %v5106 = vadd.f32 %v5104, %v337
    %v5107 = vadd.f32 %v5105, %v337
    %5108 = vmatpush.msra.mxu0 0.0
    %5109 = vmatpush.msra.mxu0 0.0
    %5110 = vmatpush.msra.mxu0 0.0
    %5111 = vmatpush.msra.mxu0 0.0
    %5112 = vmatpush.msra.mxu0 0.0
    %5113 = vmatpush.msra.mxu0 0.0
    %5114 = vmatpush.msra.mxu0 0.0
    %5115 = vmatpush.msra.mxu0 0.0
    %5116 = vmatpush.msra.mxu0 0.0
    %5117 = vmatpush.msra.mxu0 0.0
    %5118 = vmatpush.msra.mxu0 0.0
    %5119 = vmatpush.msra.mxu0 0.0
    %5120 = vmatpush.msra.mxu0 %v278
    %5121 = vmatpush.msra.mxu0 %v277
    %5122 = vmatpush.msra.mxu0 %v276
    %5123 = vmatpush.msra.mxu0 %v275
    %5124 = vmatmul.f32.gmra.mxu0 %v5076
    %v5125 = vpop.f32.mrf.mxu0
    %v5126 = vadd.f32 0.0, %v5125
    %5127 = vdwg.mxu0
    %v5129 = vrot.slane %v5126, 1
    %v5132 = vadd.f32 %v5106, %v5126
    %v5133 = vadd.f32 %v5107, %v5129
    %v5134 = vmul.f32 %v5062, %v366
    %v5135 = vmul.f32 %v5066, %v366
    %v5136 = vadd.f32 %v5134, %v369
    %v5137 = vadd.f32 %v5135, %v369
    %5138 = vmatpush.msra.mxu0 0.0
    %5139 = vmatpush.msra.mxu0 0.0
    %5140 = vmatpush.msra.mxu0 0.0
    %5141 = vmatpush.msra.mxu0 0.0
    %5142 = vmatpush.msra.mxu0 0.0
    %5143 = vmatpush.msra.mxu0 0.0
    %5144 = vmatpush.msra.mxu0 0.0
    %5145 = vmatpush.msra.mxu0 0.0
    %5146 = vmatpush.msra.mxu0 0.0
    %5147 = vmatpush.msra.mxu0 0.0
    %5148 = vmatpush.msra.mxu0 0.0
    %5149 = vmatpush.msra.mxu0 0.0
    %5150 = vmatpush.msra.mxu0 %v283
    %5151 = vmatpush.msra.mxu0 %v282
    %5152 = vmatpush.msra.mxu0 %v281
    %5153 = vmatpush.msra.mxu0 %v280
    %5154 = vmatmul.f32.gmra.mxu0 %v5076
    %v5155 = vpop.f32.mrf.mxu0
    %v5156 = vadd.f32 0.0, %v5155
    %5157 = vdwg.mxu0
    %v5159 = vrot.slane %v5156, 1
    %v5162 = vadd.f32 %v5136, %v5156
    %v5163 = vadd.f32 %v5137, %v5159
    %v5164 = vmul.f32 %v5062, %v398
    %v5165 = vmul.f32 %v5066, %v398
    %v5166 = vadd.f32 %v5164, %v401
    %v5167 = vadd.f32 %v5165, %v401
    %5168 = vmatpush.msra.mxu0 0.0
    %5169 = vmatpush.msra.mxu0 0.0
    %5170 = vmatpush.msra.mxu0 0.0
    %5171 = vmatpush.msra.mxu0 0.0
    %5172 = vmatpush.msra.mxu0 0.0
    %5173 = vmatpush.msra.mxu0 0.0
    %5174 = vmatpush.msra.mxu0 0.0
    %5175 = vmatpush.msra.mxu0 0.0
    %5176 = vmatpush.msra.mxu0 0.0
    %5177 = vmatpush.msra.mxu0 0.0
    %5178 = vmatpush.msra.mxu0 0.0
    %5179 = vmatpush.msra.mxu0 0.0
    %5180 = vmatpush.msra.mxu0 %v288
    %5181 = vmatpush.msra.mxu0 %v287
    %5182 = vmatpush.msra.mxu0 %v286
    %5183 = vmatpush.msra.mxu0 %v285
    %5184 = vmatmul.f32.gmra.mxu0 %v5076
    %v5185 = vpop.f32.mrf.mxu0
    %v5186 = vadd.f32 0.0, %v5185
    %5187 = vdwg.mxu0
    %v5189 = vrot.slane %v5186, 1
    %v5192 = vadd.f32 %v5166, %v5186
    %v5193 = vadd.f32 %v5167, %v5189
    %v5194 = vmul.f32 %v5102, 0.5
    %v5195 = vmul.f32 %v5103, 0.5
    %v5196 = vtanh.pop %v5194
    %v5197 = vtanh.pop %v5195
    %v5198 = vmul.f32 %v5196, 0.5
    %v5199 = vmul.f32 %v5197, 0.5
    %v5200 = vadd.f32 %v5198, 0.5
    %v5201 = vadd.f32 %v5199, 0.5
    %v5202 = vmul.f32 %v5132, 0.5
    %v5203 = vmul.f32 %v5133, 0.5
    %v5204 = vtanh.pop %v5202
    %v5205 = vtanh.pop %v5203
    %v5206 = vmul.f32 %v5204, 0.5
    %v5207 = vmul.f32 %v5205, 0.5
    %v5208 = vadd.f32 %v5206, 0.5
    %v5209 = vadd.f32 %v5207, 0.5
    %v5210 = vtanh.pop %v5162
    %v5211 = vtanh.pop %v5163
    %v5212 = vmul.f32 %v5192, 0.5
    %v5213 = vmul.f32 %v5193, 0.5
    %v5214 = vtanh.pop %v5212
    %v5215 = vtanh.pop %v5213
    %v5216 = vmul.f32 %v5214, 0.5
    %v5217 = vmul.f32 %v5215, 0.5
    %v5218 = vadd.f32 %v5216, 0.5
    %v5219 = vadd.f32 %v5217, 0.5
    %v5220 = vmul.f32 %v5208, %v5054
    %v5221 = vmul.f32 %v5209, %v5055
    %v5222 = vmul.f32 %v5200, %v5210
    %v5223 = vmul.f32 %v5201, %v5211
    %v5224 = vadd.f32 %v5220, %v5222
    %v5225 = vadd.f32 %v5221, %v5223
    %v5226 = vtanh.pop %v5224
    %v5227 = vtanh.pop %v5225
    %v5228 = vmul.f32 %v5218, %v5226
    %v5229 = vmul.f32 %v5219, %v5227
    %5230 = vset.pattern.permute.xlu0 29
    %5231 = vperm.xlu0 %5230, %v260
    %v5232 = vpop.permute.xlu0 %5231
    %5234 = vset.pattern.permute.xlu0 29
    %5235 = vperm.xlu0 %5234, %v267
    %v5236 = vpop.permute.xlu0 %5235
    %v5238 = vmul.f32 %v5232, %v299
    %v5239 = vmul.f32 %v5236, %v299
    %v5240 = vadd.f32 %v5238, %v302
    %v5241 = vadd.f32 %v5239, %v302
    %v5244 = vrot.slane %v5229, 7
    %v5245 = vsel %vm196, %v5244, %v5228
    %v5246 = vsel %vm117, %v5245, 0
    %5248 = vmatpush.msra.mxu0 0.0
    %5249 = vmatpush.msra.mxu0 0.0
    %5250 = vmatpush.msra.mxu0 0.0
    %5251 = vmatpush.msra.mxu0 0.0
    %5252 = vmatpush.msra.mxu0 0.0
    %5253 = vmatpush.msra.mxu0 0.0
    %5254 = vmatpush.msra.mxu0 0.0
    %5255 = vmatpush.msra.mxu0 0.0
    %5256 = vmatpush.msra.mxu0 0.0
    %5257 = vmatpush.msra.mxu0 0.0
    %5258 = vmatpush.msra.mxu0 0.0
    %5259 = vmatpush.msra.mxu0 0.0
    %5260 = vmatpush.msra.mxu0 %v273
    %5261 = vmatpush.msra.mxu0 %v272
    %5262 = vmatpush.msra.mxu0 %v271
    %5263 = vmatpush.msra.mxu0 %v270
    %5264 = vmatmul.f32.gmra.mxu0 %v5246
    %v5265 = vpop.f32.mrf.mxu0
    %v5266 = vadd.f32 0.0, %v5265
    %5267 = vdwg.mxu0
    %v5269 = vrot.slane %v5266, 1
    %v5272 = vadd.f32 %v5240, %v5266
    %v5273 = vadd.f32 %v5241, %v5269
    %v5274 = vmul.f32 %v5232, %v334
    %v5275 = vmul.f32 %v5236, %v334
    %v5276 = vadd.f32 %v5274, %v337
    %v5277 = vadd.f32 %v5275, %v337
    %5278 = vmatpush.msra.mxu0 0.0
    %5279 = vmatpush.msra.mxu0 0.0
    %5280 = vmatpush.msra.mxu0 0.0
    %5281 = vmatpush.msra.mxu0 0.0
    %5282 = vmatpush.msra.mxu0 0.0
    %5283 = vmatpush.msra.mxu0 0.0
    %5284 = vmatpush.msra.mxu0 0.0
    %5285 = vmatpush.msra.mxu0 0.0
    %5286 = vmatpush.msra.mxu0 0.0
    %5287 = vmatpush.msra.mxu0 0.0
    %5288 = vmatpush.msra.mxu0 0.0
    %5289 = vmatpush.msra.mxu0 0.0
    %5290 = vmatpush.msra.mxu0 %v278
    %5291 = vmatpush.msra.mxu0 %v277
    %5292 = vmatpush.msra.mxu0 %v276
    %5293 = vmatpush.msra.mxu0 %v275
    %5294 = vmatmul.f32.gmra.mxu0 %v5246
    %v5295 = vpop.f32.mrf.mxu0
    %v5296 = vadd.f32 0.0, %v5295
    %5297 = vdwg.mxu0
    %v5299 = vrot.slane %v5296, 1
    %v5302 = vadd.f32 %v5276, %v5296
    %v5303 = vadd.f32 %v5277, %v5299
    %v5304 = vmul.f32 %v5232, %v366
    %v5305 = vmul.f32 %v5236, %v366
    %v5306 = vadd.f32 %v5304, %v369
    %v5307 = vadd.f32 %v5305, %v369
    %5308 = vmatpush.msra.mxu0 0.0
    %5309 = vmatpush.msra.mxu0 0.0
    %5310 = vmatpush.msra.mxu0 0.0
    %5311 = vmatpush.msra.mxu0 0.0
    %5312 = vmatpush.msra.mxu0 0.0
    %5313 = vmatpush.msra.mxu0 0.0
    %5314 = vmatpush.msra.mxu0 0.0
    %5315 = vmatpush.msra.mxu0 0.0
    %5316 = vmatpush.msra.mxu0 0.0
    %5317 = vmatpush.msra.mxu0 0.0
    %5318 = vmatpush.msra.mxu0 0.0
    %5319 = vmatpush.msra.mxu0 0.0
    %5320 = vmatpush.msra.mxu0 %v283
    %5321 = vmatpush.msra.mxu0 %v282
    %5322 = vmatpush.msra.mxu0 %v281
    %5323 = vmatpush.msra.mxu0 %v280
    %5324 = vmatmul.f32.gmra.mxu0 %v5246
    %v5325 = vpop.f32.mrf.mxu0
    %v5326 = vadd.f32 0.0, %v5325
    %5327 = vdwg.mxu0
    %v5329 = vrot.slane %v5326, 1
    %v5332 = vadd.f32 %v5306, %v5326
    %v5333 = vadd.f32 %v5307, %v5329
    %v5334 = vmul.f32 %v5232, %v398
    %v5335 = vmul.f32 %v5236, %v398
    %v5336 = vadd.f32 %v5334, %v401
    %v5337 = vadd.f32 %v5335, %v401
    %5338 = vmatpush.msra.mxu0 0.0
    %5339 = vmatpush.msra.mxu0 0.0
    %5340 = vmatpush.msra.mxu0 0.0
    %5341 = vmatpush.msra.mxu0 0.0
    %5342 = vmatpush.msra.mxu0 0.0
    %5343 = vmatpush.msra.mxu0 0.0
    %5344 = vmatpush.msra.mxu0 0.0
    %5345 = vmatpush.msra.mxu0 0.0
    %5346 = vmatpush.msra.mxu0 0.0
    %5347 = vmatpush.msra.mxu0 0.0
    %5348 = vmatpush.msra.mxu0 0.0
    %5349 = vmatpush.msra.mxu0 0.0
    %5350 = vmatpush.msra.mxu0 %v288
    %5351 = vmatpush.msra.mxu0 %v287
    %5352 = vmatpush.msra.mxu0 %v286
    %5353 = vmatpush.msra.mxu0 %v285
    %5354 = vmatmul.f32.gmra.mxu0 %v5246
    %v5355 = vpop.f32.mrf.mxu0
    %v5356 = vadd.f32 0.0, %v5355
    %5357 = vdwg.mxu0
    %v5359 = vrot.slane %v5356, 1
    %v5362 = vadd.f32 %v5336, %v5356
    %v5363 = vadd.f32 %v5337, %v5359
    %v5364 = vmul.f32 %v5272, 0.5
    %v5365 = vmul.f32 %v5273, 0.5
    %v5366 = vtanh.pop %v5364
    %v5367 = vtanh.pop %v5365
    %v5368 = vmul.f32 %v5366, 0.5
    %v5369 = vmul.f32 %v5367, 0.5
    %v5370 = vadd.f32 %v5368, 0.5
    %v5371 = vadd.f32 %v5369, 0.5
    %v5372 = vmul.f32 %v5302, 0.5
    %v5373 = vmul.f32 %v5303, 0.5
    %v5374 = vtanh.pop %v5372
    %v5375 = vtanh.pop %v5373
    %v5376 = vmul.f32 %v5374, 0.5
    %v5377 = vmul.f32 %v5375, 0.5
    %v5378 = vadd.f32 %v5376, 0.5
    %v5379 = vadd.f32 %v5377, 0.5
    %v5380 = vtanh.pop %v5332
    %v5381 = vtanh.pop %v5333
    %v5382 = vmul.f32 %v5362, 0.5
    %v5383 = vmul.f32 %v5363, 0.5
    %v5384 = vtanh.pop %v5382
    %v5385 = vtanh.pop %v5383
    %v5386 = vmul.f32 %v5384, 0.5
    %v5387 = vmul.f32 %v5385, 0.5
    %v5388 = vadd.f32 %v5386, 0.5
    %v5389 = vadd.f32 %v5387, 0.5
    %v5390 = vmul.f32 %v5378, %v5224
    %v5391 = vmul.f32 %v5379, %v5225
    %v5392 = vmul.f32 %v5370, %v5380
    %v5393 = vmul.f32 %v5371, %v5381
    %v5394 = vadd.f32 %v5390, %v5392
    %v5395 = vadd.f32 %v5391, %v5393
    %v5396 = vtanh.pop %v5394
    %v5397 = vtanh.pop %v5395
    %v5398 = vmul.f32 %v5388, %v5396
    %v5399 = vmul.f32 %v5389, %v5397
    %5400 = vset.pattern.permute.xlu0 30
    %5401 = vperm.xlu0 %5400, %v260
    %v5402 = vpop.permute.xlu0 %5401
    %5404 = vset.pattern.permute.xlu0 30
    %5405 = vperm.xlu0 %5404, %v267
    %v5406 = vpop.permute.xlu0 %5405
    %v5408 = vmul.f32 %v5402, %v299
    %v5409 = vmul.f32 %v5406, %v299
    %v5410 = vadd.f32 %v5408, %v302
    %v5411 = vadd.f32 %v5409, %v302
    %v5414 = vrot.slane %v5399, 7
    %v5415 = vsel %vm196, %v5414, %v5398
    %v5416 = vsel %vm117, %v5415, 0
    %5418 = vmatpush.msra.mxu0 0.0
    %5419 = vmatpush.msra.mxu0 0.0
    %5420 = vmatpush.msra.mxu0 0.0
    %5421 = vmatpush.msra.mxu0 0.0
    %5422 = vmatpush.msra.mxu0 0.0
    %5423 = vmatpush.msra.mxu0 0.0
    %5424 = vmatpush.msra.mxu0 0.0
    %5425 = vmatpush.msra.mxu0 0.0
    %5426 = vmatpush.msra.mxu0 0.0
    %5427 = vmatpush.msra.mxu0 0.0
    %5428 = vmatpush.msra.mxu0 0.0
    %5429 = vmatpush.msra.mxu0 0.0
    %5430 = vmatpush.msra.mxu0 %v273
    %5431 = vmatpush.msra.mxu0 %v272
    %5432 = vmatpush.msra.mxu0 %v271
    %5433 = vmatpush.msra.mxu0 %v270
    %5434 = vmatmul.f32.gmra.mxu0 %v5416
    %v5435 = vpop.f32.mrf.mxu0
    %v5436 = vadd.f32 0.0, %v5435
    %5437 = vdwg.mxu0
    %v5439 = vrot.slane %v5436, 1
    %v5442 = vadd.f32 %v5410, %v5436
    %v5443 = vadd.f32 %v5411, %v5439
    %v5444 = vmul.f32 %v5402, %v334
    %v5445 = vmul.f32 %v5406, %v334
    %v5446 = vadd.f32 %v5444, %v337
    %v5447 = vadd.f32 %v5445, %v337
    %5448 = vmatpush.msra.mxu0 0.0
    %5449 = vmatpush.msra.mxu0 0.0
    %5450 = vmatpush.msra.mxu0 0.0
    %5451 = vmatpush.msra.mxu0 0.0
    %5452 = vmatpush.msra.mxu0 0.0
    %5453 = vmatpush.msra.mxu0 0.0
    %5454 = vmatpush.msra.mxu0 0.0
    %5455 = vmatpush.msra.mxu0 0.0
    %5456 = vmatpush.msra.mxu0 0.0
    %5457 = vmatpush.msra.mxu0 0.0
    %5458 = vmatpush.msra.mxu0 0.0
    %5459 = vmatpush.msra.mxu0 0.0
    %5460 = vmatpush.msra.mxu0 %v278
    %5461 = vmatpush.msra.mxu0 %v277
    %5462 = vmatpush.msra.mxu0 %v276
    %5463 = vmatpush.msra.mxu0 %v275
    %5464 = vmatmul.f32.gmra.mxu0 %v5416
    %v5465 = vpop.f32.mrf.mxu0
    %v5466 = vadd.f32 0.0, %v5465
    %5467 = vdwg.mxu0
    %v5469 = vrot.slane %v5466, 1
    %v5472 = vadd.f32 %v5446, %v5466
    %v5473 = vadd.f32 %v5447, %v5469
    %v5474 = vmul.f32 %v5402, %v366
    %v5475 = vmul.f32 %v5406, %v366
    %v5476 = vadd.f32 %v5474, %v369
    %v5477 = vadd.f32 %v5475, %v369
    %5478 = vmatpush.msra.mxu0 0.0
    %5479 = vmatpush.msra.mxu0 0.0
    %5480 = vmatpush.msra.mxu0 0.0
    %5481 = vmatpush.msra.mxu0 0.0
    %5482 = vmatpush.msra.mxu0 0.0
    %5483 = vmatpush.msra.mxu0 0.0
    %5484 = vmatpush.msra.mxu0 0.0
    %5485 = vmatpush.msra.mxu0 0.0
    %5486 = vmatpush.msra.mxu0 0.0
    %5487 = vmatpush.msra.mxu0 0.0
    %5488 = vmatpush.msra.mxu0 0.0
    %5489 = vmatpush.msra.mxu0 0.0
    %5490 = vmatpush.msra.mxu0 %v283
    %5491 = vmatpush.msra.mxu0 %v282
    %5492 = vmatpush.msra.mxu0 %v281
    %5493 = vmatpush.msra.mxu0 %v280
    %5494 = vmatmul.f32.gmra.mxu0 %v5416
    %v5495 = vpop.f32.mrf.mxu0
    %v5496 = vadd.f32 0.0, %v5495
    %5497 = vdwg.mxu0
    %v5499 = vrot.slane %v5496, 1
    %v5502 = vadd.f32 %v5476, %v5496
    %v5503 = vadd.f32 %v5477, %v5499
    %v5504 = vmul.f32 %v5402, %v398
    %v5505 = vmul.f32 %v5406, %v398
    %v5506 = vadd.f32 %v5504, %v401
    %v5507 = vadd.f32 %v5505, %v401
    %5508 = vmatpush.msra.mxu0 0.0
    %5509 = vmatpush.msra.mxu0 0.0
    %5510 = vmatpush.msra.mxu0 0.0
    %5511 = vmatpush.msra.mxu0 0.0
    %5512 = vmatpush.msra.mxu0 0.0
    %5513 = vmatpush.msra.mxu0 0.0
    %5514 = vmatpush.msra.mxu0 0.0
    %5515 = vmatpush.msra.mxu0 0.0
    %5516 = vmatpush.msra.mxu0 0.0
    %5517 = vmatpush.msra.mxu0 0.0
    %5518 = vmatpush.msra.mxu0 0.0
    %5519 = vmatpush.msra.mxu0 0.0
    %5520 = vmatpush.msra.mxu0 %v288
    %5521 = vmatpush.msra.mxu0 %v287
    %5522 = vmatpush.msra.mxu0 %v286
    %5523 = vmatpush.msra.mxu0 %v285
    %5524 = vmatmul.f32.gmra.mxu0 %v5416
    %v5525 = vpop.f32.mrf.mxu0
    %v5526 = vadd.f32 0.0, %v5525
    %5527 = vdwg.mxu0
    %v5529 = vrot.slane %v5526, 1
    %v5532 = vadd.f32 %v5506, %v5526
    %v5533 = vadd.f32 %v5507, %v5529
    %v5534 = vmul.f32 %v5442, 0.5
    %v5535 = vmul.f32 %v5443, 0.5
    %v5536 = vtanh.pop %v5534
    %v5537 = vtanh.pop %v5535
    %v5538 = vmul.f32 %v5536, 0.5
    %v5539 = vmul.f32 %v5537, 0.5
    %v5540 = vadd.f32 %v5538, 0.5
    %v5541 = vadd.f32 %v5539, 0.5
    %v5542 = vmul.f32 %v5472, 0.5
    %v5543 = vmul.f32 %v5473, 0.5
    %v5544 = vtanh.pop %v5542
    %v5545 = vtanh.pop %v5543
    %v5546 = vmul.f32 %v5544, 0.5
    %v5547 = vmul.f32 %v5545, 0.5
    %v5548 = vadd.f32 %v5546, 0.5
    %v5549 = vadd.f32 %v5547, 0.5
    %v5550 = vtanh.pop %v5502
    %v5551 = vtanh.pop %v5503
    %v5552 = vmul.f32 %v5532, 0.5
    %v5553 = vmul.f32 %v5533, 0.5
    %v5554 = vtanh.pop %v5552
    %v5555 = vtanh.pop %v5553
    %v5556 = vmul.f32 %v5554, 0.5
    %v5557 = vmul.f32 %v5555, 0.5
    %v5558 = vadd.f32 %v5556, 0.5
    %v5559 = vadd.f32 %v5557, 0.5
    %v5560 = vmul.f32 %v5548, %v5394
    %v5561 = vmul.f32 %v5549, %v5395
    %v5562 = vmul.f32 %v5540, %v5550
    %v5563 = vmul.f32 %v5541, %v5551
    %v5564 = vadd.f32 %v5560, %v5562
    %v5565 = vadd.f32 %v5561, %v5563
    %v5566 = vtanh.pop %v5564
    %v5567 = vtanh.pop %v5565
    %v5568 = vmul.f32 %v5558, %v5566
    %v5569 = vmul.f32 %v5559, %v5567
    %5570 = vset.pattern.permute.xlu0 31
    %5571 = vperm.xlu0 %5570, %v260
    %v5572 = vpop.permute.xlu0 %5571
    %5574 = vset.pattern.permute.xlu0 31
    %5575 = vperm.xlu0 %5574, %v267
    %v5576 = vpop.permute.xlu0 %5575
    %v5578 = vmul.f32 %v5572, %v299
    %v5579 = vmul.f32 %v5576, %v299
    %v5580 = vadd.f32 %v5578, %v302
    %v5581 = vadd.f32 %v5579, %v302
    %v5584 = vrot.slane %v5569, 7
    %v5585 = vsel %vm196, %v5584, %v5568
    %v5586 = vsel %vm117, %v5585, 0
    %5588 = vmatpush.msra.mxu0 0.0
    %5589 = vmatpush.msra.mxu0 0.0
    %5590 = vmatpush.msra.mxu0 0.0
    %5591 = vmatpush.msra.mxu0 0.0
    %5592 = vmatpush.msra.mxu0 0.0
    %5593 = vmatpush.msra.mxu0 0.0
    %5594 = vmatpush.msra.mxu0 0.0
    %5595 = vmatpush.msra.mxu0 0.0
    %5596 = vmatpush.msra.mxu0 0.0
    %5597 = vmatpush.msra.mxu0 0.0
    %5598 = vmatpush.msra.mxu0 0.0
    %5599 = vmatpush.msra.mxu0 0.0
    %5600 = vmatpush.msra.mxu0 %v273
    %5601 = vmatpush.msra.mxu0 %v272
    %5602 = vmatpush.msra.mxu0 %v271
    %5603 = vmatpush.msra.mxu0 %v270
    %5604 = vmatmul.f32.gmra.mxu0 %v5586
    %v5605 = vpop.f32.mrf.mxu0
    %v5606 = vadd.f32 0.0, %v5605
    %5607 = vdwg.mxu0
    %v5609 = vrot.slane %v5606, 1
    %v5612 = vadd.f32 %v5580, %v5606
    %v5613 = vadd.f32 %v5581, %v5609
    %v5614 = vmul.f32 %v5572, %v334
    %v5615 = vmul.f32 %v5576, %v334
    %v5616 = vadd.f32 %v5614, %v337
    %v5617 = vadd.f32 %v5615, %v337
    %5618 = vmatpush.msra.mxu0 0.0
    %5619 = vmatpush.msra.mxu0 0.0
    %5620 = vmatpush.msra.mxu0 0.0
    %5621 = vmatpush.msra.mxu0 0.0
    %5622 = vmatpush.msra.mxu0 0.0
    %5623 = vmatpush.msra.mxu0 0.0
    %5624 = vmatpush.msra.mxu0 0.0
    %5625 = vmatpush.msra.mxu0 0.0
    %5626 = vmatpush.msra.mxu0 0.0
    %5627 = vmatpush.msra.mxu0 0.0
    %5628 = vmatpush.msra.mxu0 0.0
    %5629 = vmatpush.msra.mxu0 0.0
    %5630 = vmatpush.msra.mxu0 %v278
    %5631 = vmatpush.msra.mxu0 %v277
    %5632 = vmatpush.msra.mxu0 %v276
    %5633 = vmatpush.msra.mxu0 %v275
    %5634 = vmatmul.f32.gmra.mxu0 %v5586
    %v5635 = vpop.f32.mrf.mxu0
    %v5636 = vadd.f32 0.0, %v5635
    %5637 = vdwg.mxu0
    %v5639 = vrot.slane %v5636, 1
    %v5642 = vadd.f32 %v5616, %v5636
    %v5643 = vadd.f32 %v5617, %v5639
    %v5644 = vmul.f32 %v5572, %v366
    %v5645 = vmul.f32 %v5576, %v366
    %v5646 = vadd.f32 %v5644, %v369
    %v5647 = vadd.f32 %v5645, %v369
    %5648 = vmatpush.msra.mxu0 0.0
    %5649 = vmatpush.msra.mxu0 0.0
    %5650 = vmatpush.msra.mxu0 0.0
    %5651 = vmatpush.msra.mxu0 0.0
    %5652 = vmatpush.msra.mxu0 0.0
    %5653 = vmatpush.msra.mxu0 0.0
    %5654 = vmatpush.msra.mxu0 0.0
    %5655 = vmatpush.msra.mxu0 0.0
    %5656 = vmatpush.msra.mxu0 0.0
    %5657 = vmatpush.msra.mxu0 0.0
    %5658 = vmatpush.msra.mxu0 0.0
    %5659 = vmatpush.msra.mxu0 0.0
    %5660 = vmatpush.msra.mxu0 %v283
    %5661 = vmatpush.msra.mxu0 %v282
    %5662 = vmatpush.msra.mxu0 %v281
    %5663 = vmatpush.msra.mxu0 %v280
    %5664 = vmatmul.f32.gmra.mxu0 %v5586
    %v5665 = vpop.f32.mrf.mxu0
    %v5666 = vadd.f32 0.0, %v5665
    %5667 = vdwg.mxu0
    %v5669 = vrot.slane %v5666, 1
    %v5672 = vadd.f32 %v5646, %v5666
    %v5673 = vadd.f32 %v5647, %v5669
    %v5674 = vmul.f32 %v5572, %v398
    %v5675 = vmul.f32 %v5576, %v398
    %v5676 = vadd.f32 %v5674, %v401
    %v5677 = vadd.f32 %v5675, %v401
    %5678 = vmatpush.msra.mxu0 0.0
    %5679 = vmatpush.msra.mxu0 0.0
    %5680 = vmatpush.msra.mxu0 0.0
    %5681 = vmatpush.msra.mxu0 0.0
    %5682 = vmatpush.msra.mxu0 0.0
    %5683 = vmatpush.msra.mxu0 0.0
    %5684 = vmatpush.msra.mxu0 0.0
    %5685 = vmatpush.msra.mxu0 0.0
    %5686 = vmatpush.msra.mxu0 0.0
    %5687 = vmatpush.msra.mxu0 0.0
    %5688 = vmatpush.msra.mxu0 0.0
    %5689 = vmatpush.msra.mxu0 0.0
    %5690 = vmatpush.msra.mxu0 %v288
    %5691 = vmatpush.msra.mxu0 %v287
    %5692 = vmatpush.msra.mxu0 %v286
    %5693 = vmatpush.msra.mxu0 %v285
    %5694 = vmatmul.f32.gmra.mxu0 %v5586
    %v5695 = vpop.f32.mrf.mxu0
    %v5696 = vadd.f32 0.0, %v5695
    %5697 = vdwg.mxu0
    %v5699 = vrot.slane %v5696, 1
    %v5702 = vadd.f32 %v5676, %v5696
    %v5703 = vadd.f32 %v5677, %v5699
    %v5704 = vmul.f32 %v5612, 0.5
    %v5705 = vmul.f32 %v5613, 0.5
    %v5706 = vtanh.pop %v5704
    %v5707 = vtanh.pop %v5705
    %v5708 = vmul.f32 %v5706, 0.5
    %v5709 = vmul.f32 %v5707, 0.5
    %v5710 = vadd.f32 %v5708, 0.5
    %v5711 = vadd.f32 %v5709, 0.5
    %v5712 = vmul.f32 %v5642, 0.5
    %v5713 = vmul.f32 %v5643, 0.5
    %v5714 = vtanh.pop %v5712
    %v5715 = vtanh.pop %v5713
    %v5716 = vmul.f32 %v5714, 0.5
    %v5717 = vmul.f32 %v5715, 0.5
    %v5718 = vadd.f32 %v5716, 0.5
    %v5719 = vadd.f32 %v5717, 0.5
    %v5720 = vtanh.pop %v5672
    %v5721 = vtanh.pop %v5673
    %v5722 = vmul.f32 %v5702, 0.5
    %v5723 = vmul.f32 %v5703, 0.5
    %v5724 = vtanh.pop %v5722
    %v5725 = vtanh.pop %v5723
    %v5726 = vmul.f32 %v5724, 0.5
    %v5727 = vmul.f32 %v5725, 0.5
    %v5728 = vadd.f32 %v5726, 0.5
    %v5729 = vadd.f32 %v5727, 0.5
    %v5730 = vmul.f32 %v5718, %v5564
    %v5731 = vmul.f32 %v5719, %v5565
    %v5732 = vmul.f32 %v5710, %v5720
    %v5733 = vmul.f32 %v5711, %v5721
    %v5734 = vadd.f32 %v5730, %v5732
    %v5735 = vadd.f32 %v5731, %v5733
    %v5736 = vtanh.pop %v5734
    %v5737 = vtanh.pop %v5735
    %v5738 = vmul.f32 %v5728, %v5736
    %v5739 = vmul.f32 %v5729, %v5737
    %5741 = vset.pattern.permute.xlu0 0
    %5742 = vperm.xlu0 %5741, %v99
    %v5743 = vpop.permute.xlu0 %5742
    %v5745 = vmul.f32 %v5743, %v299
    %v5746 = vadd.f32 %v5745, %v302
    %v5749 = vrot.slane %v5739, 7
    %v5750 = vsel %vm196, %v5749, %v5738
    %v5751 = vsel %vm117, %v5750, 0
    %5753 = vmatpush.msra.mxu0 0.0
    %5754 = vmatpush.msra.mxu0 0.0
    %5755 = vmatpush.msra.mxu0 0.0
    %5756 = vmatpush.msra.mxu0 0.0
    %5757 = vmatpush.msra.mxu0 0.0
    %5758 = vmatpush.msra.mxu0 0.0
    %5759 = vmatpush.msra.mxu0 0.0
    %5760 = vmatpush.msra.mxu0 0.0
    %5761 = vmatpush.msra.mxu0 0.0
    %5762 = vmatpush.msra.mxu0 0.0
    %5763 = vmatpush.msra.mxu0 0.0
    %5764 = vmatpush.msra.mxu0 0.0
    %5765 = vmatpush.msra.mxu0 %v273
    %5766 = vmatpush.msra.mxu0 %v272
    %5767 = vmatpush.msra.mxu0 %v271
    %5768 = vmatpush.msra.mxu0 %v270
    %5769 = vmatmul.f32.gmra.mxu0 %v5751
    %v5770 = vpop.f32.mrf.mxu0
    %v5771 = vadd.f32 0.0, %v5770
    %5772 = vdwg.mxu0
    %v5773 = vadd.f32 %v5746, %v5771
    %v5774 = vmul.f32 %v5743, %v334
    %v5775 = vadd.f32 %v5774, %v337
    %5776 = vmatpush.msra.mxu0 0.0
    %5777 = vmatpush.msra.mxu0 0.0
    %5778 = vmatpush.msra.mxu0 0.0
    %5779 = vmatpush.msra.mxu0 0.0
    %5780 = vmatpush.msra.mxu0 0.0
    %5781 = vmatpush.msra.mxu0 0.0
    %5782 = vmatpush.msra.mxu0 0.0
    %5783 = vmatpush.msra.mxu0 0.0
    %5784 = vmatpush.msra.mxu0 0.0
    %5785 = vmatpush.msra.mxu0 0.0
    %5786 = vmatpush.msra.mxu0 0.0
    %5787 = vmatpush.msra.mxu0 0.0
    %5788 = vmatpush.msra.mxu0 %v278
    %5789 = vmatpush.msra.mxu0 %v277
    %5790 = vmatpush.msra.mxu0 %v276
    %5791 = vmatpush.msra.mxu0 %v275
    %5792 = vmatmul.f32.gmra.mxu0 %v5751
    %v5793 = vpop.f32.mrf.mxu0
    %v5794 = vadd.f32 0.0, %v5793
    %5795 = vdwg.mxu0
    %v5796 = vadd.f32 %v5775, %v5794
    %v5797 = vmul.f32 %v5743, %v366
    %v5798 = vadd.f32 %v5797, %v369
    %5799 = vmatpush.msra.mxu0 0.0
    %5800 = vmatpush.msra.mxu0 0.0
    %5801 = vmatpush.msra.mxu0 0.0
    %5802 = vmatpush.msra.mxu0 0.0
    %5803 = vmatpush.msra.mxu0 0.0
    %5804 = vmatpush.msra.mxu0 0.0
    %5805 = vmatpush.msra.mxu0 0.0
    %5806 = vmatpush.msra.mxu0 0.0
    %5807 = vmatpush.msra.mxu0 0.0
    %5808 = vmatpush.msra.mxu0 0.0
    %5809 = vmatpush.msra.mxu0 0.0
    %5810 = vmatpush.msra.mxu0 0.0
    %5811 = vmatpush.msra.mxu0 %v283
    %5812 = vmatpush.msra.mxu0 %v282
    %5813 = vmatpush.msra.mxu0 %v281
    %5814 = vmatpush.msra.mxu0 %v280
    %5815 = vmatmul.f32.gmra.mxu0 %v5751
    %v5816 = vpop.f32.mrf.mxu0
    %v5817 = vadd.f32 0.0, %v5816
    %5818 = vdwg.mxu0
    %v5819 = vadd.f32 %v5798, %v5817
    %v5820 = vmul.f32 %v5743, %v398
    %v5821 = vadd.f32 %v5820, %v401
    %5822 = vmatpush.msra.mxu0 0.0
    %5823 = vmatpush.msra.mxu0 0.0
    %5824 = vmatpush.msra.mxu0 0.0
    %5825 = vmatpush.msra.mxu0 0.0
    %5826 = vmatpush.msra.mxu0 0.0
    %5827 = vmatpush.msra.mxu0 0.0
    %5828 = vmatpush.msra.mxu0 0.0
    %5829 = vmatpush.msra.mxu0 0.0
    %5830 = vmatpush.msra.mxu0 0.0
    %5831 = vmatpush.msra.mxu0 0.0
    %5832 = vmatpush.msra.mxu0 0.0
    %5833 = vmatpush.msra.mxu0 0.0
    %5834 = vmatpush.msra.mxu0 %v288
    %5835 = vmatpush.msra.mxu0 %v287
    %5836 = vmatpush.msra.mxu0 %v286
    %5837 = vmatpush.msra.mxu0 %v285
    %5838 = vmatmul.f32.gmra.mxu0 %v5751
    %v5839 = vpop.f32.mrf.mxu0
    %v5840 = vadd.f32 0.0, %v5839
    %5841 = vdwg.mxu0
    %v5842 = vadd.f32 %v5821, %v5840
    %v5843 = vmul.f32 %v5773, 0.5
    %v5844 = vtanh.pop %v5843
    %v5845 = vmul.f32 %v5844, 0.5
    %v5846 = vadd.f32 %v5845, 0.5
    %v5847 = vmul.f32 %v5796, 0.5
    %v5848 = vtanh.pop %v5847
    %v5849 = vmul.f32 %v5848, 0.5
    %v5850 = vadd.f32 %v5849, 0.5
    %v5851 = vtanh.pop %v5819
    %v5852 = vmul.f32 %v5842, 0.5
    %v5853 = vtanh.pop %v5852
    %v5854 = vmul.f32 %v5853, 0.5
    %v5855 = vadd.f32 %v5854, 0.5
    %v5858 = vrot.slane %v5735, 7
    %v5859 = vsel %vm196, %v5858, %v5734
    %v5861 = vmul.f32 %v5850, %v5859
    %v5862 = vmul.f32 %v5846, %v5851
    %v5863 = vadd.f32 %v5861, %v5862
    %v5864 = vtanh.pop %v5863
    %v5865 = vmul.f32 %v5855, %v5864
    %vm5866 = vcmask 254976
    %5867 = vst.msk [vmem:[#allocation9] sm:$0x3] %vm5866, %v5865
    %5868 = vst.msk [vmem:[#allocation10] sm:$0x3] %vm5866, %v5863
    %v5869 = vld [vmem:[%s10] sm:$0xff]
    %v5870 = vld [vmem:[%s10 + $0x8] sm:$0xff]
    %v5871 = vld [vmem:[%s10 + $0x10] sm:$0xff]
    %v5872 = vld [vmem:[%s10 + $0x18] sm:$0xff]
    %v5873 = vld [vmem:[#allocation2] sm:$0x1]
    %v5875 = vperm.slane %v5873, 0
    %v5878 = vsel %vm117, %v5865, 0
    %5880 = vmatpush.msra.mxu0 0.0
    %5881 = vmatpush.msra.mxu0 0.0
    %5882 = vmatpush.msra.mxu0 0.0
    %5883 = vmatpush.msra.mxu0 0.0
    %5884 = vmatpush.msra.mxu0 0.0
    %5885 = vmatpush.msra.mxu0 0.0
    %5886 = vmatpush.msra.mxu0 0.0
    %5887 = vmatpush.msra.mxu0 0.0
    %5888 = vmatpush.msra.mxu0 0.0
    %5889 = vmatpush.msra.mxu0 0.0
    %5890 = vmatpush.msra.mxu0 0.0
    %5891 = vmatpush.msra.mxu0 0.0
    %5892 = vmatpush.msra.mxu0 %v5872
    %5893 = vmatpush.msra.mxu0 %v5871
    %5894 = vmatpush.msra.mxu0 %v5870
    %5895 = vmatpush.msra.mxu0 %v5869
    %5896 = vmatmul.f32.gmra.mxu0 %v5878
    %v5897 = vpop.f32.mrf.mxu0
    %v5898 = vadd.f32 %v5875, %v5897
    %5899 = vdwg.mxu0
    %vm5900 = vcmask 1024
    %5901 = vst.msk [vmem:[%s12] sm:$0x3] %vm5900, %v5898
    // Predicated region
    $region62: #{tpu_custom_call.1} parent=1 // pred_check
      _
    $region63: #{tpu_custom_call.1} parent=1 // pred_check_branch
      %5903 = sbr.rel (0) target = $region65
    $region64: #{tpu_custom_call.1} parent=1 // pred_region
      _
    $region65: #{tpu_custom_call.1} parent=1 // pred_fallthru
      _
    // Predicated region
    $region66: #{tpu_custom_call.1} parent=1 // pred_check
      _
    $region67: #{tpu_custom_call.1} parent=1 // pred_check_branch
      %5905 = sbr.rel (0) target = $region69
    $region68: #{tpu_custom_call.1} parent=1 // pred_region
      %5907 = vsyncadd [#allocation5], 0
      %s5909 = sshll.u32 [#allocation9], 4
      %s5910 = int_to_ptr.vmem [resolvable:$true] %s5909
      %s5911 = sshll.u32 %s13, 4
      %s5912 = int_to_ptr.hbm [resolvable:$true] %s5911
      %5914 = dma.vmem_to_hbm [thread:$0]  %s5910, 32, %s5912, [#allocation5]
    $region69: #{tpu_custom_call.1} parent=1 // pred_fallthru
      _
    // Predicated region
    $region70: #{tpu_custom_call.1} parent=1 // pred_check
      _
    $region71: #{tpu_custom_call.1} parent=1 // pred_check_branch
      %5916 = sbr.rel (0) target = $region73
    $region72: #{tpu_custom_call.1} parent=1 // pred_region
      %5918 = vsyncadd [#allocation11], 0
      %s5920 = sshll.u32 [#allocation10], 4
      %s5921 = int_to_ptr.vmem [resolvable:$true] %s5920
      %s5922 = sshll.u32 %s14, 4
      %s5923 = int_to_ptr.hbm [resolvable:$true] %s5922
      %5925 = dma.vmem_to_hbm [thread:$0]  %s5921, 32, %s5923, [#allocation11]
    $region73: #{tpu_custom_call.1} parent=1 // pred_fallthru
      _
    // Predicated region
    $region74: #{tpu_custom_call.1} parent=1 // pred_check
      _
    $region75: #{tpu_custom_call.1} parent=1 // pred_check_branch
      %5927 = sbr.rel (0) target = $region77
    $region76: #{tpu_custom_call.1} parent=1 // pred_region
      %5929 = vsyncadd [#allocation11], 0
      %s5931 = sshll.u32 [#allocation12], 4
      %s5932 = int_to_ptr.vmem [resolvable:$true] %s5931
      %s5933 = sshll.u32 %s15, 4
      %s5934 = int_to_ptr.hbm [resolvable:$true] %s5933
      %5936 = dma.vmem_to_hbm [thread:$0]  %s5932, 32, %s5934, [#allocation11]
    $region77: #{tpu_custom_call.1} parent=1 // pred_fallthru
      _
    // Predicated region
    $region78: #{tpu_custom_call.1} parent=1 // pred_check
      _
    $region79: #{tpu_custom_call.1} parent=1 // pred_check_branch
      %5938 = sbr.rel (0) target = $region81
    $region80: #{tpu_custom_call.1} parent=1 // pred_region
      _
    $region81: #{tpu_custom_call.1} parent=1 // pred_fallthru
      _
    // Predicated region
    $region82: #{tpu_custom_call.1} parent=1 // pred_check
      _
    $region83: #{tpu_custom_call.1} parent=1 // pred_check_branch
      %5940 = sbr.rel (0) target = $region85
    $region84: #{tpu_custom_call.1} parent=1 // pred_region
      %5942 = dma.done [#allocation5], 32
    $region85: #{tpu_custom_call.1} parent=1 // pred_fallthru
      _
    // Predicated region
    $region86: #{tpu_custom_call.1} parent=1 // pred_check
      _
    $region87: #{tpu_custom_call.1} parent=1 // pred_check_branch
      %5944 = sbr.rel (0) target = $region89
    $region88: #{tpu_custom_call.1} parent=1 // pred_region
      %5946 = dma.done [#allocation11], 32
    $region89: #{tpu_custom_call.1} parent=1 // pred_fallthru
      _
    // Predicated region
    $region90: #{tpu_custom_call.1} parent=1 // pred_check
      _
    $region91: #{tpu_custom_call.1} parent=1 // pred_check_branch
      %5948 = sbr.rel (0) target = $region93
    $region92: #{tpu_custom_call.1} parent=1 // pred_region
      %5950 = dma.done [#allocation11], 32
    $region93: #{tpu_custom_call.1} parent=1 // pred_fallthru
      _
    %5951 = vsyncpa [#allocation4], 1
    %5952 = vsyncpa [#allocation7], 1
    %5953 = vsyncpa [#allocation5], 1
    %5954 = vsyncpa [#allocation11], 1

</llo_original>
